<compile_context>
chip_gen: v7x
topology: tpu7x:2x2x1
jax: 0.10.0
libtpu: 0.0.40
codegen_flags: <defaults>
</compile_context>

<pallas_src>
import jax
import jax.numpy as jnp
from jax.experimental import pallas as pl
from jax.experimental.pallas import tpu as pltpu


def _round_up(x, m):
    return (x + m - 1) // m * m


# ----------------------------------------------------------------------------
# Kernel 1: fused conv (4 pool-quadrant matmuls) + bias + ReLU + MaxPool(2,2)
# ----------------------------------------------------------------------------
def _conv_relu_pool_kernel(x00, x01, x10, x11, w_ref, b_ref, o_ref):
    # MaxPool2x2(ReLU(conv + b)) == ReLU(max(conv quadrants) + b) because the
    # bias add and ReLU are monotonic.  Each x_* holds the im2col rows of one
    # pooling quadrant, so no in-kernel reshuffling/strided slicing is needed.
    def dot(xr):
        return jnp.dot(xr[...], w_ref[...], preferred_element_type=jnp.float32)

    m = jnp.maximum(jnp.maximum(dot(x00), dot(x01)),
                    jnp.maximum(dot(x10), dot(x11)))
    o_ref[...] = jnp.maximum(m + b_ref[...], 0.0)


def _quadrant_patches(x_nhwc, k, dh, dw):
    """im2col rows for pooling quadrant (dh, dw): shape (B*Hp*Wp, k*k*Cin)."""
    B, H, W, C = x_nhwc.shape
    Hp, Wp = (H - k + 1) // 2, (W - k + 1) // 2
    cols = [
        x_nhwc[:, dh + kh: dh + kh + 2 * Hp: 2, dw + kw: dw + kw + 2 * Wp: 2, :]
        for kh in range(k) for kw in range(k)
    ]
    # column ordering (kh, kw, cin) matches the weight row ordering below.
    return jnp.concatenate(cols, axis=-1).reshape(B * Hp * Wp, k * k * C)


def conv2d_relu_pool(x_nhwc, w2d, bias, *, k, max_tm=1024):
    """Conv(k, stride 1, valid) + ReLU + MaxPool(2,2), NHWC in / NHWC out."""
    B, H, W, Cin = x_nhwc.shape
    Hp, Wp = (H - k + 1) // 2, (W - k + 1) // 2
    K = k * k * Cin
    Cout = w2d.shape[1]
    Mp = B * Hp * Wp  # pooled output rows (b, hp, wp)

    quads = [_quadrant_patches(x_nhwc, k, dh, dw)
             for dh in (0, 1) for dw in (0, 1)]

    # >=2 M blocks (v7x megacore), cdiv grid => only a partial last block,
    # no wasted padded rows; tile second-to-last dim kept a multiple of 8.
    tm = min(max_tm, _round_up(pl.cdiv(Mp, 2), 8))
    grid = (pl.cdiv(Mp, tm),)

    x_spec = pl.BlockSpec((tm, K), lambda i: (i, 0))
    out = pl.pallas_call(
        _conv_relu_pool_kernel,
        out_shape=jax.ShapeDtypeStruct((Mp, Cout), jnp.float32),
        grid=grid,
        in_specs=[x_spec, x_spec, x_spec, x_spec,
                  pl.BlockSpec((K, Cout), lambda i: (0, 0)),
                  pl.BlockSpec((1, Cout), lambda i: (0, 0))],
        out_specs=pl.BlockSpec((tm, Cout), lambda i: (i, 0)),
        compiler_params=pltpu.CompilerParams(
            dimension_semantics=("parallel",)),
    )(*quads, w2d, bias)

    return out.reshape(B, Hp, Wp, Cout)


# ----------------------------------------------------------------------------
# Kernel 2: fused FC head  (fc1 -> fc2 -> fc3, all in one VMEM-resident call)
# ----------------------------------------------------------------------------
def _fc_head_kernel(x_ref, w1_ref, b1_ref, w2_ref, b2_ref, w3_ref, b3_ref,
                    o_ref):
    h = jnp.dot(x_ref[...], w1_ref[...],
                preferred_element_type=jnp.float32) + b1_ref[...]
    h = jnp.dot(h, w2_ref[...],
                preferred_element_type=jnp.float32) + b2_ref[...]
    o_ref[...] = jnp.dot(h, w3_ref[...],
                         preferred_element_type=jnp.float32) + b3_ref[...]


def fc_head(x2d, fc1, fc2, fc3):
    B = x2d.shape[0]
    w1, b1 = fc1
    w2, b2 = fc2
    w3, b3 = fc3
    n_out = w3.shape[1]

    def full_spec(a):
        return pl.BlockSpec(a.shape, lambda i: (0,) * a.ndim)

    return pl.pallas_call(
        _fc_head_kernel,
        out_shape=jax.ShapeDtypeStruct((B, n_out), jnp.float32),
        grid=(1,),
        in_specs=[full_spec(x2d), full_spec(w1), full_spec(b1),
                  full_spec(w2), full_spec(b2), full_spec(w3), full_spec(b3)],
        out_specs=pl.BlockSpec((B, n_out), lambda i: (0, 0)),
        compiler_params=pltpu.CompilerParams(
            dimension_semantics=("arbitrary",)),
    )(x2d, w1, b1, w2, b2, w3, b3)


# ----------------------------------------------------------------------------
# Deterministic parameter init (PyTorch-style uniform bounds), no padding
# ----------------------------------------------------------------------------
def _init_conv(key, cout, cin, k):
    kw_, kb_ = jax.random.split(key)
    fan_in = cin * k * k
    bound = 1.0 / (fan_in ** 0.5)
    w = jax.random.uniform(kw_, (cout, cin, k, k), jnp.float32, -bound, bound)
    b = jax.random.uniform(kb_, (cout,), jnp.float32, -bound, bound)
    # im2col layout: rows ordered (kh, kw, cin), columns = cout
    w2d = jnp.transpose(w, (2, 3, 1, 0)).reshape(k * k * cin, cout)
    return w2d, b.reshape(1, cout)


def _init_fc1(key, c, h, w, out_f):
    # torch's fc1 consumes the NCHW flatten (c, h, w); our conv path produces
    # (h, w, c)-ordered features, so permute the weight ROWS once at init time
    # (this is exactly what one would do when porting real torch weights).
    kw_, kb_ = jax.random.split(key)
    in_f = c * h * w
    bound = 1.0 / (in_f ** 0.5)
    wt = jax.random.uniform(kw_, (in_f, out_f), jnp.float32, -bound, bound)
    b = jax.random.uniform(kb_, (out_f,), jnp.float32, -bound, bound)
    w_hwc = wt.reshape(c, h, w, out_f).transpose(1, 2, 0, 3).reshape(in_f, out_f)
    return w_hwc, b.reshape(1, out_f)


def _init_linear(key, in_f, out_f):
    kw_, kb_ = jax.random.split(key)
    bound = 1.0 / (in_f ** 0.5)
    wt = jax.random.uniform(kw_, (in_f, out_f), jnp.float32, -bound, bound)
    b = jax.random.uniform(kb_, (out_f,), jnp.float32, -bound, bound)
    return wt, b.reshape(1, out_f)


def init_m1_params(key):
    k1, k2, k3, k4, k5 = jax.random.split(key, 5)
    return {
        "conv1": _init_conv(k1, cout=6, cin=3, k=5),
        "conv2": _init_conv(k2, cout=16, cin=6, k=5),
        "fc1": _init_fc1(k3, c=16, h=13, w=13, out_f=256),
        "fc2": _init_linear(k4, 256, 64),
        "fc3": _init_linear(k5, 64, 9),
    }


# ----------------------------------------------------------------------------
# M1 forward (Pallas) and a pure-JAX reference for validation
# ----------------------------------------------------------------------------
def m1_forward(x_nchw, params):
    x = jnp.transpose(x_nchw, (0, 2, 3, 1)).astype(jnp.float32)  # NCHW -> NHWC

    w, b = params["conv1"]
    x = conv2d_relu_pool(x, w, b, k=5)          # (B, 30, 30, 6)
    w, b = params["conv2"]
    x = conv2d_relu_pool(x, w, b, k=5)          # (B, 13, 13, 16)

    B = x.shape[0]
    x2d = x.reshape(B, 13 * 13 * 16)            # (h, w, c) flatten; fc1 rows permuted to match
    return fc_head(x2d, params["fc1"], params["fc2"], params["fc3"])


def m1_reference(x_nchw, params):
    """Pure-JAX/XLA reference with identical parameter layout."""
    x = jnp.transpose(x_nchw, (0, 2, 3, 1)).astype(jnp.float32)
    k = 5
    for name in ("conv1", "conv2"):
        w2d, b = params[name]
        cin, cout = x.shape[-1], w2d.shape[1]
        wf = w2d.reshape(k, k, cin, cout)       # HWIO
        x = jax.lax.conv_general_dilated(
            x, wf, (1, 1), "VALID",
            dimension_numbers=("NHWC", "HWIO", "NHWC"))
        x = jnp.maximum(x + b.reshape(1, 1, 1, cout), 0.0)
        x = jax.lax.reduce_window(x, -jnp.inf, jax.lax.max,
                                  (1, 2, 2, 1), (1, 2, 2, 1), "VALID")
    B = x.shape[0]
    h = x.reshape(B, -1)
    for name in ("fc1", "fc2", "fc3"):
        w, b = params[name]
        h = h @ w + b
    return h


if __name__ == "__main__":
    key = jax.random.PRNGKey(0)
    k_params, k_input = jax.random.split(key)

    params = init_m1_params(k_params)

    # 64x64 spatial input is required so the conv stack yields 16 x 13 x 13.
    batch = 2
    x = jax.random.normal(k_input, (batch, 3, 64, 64), dtype=jnp.float32)

    fwd = jax.jit(m1_forward)
    out = jax.block_until_ready(fwd(x, params))

    assert out.shape == (batch, 9), out.shape
    assert out.dtype == jnp.float32, out.dtype

    ref = jax.block_until_ready(m1_reference(x, params))
    max_err = float(jnp.max(jnp.abs(out - ref)))
    assert max_err < 1e-3, f"max abs error vs reference: {max_err}"

    print("KERNEL_OK")
</pallas_src>

<mosaic_0001>
module attributes {stable_mosaic.version = 11 : i64} {
  func.func @_conv_relu_pool_kernel(%arg0: i32, %arg1: memref<904x75xf32, #tpu.memory_space<vmem>>, %arg2: memref<904x75xf32, #tpu.memory_space<vmem>>, %arg3: memref<904x75xf32, #tpu.memory_space<vmem>>, %arg4: memref<904x75xf32, #tpu.memory_space<vmem>>, %arg5: memref<75x6xf32, #tpu.memory_space<vmem>>, %arg6: memref<1x6xf32, #tpu.memory_space<vmem>>, %arg7: memref<904x6xf32, #tpu.memory_space<vmem>>) attributes {dimension_semantics = [#tpu.dimension_semantics<parallel>], iteration_bounds = array<i64: 2>, scalar_prefetch = 0 : i64, scratch_operands = 0 : i64, tpu.core_type = #tpu.core_type<tc>, window_params = [{transform_indices = @transform_0, window_bounds = array<i64: 904, 75>}, {transform_indices = @transform_1, window_bounds = array<i64: 904, 75>}, {transform_indices = @transform_2, window_bounds = array<i64: 904, 75>}, {transform_indices = @transform_3, window_bounds = array<i64: 904, 75>}, {pipeline_mode = #tpu.pipeline_mode<synchronous>, transform_indices = @transform_4, window_bounds = array<i64: 75, 6>}, {pipeline_mode = #tpu.pipeline_mode<synchronous>, transform_indices = @transform_5, window_bounds = array<i64: 1, 6>}, {transform_indices = @transform_6, window_bounds = array<i64: 904, 6>}]} {
    %c0 = arith.constant 0 : index
    %c0_0 = arith.constant 0 : index
    %0 = vector.load %arg1[%c0, %c0_0] : memref<904x75xf32, #tpu.memory_space<vmem>>, vector<904x75xf32>
    %c0_1 = arith.constant 0 : index
    %c0_2 = arith.constant 0 : index
    %1 = vector.load %arg5[%c0_1, %c0_2] : memref<75x6xf32, #tpu.memory_space<vmem>>, vector<75x6xf32>
    %cst = arith.constant dense<0.000000e+00> : vector<904x6xf32>
    %2 = tpu.matmul %0, %1, %cst {dimension_numbers = #tpu.dot_dimension_numbers<[1], [0], [0], [1], [0, 0, 1, 1], [], []>} : vector<904x75xf32>, vector<75x6xf32>, vector<904x6xf32> -> vector<904x6xf32>
    %c0_3 = arith.constant 0 : index
    %c0_4 = arith.constant 0 : index
    %3 = vector.load %arg2[%c0_3, %c0_4] : memref<904x75xf32, #tpu.memory_space<vmem>>, vector<904x75xf32>
    %c0_5 = arith.constant 0 : index
    %c0_6 = arith.constant 0 : index
    %4 = vector.load %arg5[%c0_5, %c0_6] : memref<75x6xf32, #tpu.memory_space<vmem>>, vector<75x6xf32>
    %cst_7 = arith.constant dense<0.000000e+00> : vector<904x6xf32>
    %5 = tpu.matmul %3, %4, %cst_7 {dimension_numbers = #tpu.dot_dimension_numbers<[1], [0], [0], [1], [0, 0, 1, 1], [], []>} : vector<904x75xf32>, vector<75x6xf32>, vector<904x6xf32> -> vector<904x6xf32>
    %6 = arith.maximumf %2, %5 : vector<904x6xf32>
    %c0_8 = arith.constant 0 : index
    %c0_9 = arith.constant 0 : index
    %7 = vector.load %arg3[%c0_8, %c0_9] : memref<904x75xf32, #tpu.memory_space<vmem>>, vector<904x75xf32>
    %c0_10 = arith.constant 0 : index
    %c0_11 = arith.constant 0 : index
    %8 = vector.load %arg5[%c0_10, %c0_11] : memref<75x6xf32, #tpu.memory_space<vmem>>, vector<75x6xf32>
    %cst_12 = arith.constant dense<0.000000e+00> : vector<904x6xf32>
    %9 = tpu.matmul %7, %8, %cst_12 {dimension_numbers = #tpu.dot_dimension_numbers<[1], [0], [0], [1], [0, 0, 1, 1], [], []>} : vector<904x75xf32>, vector<75x6xf32>, vector<904x6xf32> -> vector<904x6xf32>
    %c0_13 = arith.constant 0 : index
    %c0_14 = arith.constant 0 : index
    %10 = vector.load %arg4[%c0_13, %c0_14] : memref<904x75xf32, #tpu.memory_space<vmem>>, vector<904x75xf32>
    %c0_15 = arith.constant 0 : index
    %c0_16 = arith.constant 0 : index
    %11 = vector.load %arg5[%c0_15, %c0_16] : memref<75x6xf32, #tpu.memory_space<vmem>>, vector<75x6xf32>
    %cst_17 = arith.constant dense<0.000000e+00> : vector<904x6xf32>
    %12 = tpu.matmul %10, %11, %cst_17 {dimension_numbers = #tpu.dot_dimension_numbers<[1], [0], [0], [1], [0, 0, 1, 1], [], []>} : vector<904x75xf32>, vector<75x6xf32>, vector<904x6xf32> -> vector<904x6xf32>
    %13 = arith.maximumf %9, %12 : vector<904x6xf32>
    %14 = arith.maximumf %6, %13 : vector<904x6xf32>
    %c0_18 = arith.constant 0 : index
    %c0_19 = arith.constant 0 : index
    %15 = vector.load %arg6[%c0_18, %c0_19] : memref<1x6xf32, #tpu.memory_space<vmem>>, vector<1x6xf32>
    %16 = vector.broadcast %15 : vector<1x6xf32> to vector<904x6xf32>
    %17 = arith.addf %14, %16 : vector<904x6xf32>
    %cst_20 = arith.constant 0.000000e+00 : f32
    %18 = vector.broadcast %cst_20 : f32 to vector<904x6xf32>
    %19 = arith.maximumf %17, %18 : vector<904x6xf32>
    %c0_21 = arith.constant 0 : index
    %c0_22 = arith.constant 0 : index
    %20 = vector.load %arg7[%c0_21, %c0_22] : memref<904x6xf32, #tpu.memory_space<vmem>>, vector<904x6xf32>
    tpu.vector_store %arg7[%c0_21, %c0_22], %19 {strides = array<i32>} : memref<904x6xf32, #tpu.memory_space<vmem>>, vector<904x6xf32>,
    return
  }
  func.func @transform_0(%arg0: i32) -> (i32, i32) {
    %c0_i32 = arith.constant 0 : i32
    %c0_i32_0 = arith.constant 0 : i32
    return %arg0, %c0_i32 : i32, i32
  }
  func.func @transform_1(%arg0: i32) -> (i32, i32) {
    %c0_i32 = arith.constant 0 : i32
    %c0_i32_0 = arith.constant 0 : i32
    return %arg0, %c0_i32 : i32, i32
  }
  func.func @transform_2(%arg0: i32) -> (i32, i32) {
    %c0_i32 = arith.constant 0 : i32
    %c0_i32_0 = arith.constant 0 : i32
    return %arg0, %c0_i32 : i32, i32
  }
  func.func @transform_3(%arg0: i32) -> (i32, i32) {
    %c0_i32 = arith.constant 0 : i32
    %c0_i32_0 = arith.constant 0 : i32
    return %arg0, %c0_i32 : i32, i32
  }
  func.func @transform_4(%arg0: i32) -> (i32, i32) {
    %c0_i32 = arith.constant 0 : i32
    %c0_i32_0 = arith.constant 0 : i32
    %c0_i32_1 = arith.constant 0 : i32
    return %c0_i32, %c0_i32_0 : i32, i32
  }
  func.func @transform_5(%arg0: i32) -> (i32, i32) {
    %c0_i32 = arith.constant 0 : i32
    %c0_i32_0 = arith.constant 0 : i32
    %c0_i32_1 = arith.constant 0 : i32
    return %c0_i32, %c0_i32_0 : i32, i32
  }
  func.func @transform_6(%arg0: i32) -> (i32, i32) {
    %c0_i32 = arith.constant 0 : i32
    %c0_i32_0 = arith.constant 0 : i32
    return %arg0, %c0_i32 : i32, i32
  }
}

module attributes {stable_mosaic.version = 11 : i64} {
  func.func @_conv_relu_pool_kernel(%arg0: i32, %arg1: memref<176x150xf32, #tpu.memory_space<vmem>>, %arg2: memref<176x150xf32, #tpu.memory_space<vmem>>, %arg3: memref<176x150xf32, #tpu.memory_space<vmem>>, %arg4: memref<176x150xf32, #tpu.memory_space<vmem>>, %arg5: memref<150x16xf32, #tpu.memory_space<vmem>>, %arg6: memref<1x16xf32, #tpu.memory_space<vmem>>, %arg7: memref<176x16xf32, #tpu.memory_space<vmem>>) attributes {dimension_semantics = [#tpu.dimension_semantics<parallel>], iteration_bounds = array<i64: 2>, scalar_prefetch = 0 : i64, scratch_operands = 0 : i64, tpu.core_type = #tpu.core_type<tc>, window_params = [{transform_indices = @transform_0, window_bounds = array<i64: 176, 150>}, {transform_indices = @transform_1, window_bounds = array<i64: 176, 150>}, {transform_indices = @transform_2, window_bounds = array<i64: 176, 150>}, {transform_indices = @transform_3, window_bounds = array<i64: 176, 150>}, {pipeline_mode = #tpu.pipeline_mode<synchronous>, transform_indices = @transform_4, window_bounds = array<i64: 150, 16>}, {pipeline_mode = #tpu.pipeline_mode<synchronous>, transform_indices = @transform_5, window_bounds = array<i64: 1, 16>}, {transform_indices = @transform_6, window_bounds = array<i64: 176, 16>}]} {
    %c0 = arith.constant 0 : index
    %c0_0 = arith.constant 0 : index
    %0 = vector.load %arg1[%c0, %c0_0] : memref<176x150xf32, #tpu.memory_space<vmem>>, vector<176x150xf32>
    %c0_1 = arith.constant 0 : index
    %c0_2 = arith.constant 0 : index
    %1 = vector.load %arg5[%c0_1, %c0_2] : memref<150x16xf32, #tpu.memory_space<vmem>>, vector<150x16xf32>
    %cst = arith.constant dense<0.000000e+00> : vector<176x16xf32>
    %2 = tpu.matmul %0, %1, %cst {dimension_numbers = #tpu.dot_dimension_numbers<[1], [0], [0], [1], [0, 0, 1, 1], [], []>} : vector<176x150xf32>, vector<150x16xf32>, vector<176x16xf32> -> vector<176x16xf32>
    %c0_3 = arith.constant 0 : index
    %c0_4 = arith.constant 0 : index
    %3 = vector.load %arg2[%c0_3, %c0_4] : memref<176x150xf32, #tpu.memory_space<vmem>>, vector<176x150xf32>
    %c0_5 = arith.constant 0 : index
    %c0_6 = arith.constant 0 : index
    %4 = vector.load %arg5[%c0_5, %c0_6] : memref<150x16xf32, #tpu.memory_space<vmem>>, vector<150x16xf32>
    %cst_7 = arith.constant dense<0.000000e+00> : vector<176x16xf32>
    %5 = tpu.matmul %3, %4, %cst_7 {dimension_numbers = #tpu.dot_dimension_numbers<[1], [0], [0], [1], [0, 0, 1, 1], [], []>} : vector<176x150xf32>, vector<150x16xf32>, vector<176x16xf32> -> vector<176x16xf32>
    %6 = arith.maximumf %2, %5 : vector<176x16xf32>
    %c0_8 = arith.constant 0 : index
    %c0_9 = arith.constant 0 : index
    %7 = vector.load %arg3[%c0_8, %c0_9] : memref<176x150xf32, #tpu.memory_space<vmem>>, vector<176x150xf32>
    %c0_10 = arith.constant 0 : index
    %c0_11 = arith.constant 0 : index
    %8 = vector.load %arg5[%c0_10, %c0_11] : memref<150x16xf32, #tpu.memory_space<vmem>>, vector<150x16xf32>
    %cst_12 = arith.constant dense<0.000000e+00> : vector<176x16xf32>
    %9 = tpu.matmul %7, %8, %cst_12 {dimension_numbers = #tpu.dot_dimension_numbers<[1], [0], [0], [1], [0, 0, 1, 1], [], []>} : vector<176x150xf32>, vector<150x16xf32>, vector<176x16xf32> -> vector<176x16xf32>
    %c0_13 = arith.constant 0 : index
    %c0_14 = arith.constant 0 : index
    %10 = vector.load %arg4[%c0_13, %c0_14] : memref<176x150xf32, #tpu.memory_space<vmem>>, vector<176x150xf32>
    %c0_15 = arith.constant 0 : index
    %c0_16 = arith.constant 0 : index
    %11 = vector.load %arg5[%c0_15, %c0_16] : memref<150x16xf32, #tpu.memory_space<vmem>>, vector<150x16xf32>
    %cst_17 = arith.constant dense<0.000000e+00> : vector<176x16xf32>
    %12 = tpu.matmul %10, %11, %cst_17 {dimension_numbers = #tpu.dot_dimension_numbers<[1], [0], [0], [1], [0, 0, 1, 1], [], []>} : vector<176x150xf32>, vector<150x16xf32>, vector<176x16xf32> -> vector<176x16xf32>
    %13 = arith.maximumf %9, %12 : vector<176x16xf32>
    %14 = arith.maximumf %6, %13 : vector<176x16xf32>
    %c0_18 = arith.constant 0 : index
    %c0_19 = arith.constant 0 : index
    %15 = vector.load %arg6[%c0_18, %c0_19] : memref<1x16xf32, #tpu.memory_space<vmem>>, vector<1x16xf32>
    %16 = vector.broadcast %15 : vector<1x16xf32> to vector<176x16xf32>
    %17 = arith.addf %14, %16 : vector<176x16xf32>
    %cst_20 = arith.constant 0.000000e+00 : f32
    %18 = vector.broadcast %cst_20 : f32 to vector<176x16xf32>
    %19 = arith.maximumf %17, %18 : vector<176x16xf32>
    %c0_21 = arith.constant 0 : index
    %c0_22 = arith.constant 0 : index
    %20 = vector.load %arg7[%c0_21, %c0_22] : memref<176x16xf32, #tpu.memory_space<vmem>>, vector<176x16xf32>
    tpu.vector_store %arg7[%c0_21, %c0_22], %19 {strides = array<i32>} : memref<176x16xf32, #tpu.memory_space<vmem>>, vector<176x16xf32>,
    return
  }
  func.func @transform_0(%arg0: i32) -> (i32, i32) {
    %c0_i32 = arith.constant 0 : i32
    %c0_i32_0 = arith.constant 0 : i32
    return %arg0, %c0_i32 : i32, i32
  }
  func.func @transform_1(%arg0: i32) -> (i32, i32) {
    %c0_i32 = arith.constant 0 : i32
    %c0_i32_0 = arith.constant 0 : i32
    return %arg0, %c0_i32 : i32, i32
  }
  func.func @transform_2(%arg0: i32) -> (i32, i32) {
    %c0_i32 = arith.constant 0 : i32
    %c0_i32_0 = arith.constant 0 : i32
    return %arg0, %c0_i32 : i32, i32
  }
  func.func @transform_3(%arg0: i32) -> (i32, i32) {
    %c0_i32 = arith.constant 0 : i32
    %c0_i32_0 = arith.constant 0 : i32
    return %arg0, %c0_i32 : i32, i32
  }
  func.func @transform_4(%arg0: i32) -> (i32, i32) {
    %c0_i32 = arith.constant 0 : i32
    %c0_i32_0 = arith.constant 0 : i32
    %c0_i32_1 = arith.constant 0 : i32
    return %c0_i32, %c0_i32_0 : i32, i32
  }
  func.func @transform_5(%arg0: i32) -> (i32, i32) {
    %c0_i32 = arith.constant 0 : i32
    %c0_i32_0 = arith.constant 0 : i32
    %c0_i32_1 = arith.constant 0 : i32
    return %c0_i32, %c0_i32_0 : i32, i32
  }
  func.func @transform_6(%arg0: i32) -> (i32, i32) {
    %c0_i32 = arith.constant 0 : i32
    %c0_i32_0 = arith.constant 0 : i32
    return %arg0, %c0_i32 : i32, i32
  }
}

module attributes {stable_mosaic.version = 11 : i64} {
  func.func @_fc_head_kernel(%arg0: i32, %arg1: memref<2x2704xf32, #tpu.memory_space<vmem>>, %arg2: memref<2704x256xf32, #tpu.memory_space<vmem>>, %arg3: memref<1x256xf32, #tpu.memory_space<vmem>>, %arg4: memref<256x64xf32, #tpu.memory_space<vmem>>, %arg5: memref<1x64xf32, #tpu.memory_space<vmem>>, %arg6: memref<64x9xf32, #tpu.memory_space<vmem>>, %arg7: memref<1x9xf32, #tpu.memory_space<vmem>>, %arg8: memref<2x9xf32, #tpu.memory_space<vmem>>) attributes {dimension_semantics = [#tpu.dimension_semantics<arbitrary>], iteration_bounds = array<i64: 1>, scalar_prefetch = 0 : i64, scratch_operands = 0 : i64, tpu.core_type = #tpu.core_type<tc>, window_params = [{pipeline_mode = #tpu.pipeline_mode<synchronous>, transform_indices = @transform_0, window_bounds = array<i64: 2, 2704>}, {pipeline_mode = #tpu.pipeline_mode<synchronous>, transform_indices = @transform_1, window_bounds = array<i64: 2704, 256>}, {pipeline_mode = #tpu.pipeline_mode<synchronous>, transform_indices = @transform_2, window_bounds = array<i64: 1, 256>}, {pipeline_mode = #tpu.pipeline_mode<synchronous>, transform_indices = @transform_3, window_bounds = array<i64: 256, 64>}, {pipeline_mode = #tpu.pipeline_mode<synchronous>, transform_indices = @transform_4, window_bounds = array<i64: 1, 64>}, {pipeline_mode = #tpu.pipeline_mode<synchronous>, transform_indices = @transform_5, window_bounds = array<i64: 64, 9>}, {pipeline_mode = #tpu.pipeline_mode<synchronous>, transform_indices = @transform_6, window_bounds = array<i64: 1, 9>}, {pipeline_mode = #tpu.pipeline_mode<synchronous>, transform_indices = @transform_7, window_bounds = array<i64: 2, 9>}]} {
    %c0 = arith.constant 0 : index
    %c0_0 = arith.constant 0 : index
    %0 = vector.load %arg1[%c0, %c0_0] : memref<2x2704xf32, #tpu.memory_space<vmem>>, vector<2x2704xf32>
    %c0_1 = arith.constant 0 : index
    %c0_2 = arith.constant 0 : index
    %1 = vector.load %arg2[%c0_1, %c0_2] : memref<2704x256xf32, #tpu.memory_space<vmem>>, vector<2704x256xf32>
    %cst = arith.constant dense<0.000000e+00> : vector<2x256xf32>
    %2 = tpu.matmul %0, %1, %cst {dimension_numbers = #tpu.dot_dimension_numbers<[1], [0], [0], [1], [0, 0, 1, 1], [], []>} : vector<2x2704xf32>, vector<2704x256xf32>, vector<2x256xf32> -> vector<2x256xf32>
    %c0_3 = arith.constant 0 : index
    %c0_4 = arith.constant 0 : index
    %3 = vector.load %arg3[%c0_3, %c0_4] : memref<1x256xf32, #tpu.memory_space<vmem>>, vector<1x256xf32>
    %4 = vector.broadcast %3 : vector<1x256xf32> to vector<2x256xf32>
    %5 = arith.addf %2, %4 : vector<2x256xf32>
    %c0_5 = arith.constant 0 : index
    %c0_6 = arith.constant 0 : index
    %6 = vector.load %arg4[%c0_5, %c0_6] : memref<256x64xf32, #tpu.memory_space<vmem>>, vector<256x64xf32>
    %cst_7 = arith.constant dense<0.000000e+00> : vector<2x64xf32>
    %7 = tpu.matmul %5, %6, %cst_7 {dimension_numbers = #tpu.dot_dimension_numbers<[1], [0], [0], [1], [0, 0, 1, 1], [], []>} : vector<2x256xf32>, vector<256x64xf32>, vector<2x64xf32> -> vector<2x64xf32>
    %c0_8 = arith.constant 0 : index
    %c0_9 = arith.constant 0 : index
    %8 = vector.load %arg5[%c0_8, %c0_9] : memref<1x64xf32, #tpu.memory_space<vmem>>, vector<1x64xf32>
    %9 = vector.broadcast %8 : vector<1x64xf32> to vector<2x64xf32>
    %10 = arith.addf %7, %9 : vector<2x64xf32>
    %c0_10 = arith.constant 0 : index
    %c0_11 = arith.constant 0 : index
    %11 = vector.load %arg6[%c0_10, %c0_11] : memref<64x9xf32, #tpu.memory_space<vmem>>, vector<64x9xf32>
    %cst_12 = arith.constant dense<0.000000e+00> : vector<2x9xf32>
    %12 = tpu.matmul %10, %11, %cst_12 {dimension_numbers = #tpu.dot_dimension_numbers<[1], [0], [0], [1], [0, 0, 1, 1], [], []>} : vector<2x64xf32>, vector<64x9xf32>, vector<2x9xf32> -> vector<2x9xf32>
    %c0_13 = arith.constant 0 : index
    %c0_14 = arith.constant 0 : index
    %13 = vector.load %arg7[%c0_13, %c0_14] : memref<1x9xf32, #tpu.memory_space<vmem>>, vector<1x9xf32>
    %14 = vector.broadcast %13 : vector<1x9xf32> to vector<2x9xf32>
    %15 = arith.addf %12, %14 : vector<2x9xf32>
    %c0_15 = arith.constant 0 : index
    %c0_16 = arith.constant 0 : index
    %16 = vector.load %arg8[%c0_15, %c0_16] : memref<2x9xf32, #tpu.memory_space<vmem>>, vector<2x9xf32>
    tpu.vector_store %arg8[%c0_15, %c0_16], %15 {strides = array<i32>} : memref<2x9xf32, #tpu.memory_space<vmem>>, vector<2x9xf32>,
    return
  }
  func.func @transform_0(%arg0: i32) -> (i32, i32) {
    %c0_i32 = arith.constant 0 : i32
    %c0_i32_0 = arith.constant 0 : i32
    %c0_i32_1 = arith.constant 0 : i32
    return %c0_i32, %c0_i32_0 : i32, i32
  }
  func.func @transform_1(%arg0: i32) -> (i32, i32) {
    %c0_i32 = arith.constant 0 : i32
    %c0_i32_0 = arith.constant 0 : i32
    %c0_i32_1 = arith.constant 0 : i32
    return %c0_i32, %c0_i32_0 : i32, i32
  }
  func.func @transform_2(%arg0: i32) -> (i32, i32) {
    %c0_i32 = arith.constant 0 : i32
    %c0_i32_0 = arith.constant 0 : i32
    %c0_i32_1 = arith.constant 0 : i32
    return %c0_i32, %c0_i32_0 : i32, i32
  }
  func.func @transform_3(%arg0: i32) -> (i32, i32) {
    %c0_i32 = arith.constant 0 : i32
    %c0_i32_0 = arith.constant 0 : i32
    %c0_i32_1 = arith.constant 0 : i32
    return %c0_i32, %c0_i32_0 : i32, i32
  }
  func.func @transform_4(%arg0: i32) -> (i32, i32) {
    %c0_i32 = arith.constant 0 : i32
    %c0_i32_0 = arith.constant 0 : i32
    %c0_i32_1 = arith.constant 0 : i32
    return %c0_i32, %c0_i32_0 : i32, i32
  }
  func.func @transform_5(%arg0: i32) -> (i32, i32) {
    %c0_i32 = arith.constant 0 : i32
    %c0_i32_0 = arith.constant 0 : i32
    %c0_i32_1 = arith.constant 0 : i32
    return %c0_i32, %c0_i32_0 : i32, i32
  }
  func.func @transform_6(%arg0: i32) -> (i32, i32) {
    %c0_i32 = arith.constant 0 : i32
    %c0_i32_0 = arith.constant 0 : i32
    %c0_i32_1 = arith.constant 0 : i32
    return %c0_i32, %c0_i32_0 : i32, i32
  }
  func.func @transform_7(%arg0: i32) -> (i32, i32) {
    %c0_i32 = arith.constant 0 : i32
    %c0_i32_0 = arith.constant 0 : i32
    %c0_i32_1 = arith.constant 0 : i32
    return %c0_i32, %c0_i32_0 : i32, i32
  }
}

</mosaic_0001>

<llo_original>
// kernel: m1_forward.3
$region0: #{m1_forward.3}
  #allocation0 [shape = 'u32[]', space=smem, size = 0x4, offset = 0x4, fixed_abs, tag = 'smem constant byte address 0x4 - core index']
  #allocation1 [shape = 'u32[144,128]{1,0:T(1,128)}', space=vmem, size = 0x12000, scoped, tag = 'internal scratch']
  %s0 = inlined_call_operand.vmem [shape: f32[1800,75], index: 0, kind: input, shape index: {}]
  %s1 = inlined_call_operand.vmem [shape: f32[1800,75], index: 1, kind: input, shape index: {}]
  %s2 = inlined_call_operand.vmem [shape: f32[1800,75], index: 2, kind: input, shape index: {}]
  %s3 = inlined_call_operand.vmem [shape: f32[1800,75], index: 3, kind: input, shape index: {}]
  %s4 = inlined_call_operand.vmem [shape: f32[75,6], index: 4, kind: input, shape index: {}]
  %s5 = inlined_call_operand.vmem [shape: f32[1,6], index: 5, kind: input, shape index: {}]
  %s6 = inlined_call_operand.vmem [shape: f32[1800,6], index: 6, kind: output, shape index: {}]
  %s7 = sld [smem:[#allocation0]]
  $region105: #{m1_forward.3} parent=0
    _
  %s9 = ssub.s32 1, %s7
  %s10 = scalar_select 0, %s9, %s7
  $region1: #{m1_forward.3} parent=0
    #allocation2 [shape = 'u8[925696]{0}', space=vmem, size = 0xe2000, scoped, tag = 'output window, operand 0']
    loop: start=0, step=1, limit=4
    $region2: #{m1_forward.3} parent=1 // loop_pre_header
      _
    $region3: #{m1_forward.3} parent=1 // loop_header
      %s12 = sphi 0, %s16
      %p13 = scmp.ge.s32.totalorder %s12, 4
      %s22 = sphi 0, %s24
      %s25 = sphi 0, %s22
      %s26 = sphi 0, %s25
      %s42 = sphi 0, %s26
      %s48 = sphi 0, %s50
      %s51 = sphi 0, %s48
      %s52 = sphi 0, %s51
      %s68 = sphi 0, %s52
      %s74 = sphi 0, %s76
      %s77 = sphi 0, %s74
      %s78 = sphi 0, %s77
      %s94 = sphi 0, %s78
      %s100 = sphi 0, %s102
      %s103 = sphi 0, %s100
      %s104 = sphi 0, %s103
      %s120 = sphi 0, %s104
      %s124 = sphi 0, %s124
      %s126 = sphi 0, %s124
      %s127 = sphi 0, %s126
      %s141 = sphi 0, %s127
      %s145 = sphi 0, %s145
      %s147 = sphi 0, %s145
      %s148 = sphi 0, %s147
      %s162 = sphi 0, %s148
      %s168 = sphi 0, %s170
      %s171 = sphi 0, %s168
      %s172 = sphi 0, %s171
      %s188 = sphi 0, %s172
    $region4: #{m1_forward.3} parent=1 // loop_header_branch
      %15 = sbr.rel (%p13) target = $region8
    $region5: #{m1_forward.3} parent=1 // loop_body
      %s17 = ssub.s32 %s12, 1
      %s18 = ssub.s32 %s12, 2
      %s19 = sadd.s32 %s12, 1
      %s20 = ssub.s32 %s12, %s19
      %p21 = scmp.eq.s32.totalorder %s20, 0
      %s23 = sadd.s32 %s22, 1
      %s24 = scalar_select %p21, %s22, %s23
      %p27 = pneg %p21
      %p28 = scmp.eq.s32.totalorder %s12, 1
      %p29 = por %p27, %p28
      %p30 = scmp.ne.s32.totalorder %s22, %s25
      %p31 = scmp.eq.s32.totalorder %s12, 0
      %p32 = por %p30, %p31
      %p33 = scmp.ne.s32.totalorder %s22, %s25
      %p34 = scmp.eq.s32.totalorder %s17, 1
      %p35 = por %p33, %p34
      %p36 = scmp.ne.s32.totalorder %s25, %s26
      %p37 = scmp.eq.s32.totalorder %s17, 0
      %p38 = por %p36, %p37
      %p39 = scmp.ne.s32.totalorder %s25, %s26
      %p40 = scmp.eq.s32.totalorder %s18, 1
      %p41 = por %p39, %p40
      %p43 = scmp.ne.s32.totalorder %s26, %s42
      %p44 = scmp.eq.s32.totalorder %s18, 0
      %p45 = por %p43, %p44
      %s46 = ssub.s32 %s12, %s19
      %p47 = scmp.eq.s32.totalorder %s46, 0
      %s49 = sadd.s32 %s48, 1
      %s50 = scalar_select %p47, %s48, %s49
      %p53 = pneg %p47
      %p54 = scmp.eq.s32.totalorder %s12, 1
      %p55 = por %p53, %p54
      %p56 = scmp.ne.s32.totalorder %s48, %s51
      %p57 = scmp.eq.s32.totalorder %s12, 0
      %p58 = por %p56, %p57
      %p59 = scmp.ne.s32.totalorder %s48, %s51
      %p60 = scmp.eq.s32.totalorder %s17, 1
      %p61 = por %p59, %p60
      %p62 = scmp.ne.s32.totalorder %s51, %s52
      %p63 = scmp.eq.s32.totalorder %s17, 0
      %p64 = por %p62, %p63
      %p65 = scmp.ne.s32.totalorder %s51, %s52
      %p66 = scmp.eq.s32.totalorder %s18, 1
      %p67 = por %p65, %p66
      %p69 = scmp.ne.s32.totalorder %s52, %s68
      %p70 = scmp.eq.s32.totalorder %s18, 0
      %p71 = por %p69, %p70
      %s72 = ssub.s32 %s12, %s19
      %p73 = scmp.eq.s32.totalorder %s72, 0
      %s75 = sadd.s32 %s74, 1
      %s76 = scalar_select %p73, %s74, %s75
      %p79 = pneg %p73
      %p80 = scmp.eq.s32.totalorder %s12, 1
      %p81 = por %p79, %p80
      %p82 = scmp.ne.s32.totalorder %s74, %s77
      %p83 = scmp.eq.s32.totalorder %s12, 0
      %p84 = por %p82, %p83
      %p85 = scmp.ne.s32.totalorder %s74, %s77
      %p86 = scmp.eq.s32.totalorder %s17, 1
      %p87 = por %p85, %p86
      %p88 = scmp.ne.s32.totalorder %s77, %s78
      %p89 = scmp.eq.s32.totalorder %s17, 0
      %p90 = por %p88, %p89
      %p91 = scmp.ne.s32.totalorder %s77, %s78
      %p92 = scmp.eq.s32.totalorder %s18, 1
      %p93 = por %p91, %p92
      %p95 = scmp.ne.s32.totalorder %s78, %s94
      %p96 = scmp.eq.s32.totalorder %s18, 0
      %p97 = por %p95, %p96
      %s98 = ssub.s32 %s12, %s19
      %p99 = scmp.eq.s32.totalorder %s98, 0
      %s101 = sadd.s32 %s100, 1
      %s102 = scalar_select %p99, %s100, %s101
      %p105 = pneg %p99
      %p106 = scmp.eq.s32.totalorder %s12, 1
      %p107 = por %p105, %p106
      %p108 = scmp.ne.s32.totalorder %s100, %s103
      %p109 = scmp.eq.s32.totalorder %s12, 0
      %p110 = por %p108, %p109
      %p111 = scmp.ne.s32.totalorder %s100, %s103
      %p112 = scmp.eq.s32.totalorder %s17, 1
      %p113 = por %p111, %p112
      %p114 = scmp.ne.s32.totalorder %s103, %s104
      %p115 = scmp.eq.s32.totalorder %s17, 0
      %p116 = por %p114, %p115
      %p117 = scmp.ne.s32.totalorder %s103, %s104
      %p118 = scmp.eq.s32.totalorder %s18, 1
      %p119 = por %p117, %p118
      %p121 = scmp.ne.s32.totalorder %s104, %s120
      %p122 = scmp.eq.s32.totalorder %s18, 0
      %p123 = por %p121, %p122
      %s125 = sadd.s32 %s124, 1
      %p128 = scmp.eq.s32.totalorder %s12, 1
      %p129 = scmp.ne.s32.totalorder %s124, %s126
      %p130 = scmp.eq.s32.totalorder %s12, 0
      %p131 = por %p129, %p130
      %p132 = scmp.ne.s32.totalorder %s124, %s126
      %p133 = scmp.eq.s32.totalorder %s17, 1
      %p134 = por %p132, %p133
      %p135 = scmp.ne.s32.totalorder %s126, %s127
      %p136 = scmp.eq.s32.totalorder %s17, 0
      %p137 = por %p135, %p136
      %p138 = scmp.ne.s32.totalorder %s126, %s127
      %p139 = scmp.eq.s32.totalorder %s18, 1
      %p140 = por %p138, %p139
      %p142 = scmp.ne.s32.totalorder %s127, %s141
      %p143 = scmp.eq.s32.totalorder %s18, 0
      %p144 = por %p142, %p143
      %s146 = sadd.s32 %s145, 1
      %p149 = scmp.eq.s32.totalorder %s12, 1
      %p150 = scmp.ne.s32.totalorder %s145, %s147
      %p151 = scmp.eq.s32.totalorder %s12, 0
      %p152 = por %p150, %p151
      %p153 = scmp.ne.s32.totalorder %s145, %s147
      %p154 = scmp.eq.s32.totalorder %s17, 1
      %p155 = por %p153, %p154
      %p156 = scmp.ne.s32.totalorder %s147, %s148
      %p157 = scmp.eq.s32.totalorder %s17, 0
      %p158 = por %p156, %p157
      %p159 = scmp.ne.s32.totalorder %s147, %s148
      %p160 = scmp.eq.s32.totalorder %s18, 1
      %p161 = por %p159, %p160
      %p163 = scmp.ne.s32.totalorder %s148, %s162
      %p164 = scmp.eq.s32.totalorder %s18, 0
      %p165 = por %p163, %p164
      %s166 = ssub.s32 %s12, %s19
      %p167 = scmp.eq.s32.totalorder %s166, 0
      %s169 = sadd.s32 %s168, 1
      %s170 = scalar_select %p167, %s168, %s169
      %p173 = pneg %p167
      %p174 = scmp.eq.s32.totalorder %s12, 1
      %p175 = por %p173, %p174
      %p176 = scmp.ne.s32.totalorder %s168, %s171
      %p177 = scmp.eq.s32.totalorder %s12, 0
      %p178 = por %p176, %p177
      %p179 = scmp.ne.s32.totalorder %s168, %s171
      %p180 = scmp.eq.s32.totalorder %s17, 1
      %p181 = por %p179, %p180
      %p182 = scmp.ne.s32.totalorder %s171, %s172
      %p183 = scmp.eq.s32.totalorder %s17, 0
      %p184 = por %p182, %p183
      %p185 = scmp.ne.s32.totalorder %s171, %s172
      %p186 = scmp.eq.s32.totalorder %s18, 1
      %p187 = por %p185, %p186
      %p189 = scmp.ne.s32.totalorder %s172, %s188
      %p190 = scmp.eq.s32.totalorder %s18, 0
      %p191 = por %p189, %p190
      %p192 = scmp.le.s32.totalorder 1, %s12
      %p193 = scmp.lt.s32.totalorder %s12, 3
      %p194 = pnand %p192, %p193
      %p195 = pneg %p194
      // Predicated region
      $region9: #{m1_forward.3} parent=5 // pred_check
        _
      $region10: #{m1_forward.3} parent=5 // pred_check_branch
        %197 = sbr.rel (%p194) target = $region12
      $region11: #{m1_forward.3} parent=5 // pred_region
        %s198 = ssub.s32 %s12, 1
        // Predicated region
        $region13: #{m1_forward.3} parent=11 // pred_check
          %p199 = pneg %p137
        $region14: #{m1_forward.3} parent=11 // pred_check_branch
          %201 = sbr.rel (%p199) target = $region16
        $region15: #{m1_forward.3} parent=11 // pred_region
          _
        $region16: #{m1_forward.3} parent=11 // pred_fallthru
          _
        // Predicated region
        $region17: #{m1_forward.3} parent=11 // pred_check
          %p202 = pneg %p158
        $region18: #{m1_forward.3} parent=11 // pred_check_branch
          %204 = sbr.rel (%p202) target = $region20
        $region19: #{m1_forward.3} parent=11 // pred_region
          _
        $region20: #{m1_forward.3} parent=11 // pred_fallthru
          _
      $region12: #{m1_forward.3} parent=5 // pred_fallthru
        _
      %p205 = scmp.lt.s32.totalorder %s12, 2
      // Predicated region
      $region21: #{m1_forward.3} parent=5 // pred_check
        %p206 = pneg %p205
      $region22: #{m1_forward.3} parent=5 // pred_check_branch
        %208 = sbr.rel (%p206) target = $region24
      $region23: #{m1_forward.3} parent=5 // pred_region
        // Predicated region
        $region25: #{m1_forward.3} parent=23 // pred_check
          %p209 = pneg %p32
        $region26: #{m1_forward.3} parent=23 // pred_check_branch
          %211 = sbr.rel (%p209) target = $region28
        $region27: #{m1_forward.3} parent=23 // pred_region
          %s212 = smul.u32 113, %s12
          %s213 = ssub.s32 225, %s212
          %p214 = scmp.lt.s32.totalorder %s213, 113
          %s215 = scalar_select %p214, %s213, 113
          %s216 = smul.u32 128, %s215
          %p217 = scmp.lt.s32.totalorder %s212, 224
          %s218 = scalar_select %p217, %s212, 224
          %s219 = smul.addr %s218, 8
          %s220 = scalar_lea.vmem %s0, %s219
          %s221 = smul.u32 113, %s12
          %s222 = ssub.s32 225, %s221
          %p223 = scmp.lt.s32.totalorder %s222, 113
          %s224 = scalar_select %p223, %s222, 113
          %s225 = smul.u32 128, %s224
        $region28: #{m1_forward.3} parent=23 // pred_fallthru
          _
        // Predicated region
        $region29: #{m1_forward.3} parent=23 // pred_check
          %p226 = pneg %p58
        $region30: #{m1_forward.3} parent=23 // pred_check_branch
          %228 = sbr.rel (%p226) target = $region32
        $region31: #{m1_forward.3} parent=23 // pred_region
          %s229 = smul.u32 113, %s12
          %s230 = ssub.s32 225, %s229
          %p231 = scmp.lt.s32.totalorder %s230, 113
          %s232 = scalar_select %p231, %s230, 113
          %s233 = smul.u32 128, %s232
          %p234 = scmp.lt.s32.totalorder %s229, 224
          %s235 = scalar_select %p234, %s229, 224
          %s236 = smul.addr %s235, 8
          %s237 = scalar_lea.vmem %s1, %s236
          %s238 = smul.u32 113, %s12
          %s239 = ssub.s32 225, %s238
          %p240 = scmp.lt.s32.totalorder %s239, 113
          %s241 = scalar_select %p240, %s239, 113
          %s242 = smul.u32 128, %s241
        $region32: #{m1_forward.3} parent=23 // pred_fallthru
          _
        // Predicated region
        $region33: #{m1_forward.3} parent=23 // pred_check
          %p243 = pneg %p84
        $region34: #{m1_forward.3} parent=23 // pred_check_branch
          %245 = sbr.rel (%p243) target = $region36
        $region35: #{m1_forward.3} parent=23 // pred_region
          %s246 = smul.u32 113, %s12
          %s247 = ssub.s32 225, %s246
          %p248 = scmp.lt.s32.totalorder %s247, 113
          %s249 = scalar_select %p248, %s247, 113
          %s250 = smul.u32 128, %s249
          %p251 = scmp.lt.s32.totalorder %s246, 224
          %s252 = scalar_select %p251, %s246, 224
          %s253 = smul.addr %s252, 8
          %s254 = scalar_lea.vmem %s2, %s253
          %s255 = smul.u32 113, %s12
          %s256 = ssub.s32 225, %s255
          %p257 = scmp.lt.s32.totalorder %s256, 113
          %s258 = scalar_select %p257, %s256, 113
          %s259 = smul.u32 128, %s258
        $region36: #{m1_forward.3} parent=23 // pred_fallthru
          _
        // Predicated region
        $region37: #{m1_forward.3} parent=23 // pred_check
          %p260 = pneg %p110
        $region38: #{m1_forward.3} parent=23 // pred_check_branch
          %262 = sbr.rel (%p260) target = $region40
        $region39: #{m1_forward.3} parent=23 // pred_region
          %s263 = smul.u32 113, %s12
          %s264 = ssub.s32 225, %s263
          %p265 = scmp.lt.s32.totalorder %s264, 113
          %s266 = scalar_select %p265, %s264, 113
          %s267 = smul.u32 128, %s266
          %p268 = scmp.lt.s32.totalorder %s263, 224
          %s269 = scalar_select %p268, %s263, 224
          %s270 = smul.addr %s269, 8
          %s271 = scalar_lea.vmem %s3, %s270
          %s272 = smul.u32 113, %s12
          %s273 = ssub.s32 225, %s272
          %p274 = scmp.lt.s32.totalorder %s273, 113
          %s275 = scalar_select %p274, %s273, 113
          %s276 = smul.u32 128, %s275
        $region40: #{m1_forward.3} parent=23 // pred_fallthru
          _
      $region24: #{m1_forward.3} parent=5 // pred_fallthru
        _
      %p277 = scmp.le.s32.totalorder 1, %s12
      %p278 = scmp.lt.s32.totalorder %s12, 3
      %p279 = pnand %p277, %p278
      %p280 = pneg %p279
      // Predicated region
      $region41: #{m1_forward.3} parent=5 // pred_check
        _
      $region42: #{m1_forward.3} parent=5 // pred_check_branch
        %282 = sbr.rel (%p279) target = $region44
      $region43: #{m1_forward.3} parent=5 // pred_region
        %s283 = ssub.s32 %s12, 1
        %s284 = smul.u32 113, %s17
        %s285 = ssub.s32 225, %s284
        %p286 = scmp.lt.s32.totalorder %s285, 113
        %s287 = scalar_select %p286, %s285, 113
        %s288 = smul.u32 128, %s287
        %p289 = scmp.lt.s32.totalorder %s284, 224
        %s290 = scalar_select %p289, %s284, 224
        %s291 = smul.addr %s290, 8
        %s292 = scalar_lea.vmem %s0, %s291
        %p293 = pneg %p38
        %p294 = pneg %p35
        %s295 = smul.u32 113, %s17
        %s296 = ssub.s32 225, %s295
        %p297 = scmp.lt.s32.totalorder %s296, 113
        %s298 = scalar_select %p297, %s296, 113
        %s299 = smul.u32 128, %s298
        %p300 = scmp.lt.s32.totalorder %s295, 224
        %s301 = scalar_select %p300, %s295, 224
        %s302 = smul.addr %s301, 8
        %s303 = scalar_lea.vmem %s1, %s302
        %p304 = pneg %p64
        %p305 = pneg %p61
        %s306 = smul.u32 113, %s17
        %s307 = ssub.s32 225, %s306
        %p308 = scmp.lt.s32.totalorder %s307, 113
        %s309 = scalar_select %p308, %s307, 113
        %s310 = smul.u32 128, %s309
        %p311 = scmp.lt.s32.totalorder %s306, 224
        %s312 = scalar_select %p311, %s306, 224
        %s313 = smul.addr %s312, 8
        %s314 = scalar_lea.vmem %s2, %s313
        %p315 = pneg %p90
        %p316 = pneg %p87
        %s317 = smul.u32 113, %s17
        %s318 = ssub.s32 225, %s317
        %p319 = scmp.lt.s32.totalorder %s318, 113
        %s320 = scalar_select %p319, %s318, 113
        %s321 = smul.u32 128, %s320
        %p322 = scmp.lt.s32.totalorder %s317, 224
        %s323 = scalar_select %p322, %s317, 224
        %s324 = smul.addr %s323, 8
        %s325 = scalar_lea.vmem %s3, %s324
        %p326 = pneg %p116
        %p327 = pneg %p113
        %p328 = pneg %p137
        %p329 = pneg %p134
        %p330 = pneg %p158
        %p331 = pneg %p155
        %p332 = pneg %p184
        %p333 = pneg %p181
        %s334 = sand.u32 %s171, 1
        %s335 = sand.u32 %s171, 1
        %s336 = smul.addr %s335, 904
        %s337 = scalar_lea.vmem [#allocation2], %s336
        %s338 = smul.u32 113, %s17
        %s339 = ssub.s32 225, %s338
        %p340 = scmp.lt.s32.totalorder %s339, 113
        %s341 = scalar_select %p340, %s339, 113
        %s342 = smul.u32 128, %s341
        %p343 = scmp.lt.s32.totalorder %s338, 224
        %s344 = scalar_select %p343, %s338, 224
        %s345 = smul.addr %s344, 8
        %s346 = scalar_lea.vmem %s0, %s345
        %s347 = smul.u32 113, %s17
        %s348 = ssub.s32 225, %s347
        %p349 = scmp.lt.s32.totalorder %s348, 113
        %s350 = scalar_select %p349, %s348, 113
        %s351 = smul.u32 128, %s350
        %s352 = smul.u32 113, %s17
        %s353 = ssub.s32 225, %s352
        %p354 = scmp.lt.s32.totalorder %s353, 113
        %s355 = scalar_select %p354, %s353, 113
        %s356 = smul.u32 128, %s355
        %p357 = scmp.lt.s32.totalorder %s352, 224
        %s358 = scalar_select %p357, %s352, 224
        %s359 = smul.addr %s358, 8
        %s360 = scalar_lea.vmem %s1, %s359
        %s361 = smul.u32 113, %s17
        %s362 = ssub.s32 225, %s361
        %p363 = scmp.lt.s32.totalorder %s362, 113
        %s364 = scalar_select %p363, %s362, 113
        %s365 = smul.u32 128, %s364
        %s366 = smul.u32 113, %s17
        %s367 = ssub.s32 225, %s366
        %p368 = scmp.lt.s32.totalorder %s367, 113
        %s369 = scalar_select %p368, %s367, 113
        %s370 = smul.u32 128, %s369
        %p371 = scmp.lt.s32.totalorder %s366, 224
        %s372 = scalar_select %p371, %s366, 224
        %s373 = smul.addr %s372, 8
        %s374 = scalar_lea.vmem %s2, %s373
        %s375 = smul.u32 113, %s17
        %s376 = ssub.s32 225, %s375
        %p377 = scmp.lt.s32.totalorder %s376, 113
        %s378 = scalar_select %p377, %s376, 113
        %s379 = smul.u32 128, %s378
        %s380 = smul.u32 113, %s17
        %s381 = ssub.s32 225, %s380
        %p382 = scmp.lt.s32.totalorder %s381, 113
        %s383 = scalar_select %p382, %s381, 113
        %s384 = smul.u32 128, %s383
        %p385 = scmp.lt.s32.totalorder %s380, 224
        %s386 = scalar_select %p385, %s380, 224
        %s387 = smul.addr %s386, 8
        %s388 = scalar_lea.vmem %s3, %s387
        %s389 = smul.u32 113, %s17
        %s390 = ssub.s32 225, %s389
        %p391 = scmp.lt.s32.totalorder %s390, 113
        %s392 = scalar_select %p391, %s390, 113
        %s393 = smul.u32 128, %s392
        %s394 = smul.u32 113, %s17
        %s395 = ssub.s32 225, %s394
        %p396 = scmp.lt.s32.totalorder %s395, 113
        %s397 = scalar_select %p396, %s395, 113
        %s398 = smul.u32 128, %s397
        %v399 = vld [vmem:[%s346] sm:$0xff]
        %v400 = vld [vmem:[%s346 + $0x8] sm:$0xff]
        %v401 = vld [vmem:[%s346 + $0x10] sm:$0xff]
        %v402 = vld [vmem:[%s346 + $0x18] sm:$0xff]
        %v403 = vld [vmem:[%s346 + $0x20] sm:$0xff]
        %v404 = vld [vmem:[%s346 + $0x28] sm:$0xff]
        %v405 = vld [vmem:[%s346 + $0x30] sm:$0xff]
        %v406 = vld [vmem:[%s346 + $0x38] sm:$0xff]
        %v407 = vld [vmem:[%s346 + $0x40] sm:$0xff]
        %v408 = vld [vmem:[%s346 + $0x48] sm:$0xff]
        %v409 = vld [vmem:[%s346 + $0x50] sm:$0xff]
        %v410 = vld [vmem:[%s346 + $0x58] sm:$0xff]
        %v411 = vld [vmem:[%s346 + $0x60] sm:$0xff]
        %v412 = vld [vmem:[%s346 + $0x68] sm:$0xff]
        %v413 = vld [vmem:[%s346 + $0x70] sm:$0xff]
        %v414 = vld [vmem:[%s346 + $0x78] sm:$0xff]
        %v415 = vld [vmem:[%s346 + $0x80] sm:$0xff]
        %v416 = vld [vmem:[%s346 + $0x88] sm:$0xff]
        %v417 = vld [vmem:[%s346 + $0x90] sm:$0xff]
        %v418 = vld [vmem:[%s346 + $0x98] sm:$0xff]
        %v419 = vld [vmem:[%s346 + $0xa0] sm:$0xff]
        %v420 = vld [vmem:[%s346 + $0xa8] sm:$0xff]
        %v421 = vld [vmem:[%s346 + $0xb0] sm:$0xff]
        %v422 = vld [vmem:[%s346 + $0xb8] sm:$0xff]
        %v423 = vld [vmem:[%s346 + $0xc0] sm:$0xff]
        %v424 = vld [vmem:[%s346 + $0xc8] sm:$0xff]
        %v425 = vld [vmem:[%s346 + $0xd0] sm:$0xff]
        %v426 = vld [vmem:[%s346 + $0xd8] sm:$0xff]
        %v427 = vld [vmem:[%s346 + $0xe0] sm:$0xff]
        %v428 = vld [vmem:[%s346 + $0xe8] sm:$0xff]
        %v429 = vld [vmem:[%s346 + $0xf0] sm:$0xff]
        %v430 = vld [vmem:[%s346 + $0xf8] sm:$0xff]
        %v431 = vld [vmem:[%s346 + $0x100] sm:$0xff]
        %v432 = vld [vmem:[%s346 + $0x108] sm:$0xff]
        %v433 = vld [vmem:[%s346 + $0x110] sm:$0xff]
        %v434 = vld [vmem:[%s346 + $0x118] sm:$0xff]
        %v435 = vld [vmem:[%s346 + $0x120] sm:$0xff]
        %v436 = vld [vmem:[%s346 + $0x128] sm:$0xff]
        %v437 = vld [vmem:[%s346 + $0x130] sm:$0xff]
        %v438 = vld [vmem:[%s346 + $0x138] sm:$0xff]
        %v439 = vld [vmem:[%s346 + $0x140] sm:$0xff]
        %v440 = vld [vmem:[%s346 + $0x148] sm:$0xff]
        %v441 = vld [vmem:[%s346 + $0x150] sm:$0xff]
        %v442 = vld [vmem:[%s346 + $0x158] sm:$0xff]
        %v443 = vld [vmem:[%s346 + $0x160] sm:$0xff]
        %v444 = vld [vmem:[%s346 + $0x168] sm:$0xff]
        %v445 = vld [vmem:[%s346 + $0x170] sm:$0xff]
        %v446 = vld [vmem:[%s346 + $0x178] sm:$0xff]
        %v447 = vld [vmem:[%s346 + $0x180] sm:$0xff]
        %v448 = vld [vmem:[%s346 + $0x188] sm:$0xff]
        %v449 = vld [vmem:[%s346 + $0x190] sm:$0xff]
        %v450 = vld [vmem:[%s346 + $0x198] sm:$0xff]
        %v451 = vld [vmem:[%s346 + $0x1a0] sm:$0xff]
        %v452 = vld [vmem:[%s346 + $0x1a8] sm:$0xff]
        %v453 = vld [vmem:[%s346 + $0x1b0] sm:$0xff]
        %v454 = vld [vmem:[%s346 + $0x1b8] sm:$0xff]
        %v455 = vld [vmem:[%s346 + $0x1c0] sm:$0xff]
        %v456 = vld [vmem:[%s346 + $0x1c8] sm:$0xff]
        %v457 = vld [vmem:[%s346 + $0x1d0] sm:$0xff]
        %v458 = vld [vmem:[%s346 + $0x1d8] sm:$0xff]
        %v459 = vld [vmem:[%s346 + $0x1e0] sm:$0xff]
        %v460 = vld [vmem:[%s346 + $0x1e8] sm:$0xff]
        %v461 = vld [vmem:[%s346 + $0x1f0] sm:$0xff]
        %v462 = vld [vmem:[%s346 + $0x1f8] sm:$0xff]
        %v463 = vld [vmem:[%s346 + $0x200] sm:$0xff]
        %v464 = vld [vmem:[%s346 + $0x208] sm:$0xff]
        %v465 = vld [vmem:[%s346 + $0x210] sm:$0xff]
        %v466 = vld [vmem:[%s346 + $0x218] sm:$0xff]
        %v467 = vld [vmem:[%s346 + $0x220] sm:$0xff]
        %v468 = vld [vmem:[%s346 + $0x228] sm:$0xff]
        %v469 = vld [vmem:[%s346 + $0x230] sm:$0xff]
        %v470 = vld [vmem:[%s346 + $0x238] sm:$0xff]
        %v471 = vld [vmem:[%s346 + $0x240] sm:$0xff]
        %v472 = vld [vmem:[%s346 + $0x248] sm:$0xff]
        %v473 = vld [vmem:[%s346 + $0x250] sm:$0xff]
        %v474 = vld [vmem:[%s346 + $0x258] sm:$0xff]
        %v475 = vld [vmem:[%s346 + $0x260] sm:$0xff]
        %v476 = vld [vmem:[%s346 + $0x268] sm:$0xff]
        %v477 = vld [vmem:[%s346 + $0x270] sm:$0xff]
        %v478 = vld [vmem:[%s346 + $0x278] sm:$0xff]
        %v479 = vld [vmem:[%s346 + $0x280] sm:$0xff]
        %v480 = vld [vmem:[%s346 + $0x288] sm:$0xff]
        %v481 = vld [vmem:[%s346 + $0x290] sm:$0xff]
        %v482 = vld [vmem:[%s346 + $0x298] sm:$0xff]
        %v483 = vld [vmem:[%s346 + $0x2a0] sm:$0xff]
        %v484 = vld [vmem:[%s346 + $0x2a8] sm:$0xff]
        %v485 = vld [vmem:[%s346 + $0x2b0] sm:$0xff]
        %v486 = vld [vmem:[%s346 + $0x2b8] sm:$0xff]
        %v487 = vld [vmem:[%s346 + $0x2c0] sm:$0xff]
        %v488 = vld [vmem:[%s346 + $0x2c8] sm:$0xff]
        %v489 = vld [vmem:[%s346 + $0x2d0] sm:$0xff]
        %v490 = vld [vmem:[%s346 + $0x2d8] sm:$0xff]
        %v491 = vld [vmem:[%s346 + $0x2e0] sm:$0xff]
        %v492 = vld [vmem:[%s346 + $0x2e8] sm:$0xff]
        %v493 = vld [vmem:[%s346 + $0x2f0] sm:$0xff]
        %v494 = vld [vmem:[%s346 + $0x2f8] sm:$0xff]
        %v495 = vld [vmem:[%s346 + $0x300] sm:$0xff]
        %v496 = vld [vmem:[%s346 + $0x308] sm:$0xff]
        %v497 = vld [vmem:[%s346 + $0x310] sm:$0xff]
        %v498 = vld [vmem:[%s346 + $0x318] sm:$0xff]
        %v499 = vld [vmem:[%s346 + $0x320] sm:$0xff]
        %v500 = vld [vmem:[%s346 + $0x328] sm:$0xff]
        %v501 = vld [vmem:[%s346 + $0x330] sm:$0xff]
        %v502 = vld [vmem:[%s346 + $0x338] sm:$0xff]
        %v503 = vld [vmem:[%s346 + $0x340] sm:$0xff]
        %v504 = vld [vmem:[%s346 + $0x348] sm:$0xff]
        %v505 = vld [vmem:[%s346 + $0x350] sm:$0xff]
        %v506 = vld [vmem:[%s346 + $0x358] sm:$0xff]
        %v507 = vld [vmem:[%s346 + $0x360] sm:$0xff]
        %v508 = vld [vmem:[%s346 + $0x368] sm:$0xff]
        %v509 = vld [vmem:[%s346 + $0x370] sm:$0xff]
        %v510 = vld [vmem:[%s346 + $0x378] sm:$0xff]
        %v511 = vld [vmem:[%s346 + $0x380] sm:$0xff]
        %v512 = vld [vmem:[%s4] sm:$0xff]
        %v513 = vld [vmem:[%s4 + $0x8] sm:$0xff]
        %v514 = vld [vmem:[%s4 + $0x10] sm:$0xff]
        %v515 = vld [vmem:[%s4 + $0x18] sm:$0xff]
        %v516 = vld [vmem:[%s4 + $0x20] sm:$0xff]
        %v517 = vld [vmem:[%s4 + $0x28] sm:$0xff]
        %v518 = vld [vmem:[%s4 + $0x30] sm:$0xff]
        %v519 = vld [vmem:[%s4 + $0x38] sm:$0xff]
        %v520 = vld [vmem:[%s4 + $0x40] sm:$0xff]
        %v521 = vld [vmem:[%s4 + $0x48] sm:$0x7]
        %vm522 = vcmask 613376
        %v524 = vsel %vm522, %v399, 0
        %v527 = vsel %vm522, %v400, 0
        %v530 = vsel %vm522, %v401, 0
        %v533 = vsel %vm522, %v402, 0
        %v536 = vsel %vm522, %v403, 0
        %v539 = vsel %vm522, %v404, 0
        %v542 = vsel %vm522, %v405, 0
        %v545 = vsel %vm522, %v406, 0
        %v548 = vsel %vm522, %v407, 0
        %v551 = vsel %vm522, %v408, 0
        %v554 = vsel %vm522, %v409, 0
        %v557 = vsel %vm522, %v410, 0
        %v560 = vsel %vm522, %v411, 0
        %v563 = vsel %vm522, %v412, 0
        %v566 = vsel %vm522, %v413, 0
        %v569 = vsel %vm522, %v414, 0
        %v572 = vsel %vm522, %v415, 0
        %v575 = vsel %vm522, %v416, 0
        %v578 = vsel %vm522, %v417, 0
        %v581 = vsel %vm522, %v418, 0
        %v584 = vsel %vm522, %v419, 0
        %v587 = vsel %vm522, %v420, 0
        %v590 = vsel %vm522, %v421, 0
        %v593 = vsel %vm522, %v422, 0
        %v596 = vsel %vm522, %v423, 0
        %v599 = vsel %vm522, %v424, 0
        %v602 = vsel %vm522, %v425, 0
        %v605 = vsel %vm522, %v426, 0
        %v608 = vsel %vm522, %v427, 0
        %v611 = vsel %vm522, %v428, 0
        %v614 = vsel %vm522, %v429, 0
        %v617 = vsel %vm522, %v430, 0
        %v620 = vsel %vm522, %v431, 0
        %v623 = vsel %vm522, %v432, 0
        %v626 = vsel %vm522, %v433, 0
        %v629 = vsel %vm522, %v434, 0
        %v632 = vsel %vm522, %v435, 0
        %v635 = vsel %vm522, %v436, 0
        %v638 = vsel %vm522, %v437, 0
        %v641 = vsel %vm522, %v438, 0
        %v644 = vsel %vm522, %v439, 0
        %v647 = vsel %vm522, %v440, 0
        %v650 = vsel %vm522, %v441, 0
        %v653 = vsel %vm522, %v442, 0
        %v656 = vsel %vm522, %v443, 0
        %v659 = vsel %vm522, %v444, 0
        %v662 = vsel %vm522, %v445, 0
        %v665 = vsel %vm522, %v446, 0
        %v668 = vsel %vm522, %v447, 0
        %v671 = vsel %vm522, %v448, 0
        %v674 = vsel %vm522, %v449, 0
        %v677 = vsel %vm522, %v450, 0
        %v680 = vsel %vm522, %v451, 0
        %v683 = vsel %vm522, %v452, 0
        %v686 = vsel %vm522, %v453, 0
        %v689 = vsel %vm522, %v454, 0
        %v692 = vsel %vm522, %v455, 0
        %v695 = vsel %vm522, %v456, 0
        %v698 = vsel %vm522, %v457, 0
        %v701 = vsel %vm522, %v458, 0
        %v704 = vsel %vm522, %v459, 0
        %v707 = vsel %vm522, %v460, 0
        %v710 = vsel %vm522, %v461, 0
        %v713 = vsel %vm522, %v462, 0
        %v716 = vsel %vm522, %v463, 0
        %v719 = vsel %vm522, %v464, 0
        %v722 = vsel %vm522, %v465, 0
        %v725 = vsel %vm522, %v466, 0
        %v728 = vsel %vm522, %v467, 0
        %v731 = vsel %vm522, %v468, 0
        %v734 = vsel %vm522, %v469, 0
        %v737 = vsel %vm522, %v470, 0
        %v740 = vsel %vm522, %v471, 0
        %v743 = vsel %vm522, %v472, 0
        %v746 = vsel %vm522, %v473, 0
        %v749 = vsel %vm522, %v474, 0
        %v752 = vsel %vm522, %v475, 0
        %v755 = vsel %vm522, %v476, 0
        %v758 = vsel %vm522, %v477, 0
        %v761 = vsel %vm522, %v478, 0
        %v764 = vsel %vm522, %v479, 0
        %v767 = vsel %vm522, %v480, 0
        %v770 = vsel %vm522, %v481, 0
        %v773 = vsel %vm522, %v482, 0
        %v776 = vsel %vm522, %v483, 0
        %v779 = vsel %vm522, %v484, 0
        %v782 = vsel %vm522, %v485, 0
        %v785 = vsel %vm522, %v486, 0
        %v788 = vsel %vm522, %v487, 0
        %v791 = vsel %vm522, %v488, 0
        %v794 = vsel %vm522, %v489, 0
        %v797 = vsel %vm522, %v490, 0
        %v800 = vsel %vm522, %v491, 0
        %v803 = vsel %vm522, %v492, 0
        %v806 = vsel %vm522, %v493, 0
        %v809 = vsel %vm522, %v494, 0
        %v812 = vsel %vm522, %v495, 0
        %v815 = vsel %vm522, %v496, 0
        %v818 = vsel %vm522, %v497, 0
        %v821 = vsel %vm522, %v498, 0
        %v824 = vsel %vm522, %v499, 0
        %v827 = vsel %vm522, %v500, 0
        %v830 = vsel %vm522, %v501, 0
        %v833 = vsel %vm522, %v502, 0
        %v836 = vsel %vm522, %v503, 0
        %v839 = vsel %vm522, %v504, 0
        %v842 = vsel %vm522, %v505, 0
        %v845 = vsel %vm522, %v506, 0
        %v848 = vsel %vm522, %v507, 0
        %v851 = vsel %vm522, %v508, 0
        %v854 = vsel %vm522, %v509, 0
        %v857 = vsel %vm522, %v510, 0
        %v860 = vsel %vm522, %v511, 0
        %vm862 = vcmask 1042432
        %v864 = vsel %vm862, %v521, 0
        %866 = vmatprep.subr.mxu0 0.0
        %867 = vmatpush1.msra.mxu0 %v512
        %868 = vmatprep.subr.mxu0 0.0
        %869 = vmatpush1.msra.mxu0 %v513
        %870 = vmatprep.subr.mxu0 0.0
        %871 = vmatpush1.msra.mxu0 %v514
        %872 = vmatprep.subr.mxu0 0.0
        %873 = vmatpush1.msra.mxu0 %v515
        %874 = vmatprep.subr.mxu0 0.0
        %875 = vmatpush1.msra.mxu0 %v516
        %876 = vmatprep.subr.mxu0 0.0
        %877 = vmatpush1.msra.mxu0 %v517
        %878 = vmatprep.subr.mxu0 0.0
        %879 = vmatpush1.msra.mxu0 %v518
        %880 = vmatprep.subr.mxu0 0.0
        %881 = vmatpush1.msra.mxu0 %v519
        %882 = vmatprep.subr.mxu0 0.0
        %883 = vmatpush1.msra.mxu0 %v520
        %884 = vmatprep.subr.mxu0 0.0
        %885 = vmatpush1.msra.mxu0 %v864
        %886 = vmatprep.subr.mxu0 0.0
        %887 = vmatpush1.msra.mxu0 0.0
        %888 = vmatprep.subr.mxu0 0.0
        %889 = vmatpush1.msra.mxu0 0.0
        %890 = vmatprep.subr.mxu0 0.0
        %891 = vmatpush1.msra.mxu0 0.0
        %892 = vmatprep.subr.mxu0 0.0
        %893 = vmatpush1.msra.mxu0 0.0
        %894 = vmatprep.subr.mxu0 0.0
        %895 = vmatpush1.msra.mxu0 0.0
        %896 = vmatprep.subr.mxu0 0.0
        %897 = vmatpush1.msra.mxu0 0.0
        %898 = vmatprep.subr.mxu0 0.0
        %899 = vmatpush1.msra.mxu0 0.0
        %900 = vmatprep.subr.mxu0 0.0
        %901 = vmatpush1.msra.mxu0 0.0
        %902 = vmatprep.subr.mxu0 0.0
        %903 = vmatpush1.msra.mxu0 0.0
        %904 = vmatprep.subr.mxu0 0.0
        %905 = vmatpush1.msra.mxu0 0.0
        %906 = vmatprep.subr.mxu0 0.0
        %907 = vmatpush1.msra.mxu0 0.0
        %908 = vmatprep.subr.mxu0 0.0
        %909 = vmatpush1.msra.mxu0 0.0
        %910 = vmatprep.subr.mxu0 0.0
        %911 = vmatpush1.msra.mxu0 0.0
        %912 = vmatprep.subr.mxu0 0.0
        %913 = vmatpush1.msra.mxu0 0.0
        %914 = vmatprep.subr.mxu0 0.0
        %915 = vmatpush1.msra.mxu0 0.0
        %916 = vmatprep.subr.mxu0 0.0
        %917 = vmatpush1.msra.mxu0 0.0
        %918 = vmatprep.subr.mxu0 0.0
        %919 = vmatpush1.msra.mxu0 0.0
        %920 = vmatprep.subr.mxu0 0.0
        %921 = vmatpush1.msra.mxu0 0.0
        %922 = vmatprep.subr.mxu0 0.0
        %923 = vmatpush1.msra.mxu0 0.0
        %924 = vmatprep.subr.mxu0 0.0
        %925 = vmatpush1.msra.mxu0 0.0
        %926 = vmatprep.subr.mxu0 0.0
        %927 = vmatpush1.msra.mxu0 0.0
        %928 = vmatprep.subr.mxu0 0.0
        %929 = vmatpush1.msra.mxu0 0.0
        %930 = vmatprep.mubr.f32.mxu0 0.0
        %931 = vmatmul.mubr.f32.gmra.mrb[0].mxu0 %v524
        %v932 = vpop.f32.mrb[0].mxu0
        %v933 = vadd.f32 0.0, %v932
        %v934 = vpop.f32.mrb[0].mxu0
        %935 = vmatprep.mubr.f32.mxu0 0.0
        %936 = vmatmul.mubr.f32.gmra.mrb[0].mxu0 %v527
        %v937 = vpop.f32.mrb[0].mxu0
        %v938 = vadd.f32 0.0, %v937
        %v939 = vpop.f32.mrb[0].mxu0
        %940 = vmatprep.mubr.f32.mxu0 0.0
        %941 = vmatmul.mubr.f32.gmra.mrb[0].mxu0 %v530
        %v942 = vpop.f32.mrb[0].mxu0
        %v943 = vadd.f32 0.0, %v942
        %v944 = vpop.f32.mrb[0].mxu0
        %945 = vmatprep.mubr.f32.mxu0 0.0
        %946 = vmatmul.mubr.f32.gmra.mrb[0].mxu0 %v533
        %v947 = vpop.f32.mrb[0].mxu0
        %v948 = vadd.f32 0.0, %v947
        %v949 = vpop.f32.mrb[0].mxu0
        %950 = vmatprep.mubr.f32.mxu0 0.0
        %951 = vmatmul.mubr.f32.gmra.mrb[0].mxu0 %v536
        %v952 = vpop.f32.mrb[0].mxu0
        %v953 = vadd.f32 0.0, %v952
        %v954 = vpop.f32.mrb[0].mxu0
        %955 = vmatprep.mubr.f32.mxu0 0.0
        %956 = vmatmul.mubr.f32.gmra.mrb[0].mxu0 %v539
        %v957 = vpop.f32.mrb[0].mxu0
        %v958 = vadd.f32 0.0, %v957
        %v959 = vpop.f32.mrb[0].mxu0
        %960 = vmatprep.mubr.f32.mxu0 0.0
        %961 = vmatmul.mubr.f32.gmra.mrb[0].mxu0 %v542
        %v962 = vpop.f32.mrb[0].mxu0
        %v963 = vadd.f32 0.0, %v962
        %v964 = vpop.f32.mrb[0].mxu0
        %965 = vmatprep.mubr.f32.mxu0 0.0
        %966 = vmatmul.mubr.f32.gmra.mrb[0].mxu0 %v545
        %v967 = vpop.f32.mrb[0].mxu0
        %v968 = vadd.f32 0.0, %v967
        %v969 = vpop.f32.mrb[0].mxu0
        %970 = vmatprep.mubr.f32.mxu0 0.0
        %971 = vmatmul.mubr.f32.gmra.mrb[0].mxu0 %v548
        %v972 = vpop.f32.mrb[0].mxu0
        %v973 = vadd.f32 0.0, %v972
        %v974 = vpop.f32.mrb[0].mxu0
        %975 = vmatprep.mubr.f32.mxu0 0.0
        %976 = vmatmul.mubr.f32.gmra.mrb[0].mxu0 %v551
        %v977 = vpop.f32.mrb[0].mxu0
        %v978 = vadd.f32 0.0, %v977
        %v979 = vpop.f32.mrb[0].mxu0
        %980 = vmatprep.mubr.f32.mxu0 0.0
        %981 = vmatmul.mubr.f32.gmra.mrb[0].mxu0 %v554
        %v982 = vpop.f32.mrb[0].mxu0
        %v983 = vadd.f32 0.0, %v982
        %v984 = vpop.f32.mrb[0].mxu0
        %985 = vmatprep.mubr.f32.mxu0 0.0
        %986 = vmatmul.mubr.f32.gmra.mrb[0].mxu0 %v557
        %v987 = vpop.f32.mrb[0].mxu0
        %v988 = vadd.f32 0.0, %v987
        %v989 = vpop.f32.mrb[0].mxu0
        %990 = vmatprep.mubr.f32.mxu0 0.0
        %991 = vmatmul.mubr.f32.gmra.mrb[0].mxu0 %v560
        %v992 = vpop.f32.mrb[0].mxu0
        %v993 = vadd.f32 0.0, %v992
        %v994 = vpop.f32.mrb[0].mxu0
        %995 = vmatprep.mubr.f32.mxu0 0.0
        %996 = vmatmul.mubr.f32.gmra.mrb[0].mxu0 %v563
        %v997 = vpop.f32.mrb[0].mxu0
        %v998 = vadd.f32 0.0, %v997
        %v999 = vpop.f32.mrb[0].mxu0
        %1000 = vmatprep.mubr.f32.mxu0 0.0
        %1001 = vmatmul.mubr.f32.gmra.mrb[0].mxu0 %v566
        %v1002 = vpop.f32.mrb[0].mxu0
        %v1003 = vadd.f32 0.0, %v1002
        %v1004 = vpop.f32.mrb[0].mxu0
        %1005 = vmatprep.mubr.f32.mxu0 0.0
        %1006 = vmatmul.mubr.f32.gmra.mrb[0].mxu0 %v569
        %v1007 = vpop.f32.mrb[0].mxu0
        %v1008 = vadd.f32 0.0, %v1007
        %v1009 = vpop.f32.mrb[0].mxu0
        %1010 = vmatprep.mubr.f32.mxu0 0.0
        %1011 = vmatmul.mubr.f32.gmra.mrb[0].mxu0 %v572
        %v1012 = vpop.f32.mrb[0].mxu0
        %v1013 = vadd.f32 0.0, %v1012
        %v1014 = vpop.f32.mrb[0].mxu0
        %1015 = vmatprep.mubr.f32.mxu0 0.0
        %1016 = vmatmul.mubr.f32.gmra.mrb[0].mxu0 %v575
        %v1017 = vpop.f32.mrb[0].mxu0
        %v1018 = vadd.f32 0.0, %v1017
        %v1019 = vpop.f32.mrb[0].mxu0
        %1020 = vmatprep.mubr.f32.mxu0 0.0
        %1021 = vmatmul.mubr.f32.gmra.mrb[0].mxu0 %v578
        %v1022 = vpop.f32.mrb[0].mxu0
        %v1023 = vadd.f32 0.0, %v1022
        %v1024 = vpop.f32.mrb[0].mxu0
        %1025 = vmatprep.mubr.f32.mxu0 0.0
        %1026 = vmatmul.mubr.f32.gmra.mrb[0].mxu0 %v581
        %v1027 = vpop.f32.mrb[0].mxu0
        %v1028 = vadd.f32 0.0, %v1027
        %v1029 = vpop.f32.mrb[0].mxu0
        %1030 = vmatprep.mubr.f32.mxu0 0.0
        %1031 = vmatmul.mubr.f32.gmra.mrb[0].mxu0 %v584
        %v1032 = vpop.f32.mrb[0].mxu0
        %v1033 = vadd.f32 0.0, %v1032
        %v1034 = vpop.f32.mrb[0].mxu0
        %1035 = vmatprep.mubr.f32.mxu0 0.0
        %1036 = vmatmul.mubr.f32.gmra.mrb[0].mxu0 %v587
        %v1037 = vpop.f32.mrb[0].mxu0
        %v1038 = vadd.f32 0.0, %v1037
        %v1039 = vpop.f32.mrb[0].mxu0
        %1040 = vmatprep.mubr.f32.mxu0 0.0
        %1041 = vmatmul.mubr.f32.gmra.mrb[0].mxu0 %v590
        %v1042 = vpop.f32.mrb[0].mxu0
        %v1043 = vadd.f32 0.0, %v1042
        %v1044 = vpop.f32.mrb[0].mxu0
        %1045 = vmatprep.mubr.f32.mxu0 0.0
        %1046 = vmatmul.mubr.f32.gmra.mrb[0].mxu0 %v593
        %v1047 = vpop.f32.mrb[0].mxu0
        %v1048 = vadd.f32 0.0, %v1047
        %v1049 = vpop.f32.mrb[0].mxu0
        %1050 = vmatprep.mubr.f32.mxu0 0.0
        %1051 = vmatmul.mubr.f32.gmra.mrb[0].mxu0 %v596
        %v1052 = vpop.f32.mrb[0].mxu0
        %v1053 = vadd.f32 0.0, %v1052
        %v1054 = vpop.f32.mrb[0].mxu0
        %1055 = vmatprep.mubr.f32.mxu0 0.0
        %1056 = vmatmul.mubr.f32.gmra.mrb[0].mxu0 %v599
        %v1057 = vpop.f32.mrb[0].mxu0
        %v1058 = vadd.f32 0.0, %v1057
        %v1059 = vpop.f32.mrb[0].mxu0
        %1060 = vmatprep.mubr.f32.mxu0 0.0
        %1061 = vmatmul.mubr.f32.gmra.mrb[0].mxu0 %v602
        %v1062 = vpop.f32.mrb[0].mxu0
        %v1063 = vadd.f32 0.0, %v1062
        %v1064 = vpop.f32.mrb[0].mxu0
        %1065 = vmatprep.mubr.f32.mxu0 0.0
        %1066 = vmatmul.mubr.f32.gmra.mrb[0].mxu0 %v605
        %v1067 = vpop.f32.mrb[0].mxu0
        %v1068 = vadd.f32 0.0, %v1067
        %v1069 = vpop.f32.mrb[0].mxu0
        %1070 = vmatprep.mubr.f32.mxu0 0.0
        %1071 = vmatmul.mubr.f32.gmra.mrb[0].mxu0 %v608
        %v1072 = vpop.f32.mrb[0].mxu0
        %v1073 = vadd.f32 0.0, %v1072
        %v1074 = vpop.f32.mrb[0].mxu0
        %1075 = vmatprep.mubr.f32.mxu0 0.0
        %1076 = vmatmul.mubr.f32.gmra.mrb[0].mxu0 %v611
        %v1077 = vpop.f32.mrb[0].mxu0
        %v1078 = vadd.f32 0.0, %v1077
        %v1079 = vpop.f32.mrb[0].mxu0
        %1080 = vmatprep.mubr.f32.mxu0 0.0
        %1081 = vmatmul.mubr.f32.gmra.mrb[0].mxu0 %v614
        %v1082 = vpop.f32.mrb[0].mxu0
        %v1083 = vadd.f32 0.0, %v1082
        %v1084 = vpop.f32.mrb[0].mxu0
        %1085 = vmatprep.mubr.f32.mxu0 0.0
        %1086 = vmatmul.mubr.f32.gmra.mrb[0].mxu0 %v617
        %v1087 = vpop.f32.mrb[0].mxu0
        %v1088 = vadd.f32 0.0, %v1087
        %v1089 = vpop.f32.mrb[0].mxu0
        %1090 = vmatprep.mubr.f32.mxu0 0.0
        %1091 = vmatmul.mubr.f32.gmra.mrb[0].mxu0 %v620
        %v1092 = vpop.f32.mrb[0].mxu0
        %v1093 = vadd.f32 0.0, %v1092
        %v1094 = vpop.f32.mrb[0].mxu0
        %1095 = vmatprep.mubr.f32.mxu0 0.0
        %1096 = vmatmul.mubr.f32.gmra.mrb[0].mxu0 %v623
        %v1097 = vpop.f32.mrb[0].mxu0
        %v1098 = vadd.f32 0.0, %v1097
        %v1099 = vpop.f32.mrb[0].mxu0
        %1100 = vmatprep.mubr.f32.mxu0 0.0
        %1101 = vmatmul.mubr.f32.gmra.mrb[0].mxu0 %v626
        %v1102 = vpop.f32.mrb[0].mxu0
        %v1103 = vadd.f32 0.0, %v1102
        %v1104 = vpop.f32.mrb[0].mxu0
        %1105 = vmatprep.mubr.f32.mxu0 0.0
        %1106 = vmatmul.mubr.f32.gmra.mrb[0].mxu0 %v629
        %v1107 = vpop.f32.mrb[0].mxu0
        %v1108 = vadd.f32 0.0, %v1107
        %v1109 = vpop.f32.mrb[0].mxu0
        %1110 = vmatprep.mubr.f32.mxu0 0.0
        %1111 = vmatmul.mubr.f32.gmra.mrb[0].mxu0 %v632
        %v1112 = vpop.f32.mrb[0].mxu0
        %v1113 = vadd.f32 0.0, %v1112
        %v1114 = vpop.f32.mrb[0].mxu0
        %1115 = vmatprep.mubr.f32.mxu0 0.0
        %1116 = vmatmul.mubr.f32.gmra.mrb[0].mxu0 %v635
        %v1117 = vpop.f32.mrb[0].mxu0
        %v1118 = vadd.f32 0.0, %v1117
        %v1119 = vpop.f32.mrb[0].mxu0
        %1120 = vmatprep.mubr.f32.mxu0 0.0
        %1121 = vmatmul.mubr.f32.gmra.mrb[0].mxu0 %v638
        %v1122 = vpop.f32.mrb[0].mxu0
        %v1123 = vadd.f32 0.0, %v1122
        %v1124 = vpop.f32.mrb[0].mxu0
        %1125 = vmatprep.mubr.f32.mxu0 0.0
        %1126 = vmatmul.mubr.f32.gmra.mrb[0].mxu0 %v641
        %v1127 = vpop.f32.mrb[0].mxu0
        %v1128 = vadd.f32 0.0, %v1127
        %v1129 = vpop.f32.mrb[0].mxu0
        %1130 = vmatprep.mubr.f32.mxu0 0.0
        %1131 = vmatmul.mubr.f32.gmra.mrb[0].mxu0 %v644
        %v1132 = vpop.f32.mrb[0].mxu0
        %v1133 = vadd.f32 0.0, %v1132
        %v1134 = vpop.f32.mrb[0].mxu0
        %1135 = vmatprep.mubr.f32.mxu0 0.0
        %1136 = vmatmul.mubr.f32.gmra.mrb[0].mxu0 %v647
        %v1137 = vpop.f32.mrb[0].mxu0
        %v1138 = vadd.f32 0.0, %v1137
        %v1139 = vpop.f32.mrb[0].mxu0
        %1140 = vmatprep.mubr.f32.mxu0 0.0
        %1141 = vmatmul.mubr.f32.gmra.mrb[0].mxu0 %v650
        %v1142 = vpop.f32.mrb[0].mxu0
        %v1143 = vadd.f32 0.0, %v1142
        %v1144 = vpop.f32.mrb[0].mxu0
        %1145 = vmatprep.mubr.f32.mxu0 0.0
        %1146 = vmatmul.mubr.f32.gmra.mrb[0].mxu0 %v653
        %v1147 = vpop.f32.mrb[0].mxu0
        %v1148 = vadd.f32 0.0, %v1147
        %v1149 = vpop.f32.mrb[0].mxu0
        %1150 = vmatprep.mubr.f32.mxu0 0.0
        %1151 = vmatmul.mubr.f32.gmra.mrb[0].mxu0 %v656
        %v1152 = vpop.f32.mrb[0].mxu0
        %v1153 = vadd.f32 0.0, %v1152
        %v1154 = vpop.f32.mrb[0].mxu0
        %1155 = vmatprep.mubr.f32.mxu0 0.0
        %1156 = vmatmul.mubr.f32.gmra.mrb[0].mxu0 %v659
        %v1157 = vpop.f32.mrb[0].mxu0
        %v1158 = vadd.f32 0.0, %v1157
        %v1159 = vpop.f32.mrb[0].mxu0
        %1160 = vmatprep.mubr.f32.mxu0 0.0
        %1161 = vmatmul.mubr.f32.gmra.mrb[0].mxu0 %v662
        %v1162 = vpop.f32.mrb[0].mxu0
        %v1163 = vadd.f32 0.0, %v1162
        %v1164 = vpop.f32.mrb[0].mxu0
        %1165 = vmatprep.mubr.f32.mxu0 0.0
        %1166 = vmatmul.mubr.f32.gmra.mrb[0].mxu0 %v665
        %v1167 = vpop.f32.mrb[0].mxu0
        %v1168 = vadd.f32 0.0, %v1167
        %v1169 = vpop.f32.mrb[0].mxu0
        %1170 = vmatprep.mubr.f32.mxu0 0.0
        %1171 = vmatmul.mubr.f32.gmra.mrb[0].mxu0 %v668
        %v1172 = vpop.f32.mrb[0].mxu0
        %v1173 = vadd.f32 0.0, %v1172
        %v1174 = vpop.f32.mrb[0].mxu0
        %1175 = vmatprep.mubr.f32.mxu0 0.0
        %1176 = vmatmul.mubr.f32.gmra.mrb[0].mxu0 %v671
        %v1177 = vpop.f32.mrb[0].mxu0
        %v1178 = vadd.f32 0.0, %v1177
        %v1179 = vpop.f32.mrb[0].mxu0
        %1180 = vmatprep.mubr.f32.mxu0 0.0
        %1181 = vmatmul.mubr.f32.gmra.mrb[0].mxu0 %v674
        %v1182 = vpop.f32.mrb[0].mxu0
        %v1183 = vadd.f32 0.0, %v1182
        %v1184 = vpop.f32.mrb[0].mxu0
        %1185 = vmatprep.mubr.f32.mxu0 0.0
        %1186 = vmatmul.mubr.f32.gmra.mrb[0].mxu0 %v677
        %v1187 = vpop.f32.mrb[0].mxu0
        %v1188 = vadd.f32 0.0, %v1187
        %v1189 = vpop.f32.mrb[0].mxu0
        %1190 = vmatprep.mubr.f32.mxu0 0.0
        %1191 = vmatmul.mubr.f32.gmra.mrb[0].mxu0 %v680
        %v1192 = vpop.f32.mrb[0].mxu0
        %v1193 = vadd.f32 0.0, %v1192
        %v1194 = vpop.f32.mrb[0].mxu0
        %1195 = vmatprep.mubr.f32.mxu0 0.0
        %1196 = vmatmul.mubr.f32.gmra.mrb[0].mxu0 %v683
        %v1197 = vpop.f32.mrb[0].mxu0
        %v1198 = vadd.f32 0.0, %v1197
        %v1199 = vpop.f32.mrb[0].mxu0
        %1200 = vmatprep.mubr.f32.mxu0 0.0
        %1201 = vmatmul.mubr.f32.gmra.mrb[0].mxu0 %v686
        %v1202 = vpop.f32.mrb[0].mxu0
        %v1203 = vadd.f32 0.0, %v1202
        %v1204 = vpop.f32.mrb[0].mxu0
        %1205 = vmatprep.mubr.f32.mxu0 0.0
        %1206 = vmatmul.mubr.f32.gmra.mrb[0].mxu0 %v689
        %v1207 = vpop.f32.mrb[0].mxu0
        %v1208 = vadd.f32 0.0, %v1207
        %v1209 = vpop.f32.mrb[0].mxu0
        %1210 = vmatprep.mubr.f32.mxu0 0.0
        %1211 = vmatmul.mubr.f32.gmra.mrb[0].mxu0 %v692
        %v1212 = vpop.f32.mrb[0].mxu0
        %v1213 = vadd.f32 0.0, %v1212
        %v1214 = vpop.f32.mrb[0].mxu0
        %1215 = vmatprep.mubr.f32.mxu0 0.0
        %1216 = vmatmul.mubr.f32.gmra.mrb[0].mxu0 %v695
        %v1217 = vpop.f32.mrb[0].mxu0
        %v1218 = vadd.f32 0.0, %v1217
        %v1219 = vpop.f32.mrb[0].mxu0
        %1220 = vmatprep.mubr.f32.mxu0 0.0
        %1221 = vmatmul.mubr.f32.gmra.mrb[0].mxu0 %v698
        %v1222 = vpop.f32.mrb[0].mxu0
        %v1223 = vadd.f32 0.0, %v1222
        %v1224 = vpop.f32.mrb[0].mxu0
        %1225 = vmatprep.mubr.f32.mxu0 0.0
        %1226 = vmatmul.mubr.f32.gmra.mrb[0].mxu0 %v701
        %v1227 = vpop.f32.mrb[0].mxu0
        %v1228 = vadd.f32 0.0, %v1227
        %v1229 = vpop.f32.mrb[0].mxu0
        %1230 = vmatprep.mubr.f32.mxu0 0.0
        %1231 = vmatmul.mubr.f32.gmra.mrb[0].mxu0 %v704
        %v1232 = vpop.f32.mrb[0].mxu0
        %v1233 = vadd.f32 0.0, %v1232
        %v1234 = vpop.f32.mrb[0].mxu0
        %1235 = vmatprep.mubr.f32.mxu0 0.0
        %1236 = vmatmul.mubr.f32.gmra.mrb[0].mxu0 %v707
        %v1237 = vpop.f32.mrb[0].mxu0
        %v1238 = vadd.f32 0.0, %v1237
        %v1239 = vpop.f32.mrb[0].mxu0
        %1240 = vmatprep.mubr.f32.mxu0 0.0
        %1241 = vmatmul.mubr.f32.gmra.mrb[0].mxu0 %v710
        %v1242 = vpop.f32.mrb[0].mxu0
        %v1243 = vadd.f32 0.0, %v1242
        %v1244 = vpop.f32.mrb[0].mxu0
        %1245 = vmatprep.mubr.f32.mxu0 0.0
        %1246 = vmatmul.mubr.f32.gmra.mrb[0].mxu0 %v713
        %v1247 = vpop.f32.mrb[0].mxu0
        %v1248 = vadd.f32 0.0, %v1247
        %v1249 = vpop.f32.mrb[0].mxu0
        %1250 = vmatprep.mubr.f32.mxu0 0.0
        %1251 = vmatmul.mubr.f32.gmra.mrb[0].mxu0 %v716
        %v1252 = vpop.f32.mrb[0].mxu0
        %v1253 = vadd.f32 0.0, %v1252
        %v1254 = vpop.f32.mrb[0].mxu0
        %1255 = vmatprep.mubr.f32.mxu0 0.0
        %1256 = vmatmul.mubr.f32.gmra.mrb[0].mxu0 %v719
        %v1257 = vpop.f32.mrb[0].mxu0
        %v1258 = vadd.f32 0.0, %v1257
        %v1259 = vpop.f32.mrb[0].mxu0
        %1260 = vmatprep.mubr.f32.mxu0 0.0
        %1261 = vmatmul.mubr.f32.gmra.mrb[0].mxu0 %v722
        %v1262 = vpop.f32.mrb[0].mxu0
        %v1263 = vadd.f32 0.0, %v1262
        %v1264 = vpop.f32.mrb[0].mxu0
        %1265 = vmatprep.mubr.f32.mxu0 0.0
        %1266 = vmatmul.mubr.f32.gmra.mrb[0].mxu0 %v725
        %v1267 = vpop.f32.mrb[0].mxu0
        %v1268 = vadd.f32 0.0, %v1267
        %v1269 = vpop.f32.mrb[0].mxu0
        %1270 = vmatprep.mubr.f32.mxu0 0.0
        %1271 = vmatmul.mubr.f32.gmra.mrb[0].mxu0 %v728
        %v1272 = vpop.f32.mrb[0].mxu0
        %v1273 = vadd.f32 0.0, %v1272
        %v1274 = vpop.f32.mrb[0].mxu0
        %1275 = vmatprep.mubr.f32.mxu0 0.0
        %1276 = vmatmul.mubr.f32.gmra.mrb[0].mxu0 %v731
        %v1277 = vpop.f32.mrb[0].mxu0
        %v1278 = vadd.f32 0.0, %v1277
        %v1279 = vpop.f32.mrb[0].mxu0
        %1280 = vmatprep.mubr.f32.mxu0 0.0
        %1281 = vmatmul.mubr.f32.gmra.mrb[0].mxu0 %v734
        %v1282 = vpop.f32.mrb[0].mxu0
        %v1283 = vadd.f32 0.0, %v1282
        %v1284 = vpop.f32.mrb[0].mxu0
        %1285 = vmatprep.mubr.f32.mxu0 0.0
        %1286 = vmatmul.mubr.f32.gmra.mrb[0].mxu0 %v737
        %v1287 = vpop.f32.mrb[0].mxu0
        %v1288 = vadd.f32 0.0, %v1287
        %v1289 = vpop.f32.mrb[0].mxu0
        %1290 = vmatprep.mubr.f32.mxu0 0.0
        %1291 = vmatmul.mubr.f32.gmra.mrb[0].mxu0 %v740
        %v1292 = vpop.f32.mrb[0].mxu0
        %v1293 = vadd.f32 0.0, %v1292
        %v1294 = vpop.f32.mrb[0].mxu0
        %1295 = vmatprep.mubr.f32.mxu0 0.0
        %1296 = vmatmul.mubr.f32.gmra.mrb[0].mxu0 %v743
        %v1297 = vpop.f32.mrb[0].mxu0
        %v1298 = vadd.f32 0.0, %v1297
        %v1299 = vpop.f32.mrb[0].mxu0
        %1300 = vmatprep.mubr.f32.mxu0 0.0
        %1301 = vmatmul.mubr.f32.gmra.mrb[0].mxu0 %v746
        %v1302 = vpop.f32.mrb[0].mxu0
        %v1303 = vadd.f32 0.0, %v1302
        %v1304 = vpop.f32.mrb[0].mxu0
        %1305 = vmatprep.mubr.f32.mxu0 0.0
        %1306 = vmatmul.mubr.f32.gmra.mrb[0].mxu0 %v749
        %v1307 = vpop.f32.mrb[0].mxu0
        %v1308 = vadd.f32 0.0, %v1307
        %v1309 = vpop.f32.mrb[0].mxu0
        %1310 = vmatprep.mubr.f32.mxu0 0.0
        %1311 = vmatmul.mubr.f32.gmra.mrb[0].mxu0 %v752
        %v1312 = vpop.f32.mrb[0].mxu0
        %v1313 = vadd.f32 0.0, %v1312
        %v1314 = vpop.f32.mrb[0].mxu0
        %1315 = vmatprep.mubr.f32.mxu0 0.0
        %1316 = vmatmul.mubr.f32.gmra.mrb[0].mxu0 %v755
        %v1317 = vpop.f32.mrb[0].mxu0
        %v1318 = vadd.f32 0.0, %v1317
        %v1319 = vpop.f32.mrb[0].mxu0
        %1320 = vmatprep.mubr.f32.mxu0 0.0
        %1321 = vmatmul.mubr.f32.gmra.mrb[0].mxu0 %v758
        %v1322 = vpop.f32.mrb[0].mxu0
        %v1323 = vadd.f32 0.0, %v1322
        %v1324 = vpop.f32.mrb[0].mxu0
        %1325 = vmatprep.mubr.f32.mxu0 0.0
        %1326 = vmatmul.mubr.f32.gmra.mrb[0].mxu0 %v761
        %v1327 = vpop.f32.mrb[0].mxu0
        %v1328 = vadd.f32 0.0, %v1327
        %v1329 = vpop.f32.mrb[0].mxu0
        %1330 = vmatprep.mubr.f32.mxu0 0.0
        %1331 = vmatmul.mubr.f32.gmra.mrb[0].mxu0 %v764
        %v1332 = vpop.f32.mrb[0].mxu0
        %v1333 = vadd.f32 0.0, %v1332
        %v1334 = vpop.f32.mrb[0].mxu0
        %1335 = vmatprep.mubr.f32.mxu0 0.0
        %1336 = vmatmul.mubr.f32.gmra.mrb[0].mxu0 %v767
        %v1337 = vpop.f32.mrb[0].mxu0
        %v1338 = vadd.f32 0.0, %v1337
        %v1339 = vpop.f32.mrb[0].mxu0
        %1340 = vmatprep.mubr.f32.mxu0 0.0
        %1341 = vmatmul.mubr.f32.gmra.mrb[0].mxu0 %v770
        %v1342 = vpop.f32.mrb[0].mxu0
        %v1343 = vadd.f32 0.0, %v1342
        %v1344 = vpop.f32.mrb[0].mxu0
        %1345 = vmatprep.mubr.f32.mxu0 0.0
        %1346 = vmatmul.mubr.f32.gmra.mrb[0].mxu0 %v773
        %v1347 = vpop.f32.mrb[0].mxu0
        %v1348 = vadd.f32 0.0, %v1347
        %v1349 = vpop.f32.mrb[0].mxu0
        %1350 = vmatprep.mubr.f32.mxu0 0.0
        %1351 = vmatmul.mubr.f32.gmra.mrb[0].mxu0 %v776
        %v1352 = vpop.f32.mrb[0].mxu0
        %v1353 = vadd.f32 0.0, %v1352
        %v1354 = vpop.f32.mrb[0].mxu0
        %1355 = vmatprep.mubr.f32.mxu0 0.0
        %1356 = vmatmul.mubr.f32.gmra.mrb[0].mxu0 %v779
        %v1357 = vpop.f32.mrb[0].mxu0
        %v1358 = vadd.f32 0.0, %v1357
        %v1359 = vpop.f32.mrb[0].mxu0
        %1360 = vmatprep.mubr.f32.mxu0 0.0
        %1361 = vmatmul.mubr.f32.gmra.mrb[0].mxu0 %v782
        %v1362 = vpop.f32.mrb[0].mxu0
        %v1363 = vadd.f32 0.0, %v1362
        %v1364 = vpop.f32.mrb[0].mxu0
        %1365 = vmatprep.mubr.f32.mxu0 0.0
        %1366 = vmatmul.mubr.f32.gmra.mrb[0].mxu0 %v785
        %v1367 = vpop.f32.mrb[0].mxu0
        %v1368 = vadd.f32 0.0, %v1367
        %v1369 = vpop.f32.mrb[0].mxu0
        %1370 = vmatprep.mubr.f32.mxu0 0.0
        %1371 = vmatmul.mubr.f32.gmra.mrb[0].mxu0 %v788
        %v1372 = vpop.f32.mrb[0].mxu0
        %v1373 = vadd.f32 0.0, %v1372
        %v1374 = vpop.f32.mrb[0].mxu0
        %1375 = vmatprep.mubr.f32.mxu0 0.0
        %1376 = vmatmul.mubr.f32.gmra.mrb[0].mxu0 %v791
        %v1377 = vpop.f32.mrb[0].mxu0
        %v1378 = vadd.f32 0.0, %v1377
        %v1379 = vpop.f32.mrb[0].mxu0
        %1380 = vmatprep.mubr.f32.mxu0 0.0
        %1381 = vmatmul.mubr.f32.gmra.mrb[0].mxu0 %v794
        %v1382 = vpop.f32.mrb[0].mxu0
        %v1383 = vadd.f32 0.0, %v1382
        %v1384 = vpop.f32.mrb[0].mxu0
        %1385 = vmatprep.mubr.f32.mxu0 0.0
        %1386 = vmatmul.mubr.f32.gmra.mrb[0].mxu0 %v797
        %v1387 = vpop.f32.mrb[0].mxu0
        %v1388 = vadd.f32 0.0, %v1387
        %v1389 = vpop.f32.mrb[0].mxu0
        %1390 = vmatprep.mubr.f32.mxu0 0.0
        %1391 = vmatmul.mubr.f32.gmra.mrb[0].mxu0 %v800
        %v1392 = vpop.f32.mrb[0].mxu0
        %v1393 = vadd.f32 0.0, %v1392
        %v1394 = vpop.f32.mrb[0].mxu0
        %1395 = vmatprep.mubr.f32.mxu0 0.0
        %1396 = vmatmul.mubr.f32.gmra.mrb[0].mxu0 %v803
        %v1397 = vpop.f32.mrb[0].mxu0
        %v1398 = vadd.f32 0.0, %v1397
        %v1399 = vpop.f32.mrb[0].mxu0
        %1400 = vmatprep.mubr.f32.mxu0 0.0
        %1401 = vmatmul.mubr.f32.gmra.mrb[0].mxu0 %v806
        %v1402 = vpop.f32.mrb[0].mxu0
        %v1403 = vadd.f32 0.0, %v1402
        %v1404 = vpop.f32.mrb[0].mxu0
        %1405 = vmatprep.mubr.f32.mxu0 0.0
        %1406 = vmatmul.mubr.f32.gmra.mrb[0].mxu0 %v809
        %v1407 = vpop.f32.mrb[0].mxu0
        %v1408 = vadd.f32 0.0, %v1407
        %v1409 = vpop.f32.mrb[0].mxu0
        %1410 = vmatprep.mubr.f32.mxu0 0.0
        %1411 = vmatmul.mubr.f32.gmra.mrb[0].mxu0 %v812
        %v1412 = vpop.f32.mrb[0].mxu0
        %v1413 = vadd.f32 0.0, %v1412
        %v1414 = vpop.f32.mrb[0].mxu0
        %1415 = vmatprep.mubr.f32.mxu0 0.0
        %1416 = vmatmul.mubr.f32.gmra.mrb[0].mxu0 %v815
        %v1417 = vpop.f32.mrb[0].mxu0
        %v1418 = vadd.f32 0.0, %v1417
        %v1419 = vpop.f32.mrb[0].mxu0
        %1420 = vmatprep.mubr.f32.mxu0 0.0
        %1421 = vmatmul.mubr.f32.gmra.mrb[0].mxu0 %v818
        %v1422 = vpop.f32.mrb[0].mxu0
        %v1423 = vadd.f32 0.0, %v1422
        %v1424 = vpop.f32.mrb[0].mxu0
        %1425 = vmatprep.mubr.f32.mxu0 0.0
        %1426 = vmatmul.mubr.f32.gmra.mrb[0].mxu0 %v821
        %v1427 = vpop.f32.mrb[0].mxu0
        %v1428 = vadd.f32 0.0, %v1427
        %v1429 = vpop.f32.mrb[0].mxu0
        %1430 = vmatprep.mubr.f32.mxu0 0.0
        %1431 = vmatmul.mubr.f32.gmra.mrb[0].mxu0 %v824
        %v1432 = vpop.f32.mrb[0].mxu0
        %v1433 = vadd.f32 0.0, %v1432
        %v1434 = vpop.f32.mrb[0].mxu0
        %1435 = vmatprep.mubr.f32.mxu0 0.0
        %1436 = vmatmul.mubr.f32.gmra.mrb[0].mxu0 %v827
        %v1437 = vpop.f32.mrb[0].mxu0
        %v1438 = vadd.f32 0.0, %v1437
        %v1439 = vpop.f32.mrb[0].mxu0
        %1440 = vmatprep.mubr.f32.mxu0 0.0
        %1441 = vmatmul.mubr.f32.gmra.mrb[0].mxu0 %v830
        %v1442 = vpop.f32.mrb[0].mxu0
        %v1443 = vadd.f32 0.0, %v1442
        %v1444 = vpop.f32.mrb[0].mxu0
        %1445 = vmatprep.mubr.f32.mxu0 0.0
        %1446 = vmatmul.mubr.f32.gmra.mrb[0].mxu0 %v833
        %v1447 = vpop.f32.mrb[0].mxu0
        %v1448 = vadd.f32 0.0, %v1447
        %v1449 = vpop.f32.mrb[0].mxu0
        %1450 = vmatprep.mubr.f32.mxu0 0.0
        %1451 = vmatmul.mubr.f32.gmra.mrb[0].mxu0 %v836
        %v1452 = vpop.f32.mrb[0].mxu0
        %v1453 = vadd.f32 0.0, %v1452
        %v1454 = vpop.f32.mrb[0].mxu0
        %1455 = vmatprep.mubr.f32.mxu0 0.0
        %1456 = vmatmul.mubr.f32.gmra.mrb[0].mxu0 %v839
        %v1457 = vpop.f32.mrb[0].mxu0
        %v1458 = vadd.f32 0.0, %v1457
        %v1459 = vpop.f32.mrb[0].mxu0
        %1460 = vmatprep.mubr.f32.mxu0 0.0
        %1461 = vmatmul.mubr.f32.gmra.mrb[0].mxu0 %v842
        %v1462 = vpop.f32.mrb[0].mxu0
        %v1463 = vadd.f32 0.0, %v1462
        %v1464 = vpop.f32.mrb[0].mxu0
        %1465 = vmatprep.mubr.f32.mxu0 0.0
        %1466 = vmatmul.mubr.f32.gmra.mrb[0].mxu0 %v845
        %v1467 = vpop.f32.mrb[0].mxu0
        %v1468 = vadd.f32 0.0, %v1467
        %v1469 = vpop.f32.mrb[0].mxu0
        %1470 = vmatprep.mubr.f32.mxu0 0.0
        %1471 = vmatmul.mubr.f32.gmra.mrb[0].mxu0 %v848
        %v1472 = vpop.f32.mrb[0].mxu0
        %v1473 = vadd.f32 0.0, %v1472
        %v1474 = vpop.f32.mrb[0].mxu0
        %1475 = vmatprep.mubr.f32.mxu0 0.0
        %1476 = vmatmul.mubr.f32.gmra.mrb[0].mxu0 %v851
        %v1477 = vpop.f32.mrb[0].mxu0
        %v1478 = vadd.f32 0.0, %v1477
        %v1479 = vpop.f32.mrb[0].mxu0
        %1480 = vmatprep.mubr.f32.mxu0 0.0
        %1481 = vmatmul.mubr.f32.gmra.mrb[0].mxu0 %v854
        %v1482 = vpop.f32.mrb[0].mxu0
        %v1483 = vadd.f32 0.0, %v1482
        %v1484 = vpop.f32.mrb[0].mxu0
        %1485 = vmatprep.mubr.f32.mxu0 0.0
        %1486 = vmatmul.mubr.f32.gmra.mrb[0].mxu0 %v857
        %v1487 = vpop.f32.mrb[0].mxu0
        %v1488 = vadd.f32 0.0, %v1487
        %v1489 = vpop.f32.mrb[0].mxu0
        %1490 = vmatprep.mubr.f32.mxu0 0.0
        %1491 = vmatmul.mubr.f32.gmra.mrb[0].mxu0 %v860
        %v1492 = vpop.f32.mrb[0].mxu0
        %v1493 = vadd.f32 0.0, %v1492
        %v1494 = vpop.f32.mrb[0].mxu0
        %1495 = vdwg.mxu0
        %v1496 = vld [vmem:[%s360] sm:$0xff]
        %v1497 = vld [vmem:[%s360 + $0x8] sm:$0xff]
        %v1498 = vld [vmem:[%s360 + $0x10] sm:$0xff]
        %v1499 = vld [vmem:[%s360 + $0x18] sm:$0xff]
        %v1500 = vld [vmem:[%s360 + $0x20] sm:$0xff]
        %v1501 = vld [vmem:[%s360 + $0x28] sm:$0xff]
        %v1502 = vld [vmem:[%s360 + $0x30] sm:$0xff]
        %v1503 = vld [vmem:[%s360 + $0x38] sm:$0xff]
        %v1504 = vld [vmem:[%s360 + $0x40] sm:$0xff]
        %v1505 = vld [vmem:[%s360 + $0x48] sm:$0xff]
        %v1506 = vld [vmem:[%s360 + $0x50] sm:$0xff]
        %v1507 = vld [vmem:[%s360 + $0x58] sm:$0xff]
        %v1508 = vld [vmem:[%s360 + $0x60] sm:$0xff]
        %v1509 = vld [vmem:[%s360 + $0x68] sm:$0xff]
        %v1510 = vld [vmem:[%s360 + $0x70] sm:$0xff]
        %v1511 = vld [vmem:[%s360 + $0x78] sm:$0xff]
        %v1512 = vld [vmem:[%s360 + $0x80] sm:$0xff]
        %v1513 = vld [vmem:[%s360 + $0x88] sm:$0xff]
        %v1514 = vld [vmem:[%s360 + $0x90] sm:$0xff]
        %v1515 = vld [vmem:[%s360 + $0x98] sm:$0xff]
        %v1516 = vld [vmem:[%s360 + $0xa0] sm:$0xff]
        %v1517 = vld [vmem:[%s360 + $0xa8] sm:$0xff]
        %v1518 = vld [vmem:[%s360 + $0xb0] sm:$0xff]
        %v1519 = vld [vmem:[%s360 + $0xb8] sm:$0xff]
        %v1520 = vld [vmem:[%s360 + $0xc0] sm:$0xff]
        %v1521 = vld [vmem:[%s360 + $0xc8] sm:$0xff]
        %v1522 = vld [vmem:[%s360 + $0xd0] sm:$0xff]
        %v1523 = vld [vmem:[%s360 + $0xd8] sm:$0xff]
        %v1524 = vld [vmem:[%s360 + $0xe0] sm:$0xff]
        %v1525 = vld [vmem:[%s360 + $0xe8] sm:$0xff]
        %v1526 = vld [vmem:[%s360 + $0xf0] sm:$0xff]
        %v1527 = vld [vmem:[%s360 + $0xf8] sm:$0xff]
        %v1528 = vld [vmem:[%s360 + $0x100] sm:$0xff]
        %v1529 = vld [vmem:[%s360 + $0x108] sm:$0xff]
        %v1530 = vld [vmem:[%s360 + $0x110] sm:$0xff]
        %v1531 = vld [vmem:[%s360 + $0x118] sm:$0xff]
        %v1532 = vld [vmem:[%s360 + $0x120] sm:$0xff]
        %v1533 = vld [vmem:[%s360 + $0x128] sm:$0xff]
        %v1534 = vld [vmem:[%s360 + $0x130] sm:$0xff]
        %v1535 = vld [vmem:[%s360 + $0x138] sm:$0xff]
        %v1536 = vld [vmem:[%s360 + $0x140] sm:$0xff]
        %v1537 = vld [vmem:[%s360 + $0x148] sm:$0xff]
        %v1538 = vld [vmem:[%s360 + $0x150] sm:$0xff]
        %v1539 = vld [vmem:[%s360 + $0x158] sm:$0xff]
        %v1540 = vld [vmem:[%s360 + $0x160] sm:$0xff]
        %v1541 = vld [vmem:[%s360 + $0x168] sm:$0xff]
        %v1542 = vld [vmem:[%s360 + $0x170] sm:$0xff]
        %v1543 = vld [vmem:[%s360 + $0x178] sm:$0xff]
        %v1544 = vld [vmem:[%s360 + $0x180] sm:$0xff]
        %v1545 = vld [vmem:[%s360 + $0x188] sm:$0xff]
        %v1546 = vld [vmem:[%s360 + $0x190] sm:$0xff]
        %v1547 = vld [vmem:[%s360 + $0x198] sm:$0xff]
        %v1548 = vld [vmem:[%s360 + $0x1a0] sm:$0xff]
        %v1549 = vld [vmem:[%s360 + $0x1a8] sm:$0xff]
        %v1550 = vld [vmem:[%s360 + $0x1b0] sm:$0xff]
        %v1551 = vld [vmem:[%s360 + $0x1b8] sm:$0xff]
        %v1552 = vld [vmem:[%s360 + $0x1c0] sm:$0xff]
        %v1553 = vld [vmem:[%s360 + $0x1c8] sm:$0xff]
        %v1554 = vld [vmem:[%s360 + $0x1d0] sm:$0xff]
        %v1555 = vld [vmem:[%s360 + $0x1d8] sm:$0xff]
        %v1556 = vld [vmem:[%s360 + $0x1e0] sm:$0xff]
        %v1557 = vld [vmem:[%s360 + $0x1e8] sm:$0xff]
        %v1558 = vld [vmem:[%s360 + $0x1f0] sm:$0xff]
        %v1559 = vld [vmem:[%s360 + $0x1f8] sm:$0xff]
        %v1560 = vld [vmem:[%s360 + $0x200] sm:$0xff]
        %v1561 = vld [vmem:[%s360 + $0x208] sm:$0xff]
        %v1562 = vld [vmem:[%s360 + $0x210] sm:$0xff]
        %v1563 = vld [vmem:[%s360 + $0x218] sm:$0xff]
        %v1564 = vld [vmem:[%s360 + $0x220] sm:$0xff]
        %v1565 = vld [vmem:[%s360 + $0x228] sm:$0xff]
        %v1566 = vld [vmem:[%s360 + $0x230] sm:$0xff]
        %v1567 = vld [vmem:[%s360 + $0x238] sm:$0xff]
        %v1568 = vld [vmem:[%s360 + $0x240] sm:$0xff]
        %v1569 = vld [vmem:[%s360 + $0x248] sm:$0xff]
        %v1570 = vld [vmem:[%s360 + $0x250] sm:$0xff]
        %v1571 = vld [vmem:[%s360 + $0x258] sm:$0xff]
        %v1572 = vld [vmem:[%s360 + $0x260] sm:$0xff]
        %v1573 = vld [vmem:[%s360 + $0x268] sm:$0xff]
        %v1574 = vld [vmem:[%s360 + $0x270] sm:$0xff]
        %v1575 = vld [vmem:[%s360 + $0x278] sm:$0xff]
        %v1576 = vld [vmem:[%s360 + $0x280] sm:$0xff]
        %v1577 = vld [vmem:[%s360 + $0x288] sm:$0xff]
        %v1578 = vld [vmem:[%s360 + $0x290] sm:$0xff]
        %v1579 = vld [vmem:[%s360 + $0x298] sm:$0xff]
        %v1580 = vld [vmem:[%s360 + $0x2a0] sm:$0xff]
        %v1581 = vld [vmem:[%s360 + $0x2a8] sm:$0xff]
        %v1582 = vld [vmem:[%s360 + $0x2b0] sm:$0xff]
        %v1583 = vld [vmem:[%s360 + $0x2b8] sm:$0xff]
        %v1584 = vld [vmem:[%s360 + $0x2c0] sm:$0xff]
        %v1585 = vld [vmem:[%s360 + $0x2c8] sm:$0xff]
        %v1586 = vld [vmem:[%s360 + $0x2d0] sm:$0xff]
        %v1587 = vld [vmem:[%s360 + $0x2d8] sm:$0xff]
        %v1588 = vld [vmem:[%s360 + $0x2e0] sm:$0xff]
        %v1589 = vld [vmem:[%s360 + $0x2e8] sm:$0xff]
        %v1590 = vld [vmem:[%s360 + $0x2f0] sm:$0xff]
        %v1591 = vld [vmem:[%s360 + $0x2f8] sm:$0xff]
        %v1592 = vld [vmem:[%s360 + $0x300] sm:$0xff]
        %v1593 = vld [vmem:[%s360 + $0x308] sm:$0xff]
        %v1594 = vld [vmem:[%s360 + $0x310] sm:$0xff]
        %v1595 = vld [vmem:[%s360 + $0x318] sm:$0xff]
        %v1596 = vld [vmem:[%s360 + $0x320] sm:$0xff]
        %v1597 = vld [vmem:[%s360 + $0x328] sm:$0xff]
        %v1598 = vld [vmem:[%s360 + $0x330] sm:$0xff]
        %v1599 = vld [vmem:[%s360 + $0x338] sm:$0xff]
        %v1600 = vld [vmem:[%s360 + $0x340] sm:$0xff]
        %v1601 = vld [vmem:[%s360 + $0x348] sm:$0xff]
        %v1602 = vld [vmem:[%s360 + $0x350] sm:$0xff]
        %v1603 = vld [vmem:[%s360 + $0x358] sm:$0xff]
        %v1604 = vld [vmem:[%s360 + $0x360] sm:$0xff]
        %v1605 = vld [vmem:[%s360 + $0x368] sm:$0xff]
        %v1606 = vld [vmem:[%s360 + $0x370] sm:$0xff]
        %v1607 = vld [vmem:[%s360 + $0x378] sm:$0xff]
        %v1608 = vld [vmem:[%s360 + $0x380] sm:$0xff]
        %v1610 = vsel %vm522, %v1496, 0
        %v1613 = vsel %vm522, %v1497, 0
        %v1616 = vsel %vm522, %v1498, 0
        %v1619 = vsel %vm522, %v1499, 0
        %v1622 = vsel %vm522, %v1500, 0
        %v1625 = vsel %vm522, %v1501, 0
        %v1628 = vsel %vm522, %v1502, 0
        %v1631 = vsel %vm522, %v1503, 0
        %v1634 = vsel %vm522, %v1504, 0
        %v1637 = vsel %vm522, %v1505, 0
        %v1640 = vsel %vm522, %v1506, 0
        %v1643 = vsel %vm522, %v1507, 0
        %v1646 = vsel %vm522, %v1508, 0
        %v1649 = vsel %vm522, %v1509, 0
        %v1652 = vsel %vm522, %v1510, 0
        %v1655 = vsel %vm522, %v1511, 0
        %v1658 = vsel %vm522, %v1512, 0
        %v1661 = vsel %vm522, %v1513, 0
        %v1664 = vsel %vm522, %v1514, 0
        %v1667 = vsel %vm522, %v1515, 0
        %v1670 = vsel %vm522, %v1516, 0
        %v1673 = vsel %vm522, %v1517, 0
        %v1676 = vsel %vm522, %v1518, 0
        %v1679 = vsel %vm522, %v1519, 0
        %v1682 = vsel %vm522, %v1520, 0
        %v1685 = vsel %vm522, %v1521, 0
        %v1688 = vsel %vm522, %v1522, 0
        %v1691 = vsel %vm522, %v1523, 0
        %v1694 = vsel %vm522, %v1524, 0
        %v1697 = vsel %vm522, %v1525, 0
        %v1700 = vsel %vm522, %v1526, 0
        %v1703 = vsel %vm522, %v1527, 0
        %v1706 = vsel %vm522, %v1528, 0
        %v1709 = vsel %vm522, %v1529, 0
        %v1712 = vsel %vm522, %v1530, 0
        %v1715 = vsel %vm522, %v1531, 0
        %v1718 = vsel %vm522, %v1532, 0
        %v1721 = vsel %vm522, %v1533, 0
        %v1724 = vsel %vm522, %v1534, 0
        %v1727 = vsel %vm522, %v1535, 0
        %v1730 = vsel %vm522, %v1536, 0
        %v1733 = vsel %vm522, %v1537, 0
        %v1736 = vsel %vm522, %v1538, 0
        %v1739 = vsel %vm522, %v1539, 0
        %v1742 = vsel %vm522, %v1540, 0
        %v1745 = vsel %vm522, %v1541, 0
        %v1748 = vsel %vm522, %v1542, 0
        %v1751 = vsel %vm522, %v1543, 0
        %v1754 = vsel %vm522, %v1544, 0
        %v1757 = vsel %vm522, %v1545, 0
        %v1760 = vsel %vm522, %v1546, 0
        %v1763 = vsel %vm522, %v1547, 0
        %v1766 = vsel %vm522, %v1548, 0
        %v1769 = vsel %vm522, %v1549, 0
        %v1772 = vsel %vm522, %v1550, 0
        %v1775 = vsel %vm522, %v1551, 0
        %v1778 = vsel %vm522, %v1552, 0
        %v1781 = vsel %vm522, %v1553, 0
        %v1784 = vsel %vm522, %v1554, 0
        %v1787 = vsel %vm522, %v1555, 0
        %v1790 = vsel %vm522, %v1556, 0
        %v1793 = vsel %vm522, %v1557, 0
        %v1796 = vsel %vm522, %v1558, 0
        %v1799 = vsel %vm522, %v1559, 0
        %v1802 = vsel %vm522, %v1560, 0
        %v1805 = vsel %vm522, %v1561, 0
        %v1808 = vsel %vm522, %v1562, 0
        %v1811 = vsel %vm522, %v1563, 0
        %v1814 = vsel %vm522, %v1564, 0
        %v1817 = vsel %vm522, %v1565, 0
        %v1820 = vsel %vm522, %v1566, 0
        %v1823 = vsel %vm522, %v1567, 0
        %v1826 = vsel %vm522, %v1568, 0
        %v1829 = vsel %vm522, %v1569, 0
        %v1832 = vsel %vm522, %v1570, 0
        %v1835 = vsel %vm522, %v1571, 0
        %v1838 = vsel %vm522, %v1572, 0
        %v1841 = vsel %vm522, %v1573, 0
        %v1844 = vsel %vm522, %v1574, 0
        %v1847 = vsel %vm522, %v1575, 0
        %v1850 = vsel %vm522, %v1576, 0
        %v1853 = vsel %vm522, %v1577, 0
        %v1856 = vsel %vm522, %v1578, 0
        %v1859 = vsel %vm522, %v1579, 0
        %v1862 = vsel %vm522, %v1580, 0
        %v1865 = vsel %vm522, %v1581, 0
        %v1868 = vsel %vm522, %v1582, 0
        %v1871 = vsel %vm522, %v1583, 0
        %v1874 = vsel %vm522, %v1584, 0
        %v1877 = vsel %vm522, %v1585, 0
        %v1880 = vsel %vm522, %v1586, 0
        %v1883 = vsel %vm522, %v1587, 0
        %v1886 = vsel %vm522, %v1588, 0
        %v1889 = vsel %vm522, %v1589, 0
        %v1892 = vsel %vm522, %v1590, 0
        %v1895 = vsel %vm522, %v1591, 0
        %v1898 = vsel %vm522, %v1592, 0
        %v1901 = vsel %vm522, %v1593, 0
        %v1904 = vsel %vm522, %v1594, 0
        %v1907 = vsel %vm522, %v1595, 0
        %v1910 = vsel %vm522, %v1596, 0
        %v1913 = vsel %vm522, %v1597, 0
        %v1916 = vsel %vm522, %v1598, 0
        %v1919 = vsel %vm522, %v1599, 0
        %v1922 = vsel %vm522, %v1600, 0
        %v1925 = vsel %vm522, %v1601, 0
        %v1928 = vsel %vm522, %v1602, 0
        %v1931 = vsel %vm522, %v1603, 0
        %v1934 = vsel %vm522, %v1604, 0
        %v1937 = vsel %vm522, %v1605, 0
        %v1940 = vsel %vm522, %v1606, 0
        %v1943 = vsel %vm522, %v1607, 0
        %v1946 = vsel %vm522, %v1608, 0
        %1948 = vmatprep.subr.mxu0 0.0
        %1949 = vmatpush1.msra.mxu0 %v512
        %1950 = vmatprep.subr.mxu0 0.0
        %1951 = vmatpush1.msra.mxu0 %v513
        %1952 = vmatprep.subr.mxu0 0.0
        %1953 = vmatpush1.msra.mxu0 %v514
        %1954 = vmatprep.subr.mxu0 0.0
        %1955 = vmatpush1.msra.mxu0 %v515
        %1956 = vmatprep.subr.mxu0 0.0
        %1957 = vmatpush1.msra.mxu0 %v516
        %1958 = vmatprep.subr.mxu0 0.0
        %1959 = vmatpush1.msra.mxu0 %v517
        %1960 = vmatprep.subr.mxu0 0.0
        %1961 = vmatpush1.msra.mxu0 %v518
        %1962 = vmatprep.subr.mxu0 0.0
        %1963 = vmatpush1.msra.mxu0 %v519
        %1964 = vmatprep.subr.mxu0 0.0
        %1965 = vmatpush1.msra.mxu0 %v520
        %1966 = vmatprep.subr.mxu0 0.0
        %1967 = vmatpush1.msra.mxu0 %v864
        %1968 = vmatprep.subr.mxu0 0.0
        %1969 = vmatpush1.msra.mxu0 0.0
        %1970 = vmatprep.subr.mxu0 0.0
        %1971 = vmatpush1.msra.mxu0 0.0
        %1972 = vmatprep.subr.mxu0 0.0
        %1973 = vmatpush1.msra.mxu0 0.0
        %1974 = vmatprep.subr.mxu0 0.0
        %1975 = vmatpush1.msra.mxu0 0.0
        %1976 = vmatprep.subr.mxu0 0.0
        %1977 = vmatpush1.msra.mxu0 0.0
        %1978 = vmatprep.subr.mxu0 0.0
        %1979 = vmatpush1.msra.mxu0 0.0
        %1980 = vmatprep.subr.mxu0 0.0
        %1981 = vmatpush1.msra.mxu0 0.0
        %1982 = vmatprep.subr.mxu0 0.0
        %1983 = vmatpush1.msra.mxu0 0.0
        %1984 = vmatprep.subr.mxu0 0.0
        %1985 = vmatpush1.msra.mxu0 0.0
        %1986 = vmatprep.subr.mxu0 0.0
        %1987 = vmatpush1.msra.mxu0 0.0
        %1988 = vmatprep.subr.mxu0 0.0
        %1989 = vmatpush1.msra.mxu0 0.0
        %1990 = vmatprep.subr.mxu0 0.0
        %1991 = vmatpush1.msra.mxu0 0.0
        %1992 = vmatprep.subr.mxu0 0.0
        %1993 = vmatpush1.msra.mxu0 0.0
        %1994 = vmatprep.subr.mxu0 0.0
        %1995 = vmatpush1.msra.mxu0 0.0
        %1996 = vmatprep.subr.mxu0 0.0
        %1997 = vmatpush1.msra.mxu0 0.0
        %1998 = vmatprep.subr.mxu0 0.0
        %1999 = vmatpush1.msra.mxu0 0.0
        %2000 = vmatprep.subr.mxu0 0.0
        %2001 = vmatpush1.msra.mxu0 0.0
        %2002 = vmatprep.subr.mxu0 0.0
        %2003 = vmatpush1.msra.mxu0 0.0
        %2004 = vmatprep.subr.mxu0 0.0
        %2005 = vmatpush1.msra.mxu0 0.0
        %2006 = vmatprep.subr.mxu0 0.0
        %2007 = vmatpush1.msra.mxu0 0.0
        %2008 = vmatprep.subr.mxu0 0.0
        %2009 = vmatpush1.msra.mxu0 0.0
        %2010 = vmatprep.subr.mxu0 0.0
        %2011 = vmatpush1.msra.mxu0 0.0
        %2012 = vmatprep.mubr.f32.mxu0 0.0
        %2013 = vmatmul.mubr.f32.gmra.mrb[0].mxu0 %v1610
        %v2014 = vpop.f32.mrb[0].mxu0
        %v2015 = vadd.f32 0.0, %v2014
        %v2016 = vpop.f32.mrb[0].mxu0
        %2017 = vmatprep.mubr.f32.mxu0 0.0
        %2018 = vmatmul.mubr.f32.gmra.mrb[0].mxu0 %v1613
        %v2019 = vpop.f32.mrb[0].mxu0
        %v2020 = vadd.f32 0.0, %v2019
        %v2021 = vpop.f32.mrb[0].mxu0
        %2022 = vmatprep.mubr.f32.mxu0 0.0
        %2023 = vmatmul.mubr.f32.gmra.mrb[0].mxu0 %v1616
        %v2024 = vpop.f32.mrb[0].mxu0
        %v2025 = vadd.f32 0.0, %v2024
        %v2026 = vpop.f32.mrb[0].mxu0
        %2027 = vmatprep.mubr.f32.mxu0 0.0
        %2028 = vmatmul.mubr.f32.gmra.mrb[0].mxu0 %v1619
        %v2029 = vpop.f32.mrb[0].mxu0
        %v2030 = vadd.f32 0.0, %v2029
        %v2031 = vpop.f32.mrb[0].mxu0
        %2032 = vmatprep.mubr.f32.mxu0 0.0
        %2033 = vmatmul.mubr.f32.gmra.mrb[0].mxu0 %v1622
        %v2034 = vpop.f32.mrb[0].mxu0
        %v2035 = vadd.f32 0.0, %v2034
        %v2036 = vpop.f32.mrb[0].mxu0
        %2037 = vmatprep.mubr.f32.mxu0 0.0
        %2038 = vmatmul.mubr.f32.gmra.mrb[0].mxu0 %v1625
        %v2039 = vpop.f32.mrb[0].mxu0
        %v2040 = vadd.f32 0.0, %v2039
        %v2041 = vpop.f32.mrb[0].mxu0
        %2042 = vmatprep.mubr.f32.mxu0 0.0
        %2043 = vmatmul.mubr.f32.gmra.mrb[0].mxu0 %v1628
        %v2044 = vpop.f32.mrb[0].mxu0
        %v2045 = vadd.f32 0.0, %v2044
        %v2046 = vpop.f32.mrb[0].mxu0
        %2047 = vmatprep.mubr.f32.mxu0 0.0
        %2048 = vmatmul.mubr.f32.gmra.mrb[0].mxu0 %v1631
        %v2049 = vpop.f32.mrb[0].mxu0
        %v2050 = vadd.f32 0.0, %v2049
        %v2051 = vpop.f32.mrb[0].mxu0
        %2052 = vmatprep.mubr.f32.mxu0 0.0
        %2053 = vmatmul.mubr.f32.gmra.mrb[0].mxu0 %v1634
        %v2054 = vpop.f32.mrb[0].mxu0
        %v2055 = vadd.f32 0.0, %v2054
        %v2056 = vpop.f32.mrb[0].mxu0
        %2057 = vmatprep.mubr.f32.mxu0 0.0
        %2058 = vmatmul.mubr.f32.gmra.mrb[0].mxu0 %v1637
        %v2059 = vpop.f32.mrb[0].mxu0
        %v2060 = vadd.f32 0.0, %v2059
        %v2061 = vpop.f32.mrb[0].mxu0
        %2062 = vmatprep.mubr.f32.mxu0 0.0
        %2063 = vmatmul.mubr.f32.gmra.mrb[0].mxu0 %v1640
        %v2064 = vpop.f32.mrb[0].mxu0
        %v2065 = vadd.f32 0.0, %v2064
        %v2066 = vpop.f32.mrb[0].mxu0
        %2067 = vmatprep.mubr.f32.mxu0 0.0
        %2068 = vmatmul.mubr.f32.gmra.mrb[0].mxu0 %v1643
        %v2069 = vpop.f32.mrb[0].mxu0
        %v2070 = vadd.f32 0.0, %v2069
        %v2071 = vpop.f32.mrb[0].mxu0
        %2072 = vmatprep.mubr.f32.mxu0 0.0
        %2073 = vmatmul.mubr.f32.gmra.mrb[0].mxu0 %v1646
        %v2074 = vpop.f32.mrb[0].mxu0
        %v2075 = vadd.f32 0.0, %v2074
        %v2076 = vpop.f32.mrb[0].mxu0
        %2077 = vmatprep.mubr.f32.mxu0 0.0
        %2078 = vmatmul.mubr.f32.gmra.mrb[0].mxu0 %v1649
        %v2079 = vpop.f32.mrb[0].mxu0
        %v2080 = vadd.f32 0.0, %v2079
        %v2081 = vpop.f32.mrb[0].mxu0
        %2082 = vmatprep.mubr.f32.mxu0 0.0
        %2083 = vmatmul.mubr.f32.gmra.mrb[0].mxu0 %v1652
        %v2084 = vpop.f32.mrb[0].mxu0
        %v2085 = vadd.f32 0.0, %v2084
        %v2086 = vpop.f32.mrb[0].mxu0
        %2087 = vmatprep.mubr.f32.mxu0 0.0
        %2088 = vmatmul.mubr.f32.gmra.mrb[0].mxu0 %v1655
        %v2089 = vpop.f32.mrb[0].mxu0
        %v2090 = vadd.f32 0.0, %v2089
        %v2091 = vpop.f32.mrb[0].mxu0
        %2092 = vmatprep.mubr.f32.mxu0 0.0
        %2093 = vmatmul.mubr.f32.gmra.mrb[0].mxu0 %v1658
        %v2094 = vpop.f32.mrb[0].mxu0
        %v2095 = vadd.f32 0.0, %v2094
        %v2096 = vpop.f32.mrb[0].mxu0
        %2097 = vmatprep.mubr.f32.mxu0 0.0
        %2098 = vmatmul.mubr.f32.gmra.mrb[0].mxu0 %v1661
        %v2099 = vpop.f32.mrb[0].mxu0
        %v2100 = vadd.f32 0.0, %v2099
        %v2101 = vpop.f32.mrb[0].mxu0
        %2102 = vmatprep.mubr.f32.mxu0 0.0
        %2103 = vmatmul.mubr.f32.gmra.mrb[0].mxu0 %v1664
        %v2104 = vpop.f32.mrb[0].mxu0
        %v2105 = vadd.f32 0.0, %v2104
        %v2106 = vpop.f32.mrb[0].mxu0
        %2107 = vmatprep.mubr.f32.mxu0 0.0
        %2108 = vmatmul.mubr.f32.gmra.mrb[0].mxu0 %v1667
        %v2109 = vpop.f32.mrb[0].mxu0
        %v2110 = vadd.f32 0.0, %v2109
        %v2111 = vpop.f32.mrb[0].mxu0
        %2112 = vmatprep.mubr.f32.mxu0 0.0
        %2113 = vmatmul.mubr.f32.gmra.mrb[0].mxu0 %v1670
        %v2114 = vpop.f32.mrb[0].mxu0
        %v2115 = vadd.f32 0.0, %v2114
        %v2116 = vpop.f32.mrb[0].mxu0
        %2117 = vmatprep.mubr.f32.mxu0 0.0
        %2118 = vmatmul.mubr.f32.gmra.mrb[0].mxu0 %v1673
        %v2119 = vpop.f32.mrb[0].mxu0
        %v2120 = vadd.f32 0.0, %v2119
        %v2121 = vpop.f32.mrb[0].mxu0
        %2122 = vmatprep.mubr.f32.mxu0 0.0
        %2123 = vmatmul.mubr.f32.gmra.mrb[0].mxu0 %v1676
        %v2124 = vpop.f32.mrb[0].mxu0
        %v2125 = vadd.f32 0.0, %v2124
        %v2126 = vpop.f32.mrb[0].mxu0
        %2127 = vmatprep.mubr.f32.mxu0 0.0
        %2128 = vmatmul.mubr.f32.gmra.mrb[0].mxu0 %v1679
        %v2129 = vpop.f32.mrb[0].mxu0
        %v2130 = vadd.f32 0.0, %v2129
        %v2131 = vpop.f32.mrb[0].mxu0
        %2132 = vmatprep.mubr.f32.mxu0 0.0
        %2133 = vmatmul.mubr.f32.gmra.mrb[0].mxu0 %v1682
        %v2134 = vpop.f32.mrb[0].mxu0
        %v2135 = vadd.f32 0.0, %v2134
        %v2136 = vpop.f32.mrb[0].mxu0
        %2137 = vmatprep.mubr.f32.mxu0 0.0
        %2138 = vmatmul.mubr.f32.gmra.mrb[0].mxu0 %v1685
        %v2139 = vpop.f32.mrb[0].mxu0
        %v2140 = vadd.f32 0.0, %v2139
        %v2141 = vpop.f32.mrb[0].mxu0
        %2142 = vmatprep.mubr.f32.mxu0 0.0
        %2143 = vmatmul.mubr.f32.gmra.mrb[0].mxu0 %v1688
        %v2144 = vpop.f32.mrb[0].mxu0
        %v2145 = vadd.f32 0.0, %v2144
        %v2146 = vpop.f32.mrb[0].mxu0
        %2147 = vmatprep.mubr.f32.mxu0 0.0
        %2148 = vmatmul.mubr.f32.gmra.mrb[0].mxu0 %v1691
        %v2149 = vpop.f32.mrb[0].mxu0
        %v2150 = vadd.f32 0.0, %v2149
        %v2151 = vpop.f32.mrb[0].mxu0
        %2152 = vmatprep.mubr.f32.mxu0 0.0
        %2153 = vmatmul.mubr.f32.gmra.mrb[0].mxu0 %v1694
        %v2154 = vpop.f32.mrb[0].mxu0
        %v2155 = vadd.f32 0.0, %v2154
        %v2156 = vpop.f32.mrb[0].mxu0
        %2157 = vmatprep.mubr.f32.mxu0 0.0
        %2158 = vmatmul.mubr.f32.gmra.mrb[0].mxu0 %v1697
        %v2159 = vpop.f32.mrb[0].mxu0
        %v2160 = vadd.f32 0.0, %v2159
        %v2161 = vpop.f32.mrb[0].mxu0
        %2162 = vmatprep.mubr.f32.mxu0 0.0
        %2163 = vmatmul.mubr.f32.gmra.mrb[0].mxu0 %v1700
        %v2164 = vpop.f32.mrb[0].mxu0
        %v2165 = vadd.f32 0.0, %v2164
        %v2166 = vpop.f32.mrb[0].mxu0
        %2167 = vmatprep.mubr.f32.mxu0 0.0
        %2168 = vmatmul.mubr.f32.gmra.mrb[0].mxu0 %v1703
        %v2169 = vpop.f32.mrb[0].mxu0
        %v2170 = vadd.f32 0.0, %v2169
        %v2171 = vpop.f32.mrb[0].mxu0
        %2172 = vmatprep.mubr.f32.mxu0 0.0
        %2173 = vmatmul.mubr.f32.gmra.mrb[0].mxu0 %v1706
        %v2174 = vpop.f32.mrb[0].mxu0
        %v2175 = vadd.f32 0.0, %v2174
        %v2176 = vpop.f32.mrb[0].mxu0
        %2177 = vmatprep.mubr.f32.mxu0 0.0
        %2178 = vmatmul.mubr.f32.gmra.mrb[0].mxu0 %v1709
        %v2179 = vpop.f32.mrb[0].mxu0
        %v2180 = vadd.f32 0.0, %v2179
        %v2181 = vpop.f32.mrb[0].mxu0
        %2182 = vmatprep.mubr.f32.mxu0 0.0
        %2183 = vmatmul.mubr.f32.gmra.mrb[0].mxu0 %v1712
        %v2184 = vpop.f32.mrb[0].mxu0
        %v2185 = vadd.f32 0.0, %v2184
        %v2186 = vpop.f32.mrb[0].mxu0
        %2187 = vmatprep.mubr.f32.mxu0 0.0
        %2188 = vmatmul.mubr.f32.gmra.mrb[0].mxu0 %v1715
        %v2189 = vpop.f32.mrb[0].mxu0
        %v2190 = vadd.f32 0.0, %v2189
        %v2191 = vpop.f32.mrb[0].mxu0
        %2192 = vmatprep.mubr.f32.mxu0 0.0
        %2193 = vmatmul.mubr.f32.gmra.mrb[0].mxu0 %v1718
        %v2194 = vpop.f32.mrb[0].mxu0
        %v2195 = vadd.f32 0.0, %v2194
        %v2196 = vpop.f32.mrb[0].mxu0
        %2197 = vmatprep.mubr.f32.mxu0 0.0
        %2198 = vmatmul.mubr.f32.gmra.mrb[0].mxu0 %v1721
        %v2199 = vpop.f32.mrb[0].mxu0
        %v2200 = vadd.f32 0.0, %v2199
        %v2201 = vpop.f32.mrb[0].mxu0
        %2202 = vmatprep.mubr.f32.mxu0 0.0
        %2203 = vmatmul.mubr.f32.gmra.mrb[0].mxu0 %v1724
        %v2204 = vpop.f32.mrb[0].mxu0
        %v2205 = vadd.f32 0.0, %v2204
        %v2206 = vpop.f32.mrb[0].mxu0
        %2207 = vmatprep.mubr.f32.mxu0 0.0
        %2208 = vmatmul.mubr.f32.gmra.mrb[0].mxu0 %v1727
        %v2209 = vpop.f32.mrb[0].mxu0
        %v2210 = vadd.f32 0.0, %v2209
        %v2211 = vpop.f32.mrb[0].mxu0
        %2212 = vmatprep.mubr.f32.mxu0 0.0
        %2213 = vmatmul.mubr.f32.gmra.mrb[0].mxu0 %v1730
        %v2214 = vpop.f32.mrb[0].mxu0
        %v2215 = vadd.f32 0.0, %v2214
        %v2216 = vpop.f32.mrb[0].mxu0
        %2217 = vmatprep.mubr.f32.mxu0 0.0
        %2218 = vmatmul.mubr.f32.gmra.mrb[0].mxu0 %v1733
        %v2219 = vpop.f32.mrb[0].mxu0
        %v2220 = vadd.f32 0.0, %v2219
        %v2221 = vpop.f32.mrb[0].mxu0
        %2222 = vmatprep.mubr.f32.mxu0 0.0
        %2223 = vmatmul.mubr.f32.gmra.mrb[0].mxu0 %v1736
        %v2224 = vpop.f32.mrb[0].mxu0
        %v2225 = vadd.f32 0.0, %v2224
        %v2226 = vpop.f32.mrb[0].mxu0
        %2227 = vmatprep.mubr.f32.mxu0 0.0
        %2228 = vmatmul.mubr.f32.gmra.mrb[0].mxu0 %v1739
        %v2229 = vpop.f32.mrb[0].mxu0
        %v2230 = vadd.f32 0.0, %v2229
        %v2231 = vpop.f32.mrb[0].mxu0
        %2232 = vmatprep.mubr.f32.mxu0 0.0
        %2233 = vmatmul.mubr.f32.gmra.mrb[0].mxu0 %v1742
        %v2234 = vpop.f32.mrb[0].mxu0
        %v2235 = vadd.f32 0.0, %v2234
        %v2236 = vpop.f32.mrb[0].mxu0
        %2237 = vmatprep.mubr.f32.mxu0 0.0
        %2238 = vmatmul.mubr.f32.gmra.mrb[0].mxu0 %v1745
        %v2239 = vpop.f32.mrb[0].mxu0
        %v2240 = vadd.f32 0.0, %v2239
        %v2241 = vpop.f32.mrb[0].mxu0
        %2242 = vmatprep.mubr.f32.mxu0 0.0
        %2243 = vmatmul.mubr.f32.gmra.mrb[0].mxu0 %v1748
        %v2244 = vpop.f32.mrb[0].mxu0
        %v2245 = vadd.f32 0.0, %v2244
        %v2246 = vpop.f32.mrb[0].mxu0
        %2247 = vmatprep.mubr.f32.mxu0 0.0
        %2248 = vmatmul.mubr.f32.gmra.mrb[0].mxu0 %v1751
        %v2249 = vpop.f32.mrb[0].mxu0
        %v2250 = vadd.f32 0.0, %v2249
        %v2251 = vpop.f32.mrb[0].mxu0
        %2252 = vmatprep.mubr.f32.mxu0 0.0
        %2253 = vmatmul.mubr.f32.gmra.mrb[0].mxu0 %v1754
        %v2254 = vpop.f32.mrb[0].mxu0
        %v2255 = vadd.f32 0.0, %v2254
        %v2256 = vpop.f32.mrb[0].mxu0
        %2257 = vmatprep.mubr.f32.mxu0 0.0
        %2258 = vmatmul.mubr.f32.gmra.mrb[0].mxu0 %v1757
        %v2259 = vpop.f32.mrb[0].mxu0
        %v2260 = vadd.f32 0.0, %v2259
        %v2261 = vpop.f32.mrb[0].mxu0
        %2262 = vmatprep.mubr.f32.mxu0 0.0
        %2263 = vmatmul.mubr.f32.gmra.mrb[0].mxu0 %v1760
        %v2264 = vpop.f32.mrb[0].mxu0
        %v2265 = vadd.f32 0.0, %v2264
        %v2266 = vpop.f32.mrb[0].mxu0
        %2267 = vmatprep.mubr.f32.mxu0 0.0
        %2268 = vmatmul.mubr.f32.gmra.mrb[0].mxu0 %v1763
        %v2269 = vpop.f32.mrb[0].mxu0
        %v2270 = vadd.f32 0.0, %v2269
        %v2271 = vpop.f32.mrb[0].mxu0
        %2272 = vmatprep.mubr.f32.mxu0 0.0
        %2273 = vmatmul.mubr.f32.gmra.mrb[0].mxu0 %v1766
        %v2274 = vpop.f32.mrb[0].mxu0
        %v2275 = vadd.f32 0.0, %v2274
        %v2276 = vpop.f32.mrb[0].mxu0
        %2277 = vmatprep.mubr.f32.mxu0 0.0
        %2278 = vmatmul.mubr.f32.gmra.mrb[0].mxu0 %v1769
        %v2279 = vpop.f32.mrb[0].mxu0
        %v2280 = vadd.f32 0.0, %v2279
        %v2281 = vpop.f32.mrb[0].mxu0
        %2282 = vmatprep.mubr.f32.mxu0 0.0
        %2283 = vmatmul.mubr.f32.gmra.mrb[0].mxu0 %v1772
        %v2284 = vpop.f32.mrb[0].mxu0
        %v2285 = vadd.f32 0.0, %v2284
        %v2286 = vpop.f32.mrb[0].mxu0
        %2287 = vmatprep.mubr.f32.mxu0 0.0
        %2288 = vmatmul.mubr.f32.gmra.mrb[0].mxu0 %v1775
        %v2289 = vpop.f32.mrb[0].mxu0
        %v2290 = vadd.f32 0.0, %v2289
        %v2291 = vpop.f32.mrb[0].mxu0
        %2292 = vmatprep.mubr.f32.mxu0 0.0
        %2293 = vmatmul.mubr.f32.gmra.mrb[0].mxu0 %v1778
        %v2294 = vpop.f32.mrb[0].mxu0
        %v2295 = vadd.f32 0.0, %v2294
        %v2296 = vpop.f32.mrb[0].mxu0
        %2297 = vmatprep.mubr.f32.mxu0 0.0
        %2298 = vmatmul.mubr.f32.gmra.mrb[0].mxu0 %v1781
        %v2299 = vpop.f32.mrb[0].mxu0
        %v2300 = vadd.f32 0.0, %v2299
        %v2301 = vpop.f32.mrb[0].mxu0
        %2302 = vmatprep.mubr.f32.mxu0 0.0
        %2303 = vmatmul.mubr.f32.gmra.mrb[0].mxu0 %v1784
        %v2304 = vpop.f32.mrb[0].mxu0
        %v2305 = vadd.f32 0.0, %v2304
        %v2306 = vpop.f32.mrb[0].mxu0
        %2307 = vmatprep.mubr.f32.mxu0 0.0
        %2308 = vmatmul.mubr.f32.gmra.mrb[0].mxu0 %v1787
        %v2309 = vpop.f32.mrb[0].mxu0
        %v2310 = vadd.f32 0.0, %v2309
        %v2311 = vpop.f32.mrb[0].mxu0
        %2312 = vmatprep.mubr.f32.mxu0 0.0
        %2313 = vmatmul.mubr.f32.gmra.mrb[0].mxu0 %v1790
        %v2314 = vpop.f32.mrb[0].mxu0
        %v2315 = vadd.f32 0.0, %v2314
        %v2316 = vpop.f32.mrb[0].mxu0
        %2317 = vmatprep.mubr.f32.mxu0 0.0
        %2318 = vmatmul.mubr.f32.gmra.mrb[0].mxu0 %v1793
        %v2319 = vpop.f32.mrb[0].mxu0
        %v2320 = vadd.f32 0.0, %v2319
        %v2321 = vpop.f32.mrb[0].mxu0
        %2322 = vmatprep.mubr.f32.mxu0 0.0
        %2323 = vmatmul.mubr.f32.gmra.mrb[0].mxu0 %v1796
        %v2324 = vpop.f32.mrb[0].mxu0
        %v2325 = vadd.f32 0.0, %v2324
        %v2326 = vpop.f32.mrb[0].mxu0
        %2327 = vmatprep.mubr.f32.mxu0 0.0
        %2328 = vmatmul.mubr.f32.gmra.mrb[0].mxu0 %v1799
        %v2329 = vpop.f32.mrb[0].mxu0
        %v2330 = vadd.f32 0.0, %v2329
        %v2331 = vpop.f32.mrb[0].mxu0
        %2332 = vmatprep.mubr.f32.mxu0 0.0
        %2333 = vmatmul.mubr.f32.gmra.mrb[0].mxu0 %v1802
        %v2334 = vpop.f32.mrb[0].mxu0
        %v2335 = vadd.f32 0.0, %v2334
        %v2336 = vpop.f32.mrb[0].mxu0
        %2337 = vmatprep.mubr.f32.mxu0 0.0
        %2338 = vmatmul.mubr.f32.gmra.mrb[0].mxu0 %v1805
        %v2339 = vpop.f32.mrb[0].mxu0
        %v2340 = vadd.f32 0.0, %v2339
        %v2341 = vpop.f32.mrb[0].mxu0
        %2342 = vmatprep.mubr.f32.mxu0 0.0
        %2343 = vmatmul.mubr.f32.gmra.mrb[0].mxu0 %v1808
        %v2344 = vpop.f32.mrb[0].mxu0
        %v2345 = vadd.f32 0.0, %v2344
        %v2346 = vpop.f32.mrb[0].mxu0
        %2347 = vmatprep.mubr.f32.mxu0 0.0
        %2348 = vmatmul.mubr.f32.gmra.mrb[0].mxu0 %v1811
        %v2349 = vpop.f32.mrb[0].mxu0
        %v2350 = vadd.f32 0.0, %v2349
        %v2351 = vpop.f32.mrb[0].mxu0
        %2352 = vmatprep.mubr.f32.mxu0 0.0
        %2353 = vmatmul.mubr.f32.gmra.mrb[0].mxu0 %v1814
        %v2354 = vpop.f32.mrb[0].mxu0
        %v2355 = vadd.f32 0.0, %v2354
        %v2356 = vpop.f32.mrb[0].mxu0
        %2357 = vmatprep.mubr.f32.mxu0 0.0
        %2358 = vmatmul.mubr.f32.gmra.mrb[0].mxu0 %v1817
        %v2359 = vpop.f32.mrb[0].mxu0
        %v2360 = vadd.f32 0.0, %v2359
        %v2361 = vpop.f32.mrb[0].mxu0
        %2362 = vmatprep.mubr.f32.mxu0 0.0
        %2363 = vmatmul.mubr.f32.gmra.mrb[0].mxu0 %v1820
        %v2364 = vpop.f32.mrb[0].mxu0
        %v2365 = vadd.f32 0.0, %v2364
        %v2366 = vpop.f32.mrb[0].mxu0
        %2367 = vmatprep.mubr.f32.mxu0 0.0
        %2368 = vmatmul.mubr.f32.gmra.mrb[0].mxu0 %v1823
        %v2369 = vpop.f32.mrb[0].mxu0
        %v2370 = vadd.f32 0.0, %v2369
        %v2371 = vpop.f32.mrb[0].mxu0
        %2372 = vmatprep.mubr.f32.mxu0 0.0
        %2373 = vmatmul.mubr.f32.gmra.mrb[0].mxu0 %v1826
        %v2374 = vpop.f32.mrb[0].mxu0
        %v2375 = vadd.f32 0.0, %v2374
        %v2376 = vpop.f32.mrb[0].mxu0
        %2377 = vmatprep.mubr.f32.mxu0 0.0
        %2378 = vmatmul.mubr.f32.gmra.mrb[0].mxu0 %v1829
        %v2379 = vpop.f32.mrb[0].mxu0
        %v2380 = vadd.f32 0.0, %v2379
        %v2381 = vpop.f32.mrb[0].mxu0
        %2382 = vmatprep.mubr.f32.mxu0 0.0
        %2383 = vmatmul.mubr.f32.gmra.mrb[0].mxu0 %v1832
        %v2384 = vpop.f32.mrb[0].mxu0
        %v2385 = vadd.f32 0.0, %v2384
        %v2386 = vpop.f32.mrb[0].mxu0
        %2387 = vmatprep.mubr.f32.mxu0 0.0
        %2388 = vmatmul.mubr.f32.gmra.mrb[0].mxu0 %v1835
        %v2389 = vpop.f32.mrb[0].mxu0
        %v2390 = vadd.f32 0.0, %v2389
        %v2391 = vpop.f32.mrb[0].mxu0
        %2392 = vmatprep.mubr.f32.mxu0 0.0
        %2393 = vmatmul.mubr.f32.gmra.mrb[0].mxu0 %v1838
        %v2394 = vpop.f32.mrb[0].mxu0
        %v2395 = vadd.f32 0.0, %v2394
        %v2396 = vpop.f32.mrb[0].mxu0
        %2397 = vmatprep.mubr.f32.mxu0 0.0
        %2398 = vmatmul.mubr.f32.gmra.mrb[0].mxu0 %v1841
        %v2399 = vpop.f32.mrb[0].mxu0
        %v2400 = vadd.f32 0.0, %v2399
        %v2401 = vpop.f32.mrb[0].mxu0
        %2402 = vmatprep.mubr.f32.mxu0 0.0
        %2403 = vmatmul.mubr.f32.gmra.mrb[0].mxu0 %v1844
        %v2404 = vpop.f32.mrb[0].mxu0
        %v2405 = vadd.f32 0.0, %v2404
        %v2406 = vpop.f32.mrb[0].mxu0
        %2407 = vmatprep.mubr.f32.mxu0 0.0
        %2408 = vmatmul.mubr.f32.gmra.mrb[0].mxu0 %v1847
        %v2409 = vpop.f32.mrb[0].mxu0
        %v2410 = vadd.f32 0.0, %v2409
        %v2411 = vpop.f32.mrb[0].mxu0
        %2412 = vmatprep.mubr.f32.mxu0 0.0
        %2413 = vmatmul.mubr.f32.gmra.mrb[0].mxu0 %v1850
        %v2414 = vpop.f32.mrb[0].mxu0
        %v2415 = vadd.f32 0.0, %v2414
        %v2416 = vpop.f32.mrb[0].mxu0
        %2417 = vmatprep.mubr.f32.mxu0 0.0
        %2418 = vmatmul.mubr.f32.gmra.mrb[0].mxu0 %v1853
        %v2419 = vpop.f32.mrb[0].mxu0
        %v2420 = vadd.f32 0.0, %v2419
        %v2421 = vpop.f32.mrb[0].mxu0
        %2422 = vmatprep.mubr.f32.mxu0 0.0
        %2423 = vmatmul.mubr.f32.gmra.mrb[0].mxu0 %v1856
        %v2424 = vpop.f32.mrb[0].mxu0
        %v2425 = vadd.f32 0.0, %v2424
        %v2426 = vpop.f32.mrb[0].mxu0
        %2427 = vmatprep.mubr.f32.mxu0 0.0
        %2428 = vmatmul.mubr.f32.gmra.mrb[0].mxu0 %v1859
        %v2429 = vpop.f32.mrb[0].mxu0
        %v2430 = vadd.f32 0.0, %v2429
        %v2431 = vpop.f32.mrb[0].mxu0
        %2432 = vmatprep.mubr.f32.mxu0 0.0
        %2433 = vmatmul.mubr.f32.gmra.mrb[0].mxu0 %v1862
        %v2434 = vpop.f32.mrb[0].mxu0
        %v2435 = vadd.f32 0.0, %v2434
        %v2436 = vpop.f32.mrb[0].mxu0
        %2437 = vmatprep.mubr.f32.mxu0 0.0
        %2438 = vmatmul.mubr.f32.gmra.mrb[0].mxu0 %v1865
        %v2439 = vpop.f32.mrb[0].mxu0
        %v2440 = vadd.f32 0.0, %v2439
        %v2441 = vpop.f32.mrb[0].mxu0
        %2442 = vmatprep.mubr.f32.mxu0 0.0
        %2443 = vmatmul.mubr.f32.gmra.mrb[0].mxu0 %v1868
        %v2444 = vpop.f32.mrb[0].mxu0
        %v2445 = vadd.f32 0.0, %v2444
        %v2446 = vpop.f32.mrb[0].mxu0
        %2447 = vmatprep.mubr.f32.mxu0 0.0
        %2448 = vmatmul.mubr.f32.gmra.mrb[0].mxu0 %v1871
        %v2449 = vpop.f32.mrb[0].mxu0
        %v2450 = vadd.f32 0.0, %v2449
        %v2451 = vpop.f32.mrb[0].mxu0
        %2452 = vmatprep.mubr.f32.mxu0 0.0
        %2453 = vmatmul.mubr.f32.gmra.mrb[0].mxu0 %v1874
        %v2454 = vpop.f32.mrb[0].mxu0
        %v2455 = vadd.f32 0.0, %v2454
        %v2456 = vpop.f32.mrb[0].mxu0
        %2457 = vmatprep.mubr.f32.mxu0 0.0
        %2458 = vmatmul.mubr.f32.gmra.mrb[0].mxu0 %v1877
        %v2459 = vpop.f32.mrb[0].mxu0
        %v2460 = vadd.f32 0.0, %v2459
        %v2461 = vpop.f32.mrb[0].mxu0
        %2462 = vmatprep.mubr.f32.mxu0 0.0
        %2463 = vmatmul.mubr.f32.gmra.mrb[0].mxu0 %v1880
        %v2464 = vpop.f32.mrb[0].mxu0
        %v2465 = vadd.f32 0.0, %v2464
        %v2466 = vpop.f32.mrb[0].mxu0
        %2467 = vmatprep.mubr.f32.mxu0 0.0
        %2468 = vmatmul.mubr.f32.gmra.mrb[0].mxu0 %v1883
        %v2469 = vpop.f32.mrb[0].mxu0
        %v2470 = vadd.f32 0.0, %v2469
        %v2471 = vpop.f32.mrb[0].mxu0
        %2472 = vmatprep.mubr.f32.mxu0 0.0
        %2473 = vmatmul.mubr.f32.gmra.mrb[0].mxu0 %v1886
        %v2474 = vpop.f32.mrb[0].mxu0
        %v2475 = vadd.f32 0.0, %v2474
        %v2476 = vpop.f32.mrb[0].mxu0
        %2477 = vmatprep.mubr.f32.mxu0 0.0
        %2478 = vmatmul.mubr.f32.gmra.mrb[0].mxu0 %v1889
        %v2479 = vpop.f32.mrb[0].mxu0
        %v2480 = vadd.f32 0.0, %v2479
        %v2481 = vpop.f32.mrb[0].mxu0
        %2482 = vmatprep.mubr.f32.mxu0 0.0
        %2483 = vmatmul.mubr.f32.gmra.mrb[0].mxu0 %v1892
        %v2484 = vpop.f32.mrb[0].mxu0
        %v2485 = vadd.f32 0.0, %v2484
        %v2486 = vpop.f32.mrb[0].mxu0
        %2487 = vmatprep.mubr.f32.mxu0 0.0
        %2488 = vmatmul.mubr.f32.gmra.mrb[0].mxu0 %v1895
        %v2489 = vpop.f32.mrb[0].mxu0
        %v2490 = vadd.f32 0.0, %v2489
        %v2491 = vpop.f32.mrb[0].mxu0
        %2492 = vmatprep.mubr.f32.mxu0 0.0
        %2493 = vmatmul.mubr.f32.gmra.mrb[0].mxu0 %v1898
        %v2494 = vpop.f32.mrb[0].mxu0
        %v2495 = vadd.f32 0.0, %v2494
        %v2496 = vpop.f32.mrb[0].mxu0
        %2497 = vmatprep.mubr.f32.mxu0 0.0
        %2498 = vmatmul.mubr.f32.gmra.mrb[0].mxu0 %v1901
        %v2499 = vpop.f32.mrb[0].mxu0
        %v2500 = vadd.f32 0.0, %v2499
        %v2501 = vpop.f32.mrb[0].mxu0
        %2502 = vmatprep.mubr.f32.mxu0 0.0
        %2503 = vmatmul.mubr.f32.gmra.mrb[0].mxu0 %v1904
        %v2504 = vpop.f32.mrb[0].mxu0
        %v2505 = vadd.f32 0.0, %v2504
        %v2506 = vpop.f32.mrb[0].mxu0
        %2507 = vmatprep.mubr.f32.mxu0 0.0
        %2508 = vmatmul.mubr.f32.gmra.mrb[0].mxu0 %v1907
        %v2509 = vpop.f32.mrb[0].mxu0
        %v2510 = vadd.f32 0.0, %v2509
        %v2511 = vpop.f32.mrb[0].mxu0
        %2512 = vmatprep.mubr.f32.mxu0 0.0
        %2513 = vmatmul.mubr.f32.gmra.mrb[0].mxu0 %v1910
        %v2514 = vpop.f32.mrb[0].mxu0
        %v2515 = vadd.f32 0.0, %v2514
        %v2516 = vpop.f32.mrb[0].mxu0
        %2517 = vmatprep.mubr.f32.mxu0 0.0
        %2518 = vmatmul.mubr.f32.gmra.mrb[0].mxu0 %v1913
        %v2519 = vpop.f32.mrb[0].mxu0
        %v2520 = vadd.f32 0.0, %v2519
        %v2521 = vpop.f32.mrb[0].mxu0
        %2522 = vmatprep.mubr.f32.mxu0 0.0
        %2523 = vmatmul.mubr.f32.gmra.mrb[0].mxu0 %v1916
        %v2524 = vpop.f32.mrb[0].mxu0
        %v2525 = vadd.f32 0.0, %v2524
        %v2526 = vpop.f32.mrb[0].mxu0
        %2527 = vmatprep.mubr.f32.mxu0 0.0
        %2528 = vmatmul.mubr.f32.gmra.mrb[0].mxu0 %v1919
        %v2529 = vpop.f32.mrb[0].mxu0
        %v2530 = vadd.f32 0.0, %v2529
        %v2531 = vpop.f32.mrb[0].mxu0
        %2532 = vmatprep.mubr.f32.mxu0 0.0
        %2533 = vmatmul.mubr.f32.gmra.mrb[0].mxu0 %v1922
        %v2534 = vpop.f32.mrb[0].mxu0
        %v2535 = vadd.f32 0.0, %v2534
        %v2536 = vpop.f32.mrb[0].mxu0
        %2537 = vmatprep.mubr.f32.mxu0 0.0
        %2538 = vmatmul.mubr.f32.gmra.mrb[0].mxu0 %v1925
        %v2539 = vpop.f32.mrb[0].mxu0
        %v2540 = vadd.f32 0.0, %v2539
        %v2541 = vpop.f32.mrb[0].mxu0
        %2542 = vmatprep.mubr.f32.mxu0 0.0
        %2543 = vmatmul.mubr.f32.gmra.mrb[0].mxu0 %v1928
        %v2544 = vpop.f32.mrb[0].mxu0
        %v2545 = vadd.f32 0.0, %v2544
        %v2546 = vpop.f32.mrb[0].mxu0
        %2547 = vmatprep.mubr.f32.mxu0 0.0
        %2548 = vmatmul.mubr.f32.gmra.mrb[0].mxu0 %v1931
        %v2549 = vpop.f32.mrb[0].mxu0
        %v2550 = vadd.f32 0.0, %v2549
        %v2551 = vpop.f32.mrb[0].mxu0
        %2552 = vmatprep.mubr.f32.mxu0 0.0
        %2553 = vmatmul.mubr.f32.gmra.mrb[0].mxu0 %v1934
        %v2554 = vpop.f32.mrb[0].mxu0
        %v2555 = vadd.f32 0.0, %v2554
        %v2556 = vpop.f32.mrb[0].mxu0
        %2557 = vmatprep.mubr.f32.mxu0 0.0
        %2558 = vmatmul.mubr.f32.gmra.mrb[0].mxu0 %v1937
        %v2559 = vpop.f32.mrb[0].mxu0
        %v2560 = vadd.f32 0.0, %v2559
        %v2561 = vpop.f32.mrb[0].mxu0
        %2562 = vmatprep.mubr.f32.mxu0 0.0
        %2563 = vmatmul.mubr.f32.gmra.mrb[0].mxu0 %v1940
        %v2564 = vpop.f32.mrb[0].mxu0
        %v2565 = vadd.f32 0.0, %v2564
        %v2566 = vpop.f32.mrb[0].mxu0
        %2567 = vmatprep.mubr.f32.mxu0 0.0
        %2568 = vmatmul.mubr.f32.gmra.mrb[0].mxu0 %v1943
        %v2569 = vpop.f32.mrb[0].mxu0
        %v2570 = vadd.f32 0.0, %v2569
        %v2571 = vpop.f32.mrb[0].mxu0
        %2572 = vmatprep.mubr.f32.mxu0 0.0
        %2573 = vmatmul.mubr.f32.gmra.mrb[0].mxu0 %v1946
        %v2574 = vpop.f32.mrb[0].mxu0
        %v2575 = vadd.f32 0.0, %v2574
        %v2576 = vpop.f32.mrb[0].mxu0
        %2577 = vdwg.mxu0
        %v2578 = vmax.f32 %v933, %v2015
        %v2579 = vmax.f32 %v938, %v2020
        %v2580 = vmax.f32 %v943, %v2025
        %v2581 = vmax.f32 %v948, %v2030
        %v2582 = vmax.f32 %v953, %v2035
        %v2583 = vmax.f32 %v958, %v2040
        %v2584 = vmax.f32 %v963, %v2045
        %v2585 = vmax.f32 %v968, %v2050
        %v2586 = vmax.f32 %v973, %v2055
        %v2587 = vmax.f32 %v978, %v2060
        %v2588 = vmax.f32 %v983, %v2065
        %v2589 = vmax.f32 %v988, %v2070
        %v2590 = vmax.f32 %v993, %v2075
        %v2591 = vmax.f32 %v998, %v2080
        %v2592 = vmax.f32 %v1003, %v2085
        %v2593 = vmax.f32 %v1008, %v2090
        %v2594 = vmax.f32 %v1013, %v2095
        %v2595 = vmax.f32 %v1018, %v2100
        %v2596 = vmax.f32 %v1023, %v2105
        %v2597 = vmax.f32 %v1028, %v2110
        %v2598 = vmax.f32 %v1033, %v2115
        %v2599 = vmax.f32 %v1038, %v2120
        %v2600 = vmax.f32 %v1043, %v2125
        %v2601 = vmax.f32 %v1048, %v2130
        %v2602 = vmax.f32 %v1053, %v2135
        %v2603 = vmax.f32 %v1058, %v2140
        %v2604 = vmax.f32 %v1063, %v2145
        %v2605 = vmax.f32 %v1068, %v2150
        %v2606 = vmax.f32 %v1073, %v2155
        %v2607 = vmax.f32 %v1078, %v2160
        %v2608 = vmax.f32 %v1083, %v2165
        %v2609 = vmax.f32 %v1088, %v2170
        %v2610 = vmax.f32 %v1093, %v2175
        %v2611 = vmax.f32 %v1098, %v2180
        %v2612 = vmax.f32 %v1103, %v2185
        %v2613 = vmax.f32 %v1108, %v2190
        %v2614 = vmax.f32 %v1113, %v2195
        %v2615 = vmax.f32 %v1118, %v2200
        %v2616 = vmax.f32 %v1123, %v2205
        %v2617 = vmax.f32 %v1128, %v2210
        %v2618 = vmax.f32 %v1133, %v2215
        %v2619 = vmax.f32 %v1138, %v2220
        %v2620 = vmax.f32 %v1143, %v2225
        %v2621 = vmax.f32 %v1148, %v2230
        %v2622 = vmax.f32 %v1153, %v2235
        %v2623 = vmax.f32 %v1158, %v2240
        %v2624 = vmax.f32 %v1163, %v2245
        %v2625 = vmax.f32 %v1168, %v2250
        %v2626 = vmax.f32 %v1173, %v2255
        %v2627 = vmax.f32 %v1178, %v2260
        %v2628 = vmax.f32 %v1183, %v2265
        %v2629 = vmax.f32 %v1188, %v2270
        %v2630 = vmax.f32 %v1193, %v2275
        %v2631 = vmax.f32 %v1198, %v2280
        %v2632 = vmax.f32 %v1203, %v2285
        %v2633 = vmax.f32 %v1208, %v2290
        %v2634 = vmax.f32 %v1213, %v2295
        %v2635 = vmax.f32 %v1218, %v2300
        %v2636 = vmax.f32 %v1223, %v2305
        %v2637 = vmax.f32 %v1228, %v2310
        %v2638 = vmax.f32 %v1233, %v2315
        %v2639 = vmax.f32 %v1238, %v2320
        %v2640 = vmax.f32 %v1243, %v2325
        %v2641 = vmax.f32 %v1248, %v2330
        %v2642 = vmax.f32 %v1253, %v2335
        %v2643 = vmax.f32 %v1258, %v2340
        %v2644 = vmax.f32 %v1263, %v2345
        %v2645 = vmax.f32 %v1268, %v2350
        %v2646 = vmax.f32 %v1273, %v2355
        %v2647 = vmax.f32 %v1278, %v2360
        %v2648 = vmax.f32 %v1283, %v2365
        %v2649 = vmax.f32 %v1288, %v2370
        %v2650 = vmax.f32 %v1293, %v2375
        %v2651 = vmax.f32 %v1298, %v2380
        %v2652 = vmax.f32 %v1303, %v2385
        %v2653 = vmax.f32 %v1308, %v2390
        %v2654 = vmax.f32 %v1313, %v2395
        %v2655 = vmax.f32 %v1318, %v2400
        %v2656 = vmax.f32 %v1323, %v2405
        %v2657 = vmax.f32 %v1328, %v2410
        %v2658 = vmax.f32 %v1333, %v2415
        %v2659 = vmax.f32 %v1338, %v2420
        %v2660 = vmax.f32 %v1343, %v2425
        %v2661 = vmax.f32 %v1348, %v2430
        %v2662 = vmax.f32 %v1353, %v2435
        %v2663 = vmax.f32 %v1358, %v2440
        %v2664 = vmax.f32 %v1363, %v2445
        %v2665 = vmax.f32 %v1368, %v2450
        %v2666 = vmax.f32 %v1373, %v2455
        %v2667 = vmax.f32 %v1378, %v2460
        %v2668 = vmax.f32 %v1383, %v2465
        %v2669 = vmax.f32 %v1388, %v2470
        %v2670 = vmax.f32 %v1393, %v2475
        %v2671 = vmax.f32 %v1398, %v2480
        %v2672 = vmax.f32 %v1403, %v2485
        %v2673 = vmax.f32 %v1408, %v2490
        %v2674 = vmax.f32 %v1413, %v2495
        %v2675 = vmax.f32 %v1418, %v2500
        %v2676 = vmax.f32 %v1423, %v2505
        %v2677 = vmax.f32 %v1428, %v2510
        %v2678 = vmax.f32 %v1433, %v2515
        %v2679 = vmax.f32 %v1438, %v2520
        %v2680 = vmax.f32 %v1443, %v2525
        %v2681 = vmax.f32 %v1448, %v2530
        %v2682 = vmax.f32 %v1453, %v2535
        %v2683 = vmax.f32 %v1458, %v2540
        %v2684 = vmax.f32 %v1463, %v2545
        %v2685 = vmax.f32 %v1468, %v2550
        %v2686 = vmax.f32 %v1473, %v2555
        %v2687 = vmax.f32 %v1478, %v2560
        %v2688 = vmax.f32 %v1483, %v2565
        %v2689 = vmax.f32 %v1488, %v2570
        %v2690 = vmax.f32 %v1493, %v2575
        %v2691 = vld [vmem:[%s374] sm:$0xff]
        %v2692 = vld [vmem:[%s374 + $0x8] sm:$0xff]
        %v2693 = vld [vmem:[%s374 + $0x10] sm:$0xff]
        %v2694 = vld [vmem:[%s374 + $0x18] sm:$0xff]
        %v2695 = vld [vmem:[%s374 + $0x20] sm:$0xff]
        %v2696 = vld [vmem:[%s374 + $0x28] sm:$0xff]
        %v2697 = vld [vmem:[%s374 + $0x30] sm:$0xff]
        %v2698 = vld [vmem:[%s374 + $0x38] sm:$0xff]
        %v2699 = vld [vmem:[%s374 + $0x40] sm:$0xff]
        %v2700 = vld [vmem:[%s374 + $0x48] sm:$0xff]
        %v2701 = vld [vmem:[%s374 + $0x50] sm:$0xff]
        %v2702 = vld [vmem:[%s374 + $0x58] sm:$0xff]
        %v2703 = vld [vmem:[%s374 + $0x60] sm:$0xff]
        %v2704 = vld [vmem:[%s374 + $0x68] sm:$0xff]
        %v2705 = vld [vmem:[%s374 + $0x70] sm:$0xff]
        %v2706 = vld [vmem:[%s374 + $0x78] sm:$0xff]
        %v2707 = vld [vmem:[%s374 + $0x80] sm:$0xff]
        %v2708 = vld [vmem:[%s374 + $0x88] sm:$0xff]
        %v2709 = vld [vmem:[%s374 + $0x90] sm:$0xff]
        %v2710 = vld [vmem:[%s374 + $0x98] sm:$0xff]
        %v2711 = vld [vmem:[%s374 + $0xa0] sm:$0xff]
        %v2712 = vld [vmem:[%s374 + $0xa8] sm:$0xff]
        %v2713 = vld [vmem:[%s374 + $0xb0] sm:$0xff]
        %v2714 = vld [vmem:[%s374 + $0xb8] sm:$0xff]
        %v2715 = vld [vmem:[%s374 + $0xc0] sm:$0xff]
        %v2716 = vld [vmem:[%s374 + $0xc8] sm:$0xff]
        %v2717 = vld [vmem:[%s374 + $0xd0] sm:$0xff]
        %v2718 = vld [vmem:[%s374 + $0xd8] sm:$0xff]
        %v2719 = vld [vmem:[%s374 + $0xe0] sm:$0xff]
        %v2720 = vld [vmem:[%s374 + $0xe8] sm:$0xff]
        %v2721 = vld [vmem:[%s374 + $0xf0] sm:$0xff]
        %v2722 = vld [vmem:[%s374 + $0xf8] sm:$0xff]
        %v2723 = vld [vmem:[%s374 + $0x100] sm:$0xff]
        %v2724 = vld [vmem:[%s374 + $0x108] sm:$0xff]
        %v2725 = vld [vmem:[%s374 + $0x110] sm:$0xff]
        %v2726 = vld [vmem:[%s374 + $0x118] sm:$0xff]
        %v2727 = vld [vmem:[%s374 + $0x120] sm:$0xff]
        %v2728 = vld [vmem:[%s374 + $0x128] sm:$0xff]
        %v2729 = vld [vmem:[%s374 + $0x130] sm:$0xff]
        %v2730 = vld [vmem:[%s374 + $0x138] sm:$0xff]
        %v2731 = vld [vmem:[%s374 + $0x140] sm:$0xff]
        %v2732 = vld [vmem:[%s374 + $0x148] sm:$0xff]
        %v2733 = vld [vmem:[%s374 + $0x150] sm:$0xff]
        %v2734 = vld [vmem:[%s374 + $0x158] sm:$0xff]
        %v2735 = vld [vmem:[%s374 + $0x160] sm:$0xff]
        %v2736 = vld [vmem:[%s374 + $0x168] sm:$0xff]
        %v2737 = vld [vmem:[%s374 + $0x170] sm:$0xff]
        %v2738 = vld [vmem:[%s374 + $0x178] sm:$0xff]
        %v2739 = vld [vmem:[%s374 + $0x180] sm:$0xff]
        %v2740 = vld [vmem:[%s374 + $0x188] sm:$0xff]
        %v2741 = vld [vmem:[%s374 + $0x190] sm:$0xff]
        %v2742 = vld [vmem:[%s374 + $0x198] sm:$0xff]
        %v2743 = vld [vmem:[%s374 + $0x1a0] sm:$0xff]
        %v2744 = vld [vmem:[%s374 + $0x1a8] sm:$0xff]
        %v2745 = vld [vmem:[%s374 + $0x1b0] sm:$0xff]
        %v2746 = vld [vmem:[%s374 + $0x1b8] sm:$0xff]
        %v2747 = vld [vmem:[%s374 + $0x1c0] sm:$0xff]
        %v2748 = vld [vmem:[%s374 + $0x1c8] sm:$0xff]
        %v2749 = vld [vmem:[%s374 + $0x1d0] sm:$0xff]
        %v2750 = vld [vmem:[%s374 + $0x1d8] sm:$0xff]
        %v2751 = vld [vmem:[%s374 + $0x1e0] sm:$0xff]
        %v2752 = vld [vmem:[%s374 + $0x1e8] sm:$0xff]
        %v2753 = vld [vmem:[%s374 + $0x1f0] sm:$0xff]
        %v2754 = vld [vmem:[%s374 + $0x1f8] sm:$0xff]
        %v2755 = vld [vmem:[%s374 + $0x200] sm:$0xff]
        %v2756 = vld [vmem:[%s374 + $0x208] sm:$0xff]
        %v2757 = vld [vmem:[%s374 + $0x210] sm:$0xff]
        %v2758 = vld [vmem:[%s374 + $0x218] sm:$0xff]
        %v2759 = vld [vmem:[%s374 + $0x220] sm:$0xff]
        %v2760 = vld [vmem:[%s374 + $0x228] sm:$0xff]
        %v2761 = vld [vmem:[%s374 + $0x230] sm:$0xff]
        %v2762 = vld [vmem:[%s374 + $0x238] sm:$0xff]
        %v2763 = vld [vmem:[%s374 + $0x240] sm:$0xff]
        %v2764 = vld [vmem:[%s374 + $0x248] sm:$0xff]
        %v2765 = vld [vmem:[%s374 + $0x250] sm:$0xff]
        %v2766 = vld [vmem:[%s374 + $0x258] sm:$0xff]
        %v2767 = vld [vmem:[%s374 + $0x260] sm:$0xff]
        %v2768 = vld [vmem:[%s374 + $0x268] sm:$0xff]
        %v2769 = vld [vmem:[%s374 + $0x270] sm:$0xff]
        %v2770 = vld [vmem:[%s374 + $0x278] sm:$0xff]
        %v2771 = vld [vmem:[%s374 + $0x280] sm:$0xff]
        %v2772 = vld [vmem:[%s374 + $0x288] sm:$0xff]
        %v2773 = vld [vmem:[%s374 + $0x290] sm:$0xff]
        %v2774 = vld [vmem:[%s374 + $0x298] sm:$0xff]
        %v2775 = vld [vmem:[%s374 + $0x2a0] sm:$0xff]
        %v2776 = vld [vmem:[%s374 + $0x2a8] sm:$0xff]
        %v2777 = vld [vmem:[%s374 + $0x2b0] sm:$0xff]
        %v2778 = vld [vmem:[%s374 + $0x2b8] sm:$0xff]
        %v2779 = vld [vmem:[%s374 + $0x2c0] sm:$0xff]
        %v2780 = vld [vmem:[%s374 + $0x2c8] sm:$0xff]
        %v2781 = vld [vmem:[%s374 + $0x2d0] sm:$0xff]
        %v2782 = vld [vmem:[%s374 + $0x2d8] sm:$0xff]
        %v2783 = vld [vmem:[%s374 + $0x2e0] sm:$0xff]
        %v2784 = vld [vmem:[%s374 + $0x2e8] sm:$0xff]
        %v2785 = vld [vmem:[%s374 + $0x2f0] sm:$0xff]
        %v2786 = vld [vmem:[%s374 + $0x2f8] sm:$0xff]
        %v2787 = vld [vmem:[%s374 + $0x300] sm:$0xff]
        %v2788 = vld [vmem:[%s374 + $0x308] sm:$0xff]
        %v2789 = vld [vmem:[%s374 + $0x310] sm:$0xff]
        %v2790 = vld [vmem:[%s374 + $0x318] sm:$0xff]
        %v2791 = vld [vmem:[%s374 + $0x320] sm:$0xff]
        %v2792 = vld [vmem:[%s374 + $0x328] sm:$0xff]
        %v2793 = vld [vmem:[%s374 + $0x330] sm:$0xff]
        %v2794 = vld [vmem:[%s374 + $0x338] sm:$0xff]
        %v2795 = vld [vmem:[%s374 + $0x340] sm:$0xff]
        %v2796 = vld [vmem:[%s374 + $0x348] sm:$0xff]
        %v2797 = vld [vmem:[%s374 + $0x350] sm:$0xff]
        %v2798 = vld [vmem:[%s374 + $0x358] sm:$0xff]
        %v2799 = vld [vmem:[%s374 + $0x360] sm:$0xff]
        %v2800 = vld [vmem:[%s374 + $0x368] sm:$0xff]
        %v2801 = vld [vmem:[%s374 + $0x370] sm:$0xff]
        %v2802 = vld [vmem:[%s374 + $0x378] sm:$0xff]
        %v2803 = vld [vmem:[%s374 + $0x380] sm:$0xff]
        %v2805 = vsel %vm522, %v2691, 0
        %v2808 = vsel %vm522, %v2692, 0
        %v2811 = vsel %vm522, %v2693, 0
        %v2814 = vsel %vm522, %v2694, 0
        %v2817 = vsel %vm522, %v2695, 0
        %v2820 = vsel %vm522, %v2696, 0
        %v2823 = vsel %vm522, %v2697, 0
        %v2826 = vsel %vm522, %v2698, 0
        %v2829 = vsel %vm522, %v2699, 0
        %v2832 = vsel %vm522, %v2700, 0
        %v2835 = vsel %vm522, %v2701, 0
        %v2838 = vsel %vm522, %v2702, 0
        %v2841 = vsel %vm522, %v2703, 0
        %v2844 = vsel %vm522, %v2704, 0
        %v2847 = vsel %vm522, %v2705, 0
        %v2850 = vsel %vm522, %v2706, 0
        %v2853 = vsel %vm522, %v2707, 0
        %v2856 = vsel %vm522, %v2708, 0
        %v2859 = vsel %vm522, %v2709, 0
        %v2862 = vsel %vm522, %v2710, 0
        %v2865 = vsel %vm522, %v2711, 0
        %v2868 = vsel %vm522, %v2712, 0
        %v2871 = vsel %vm522, %v2713, 0
        %v2874 = vsel %vm522, %v2714, 0
        %v2877 = vsel %vm522, %v2715, 0
        %v2880 = vsel %vm522, %v2716, 0
        %v2883 = vsel %vm522, %v2717, 0
        %v2886 = vsel %vm522, %v2718, 0
        %v2889 = vsel %vm522, %v2719, 0
        %v2892 = vsel %vm522, %v2720, 0
        %v2895 = vsel %vm522, %v2721, 0
        %v2898 = vsel %vm522, %v2722, 0
        %v2901 = vsel %vm522, %v2723, 0
        %v2904 = vsel %vm522, %v2724, 0
        %v2907 = vsel %vm522, %v2725, 0
        %v2910 = vsel %vm522, %v2726, 0
        %v2913 = vsel %vm522, %v2727, 0
        %v2916 = vsel %vm522, %v2728, 0
        %v2919 = vsel %vm522, %v2729, 0
        %v2922 = vsel %vm522, %v2730, 0
        %v2925 = vsel %vm522, %v2731, 0
        %v2928 = vsel %vm522, %v2732, 0
        %v2931 = vsel %vm522, %v2733, 0
        %v2934 = vsel %vm522, %v2734, 0
        %v2937 = vsel %vm522, %v2735, 0
        %v2940 = vsel %vm522, %v2736, 0
        %v2943 = vsel %vm522, %v2737, 0
        %v2946 = vsel %vm522, %v2738, 0
        %v2949 = vsel %vm522, %v2739, 0
        %v2952 = vsel %vm522, %v2740, 0
        %v2955 = vsel %vm522, %v2741, 0
        %v2958 = vsel %vm522, %v2742, 0
        %v2961 = vsel %vm522, %v2743, 0
        %v2964 = vsel %vm522, %v2744, 0
        %v2967 = vsel %vm522, %v2745, 0
        %v2970 = vsel %vm522, %v2746, 0
        %v2973 = vsel %vm522, %v2747, 0
        %v2976 = vsel %vm522, %v2748, 0
        %v2979 = vsel %vm522, %v2749, 0
        %v2982 = vsel %vm522, %v2750, 0
        %v2985 = vsel %vm522, %v2751, 0
        %v2988 = vsel %vm522, %v2752, 0
        %v2991 = vsel %vm522, %v2753, 0
        %v2994 = vsel %vm522, %v2754, 0
        %v2997 = vsel %vm522, %v2755, 0
        %v3000 = vsel %vm522, %v2756, 0
        %v3003 = vsel %vm522, %v2757, 0
        %v3006 = vsel %vm522, %v2758, 0
        %v3009 = vsel %vm522, %v2759, 0
        %v3012 = vsel %vm522, %v2760, 0
        %v3015 = vsel %vm522, %v2761, 0
        %v3018 = vsel %vm522, %v2762, 0
        %v3021 = vsel %vm522, %v2763, 0
        %v3024 = vsel %vm522, %v2764, 0
        %v3027 = vsel %vm522, %v2765, 0
        %v3030 = vsel %vm522, %v2766, 0
        %v3033 = vsel %vm522, %v2767, 0
        %v3036 = vsel %vm522, %v2768, 0
        %v3039 = vsel %vm522, %v2769, 0
        %v3042 = vsel %vm522, %v2770, 0
        %v3045 = vsel %vm522, %v2771, 0
        %v3048 = vsel %vm522, %v2772, 0
        %v3051 = vsel %vm522, %v2773, 0
        %v3054 = vsel %vm522, %v2774, 0
        %v3057 = vsel %vm522, %v2775, 0
        %v3060 = vsel %vm522, %v2776, 0
        %v3063 = vsel %vm522, %v2777, 0
        %v3066 = vsel %vm522, %v2778, 0
        %v3069 = vsel %vm522, %v2779, 0
        %v3072 = vsel %vm522, %v2780, 0
        %v3075 = vsel %vm522, %v2781, 0
        %v3078 = vsel %vm522, %v2782, 0
        %v3081 = vsel %vm522, %v2783, 0
        %v3084 = vsel %vm522, %v2784, 0
        %v3087 = vsel %vm522, %v2785, 0
        %v3090 = vsel %vm522, %v2786, 0
        %v3093 = vsel %vm522, %v2787, 0
        %v3096 = vsel %vm522, %v2788, 0
        %v3099 = vsel %vm522, %v2789, 0
        %v3102 = vsel %vm522, %v2790, 0
        %v3105 = vsel %vm522, %v2791, 0
        %v3108 = vsel %vm522, %v2792, 0
        %v3111 = vsel %vm522, %v2793, 0
        %v3114 = vsel %vm522, %v2794, 0
        %v3117 = vsel %vm522, %v2795, 0
        %v3120 = vsel %vm522, %v2796, 0
        %v3123 = vsel %vm522, %v2797, 0
        %v3126 = vsel %vm522, %v2798, 0
        %v3129 = vsel %vm522, %v2799, 0
        %v3132 = vsel %vm522, %v2800, 0
        %v3135 = vsel %vm522, %v2801, 0
        %v3138 = vsel %vm522, %v2802, 0
        %v3141 = vsel %vm522, %v2803, 0
        %3143 = vmatprep.subr.mxu0 0.0
        %3144 = vmatpush1.msra.mxu0 %v512
        %3145 = vmatprep.subr.mxu0 0.0
        %3146 = vmatpush1.msra.mxu0 %v513
        %3147 = vmatprep.subr.mxu0 0.0
        %3148 = vmatpush1.msra.mxu0 %v514
        %3149 = vmatprep.subr.mxu0 0.0
        %3150 = vmatpush1.msra.mxu0 %v515
        %3151 = vmatprep.subr.mxu0 0.0
        %3152 = vmatpush1.msra.mxu0 %v516
        %3153 = vmatprep.subr.mxu0 0.0
        %3154 = vmatpush1.msra.mxu0 %v517
        %3155 = vmatprep.subr.mxu0 0.0
        %3156 = vmatpush1.msra.mxu0 %v518
        %3157 = vmatprep.subr.mxu0 0.0
        %3158 = vmatpush1.msra.mxu0 %v519
        %3159 = vmatprep.subr.mxu0 0.0
        %3160 = vmatpush1.msra.mxu0 %v520
        %3161 = vmatprep.subr.mxu0 0.0
        %3162 = vmatpush1.msra.mxu0 %v864
        %3163 = vmatprep.subr.mxu0 0.0
        %3164 = vmatpush1.msra.mxu0 0.0
        %3165 = vmatprep.subr.mxu0 0.0
        %3166 = vmatpush1.msra.mxu0 0.0
        %3167 = vmatprep.subr.mxu0 0.0
        %3168 = vmatpush1.msra.mxu0 0.0
        %3169 = vmatprep.subr.mxu0 0.0
        %3170 = vmatpush1.msra.mxu0 0.0
        %3171 = vmatprep.subr.mxu0 0.0
        %3172 = vmatpush1.msra.mxu0 0.0
        %3173 = vmatprep.subr.mxu0 0.0
        %3174 = vmatpush1.msra.mxu0 0.0
        %3175 = vmatprep.subr.mxu0 0.0
        %3176 = vmatpush1.msra.mxu0 0.0
        %3177 = vmatprep.subr.mxu0 0.0
        %3178 = vmatpush1.msra.mxu0 0.0
        %3179 = vmatprep.subr.mxu0 0.0
        %3180 = vmatpush1.msra.mxu0 0.0
        %3181 = vmatprep.subr.mxu0 0.0
        %3182 = vmatpush1.msra.mxu0 0.0
        %3183 = vmatprep.subr.mxu0 0.0
        %3184 = vmatpush1.msra.mxu0 0.0
        %3185 = vmatprep.subr.mxu0 0.0
        %3186 = vmatpush1.msra.mxu0 0.0
        %3187 = vmatprep.subr.mxu0 0.0
        %3188 = vmatpush1.msra.mxu0 0.0
        %3189 = vmatprep.subr.mxu0 0.0
        %3190 = vmatpush1.msra.mxu0 0.0
        %3191 = vmatprep.subr.mxu0 0.0
        %3192 = vmatpush1.msra.mxu0 0.0
        %3193 = vmatprep.subr.mxu0 0.0
        %3194 = vmatpush1.msra.mxu0 0.0
        %3195 = vmatprep.subr.mxu0 0.0
        %3196 = vmatpush1.msra.mxu0 0.0
        %3197 = vmatprep.subr.mxu0 0.0
        %3198 = vmatpush1.msra.mxu0 0.0
        %3199 = vmatprep.subr.mxu0 0.0
        %3200 = vmatpush1.msra.mxu0 0.0
        %3201 = vmatprep.subr.mxu0 0.0
        %3202 = vmatpush1.msra.mxu0 0.0
        %3203 = vmatprep.subr.mxu0 0.0
        %3204 = vmatpush1.msra.mxu0 0.0
        %3205 = vmatprep.subr.mxu0 0.0
        %3206 = vmatpush1.msra.mxu0 0.0
        %3207 = vmatprep.mubr.f32.mxu0 0.0
        %3208 = vmatmul.mubr.f32.gmra.mrb[0].mxu0 %v2805
        %v3209 = vpop.f32.mrb[0].mxu0
        %v3210 = vadd.f32 0.0, %v3209
        %v3211 = vpop.f32.mrb[0].mxu0
        %3212 = vmatprep.mubr.f32.mxu0 0.0
        %3213 = vmatmul.mubr.f32.gmra.mrb[0].mxu0 %v2808
        %v3214 = vpop.f32.mrb[0].mxu0
        %v3215 = vadd.f32 0.0, %v3214
        %v3216 = vpop.f32.mrb[0].mxu0
        %3217 = vmatprep.mubr.f32.mxu0 0.0
        %3218 = vmatmul.mubr.f32.gmra.mrb[0].mxu0 %v2811
        %v3219 = vpop.f32.mrb[0].mxu0
        %v3220 = vadd.f32 0.0, %v3219
        %v3221 = vpop.f32.mrb[0].mxu0
        %3222 = vmatprep.mubr.f32.mxu0 0.0
        %3223 = vmatmul.mubr.f32.gmra.mrb[0].mxu0 %v2814
        %v3224 = vpop.f32.mrb[0].mxu0
        %v3225 = vadd.f32 0.0, %v3224
        %v3226 = vpop.f32.mrb[0].mxu0
        %3227 = vmatprep.mubr.f32.mxu0 0.0
        %3228 = vmatmul.mubr.f32.gmra.mrb[0].mxu0 %v2817
        %v3229 = vpop.f32.mrb[0].mxu0
        %v3230 = vadd.f32 0.0, %v3229
        %v3231 = vpop.f32.mrb[0].mxu0
        %3232 = vmatprep.mubr.f32.mxu0 0.0
        %3233 = vmatmul.mubr.f32.gmra.mrb[0].mxu0 %v2820
        %v3234 = vpop.f32.mrb[0].mxu0
        %v3235 = vadd.f32 0.0, %v3234
        %v3236 = vpop.f32.mrb[0].mxu0
        %3237 = vmatprep.mubr.f32.mxu0 0.0
        %3238 = vmatmul.mubr.f32.gmra.mrb[0].mxu0 %v2823
        %v3239 = vpop.f32.mrb[0].mxu0
        %v3240 = vadd.f32 0.0, %v3239
        %v3241 = vpop.f32.mrb[0].mxu0
        %3242 = vmatprep.mubr.f32.mxu0 0.0
        %3243 = vmatmul.mubr.f32.gmra.mrb[0].mxu0 %v2826
        %v3244 = vpop.f32.mrb[0].mxu0
        %v3245 = vadd.f32 0.0, %v3244
        %v3246 = vpop.f32.mrb[0].mxu0
        %3247 = vmatprep.mubr.f32.mxu0 0.0
        %3248 = vmatmul.mubr.f32.gmra.mrb[0].mxu0 %v2829
        %v3249 = vpop.f32.mrb[0].mxu0
        %v3250 = vadd.f32 0.0, %v3249
        %v3251 = vpop.f32.mrb[0].mxu0
        %3252 = vmatprep.mubr.f32.mxu0 0.0
        %3253 = vmatmul.mubr.f32.gmra.mrb[0].mxu0 %v2832
        %v3254 = vpop.f32.mrb[0].mxu0
        %v3255 = vadd.f32 0.0, %v3254
        %v3256 = vpop.f32.mrb[0].mxu0
        %3257 = vmatprep.mubr.f32.mxu0 0.0
        %3258 = vmatmul.mubr.f32.gmra.mrb[0].mxu0 %v2835
        %v3259 = vpop.f32.mrb[0].mxu0
        %v3260 = vadd.f32 0.0, %v3259
        %v3261 = vpop.f32.mrb[0].mxu0
        %3262 = vmatprep.mubr.f32.mxu0 0.0
        %3263 = vmatmul.mubr.f32.gmra.mrb[0].mxu0 %v2838
        %v3264 = vpop.f32.mrb[0].mxu0
        %v3265 = vadd.f32 0.0, %v3264
        %v3266 = vpop.f32.mrb[0].mxu0
        %3267 = vmatprep.mubr.f32.mxu0 0.0
        %3268 = vmatmul.mubr.f32.gmra.mrb[0].mxu0 %v2841
        %v3269 = vpop.f32.mrb[0].mxu0
        %v3270 = vadd.f32 0.0, %v3269
        %v3271 = vpop.f32.mrb[0].mxu0
        %3272 = vmatprep.mubr.f32.mxu0 0.0
        %3273 = vmatmul.mubr.f32.gmra.mrb[0].mxu0 %v2844
        %v3274 = vpop.f32.mrb[0].mxu0
        %v3275 = vadd.f32 0.0, %v3274
        %v3276 = vpop.f32.mrb[0].mxu0
        %3277 = vmatprep.mubr.f32.mxu0 0.0
        %3278 = vmatmul.mubr.f32.gmra.mrb[0].mxu0 %v2847
        %v3279 = vpop.f32.mrb[0].mxu0
        %v3280 = vadd.f32 0.0, %v3279
        %v3281 = vpop.f32.mrb[0].mxu0
        %3282 = vmatprep.mubr.f32.mxu0 0.0
        %3283 = vmatmul.mubr.f32.gmra.mrb[0].mxu0 %v2850
        %v3284 = vpop.f32.mrb[0].mxu0
        %v3285 = vadd.f32 0.0, %v3284
        %v3286 = vpop.f32.mrb[0].mxu0
        %3287 = vmatprep.mubr.f32.mxu0 0.0
        %3288 = vmatmul.mubr.f32.gmra.mrb[0].mxu0 %v2853
        %v3289 = vpop.f32.mrb[0].mxu0
        %v3290 = vadd.f32 0.0, %v3289
        %v3291 = vpop.f32.mrb[0].mxu0
        %3292 = vmatprep.mubr.f32.mxu0 0.0
        %3293 = vmatmul.mubr.f32.gmra.mrb[0].mxu0 %v2856
        %v3294 = vpop.f32.mrb[0].mxu0
        %v3295 = vadd.f32 0.0, %v3294
        %v3296 = vpop.f32.mrb[0].mxu0
        %3297 = vmatprep.mubr.f32.mxu0 0.0
        %3298 = vmatmul.mubr.f32.gmra.mrb[0].mxu0 %v2859
        %v3299 = vpop.f32.mrb[0].mxu0
        %v3300 = vadd.f32 0.0, %v3299
        %v3301 = vpop.f32.mrb[0].mxu0
        %3302 = vmatprep.mubr.f32.mxu0 0.0
        %3303 = vmatmul.mubr.f32.gmra.mrb[0].mxu0 %v2862
        %v3304 = vpop.f32.mrb[0].mxu0
        %v3305 = vadd.f32 0.0, %v3304
        %v3306 = vpop.f32.mrb[0].mxu0
        %3307 = vmatprep.mubr.f32.mxu0 0.0
        %3308 = vmatmul.mubr.f32.gmra.mrb[0].mxu0 %v2865
        %v3309 = vpop.f32.mrb[0].mxu0
        %v3310 = vadd.f32 0.0, %v3309
        %v3311 = vpop.f32.mrb[0].mxu0
        %3312 = vmatprep.mubr.f32.mxu0 0.0
        %3313 = vmatmul.mubr.f32.gmra.mrb[0].mxu0 %v2868
        %v3314 = vpop.f32.mrb[0].mxu0
        %v3315 = vadd.f32 0.0, %v3314
        %v3316 = vpop.f32.mrb[0].mxu0
        %3317 = vmatprep.mubr.f32.mxu0 0.0
        %3318 = vmatmul.mubr.f32.gmra.mrb[0].mxu0 %v2871
        %v3319 = vpop.f32.mrb[0].mxu0
        %v3320 = vadd.f32 0.0, %v3319
        %v3321 = vpop.f32.mrb[0].mxu0
        %3322 = vmatprep.mubr.f32.mxu0 0.0
        %3323 = vmatmul.mubr.f32.gmra.mrb[0].mxu0 %v2874
        %v3324 = vpop.f32.mrb[0].mxu0
        %v3325 = vadd.f32 0.0, %v3324
        %v3326 = vpop.f32.mrb[0].mxu0
        %3327 = vmatprep.mubr.f32.mxu0 0.0
        %3328 = vmatmul.mubr.f32.gmra.mrb[0].mxu0 %v2877
        %v3329 = vpop.f32.mrb[0].mxu0
        %v3330 = vadd.f32 0.0, %v3329
        %v3331 = vpop.f32.mrb[0].mxu0
        %3332 = vmatprep.mubr.f32.mxu0 0.0
        %3333 = vmatmul.mubr.f32.gmra.mrb[0].mxu0 %v2880
        %v3334 = vpop.f32.mrb[0].mxu0
        %v3335 = vadd.f32 0.0, %v3334
        %v3336 = vpop.f32.mrb[0].mxu0
        %3337 = vmatprep.mubr.f32.mxu0 0.0
        %3338 = vmatmul.mubr.f32.gmra.mrb[0].mxu0 %v2883
        %v3339 = vpop.f32.mrb[0].mxu0
        %v3340 = vadd.f32 0.0, %v3339
        %v3341 = vpop.f32.mrb[0].mxu0
        %3342 = vmatprep.mubr.f32.mxu0 0.0
        %3343 = vmatmul.mubr.f32.gmra.mrb[0].mxu0 %v2886
        %v3344 = vpop.f32.mrb[0].mxu0
        %v3345 = vadd.f32 0.0, %v3344
        %v3346 = vpop.f32.mrb[0].mxu0
        %3347 = vmatprep.mubr.f32.mxu0 0.0
        %3348 = vmatmul.mubr.f32.gmra.mrb[0].mxu0 %v2889
        %v3349 = vpop.f32.mrb[0].mxu0
        %v3350 = vadd.f32 0.0, %v3349
        %v3351 = vpop.f32.mrb[0].mxu0
        %3352 = vmatprep.mubr.f32.mxu0 0.0
        %3353 = vmatmul.mubr.f32.gmra.mrb[0].mxu0 %v2892
        %v3354 = vpop.f32.mrb[0].mxu0
        %v3355 = vadd.f32 0.0, %v3354
        %v3356 = vpop.f32.mrb[0].mxu0
        %3357 = vmatprep.mubr.f32.mxu0 0.0
        %3358 = vmatmul.mubr.f32.gmra.mrb[0].mxu0 %v2895
        %v3359 = vpop.f32.mrb[0].mxu0
        %v3360 = vadd.f32 0.0, %v3359
        %v3361 = vpop.f32.mrb[0].mxu0
        %3362 = vmatprep.mubr.f32.mxu0 0.0
        %3363 = vmatmul.mubr.f32.gmra.mrb[0].mxu0 %v2898
        %v3364 = vpop.f32.mrb[0].mxu0
        %v3365 = vadd.f32 0.0, %v3364
        %v3366 = vpop.f32.mrb[0].mxu0
        %3367 = vmatprep.mubr.f32.mxu0 0.0
        %3368 = vmatmul.mubr.f32.gmra.mrb[0].mxu0 %v2901
        %v3369 = vpop.f32.mrb[0].mxu0
        %v3370 = vadd.f32 0.0, %v3369
        %v3371 = vpop.f32.mrb[0].mxu0
        %3372 = vmatprep.mubr.f32.mxu0 0.0
        %3373 = vmatmul.mubr.f32.gmra.mrb[0].mxu0 %v2904
        %v3374 = vpop.f32.mrb[0].mxu0
        %v3375 = vadd.f32 0.0, %v3374
        %v3376 = vpop.f32.mrb[0].mxu0
        %3377 = vmatprep.mubr.f32.mxu0 0.0
        %3378 = vmatmul.mubr.f32.gmra.mrb[0].mxu0 %v2907
        %v3379 = vpop.f32.mrb[0].mxu0
        %v3380 = vadd.f32 0.0, %v3379
        %v3381 = vpop.f32.mrb[0].mxu0
        %3382 = vmatprep.mubr.f32.mxu0 0.0
        %3383 = vmatmul.mubr.f32.gmra.mrb[0].mxu0 %v2910
        %v3384 = vpop.f32.mrb[0].mxu0
        %v3385 = vadd.f32 0.0, %v3384
        %v3386 = vpop.f32.mrb[0].mxu0
        %3387 = vmatprep.mubr.f32.mxu0 0.0
        %3388 = vmatmul.mubr.f32.gmra.mrb[0].mxu0 %v2913
        %v3389 = vpop.f32.mrb[0].mxu0
        %v3390 = vadd.f32 0.0, %v3389
        %v3391 = vpop.f32.mrb[0].mxu0
        %3392 = vmatprep.mubr.f32.mxu0 0.0
        %3393 = vmatmul.mubr.f32.gmra.mrb[0].mxu0 %v2916
        %v3394 = vpop.f32.mrb[0].mxu0
        %v3395 = vadd.f32 0.0, %v3394
        %v3396 = vpop.f32.mrb[0].mxu0
        %3397 = vmatprep.mubr.f32.mxu0 0.0
        %3398 = vmatmul.mubr.f32.gmra.mrb[0].mxu0 %v2919
        %v3399 = vpop.f32.mrb[0].mxu0
        %v3400 = vadd.f32 0.0, %v3399
        %v3401 = vpop.f32.mrb[0].mxu0
        %3402 = vmatprep.mubr.f32.mxu0 0.0
        %3403 = vmatmul.mubr.f32.gmra.mrb[0].mxu0 %v2922
        %v3404 = vpop.f32.mrb[0].mxu0
        %v3405 = vadd.f32 0.0, %v3404
        %v3406 = vpop.f32.mrb[0].mxu0
        %3407 = vmatprep.mubr.f32.mxu0 0.0
        %3408 = vmatmul.mubr.f32.gmra.mrb[0].mxu0 %v2925
        %v3409 = vpop.f32.mrb[0].mxu0
        %v3410 = vadd.f32 0.0, %v3409
        %v3411 = vpop.f32.mrb[0].mxu0
        %3412 = vmatprep.mubr.f32.mxu0 0.0
        %3413 = vmatmul.mubr.f32.gmra.mrb[0].mxu0 %v2928
        %v3414 = vpop.f32.mrb[0].mxu0
        %v3415 = vadd.f32 0.0, %v3414
        %v3416 = vpop.f32.mrb[0].mxu0
        %3417 = vmatprep.mubr.f32.mxu0 0.0
        %3418 = vmatmul.mubr.f32.gmra.mrb[0].mxu0 %v2931
        %v3419 = vpop.f32.mrb[0].mxu0
        %v3420 = vadd.f32 0.0, %v3419
        %v3421 = vpop.f32.mrb[0].mxu0
        %3422 = vmatprep.mubr.f32.mxu0 0.0
        %3423 = vmatmul.mubr.f32.gmra.mrb[0].mxu0 %v2934
        %v3424 = vpop.f32.mrb[0].mxu0
        %v3425 = vadd.f32 0.0, %v3424
        %v3426 = vpop.f32.mrb[0].mxu0
        %3427 = vmatprep.mubr.f32.mxu0 0.0
        %3428 = vmatmul.mubr.f32.gmra.mrb[0].mxu0 %v2937
        %v3429 = vpop.f32.mrb[0].mxu0
        %v3430 = vadd.f32 0.0, %v3429
        %v3431 = vpop.f32.mrb[0].mxu0
        %3432 = vmatprep.mubr.f32.mxu0 0.0
        %3433 = vmatmul.mubr.f32.gmra.mrb[0].mxu0 %v2940
        %v3434 = vpop.f32.mrb[0].mxu0
        %v3435 = vadd.f32 0.0, %v3434
        %v3436 = vpop.f32.mrb[0].mxu0
        %3437 = vmatprep.mubr.f32.mxu0 0.0
        %3438 = vmatmul.mubr.f32.gmra.mrb[0].mxu0 %v2943
        %v3439 = vpop.f32.mrb[0].mxu0
        %v3440 = vadd.f32 0.0, %v3439
        %v3441 = vpop.f32.mrb[0].mxu0
        %3442 = vmatprep.mubr.f32.mxu0 0.0
        %3443 = vmatmul.mubr.f32.gmra.mrb[0].mxu0 %v2946
        %v3444 = vpop.f32.mrb[0].mxu0
        %v3445 = vadd.f32 0.0, %v3444
        %v3446 = vpop.f32.mrb[0].mxu0
        %3447 = vmatprep.mubr.f32.mxu0 0.0
        %3448 = vmatmul.mubr.f32.gmra.mrb[0].mxu0 %v2949
        %v3449 = vpop.f32.mrb[0].mxu0
        %v3450 = vadd.f32 0.0, %v3449
        %v3451 = vpop.f32.mrb[0].mxu0
        %3452 = vmatprep.mubr.f32.mxu0 0.0
        %3453 = vmatmul.mubr.f32.gmra.mrb[0].mxu0 %v2952
        %v3454 = vpop.f32.mrb[0].mxu0
        %v3455 = vadd.f32 0.0, %v3454
        %v3456 = vpop.f32.mrb[0].mxu0
        %3457 = vmatprep.mubr.f32.mxu0 0.0
        %3458 = vmatmul.mubr.f32.gmra.mrb[0].mxu0 %v2955
        %v3459 = vpop.f32.mrb[0].mxu0
        %v3460 = vadd.f32 0.0, %v3459
        %v3461 = vpop.f32.mrb[0].mxu0
        %3462 = vmatprep.mubr.f32.mxu0 0.0
        %3463 = vmatmul.mubr.f32.gmra.mrb[0].mxu0 %v2958
        %v3464 = vpop.f32.mrb[0].mxu0
        %v3465 = vadd.f32 0.0, %v3464
        %v3466 = vpop.f32.mrb[0].mxu0
        %3467 = vmatprep.mubr.f32.mxu0 0.0
        %3468 = vmatmul.mubr.f32.gmra.mrb[0].mxu0 %v2961
        %v3469 = vpop.f32.mrb[0].mxu0
        %v3470 = vadd.f32 0.0, %v3469
        %v3471 = vpop.f32.mrb[0].mxu0
        %3472 = vmatprep.mubr.f32.mxu0 0.0
        %3473 = vmatmul.mubr.f32.gmra.mrb[0].mxu0 %v2964
        %v3474 = vpop.f32.mrb[0].mxu0
        %v3475 = vadd.f32 0.0, %v3474
        %v3476 = vpop.f32.mrb[0].mxu0
        %3477 = vmatprep.mubr.f32.mxu0 0.0
        %3478 = vmatmul.mubr.f32.gmra.mrb[0].mxu0 %v2967
        %v3479 = vpop.f32.mrb[0].mxu0
        %v3480 = vadd.f32 0.0, %v3479
        %v3481 = vpop.f32.mrb[0].mxu0
        %3482 = vmatprep.mubr.f32.mxu0 0.0
        %3483 = vmatmul.mubr.f32.gmra.mrb[0].mxu0 %v2970
        %v3484 = vpop.f32.mrb[0].mxu0
        %v3485 = vadd.f32 0.0, %v3484
        %v3486 = vpop.f32.mrb[0].mxu0
        %3487 = vmatprep.mubr.f32.mxu0 0.0
        %3488 = vmatmul.mubr.f32.gmra.mrb[0].mxu0 %v2973
        %v3489 = vpop.f32.mrb[0].mxu0
        %v3490 = vadd.f32 0.0, %v3489
        %v3491 = vpop.f32.mrb[0].mxu0
        %3492 = vmatprep.mubr.f32.mxu0 0.0
        %3493 = vmatmul.mubr.f32.gmra.mrb[0].mxu0 %v2976
        %v3494 = vpop.f32.mrb[0].mxu0
        %v3495 = vadd.f32 0.0, %v3494
        %v3496 = vpop.f32.mrb[0].mxu0
        %3497 = vmatprep.mubr.f32.mxu0 0.0
        %3498 = vmatmul.mubr.f32.gmra.mrb[0].mxu0 %v2979
        %v3499 = vpop.f32.mrb[0].mxu0
        %v3500 = vadd.f32 0.0, %v3499
        %v3501 = vpop.f32.mrb[0].mxu0
        %3502 = vmatprep.mubr.f32.mxu0 0.0
        %3503 = vmatmul.mubr.f32.gmra.mrb[0].mxu0 %v2982
        %v3504 = vpop.f32.mrb[0].mxu0
        %v3505 = vadd.f32 0.0, %v3504
        %v3506 = vpop.f32.mrb[0].mxu0
        %3507 = vmatprep.mubr.f32.mxu0 0.0
        %3508 = vmatmul.mubr.f32.gmra.mrb[0].mxu0 %v2985
        %v3509 = vpop.f32.mrb[0].mxu0
        %v3510 = vadd.f32 0.0, %v3509
        %v3511 = vpop.f32.mrb[0].mxu0
        %3512 = vmatprep.mubr.f32.mxu0 0.0
        %3513 = vmatmul.mubr.f32.gmra.mrb[0].mxu0 %v2988
        %v3514 = vpop.f32.mrb[0].mxu0
        %v3515 = vadd.f32 0.0, %v3514
        %v3516 = vpop.f32.mrb[0].mxu0
        %3517 = vmatprep.mubr.f32.mxu0 0.0
        %3518 = vmatmul.mubr.f32.gmra.mrb[0].mxu0 %v2991
        %v3519 = vpop.f32.mrb[0].mxu0
        %v3520 = vadd.f32 0.0, %v3519
        %v3521 = vpop.f32.mrb[0].mxu0
        %3522 = vmatprep.mubr.f32.mxu0 0.0
        %3523 = vmatmul.mubr.f32.gmra.mrb[0].mxu0 %v2994
        %v3524 = vpop.f32.mrb[0].mxu0
        %v3525 = vadd.f32 0.0, %v3524
        %v3526 = vpop.f32.mrb[0].mxu0
        %3527 = vmatprep.mubr.f32.mxu0 0.0
        %3528 = vmatmul.mubr.f32.gmra.mrb[0].mxu0 %v2997
        %v3529 = vpop.f32.mrb[0].mxu0
        %v3530 = vadd.f32 0.0, %v3529
        %v3531 = vpop.f32.mrb[0].mxu0
        %3532 = vmatprep.mubr.f32.mxu0 0.0
        %3533 = vmatmul.mubr.f32.gmra.mrb[0].mxu0 %v3000
        %v3534 = vpop.f32.mrb[0].mxu0
        %v3535 = vadd.f32 0.0, %v3534
        %v3536 = vpop.f32.mrb[0].mxu0
        %3537 = vmatprep.mubr.f32.mxu0 0.0
        %3538 = vmatmul.mubr.f32.gmra.mrb[0].mxu0 %v3003
        %v3539 = vpop.f32.mrb[0].mxu0
        %v3540 = vadd.f32 0.0, %v3539
        %v3541 = vpop.f32.mrb[0].mxu0
        %3542 = vmatprep.mubr.f32.mxu0 0.0
        %3543 = vmatmul.mubr.f32.gmra.mrb[0].mxu0 %v3006
        %v3544 = vpop.f32.mrb[0].mxu0
        %v3545 = vadd.f32 0.0, %v3544
        %v3546 = vpop.f32.mrb[0].mxu0
        %3547 = vmatprep.mubr.f32.mxu0 0.0
        %3548 = vmatmul.mubr.f32.gmra.mrb[0].mxu0 %v3009
        %v3549 = vpop.f32.mrb[0].mxu0
        %v3550 = vadd.f32 0.0, %v3549
        %v3551 = vpop.f32.mrb[0].mxu0
        %3552 = vmatprep.mubr.f32.mxu0 0.0
        %3553 = vmatmul.mubr.f32.gmra.mrb[0].mxu0 %v3012
        %v3554 = vpop.f32.mrb[0].mxu0
        %v3555 = vadd.f32 0.0, %v3554
        %v3556 = vpop.f32.mrb[0].mxu0
        %3557 = vmatprep.mubr.f32.mxu0 0.0
        %3558 = vmatmul.mubr.f32.gmra.mrb[0].mxu0 %v3015
        %v3559 = vpop.f32.mrb[0].mxu0
        %v3560 = vadd.f32 0.0, %v3559
        %v3561 = vpop.f32.mrb[0].mxu0
        %3562 = vmatprep.mubr.f32.mxu0 0.0
        %3563 = vmatmul.mubr.f32.gmra.mrb[0].mxu0 %v3018
        %v3564 = vpop.f32.mrb[0].mxu0
        %v3565 = vadd.f32 0.0, %v3564
        %v3566 = vpop.f32.mrb[0].mxu0
        %3567 = vmatprep.mubr.f32.mxu0 0.0
        %3568 = vmatmul.mubr.f32.gmra.mrb[0].mxu0 %v3021
        %v3569 = vpop.f32.mrb[0].mxu0
        %v3570 = vadd.f32 0.0, %v3569
        %v3571 = vpop.f32.mrb[0].mxu0
        %3572 = vmatprep.mubr.f32.mxu0 0.0
        %3573 = vmatmul.mubr.f32.gmra.mrb[0].mxu0 %v3024
        %v3574 = vpop.f32.mrb[0].mxu0
        %v3575 = vadd.f32 0.0, %v3574
        %v3576 = vpop.f32.mrb[0].mxu0
        %3577 = vmatprep.mubr.f32.mxu0 0.0
        %3578 = vmatmul.mubr.f32.gmra.mrb[0].mxu0 %v3027
        %v3579 = vpop.f32.mrb[0].mxu0
        %v3580 = vadd.f32 0.0, %v3579
        %v3581 = vpop.f32.mrb[0].mxu0
        %3582 = vmatprep.mubr.f32.mxu0 0.0
        %3583 = vmatmul.mubr.f32.gmra.mrb[0].mxu0 %v3030
        %v3584 = vpop.f32.mrb[0].mxu0
        %v3585 = vadd.f32 0.0, %v3584
        %v3586 = vpop.f32.mrb[0].mxu0
        %3587 = vmatprep.mubr.f32.mxu0 0.0
        %3588 = vmatmul.mubr.f32.gmra.mrb[0].mxu0 %v3033
        %v3589 = vpop.f32.mrb[0].mxu0
        %v3590 = vadd.f32 0.0, %v3589
        %v3591 = vpop.f32.mrb[0].mxu0
        %3592 = vmatprep.mubr.f32.mxu0 0.0
        %3593 = vmatmul.mubr.f32.gmra.mrb[0].mxu0 %v3036
        %v3594 = vpop.f32.mrb[0].mxu0
        %v3595 = vadd.f32 0.0, %v3594
        %v3596 = vpop.f32.mrb[0].mxu0
        %3597 = vmatprep.mubr.f32.mxu0 0.0
        %3598 = vmatmul.mubr.f32.gmra.mrb[0].mxu0 %v3039
        %v3599 = vpop.f32.mrb[0].mxu0
        %v3600 = vadd.f32 0.0, %v3599
        %v3601 = vpop.f32.mrb[0].mxu0
        %3602 = vmatprep.mubr.f32.mxu0 0.0
        %3603 = vmatmul.mubr.f32.gmra.mrb[0].mxu0 %v3042
        %v3604 = vpop.f32.mrb[0].mxu0
        %v3605 = vadd.f32 0.0, %v3604
        %v3606 = vpop.f32.mrb[0].mxu0
        %3607 = vmatprep.mubr.f32.mxu0 0.0
        %3608 = vmatmul.mubr.f32.gmra.mrb[0].mxu0 %v3045
        %v3609 = vpop.f32.mrb[0].mxu0
        %v3610 = vadd.f32 0.0, %v3609
        %v3611 = vpop.f32.mrb[0].mxu0
        %3612 = vmatprep.mubr.f32.mxu0 0.0
        %3613 = vmatmul.mubr.f32.gmra.mrb[0].mxu0 %v3048
        %v3614 = vpop.f32.mrb[0].mxu0
        %v3615 = vadd.f32 0.0, %v3614
        %v3616 = vpop.f32.mrb[0].mxu0
        %3617 = vmatprep.mubr.f32.mxu0 0.0
        %3618 = vmatmul.mubr.f32.gmra.mrb[0].mxu0 %v3051
        %v3619 = vpop.f32.mrb[0].mxu0
        %v3620 = vadd.f32 0.0, %v3619
        %v3621 = vpop.f32.mrb[0].mxu0
        %3622 = vmatprep.mubr.f32.mxu0 0.0
        %3623 = vmatmul.mubr.f32.gmra.mrb[0].mxu0 %v3054
        %v3624 = vpop.f32.mrb[0].mxu0
        %v3625 = vadd.f32 0.0, %v3624
        %v3626 = vpop.f32.mrb[0].mxu0
        %3627 = vmatprep.mubr.f32.mxu0 0.0
        %3628 = vmatmul.mubr.f32.gmra.mrb[0].mxu0 %v3057
        %v3629 = vpop.f32.mrb[0].mxu0
        %v3630 = vadd.f32 0.0, %v3629
        %v3631 = vpop.f32.mrb[0].mxu0
        %3632 = vmatprep.mubr.f32.mxu0 0.0
        %3633 = vmatmul.mubr.f32.gmra.mrb[0].mxu0 %v3060
        %v3634 = vpop.f32.mrb[0].mxu0
        %v3635 = vadd.f32 0.0, %v3634
        %v3636 = vpop.f32.mrb[0].mxu0
        %3637 = vmatprep.mubr.f32.mxu0 0.0
        %3638 = vmatmul.mubr.f32.gmra.mrb[0].mxu0 %v3063
        %v3639 = vpop.f32.mrb[0].mxu0
        %v3640 = vadd.f32 0.0, %v3639
        %v3641 = vpop.f32.mrb[0].mxu0
        %3642 = vmatprep.mubr.f32.mxu0 0.0
        %3643 = vmatmul.mubr.f32.gmra.mrb[0].mxu0 %v3066
        %v3644 = vpop.f32.mrb[0].mxu0
        %v3645 = vadd.f32 0.0, %v3644
        %v3646 = vpop.f32.mrb[0].mxu0
        %3647 = vmatprep.mubr.f32.mxu0 0.0
        %3648 = vmatmul.mubr.f32.gmra.mrb[0].mxu0 %v3069
        %v3649 = vpop.f32.mrb[0].mxu0
        %v3650 = vadd.f32 0.0, %v3649
        %v3651 = vpop.f32.mrb[0].mxu0
        %3652 = vmatprep.mubr.f32.mxu0 0.0
        %3653 = vmatmul.mubr.f32.gmra.mrb[0].mxu0 %v3072
        %v3654 = vpop.f32.mrb[0].mxu0
        %v3655 = vadd.f32 0.0, %v3654
        %v3656 = vpop.f32.mrb[0].mxu0
        %3657 = vmatprep.mubr.f32.mxu0 0.0
        %3658 = vmatmul.mubr.f32.gmra.mrb[0].mxu0 %v3075
        %v3659 = vpop.f32.mrb[0].mxu0
        %v3660 = vadd.f32 0.0, %v3659
        %v3661 = vpop.f32.mrb[0].mxu0
        %3662 = vmatprep.mubr.f32.mxu0 0.0
        %3663 = vmatmul.mubr.f32.gmra.mrb[0].mxu0 %v3078
        %v3664 = vpop.f32.mrb[0].mxu0
        %v3665 = vadd.f32 0.0, %v3664
        %v3666 = vpop.f32.mrb[0].mxu0
        %3667 = vmatprep.mubr.f32.mxu0 0.0
        %3668 = vmatmul.mubr.f32.gmra.mrb[0].mxu0 %v3081
        %v3669 = vpop.f32.mrb[0].mxu0
        %v3670 = vadd.f32 0.0, %v3669
        %v3671 = vpop.f32.mrb[0].mxu0
        %3672 = vmatprep.mubr.f32.mxu0 0.0
        %3673 = vmatmul.mubr.f32.gmra.mrb[0].mxu0 %v3084
        %v3674 = vpop.f32.mrb[0].mxu0
        %v3675 = vadd.f32 0.0, %v3674
        %v3676 = vpop.f32.mrb[0].mxu0
        %3677 = vmatprep.mubr.f32.mxu0 0.0
        %3678 = vmatmul.mubr.f32.gmra.mrb[0].mxu0 %v3087
        %v3679 = vpop.f32.mrb[0].mxu0
        %v3680 = vadd.f32 0.0, %v3679
        %v3681 = vpop.f32.mrb[0].mxu0
        %3682 = vmatprep.mubr.f32.mxu0 0.0
        %3683 = vmatmul.mubr.f32.gmra.mrb[0].mxu0 %v3090
        %v3684 = vpop.f32.mrb[0].mxu0
        %v3685 = vadd.f32 0.0, %v3684
        %v3686 = vpop.f32.mrb[0].mxu0
        %3687 = vmatprep.mubr.f32.mxu0 0.0
        %3688 = vmatmul.mubr.f32.gmra.mrb[0].mxu0 %v3093
        %v3689 = vpop.f32.mrb[0].mxu0
        %v3690 = vadd.f32 0.0, %v3689
        %v3691 = vpop.f32.mrb[0].mxu0
        %3692 = vmatprep.mubr.f32.mxu0 0.0
        %3693 = vmatmul.mubr.f32.gmra.mrb[0].mxu0 %v3096
        %v3694 = vpop.f32.mrb[0].mxu0
        %v3695 = vadd.f32 0.0, %v3694
        %v3696 = vpop.f32.mrb[0].mxu0
        %3697 = vmatprep.mubr.f32.mxu0 0.0
        %3698 = vmatmul.mubr.f32.gmra.mrb[0].mxu0 %v3099
        %v3699 = vpop.f32.mrb[0].mxu0
        %v3700 = vadd.f32 0.0, %v3699
        %v3701 = vpop.f32.mrb[0].mxu0
        %3702 = vmatprep.mubr.f32.mxu0 0.0
        %3703 = vmatmul.mubr.f32.gmra.mrb[0].mxu0 %v3102
        %v3704 = vpop.f32.mrb[0].mxu0
        %v3705 = vadd.f32 0.0, %v3704
        %v3706 = vpop.f32.mrb[0].mxu0
        %3707 = vmatprep.mubr.f32.mxu0 0.0
        %3708 = vmatmul.mubr.f32.gmra.mrb[0].mxu0 %v3105
        %v3709 = vpop.f32.mrb[0].mxu0
        %v3710 = vadd.f32 0.0, %v3709
        %v3711 = vpop.f32.mrb[0].mxu0
        %3712 = vmatprep.mubr.f32.mxu0 0.0
        %3713 = vmatmul.mubr.f32.gmra.mrb[0].mxu0 %v3108
        %v3714 = vpop.f32.mrb[0].mxu0
        %v3715 = vadd.f32 0.0, %v3714
        %v3716 = vpop.f32.mrb[0].mxu0
        %3717 = vmatprep.mubr.f32.mxu0 0.0
        %3718 = vmatmul.mubr.f32.gmra.mrb[0].mxu0 %v3111
        %v3719 = vpop.f32.mrb[0].mxu0
        %v3720 = vadd.f32 0.0, %v3719
        %v3721 = vpop.f32.mrb[0].mxu0
        %3722 = vmatprep.mubr.f32.mxu0 0.0
        %3723 = vmatmul.mubr.f32.gmra.mrb[0].mxu0 %v3114
        %v3724 = vpop.f32.mrb[0].mxu0
        %v3725 = vadd.f32 0.0, %v3724
        %v3726 = vpop.f32.mrb[0].mxu0
        %3727 = vmatprep.mubr.f32.mxu0 0.0
        %3728 = vmatmul.mubr.f32.gmra.mrb[0].mxu0 %v3117
        %v3729 = vpop.f32.mrb[0].mxu0
        %v3730 = vadd.f32 0.0, %v3729
        %v3731 = vpop.f32.mrb[0].mxu0
        %3732 = vmatprep.mubr.f32.mxu0 0.0
        %3733 = vmatmul.mubr.f32.gmra.mrb[0].mxu0 %v3120
        %v3734 = vpop.f32.mrb[0].mxu0
        %v3735 = vadd.f32 0.0, %v3734
        %v3736 = vpop.f32.mrb[0].mxu0
        %3737 = vmatprep.mubr.f32.mxu0 0.0
        %3738 = vmatmul.mubr.f32.gmra.mrb[0].mxu0 %v3123
        %v3739 = vpop.f32.mrb[0].mxu0
        %v3740 = vadd.f32 0.0, %v3739
        %v3741 = vpop.f32.mrb[0].mxu0
        %3742 = vmatprep.mubr.f32.mxu0 0.0
        %3743 = vmatmul.mubr.f32.gmra.mrb[0].mxu0 %v3126
        %v3744 = vpop.f32.mrb[0].mxu0
        %v3745 = vadd.f32 0.0, %v3744
        %v3746 = vpop.f32.mrb[0].mxu0
        %3747 = vmatprep.mubr.f32.mxu0 0.0
        %3748 = vmatmul.mubr.f32.gmra.mrb[0].mxu0 %v3129
        %v3749 = vpop.f32.mrb[0].mxu0
        %v3750 = vadd.f32 0.0, %v3749
        %v3751 = vpop.f32.mrb[0].mxu0
        %3752 = vmatprep.mubr.f32.mxu0 0.0
        %3753 = vmatmul.mubr.f32.gmra.mrb[0].mxu0 %v3132
        %v3754 = vpop.f32.mrb[0].mxu0
        %v3755 = vadd.f32 0.0, %v3754
        %v3756 = vpop.f32.mrb[0].mxu0
        %3757 = vmatprep.mubr.f32.mxu0 0.0
        %3758 = vmatmul.mubr.f32.gmra.mrb[0].mxu0 %v3135
        %v3759 = vpop.f32.mrb[0].mxu0
        %v3760 = vadd.f32 0.0, %v3759
        %v3761 = vpop.f32.mrb[0].mxu0
        %3762 = vmatprep.mubr.f32.mxu0 0.0
        %3763 = vmatmul.mubr.f32.gmra.mrb[0].mxu0 %v3138
        %v3764 = vpop.f32.mrb[0].mxu0
        %v3765 = vadd.f32 0.0, %v3764
        %v3766 = vpop.f32.mrb[0].mxu0
        %3767 = vmatprep.mubr.f32.mxu0 0.0
        %3768 = vmatmul.mubr.f32.gmra.mrb[0].mxu0 %v3141
        %v3769 = vpop.f32.mrb[0].mxu0
        %v3770 = vadd.f32 0.0, %v3769
        %v3771 = vpop.f32.mrb[0].mxu0
        %3772 = vdwg.mxu0
        %v3773 = vld [vmem:[%s388] sm:$0xff]
        %v3774 = vld [vmem:[%s388 + $0x8] sm:$0xff]
        %v3775 = vld [vmem:[%s388 + $0x10] sm:$0xff]
        %v3776 = vld [vmem:[%s388 + $0x18] sm:$0xff]
        %v3777 = vld [vmem:[%s388 + $0x20] sm:$0xff]
        %v3778 = vld [vmem:[%s388 + $0x28] sm:$0xff]
        %v3779 = vld [vmem:[%s388 + $0x30] sm:$0xff]
        %v3780 = vld [vmem:[%s388 + $0x38] sm:$0xff]
        %v3781 = vld [vmem:[%s388 + $0x40] sm:$0xff]
        %v3782 = vld [vmem:[%s388 + $0x48] sm:$0xff]
        %v3783 = vld [vmem:[%s388 + $0x50] sm:$0xff]
        %v3784 = vld [vmem:[%s388 + $0x58] sm:$0xff]
        %v3785 = vld [vmem:[%s388 + $0x60] sm:$0xff]
        %v3786 = vld [vmem:[%s388 + $0x68] sm:$0xff]
        %v3787 = vld [vmem:[%s388 + $0x70] sm:$0xff]
        %v3788 = vld [vmem:[%s388 + $0x78] sm:$0xff]
        %v3789 = vld [vmem:[%s388 + $0x80] sm:$0xff]
        %v3790 = vld [vmem:[%s388 + $0x88] sm:$0xff]
        %v3791 = vld [vmem:[%s388 + $0x90] sm:$0xff]
        %v3792 = vld [vmem:[%s388 + $0x98] sm:$0xff]
        %v3793 = vld [vmem:[%s388 + $0xa0] sm:$0xff]
        %v3794 = vld [vmem:[%s388 + $0xa8] sm:$0xff]
        %v3795 = vld [vmem:[%s388 + $0xb0] sm:$0xff]
        %v3796 = vld [vmem:[%s388 + $0xb8] sm:$0xff]
        %v3797 = vld [vmem:[%s388 + $0xc0] sm:$0xff]
        %v3798 = vld [vmem:[%s388 + $0xc8] sm:$0xff]
        %v3799 = vld [vmem:[%s388 + $0xd0] sm:$0xff]
        %v3800 = vld [vmem:[%s388 + $0xd8] sm:$0xff]
        %v3801 = vld [vmem:[%s388 + $0xe0] sm:$0xff]
        %v3802 = vld [vmem:[%s388 + $0xe8] sm:$0xff]
        %v3803 = vld [vmem:[%s388 + $0xf0] sm:$0xff]
        %v3804 = vld [vmem:[%s388 + $0xf8] sm:$0xff]
        %v3805 = vld [vmem:[%s388 + $0x100] sm:$0xff]
        %v3806 = vld [vmem:[%s388 + $0x108] sm:$0xff]
        %v3807 = vld [vmem:[%s388 + $0x110] sm:$0xff]
        %v3808 = vld [vmem:[%s388 + $0x118] sm:$0xff]
        %v3809 = vld [vmem:[%s388 + $0x120] sm:$0xff]
        %v3810 = vld [vmem:[%s388 + $0x128] sm:$0xff]
        %v3811 = vld [vmem:[%s388 + $0x130] sm:$0xff]
        %v3812 = vld [vmem:[%s388 + $0x138] sm:$0xff]
        %v3813 = vld [vmem:[%s388 + $0x140] sm:$0xff]
        %v3814 = vld [vmem:[%s388 + $0x148] sm:$0xff]
        %v3815 = vld [vmem:[%s388 + $0x150] sm:$0xff]
        %v3816 = vld [vmem:[%s388 + $0x158] sm:$0xff]
        %v3817 = vld [vmem:[%s388 + $0x160] sm:$0xff]
        %v3818 = vld [vmem:[%s388 + $0x168] sm:$0xff]
        %v3819 = vld [vmem:[%s388 + $0x170] sm:$0xff]
        %v3820 = vld [vmem:[%s388 + $0x178] sm:$0xff]
        %v3821 = vld [vmem:[%s388 + $0x180] sm:$0xff]
        %v3822 = vld [vmem:[%s388 + $0x188] sm:$0xff]
        %v3823 = vld [vmem:[%s388 + $0x190] sm:$0xff]
        %v3824 = vld [vmem:[%s388 + $0x198] sm:$0xff]
        %v3825 = vld [vmem:[%s388 + $0x1a0] sm:$0xff]
        %v3826 = vld [vmem:[%s388 + $0x1a8] sm:$0xff]
        %v3827 = vld [vmem:[%s388 + $0x1b0] sm:$0xff]
        %v3828 = vld [vmem:[%s388 + $0x1b8] sm:$0xff]
        %v3829 = vld [vmem:[%s388 + $0x1c0] sm:$0xff]
        %v3830 = vld [vmem:[%s388 + $0x1c8] sm:$0xff]
        %v3831 = vld [vmem:[%s388 + $0x1d0] sm:$0xff]
        %v3832 = vld [vmem:[%s388 + $0x1d8] sm:$0xff]
        %v3833 = vld [vmem:[%s388 + $0x1e0] sm:$0xff]
        %v3834 = vld [vmem:[%s388 + $0x1e8] sm:$0xff]
        %v3835 = vld [vmem:[%s388 + $0x1f0] sm:$0xff]
        %v3836 = vld [vmem:[%s388 + $0x1f8] sm:$0xff]
        %v3837 = vld [vmem:[%s388 + $0x200] sm:$0xff]
        %v3838 = vld [vmem:[%s388 + $0x208] sm:$0xff]
        %v3839 = vld [vmem:[%s388 + $0x210] sm:$0xff]
        %v3840 = vld [vmem:[%s388 + $0x218] sm:$0xff]
        %v3841 = vld [vmem:[%s388 + $0x220] sm:$0xff]
        %v3842 = vld [vmem:[%s388 + $0x228] sm:$0xff]
        %v3843 = vld [vmem:[%s388 + $0x230] sm:$0xff]
        %v3844 = vld [vmem:[%s388 + $0x238] sm:$0xff]
        %v3845 = vld [vmem:[%s388 + $0x240] sm:$0xff]
        %v3846 = vld [vmem:[%s388 + $0x248] sm:$0xff]
        %v3847 = vld [vmem:[%s388 + $0x250] sm:$0xff]
        %v3848 = vld [vmem:[%s388 + $0x258] sm:$0xff]
        %v3849 = vld [vmem:[%s388 + $0x260] sm:$0xff]
        %v3850 = vld [vmem:[%s388 + $0x268] sm:$0xff]
        %v3851 = vld [vmem:[%s388 + $0x270] sm:$0xff]
        %v3852 = vld [vmem:[%s388 + $0x278] sm:$0xff]
        %v3853 = vld [vmem:[%s388 + $0x280] sm:$0xff]
        %v3854 = vld [vmem:[%s388 + $0x288] sm:$0xff]
        %v3855 = vld [vmem:[%s388 + $0x290] sm:$0xff]
        %v3856 = vld [vmem:[%s388 + $0x298] sm:$0xff]
        %v3857 = vld [vmem:[%s388 + $0x2a0] sm:$0xff]
        %v3858 = vld [vmem:[%s388 + $0x2a8] sm:$0xff]
        %v3859 = vld [vmem:[%s388 + $0x2b0] sm:$0xff]
        %v3860 = vld [vmem:[%s388 + $0x2b8] sm:$0xff]
        %v3861 = vld [vmem:[%s388 + $0x2c0] sm:$0xff]
        %v3862 = vld [vmem:[%s388 + $0x2c8] sm:$0xff]
        %v3863 = vld [vmem:[%s388 + $0x2d0] sm:$0xff]
        %v3864 = vld [vmem:[%s388 + $0x2d8] sm:$0xff]
        %v3865 = vld [vmem:[%s388 + $0x2e0] sm:$0xff]
        %v3866 = vld [vmem:[%s388 + $0x2e8] sm:$0xff]
        %v3867 = vld [vmem:[%s388 + $0x2f0] sm:$0xff]
        %v3868 = vld [vmem:[%s388 + $0x2f8] sm:$0xff]
        %v3869 = vld [vmem:[%s388 + $0x300] sm:$0xff]
        %v3870 = vld [vmem:[%s388 + $0x308] sm:$0xff]
        %v3871 = vld [vmem:[%s388 + $0x310] sm:$0xff]
        %v3872 = vld [vmem:[%s388 + $0x318] sm:$0xff]
        %v3873 = vld [vmem:[%s388 + $0x320] sm:$0xff]
        %v3874 = vld [vmem:[%s388 + $0x328] sm:$0xff]
        %v3875 = vld [vmem:[%s388 + $0x330] sm:$0xff]
        %v3876 = vld [vmem:[%s388 + $0x338] sm:$0xff]
        %v3877 = vld [vmem:[%s388 + $0x340] sm:$0xff]
        %v3878 = vld [vmem:[%s388 + $0x348] sm:$0xff]
        %v3879 = vld [vmem:[%s388 + $0x350] sm:$0xff]
        %v3880 = vld [vmem:[%s388 + $0x358] sm:$0xff]
        %v3881 = vld [vmem:[%s388 + $0x360] sm:$0xff]
        %v3882 = vld [vmem:[%s388 + $0x368] sm:$0xff]
        %v3883 = vld [vmem:[%s388 + $0x370] sm:$0xff]
        %v3884 = vld [vmem:[%s388 + $0x378] sm:$0xff]
        %v3885 = vld [vmem:[%s388 + $0x380] sm:$0xff]
        %v3887 = vsel %vm522, %v3773, 0
        %v3890 = vsel %vm522, %v3774, 0
        %v3893 = vsel %vm522, %v3775, 0
        %v3896 = vsel %vm522, %v3776, 0
        %v3899 = vsel %vm522, %v3777, 0
        %v3902 = vsel %vm522, %v3778, 0
        %v3905 = vsel %vm522, %v3779, 0
        %v3908 = vsel %vm522, %v3780, 0
        %v3911 = vsel %vm522, %v3781, 0
        %v3914 = vsel %vm522, %v3782, 0
        %v3917 = vsel %vm522, %v3783, 0
        %v3920 = vsel %vm522, %v3784, 0
        %v3923 = vsel %vm522, %v3785, 0
        %v3926 = vsel %vm522, %v3786, 0
        %v3929 = vsel %vm522, %v3787, 0
        %v3932 = vsel %vm522, %v3788, 0
        %v3935 = vsel %vm522, %v3789, 0
        %v3938 = vsel %vm522, %v3790, 0
        %v3941 = vsel %vm522, %v3791, 0
        %v3944 = vsel %vm522, %v3792, 0
        %v3947 = vsel %vm522, %v3793, 0
        %v3950 = vsel %vm522, %v3794, 0
        %v3953 = vsel %vm522, %v3795, 0
        %v3956 = vsel %vm522, %v3796, 0
        %v3959 = vsel %vm522, %v3797, 0
        %v3962 = vsel %vm522, %v3798, 0
        %v3965 = vsel %vm522, %v3799, 0
        %v3968 = vsel %vm522, %v3800, 0
        %v3971 = vsel %vm522, %v3801, 0
        %v3974 = vsel %vm522, %v3802, 0
        %v3977 = vsel %vm522, %v3803, 0
        %v3980 = vsel %vm522, %v3804, 0
        %v3983 = vsel %vm522, %v3805, 0
        %v3986 = vsel %vm522, %v3806, 0
        %v3989 = vsel %vm522, %v3807, 0
        %v3992 = vsel %vm522, %v3808, 0
        %v3995 = vsel %vm522, %v3809, 0
        %v3998 = vsel %vm522, %v3810, 0
        %v4001 = vsel %vm522, %v3811, 0
        %v4004 = vsel %vm522, %v3812, 0
        %v4007 = vsel %vm522, %v3813, 0
        %v4010 = vsel %vm522, %v3814, 0
        %v4013 = vsel %vm522, %v3815, 0
        %v4016 = vsel %vm522, %v3816, 0
        %v4019 = vsel %vm522, %v3817, 0
        %v4022 = vsel %vm522, %v3818, 0
        %v4025 = vsel %vm522, %v3819, 0
        %v4028 = vsel %vm522, %v3820, 0
        %v4031 = vsel %vm522, %v3821, 0
        %v4034 = vsel %vm522, %v3822, 0
        %v4037 = vsel %vm522, %v3823, 0
        %v4040 = vsel %vm522, %v3824, 0
        %v4043 = vsel %vm522, %v3825, 0
        %v4046 = vsel %vm522, %v3826, 0
        %v4049 = vsel %vm522, %v3827, 0
        %v4052 = vsel %vm522, %v3828, 0
        %v4055 = vsel %vm522, %v3829, 0
        %v4058 = vsel %vm522, %v3830, 0
        %v4061 = vsel %vm522, %v3831, 0
        %v4064 = vsel %vm522, %v3832, 0
        %v4067 = vsel %vm522, %v3833, 0
        %v4070 = vsel %vm522, %v3834, 0
        %v4073 = vsel %vm522, %v3835, 0
        %v4076 = vsel %vm522, %v3836, 0
        %v4079 = vsel %vm522, %v3837, 0
        %v4082 = vsel %vm522, %v3838, 0
        %v4085 = vsel %vm522, %v3839, 0
        %v4088 = vsel %vm522, %v3840, 0
        %v4091 = vsel %vm522, %v3841, 0
        %v4094 = vsel %vm522, %v3842, 0
        %v4097 = vsel %vm522, %v3843, 0
        %v4100 = vsel %vm522, %v3844, 0
        %v4103 = vsel %vm522, %v3845, 0
        %v4106 = vsel %vm522, %v3846, 0
        %v4109 = vsel %vm522, %v3847, 0
        %v4112 = vsel %vm522, %v3848, 0
        %v4115 = vsel %vm522, %v3849, 0
        %v4118 = vsel %vm522, %v3850, 0
        %v4121 = vsel %vm522, %v3851, 0
        %v4124 = vsel %vm522, %v3852, 0
        %v4127 = vsel %vm522, %v3853, 0
        %v4130 = vsel %vm522, %v3854, 0
        %v4133 = vsel %vm522, %v3855, 0
        %v4136 = vsel %vm522, %v3856, 0
        %v4139 = vsel %vm522, %v3857, 0
        %v4142 = vsel %vm522, %v3858, 0
        %v4145 = vsel %vm522, %v3859, 0
        %v4148 = vsel %vm522, %v3860, 0
        %v4151 = vsel %vm522, %v3861, 0
        %v4154 = vsel %vm522, %v3862, 0
        %v4157 = vsel %vm522, %v3863, 0
        %v4160 = vsel %vm522, %v3864, 0
        %v4163 = vsel %vm522, %v3865, 0
        %v4166 = vsel %vm522, %v3866, 0
        %v4169 = vsel %vm522, %v3867, 0
        %v4172 = vsel %vm522, %v3868, 0
        %v4175 = vsel %vm522, %v3869, 0
        %v4178 = vsel %vm522, %v3870, 0
        %v4181 = vsel %vm522, %v3871, 0
        %v4184 = vsel %vm522, %v3872, 0
        %v4187 = vsel %vm522, %v3873, 0
        %v4190 = vsel %vm522, %v3874, 0
        %v4193 = vsel %vm522, %v3875, 0
        %v4196 = vsel %vm522, %v3876, 0
        %v4199 = vsel %vm522, %v3877, 0
        %v4202 = vsel %vm522, %v3878, 0
        %v4205 = vsel %vm522, %v3879, 0
        %v4208 = vsel %vm522, %v3880, 0
        %v4211 = vsel %vm522, %v3881, 0
        %v4214 = vsel %vm522, %v3882, 0
        %v4217 = vsel %vm522, %v3883, 0
        %v4220 = vsel %vm522, %v3884, 0
        %v4223 = vsel %vm522, %v3885, 0
        %4225 = vmatprep.subr.mxu0 0.0
        %4226 = vmatpush1.msra.mxu0 %v512
        %4227 = vmatprep.subr.mxu0 0.0
        %4228 = vmatpush1.msra.mxu0 %v513
        %4229 = vmatprep.subr.mxu0 0.0
        %4230 = vmatpush1.msra.mxu0 %v514
        %4231 = vmatprep.subr.mxu0 0.0
        %4232 = vmatpush1.msra.mxu0 %v515
        %4233 = vmatprep.subr.mxu0 0.0
        %4234 = vmatpush1.msra.mxu0 %v516
        %4235 = vmatprep.subr.mxu0 0.0
        %4236 = vmatpush1.msra.mxu0 %v517
        %4237 = vmatprep.subr.mxu0 0.0
        %4238 = vmatpush1.msra.mxu0 %v518
        %4239 = vmatprep.subr.mxu0 0.0
        %4240 = vmatpush1.msra.mxu0 %v519
        %4241 = vmatprep.subr.mxu0 0.0
        %4242 = vmatpush1.msra.mxu0 %v520
        %4243 = vmatprep.subr.mxu0 0.0
        %4244 = vmatpush1.msra.mxu0 %v864
        %4245 = vmatprep.subr.mxu0 0.0
        %4246 = vmatpush1.msra.mxu0 0.0
        %4247 = vmatprep.subr.mxu0 0.0
        %4248 = vmatpush1.msra.mxu0 0.0
        %4249 = vmatprep.subr.mxu0 0.0
        %4250 = vmatpush1.msra.mxu0 0.0
        %4251 = vmatprep.subr.mxu0 0.0
        %4252 = vmatpush1.msra.mxu0 0.0
        %4253 = vmatprep.subr.mxu0 0.0
        %4254 = vmatpush1.msra.mxu0 0.0
        %4255 = vmatprep.subr.mxu0 0.0
        %4256 = vmatpush1.msra.mxu0 0.0
        %4257 = vmatprep.subr.mxu0 0.0
        %4258 = vmatpush1.msra.mxu0 0.0
        %4259 = vmatprep.subr.mxu0 0.0
        %4260 = vmatpush1.msra.mxu0 0.0
        %4261 = vmatprep.subr.mxu0 0.0
        %4262 = vmatpush1.msra.mxu0 0.0
        %4263 = vmatprep.subr.mxu0 0.0
        %4264 = vmatpush1.msra.mxu0 0.0
        %4265 = vmatprep.subr.mxu0 0.0
        %4266 = vmatpush1.msra.mxu0 0.0
        %4267 = vmatprep.subr.mxu0 0.0
        %4268 = vmatpush1.msra.mxu0 0.0
        %4269 = vmatprep.subr.mxu0 0.0
        %4270 = vmatpush1.msra.mxu0 0.0
        %4271 = vmatprep.subr.mxu0 0.0
        %4272 = vmatpush1.msra.mxu0 0.0
        %4273 = vmatprep.subr.mxu0 0.0
        %4274 = vmatpush1.msra.mxu0 0.0
        %4275 = vmatprep.subr.mxu0 0.0
        %4276 = vmatpush1.msra.mxu0 0.0
        %4277 = vmatprep.subr.mxu0 0.0
        %4278 = vmatpush1.msra.mxu0 0.0
        %4279 = vmatprep.subr.mxu0 0.0
        %4280 = vmatpush1.msra.mxu0 0.0
        %4281 = vmatprep.subr.mxu0 0.0
        %4282 = vmatpush1.msra.mxu0 0.0
        %4283 = vmatprep.subr.mxu0 0.0
        %4284 = vmatpush1.msra.mxu0 0.0
        %4285 = vmatprep.subr.mxu0 0.0
        %4286 = vmatpush1.msra.mxu0 0.0
        %4287 = vmatprep.subr.mxu0 0.0
        %4288 = vmatpush1.msra.mxu0 0.0
        %4289 = vmatprep.mubr.f32.mxu0 0.0
        %4290 = vmatmul.mubr.f32.gmra.mrb[0].mxu0 %v3887
        %v4291 = vpop.f32.mrb[0].mxu0
        %v4292 = vadd.f32 0.0, %v4291
        %v4293 = vpop.f32.mrb[0].mxu0
        %4294 = vmatprep.mubr.f32.mxu0 0.0
        %4295 = vmatmul.mubr.f32.gmra.mrb[0].mxu0 %v3890
        %v4296 = vpop.f32.mrb[0].mxu0
        %v4297 = vadd.f32 0.0, %v4296
        %v4298 = vpop.f32.mrb[0].mxu0
        %4299 = vmatprep.mubr.f32.mxu0 0.0
        %4300 = vmatmul.mubr.f32.gmra.mrb[0].mxu0 %v3893
        %v4301 = vpop.f32.mrb[0].mxu0
        %v4302 = vadd.f32 0.0, %v4301
        %v4303 = vpop.f32.mrb[0].mxu0
        %4304 = vmatprep.mubr.f32.mxu0 0.0
        %4305 = vmatmul.mubr.f32.gmra.mrb[0].mxu0 %v3896
        %v4306 = vpop.f32.mrb[0].mxu0
        %v4307 = vadd.f32 0.0, %v4306
        %v4308 = vpop.f32.mrb[0].mxu0
        %4309 = vmatprep.mubr.f32.mxu0 0.0
        %4310 = vmatmul.mubr.f32.gmra.mrb[0].mxu0 %v3899
        %v4311 = vpop.f32.mrb[0].mxu0
        %v4312 = vadd.f32 0.0, %v4311
        %v4313 = vpop.f32.mrb[0].mxu0
        %4314 = vmatprep.mubr.f32.mxu0 0.0
        %4315 = vmatmul.mubr.f32.gmra.mrb[0].mxu0 %v3902
        %v4316 = vpop.f32.mrb[0].mxu0
        %v4317 = vadd.f32 0.0, %v4316
        %v4318 = vpop.f32.mrb[0].mxu0
        %4319 = vmatprep.mubr.f32.mxu0 0.0
        %4320 = vmatmul.mubr.f32.gmra.mrb[0].mxu0 %v3905
        %v4321 = vpop.f32.mrb[0].mxu0
        %v4322 = vadd.f32 0.0, %v4321
        %v4323 = vpop.f32.mrb[0].mxu0
        %4324 = vmatprep.mubr.f32.mxu0 0.0
        %4325 = vmatmul.mubr.f32.gmra.mrb[0].mxu0 %v3908
        %v4326 = vpop.f32.mrb[0].mxu0
        %v4327 = vadd.f32 0.0, %v4326
        %v4328 = vpop.f32.mrb[0].mxu0
        %4329 = vmatprep.mubr.f32.mxu0 0.0
        %4330 = vmatmul.mubr.f32.gmra.mrb[0].mxu0 %v3911
        %v4331 = vpop.f32.mrb[0].mxu0
        %v4332 = vadd.f32 0.0, %v4331
        %v4333 = vpop.f32.mrb[0].mxu0
        %4334 = vmatprep.mubr.f32.mxu0 0.0
        %4335 = vmatmul.mubr.f32.gmra.mrb[0].mxu0 %v3914
        %v4336 = vpop.f32.mrb[0].mxu0
        %v4337 = vadd.f32 0.0, %v4336
        %v4338 = vpop.f32.mrb[0].mxu0
        %4339 = vmatprep.mubr.f32.mxu0 0.0
        %4340 = vmatmul.mubr.f32.gmra.mrb[0].mxu0 %v3917
        %v4341 = vpop.f32.mrb[0].mxu0
        %v4342 = vadd.f32 0.0, %v4341
        %v4343 = vpop.f32.mrb[0].mxu0
        %4344 = vmatprep.mubr.f32.mxu0 0.0
        %4345 = vmatmul.mubr.f32.gmra.mrb[0].mxu0 %v3920
        %v4346 = vpop.f32.mrb[0].mxu0
        %v4347 = vadd.f32 0.0, %v4346
        %v4348 = vpop.f32.mrb[0].mxu0
        %4349 = vmatprep.mubr.f32.mxu0 0.0
        %4350 = vmatmul.mubr.f32.gmra.mrb[0].mxu0 %v3923
        %v4351 = vpop.f32.mrb[0].mxu0
        %v4352 = vadd.f32 0.0, %v4351
        %v4353 = vpop.f32.mrb[0].mxu0
        %4354 = vmatprep.mubr.f32.mxu0 0.0
        %4355 = vmatmul.mubr.f32.gmra.mrb[0].mxu0 %v3926
        %v4356 = vpop.f32.mrb[0].mxu0
        %v4357 = vadd.f32 0.0, %v4356
        %v4358 = vpop.f32.mrb[0].mxu0
        %4359 = vmatprep.mubr.f32.mxu0 0.0
        %4360 = vmatmul.mubr.f32.gmra.mrb[0].mxu0 %v3929
        %v4361 = vpop.f32.mrb[0].mxu0
        %v4362 = vadd.f32 0.0, %v4361
        %v4363 = vpop.f32.mrb[0].mxu0
        %4364 = vmatprep.mubr.f32.mxu0 0.0
        %4365 = vmatmul.mubr.f32.gmra.mrb[0].mxu0 %v3932
        %v4366 = vpop.f32.mrb[0].mxu0
        %v4367 = vadd.f32 0.0, %v4366
        %v4368 = vpop.f32.mrb[0].mxu0
        %4369 = vmatprep.mubr.f32.mxu0 0.0
        %4370 = vmatmul.mubr.f32.gmra.mrb[0].mxu0 %v3935
        %v4371 = vpop.f32.mrb[0].mxu0
        %v4372 = vadd.f32 0.0, %v4371
        %v4373 = vpop.f32.mrb[0].mxu0
        %4374 = vmatprep.mubr.f32.mxu0 0.0
        %4375 = vmatmul.mubr.f32.gmra.mrb[0].mxu0 %v3938
        %v4376 = vpop.f32.mrb[0].mxu0
        %v4377 = vadd.f32 0.0, %v4376
        %v4378 = vpop.f32.mrb[0].mxu0
        %4379 = vmatprep.mubr.f32.mxu0 0.0
        %4380 = vmatmul.mubr.f32.gmra.mrb[0].mxu0 %v3941
        %v4381 = vpop.f32.mrb[0].mxu0
        %v4382 = vadd.f32 0.0, %v4381
        %v4383 = vpop.f32.mrb[0].mxu0
        %4384 = vmatprep.mubr.f32.mxu0 0.0
        %4385 = vmatmul.mubr.f32.gmra.mrb[0].mxu0 %v3944
        %v4386 = vpop.f32.mrb[0].mxu0
        %v4387 = vadd.f32 0.0, %v4386
        %v4388 = vpop.f32.mrb[0].mxu0
        %4389 = vmatprep.mubr.f32.mxu0 0.0
        %4390 = vmatmul.mubr.f32.gmra.mrb[0].mxu0 %v3947
        %v4391 = vpop.f32.mrb[0].mxu0
        %v4392 = vadd.f32 0.0, %v4391
        %v4393 = vpop.f32.mrb[0].mxu0
        %4394 = vmatprep.mubr.f32.mxu0 0.0
        %4395 = vmatmul.mubr.f32.gmra.mrb[0].mxu0 %v3950
        %v4396 = vpop.f32.mrb[0].mxu0
        %v4397 = vadd.f32 0.0, %v4396
        %v4398 = vpop.f32.mrb[0].mxu0
        %4399 = vmatprep.mubr.f32.mxu0 0.0
        %4400 = vmatmul.mubr.f32.gmra.mrb[0].mxu0 %v3953
        %v4401 = vpop.f32.mrb[0].mxu0
        %v4402 = vadd.f32 0.0, %v4401
        %v4403 = vpop.f32.mrb[0].mxu0
        %4404 = vmatprep.mubr.f32.mxu0 0.0
        %4405 = vmatmul.mubr.f32.gmra.mrb[0].mxu0 %v3956
        %v4406 = vpop.f32.mrb[0].mxu0
        %v4407 = vadd.f32 0.0, %v4406
        %v4408 = vpop.f32.mrb[0].mxu0
        %4409 = vmatprep.mubr.f32.mxu0 0.0
        %4410 = vmatmul.mubr.f32.gmra.mrb[0].mxu0 %v3959
        %v4411 = vpop.f32.mrb[0].mxu0
        %v4412 = vadd.f32 0.0, %v4411
        %v4413 = vpop.f32.mrb[0].mxu0
        %4414 = vmatprep.mubr.f32.mxu0 0.0
        %4415 = vmatmul.mubr.f32.gmra.mrb[0].mxu0 %v3962
        %v4416 = vpop.f32.mrb[0].mxu0
        %v4417 = vadd.f32 0.0, %v4416
        %v4418 = vpop.f32.mrb[0].mxu0
        %4419 = vmatprep.mubr.f32.mxu0 0.0
        %4420 = vmatmul.mubr.f32.gmra.mrb[0].mxu0 %v3965
        %v4421 = vpop.f32.mrb[0].mxu0
        %v4422 = vadd.f32 0.0, %v4421
        %v4423 = vpop.f32.mrb[0].mxu0
        %4424 = vmatprep.mubr.f32.mxu0 0.0
        %4425 = vmatmul.mubr.f32.gmra.mrb[0].mxu0 %v3968
        %v4426 = vpop.f32.mrb[0].mxu0
        %v4427 = vadd.f32 0.0, %v4426
        %v4428 = vpop.f32.mrb[0].mxu0
        %4429 = vmatprep.mubr.f32.mxu0 0.0
        %4430 = vmatmul.mubr.f32.gmra.mrb[0].mxu0 %v3971
        %v4431 = vpop.f32.mrb[0].mxu0
        %v4432 = vadd.f32 0.0, %v4431
        %v4433 = vpop.f32.mrb[0].mxu0
        %4434 = vmatprep.mubr.f32.mxu0 0.0
        %4435 = vmatmul.mubr.f32.gmra.mrb[0].mxu0 %v3974
        %v4436 = vpop.f32.mrb[0].mxu0
        %v4437 = vadd.f32 0.0, %v4436
        %v4438 = vpop.f32.mrb[0].mxu0
        %4439 = vmatprep.mubr.f32.mxu0 0.0
        %4440 = vmatmul.mubr.f32.gmra.mrb[0].mxu0 %v3977
        %v4441 = vpop.f32.mrb[0].mxu0
        %v4442 = vadd.f32 0.0, %v4441
        %v4443 = vpop.f32.mrb[0].mxu0
        %4444 = vmatprep.mubr.f32.mxu0 0.0
        %4445 = vmatmul.mubr.f32.gmra.mrb[0].mxu0 %v3980
        %v4446 = vpop.f32.mrb[0].mxu0
        %v4447 = vadd.f32 0.0, %v4446
        %v4448 = vpop.f32.mrb[0].mxu0
        %4449 = vmatprep.mubr.f32.mxu0 0.0
        %4450 = vmatmul.mubr.f32.gmra.mrb[0].mxu0 %v3983
        %v4451 = vpop.f32.mrb[0].mxu0
        %v4452 = vadd.f32 0.0, %v4451
        %v4453 = vpop.f32.mrb[0].mxu0
        %4454 = vmatprep.mubr.f32.mxu0 0.0
        %4455 = vmatmul.mubr.f32.gmra.mrb[0].mxu0 %v3986
        %v4456 = vpop.f32.mrb[0].mxu0
        %v4457 = vadd.f32 0.0, %v4456
        %v4458 = vpop.f32.mrb[0].mxu0
        %4459 = vmatprep.mubr.f32.mxu0 0.0
        %4460 = vmatmul.mubr.f32.gmra.mrb[0].mxu0 %v3989
        %v4461 = vpop.f32.mrb[0].mxu0
        %v4462 = vadd.f32 0.0, %v4461
        %v4463 = vpop.f32.mrb[0].mxu0
        %4464 = vmatprep.mubr.f32.mxu0 0.0
        %4465 = vmatmul.mubr.f32.gmra.mrb[0].mxu0 %v3992
        %v4466 = vpop.f32.mrb[0].mxu0
        %v4467 = vadd.f32 0.0, %v4466
        %v4468 = vpop.f32.mrb[0].mxu0
        %4469 = vmatprep.mubr.f32.mxu0 0.0
        %4470 = vmatmul.mubr.f32.gmra.mrb[0].mxu0 %v3995
        %v4471 = vpop.f32.mrb[0].mxu0
        %v4472 = vadd.f32 0.0, %v4471
        %v4473 = vpop.f32.mrb[0].mxu0
        %4474 = vmatprep.mubr.f32.mxu0 0.0
        %4475 = vmatmul.mubr.f32.gmra.mrb[0].mxu0 %v3998
        %v4476 = vpop.f32.mrb[0].mxu0
        %v4477 = vadd.f32 0.0, %v4476
        %v4478 = vpop.f32.mrb[0].mxu0
        %4479 = vmatprep.mubr.f32.mxu0 0.0
        %4480 = vmatmul.mubr.f32.gmra.mrb[0].mxu0 %v4001
        %v4481 = vpop.f32.mrb[0].mxu0
        %v4482 = vadd.f32 0.0, %v4481
        %v4483 = vpop.f32.mrb[0].mxu0
        %4484 = vmatprep.mubr.f32.mxu0 0.0
        %4485 = vmatmul.mubr.f32.gmra.mrb[0].mxu0 %v4004
        %v4486 = vpop.f32.mrb[0].mxu0
        %v4487 = vadd.f32 0.0, %v4486
        %v4488 = vpop.f32.mrb[0].mxu0
        %4489 = vmatprep.mubr.f32.mxu0 0.0
        %4490 = vmatmul.mubr.f32.gmra.mrb[0].mxu0 %v4007
        %v4491 = vpop.f32.mrb[0].mxu0
        %v4492 = vadd.f32 0.0, %v4491
        %v4493 = vpop.f32.mrb[0].mxu0
        %4494 = vmatprep.mubr.f32.mxu0 0.0
        %4495 = vmatmul.mubr.f32.gmra.mrb[0].mxu0 %v4010
        %v4496 = vpop.f32.mrb[0].mxu0
        %v4497 = vadd.f32 0.0, %v4496
        %v4498 = vpop.f32.mrb[0].mxu0
        %4499 = vmatprep.mubr.f32.mxu0 0.0
        %4500 = vmatmul.mubr.f32.gmra.mrb[0].mxu0 %v4013
        %v4501 = vpop.f32.mrb[0].mxu0
        %v4502 = vadd.f32 0.0, %v4501
        %v4503 = vpop.f32.mrb[0].mxu0
        %4504 = vmatprep.mubr.f32.mxu0 0.0
        %4505 = vmatmul.mubr.f32.gmra.mrb[0].mxu0 %v4016
        %v4506 = vpop.f32.mrb[0].mxu0
        %v4507 = vadd.f32 0.0, %v4506
        %v4508 = vpop.f32.mrb[0].mxu0
        %4509 = vmatprep.mubr.f32.mxu0 0.0
        %4510 = vmatmul.mubr.f32.gmra.mrb[0].mxu0 %v4019
        %v4511 = vpop.f32.mrb[0].mxu0
        %v4512 = vadd.f32 0.0, %v4511
        %v4513 = vpop.f32.mrb[0].mxu0
        %4514 = vmatprep.mubr.f32.mxu0 0.0
        %4515 = vmatmul.mubr.f32.gmra.mrb[0].mxu0 %v4022
        %v4516 = vpop.f32.mrb[0].mxu0
        %v4517 = vadd.f32 0.0, %v4516
        %v4518 = vpop.f32.mrb[0].mxu0
        %4519 = vmatprep.mubr.f32.mxu0 0.0
        %4520 = vmatmul.mubr.f32.gmra.mrb[0].mxu0 %v4025
        %v4521 = vpop.f32.mrb[0].mxu0
        %v4522 = vadd.f32 0.0, %v4521
        %v4523 = vpop.f32.mrb[0].mxu0
        %4524 = vmatprep.mubr.f32.mxu0 0.0
        %4525 = vmatmul.mubr.f32.gmra.mrb[0].mxu0 %v4028
        %v4526 = vpop.f32.mrb[0].mxu0
        %v4527 = vadd.f32 0.0, %v4526
        %v4528 = vpop.f32.mrb[0].mxu0
        %4529 = vmatprep.mubr.f32.mxu0 0.0
        %4530 = vmatmul.mubr.f32.gmra.mrb[0].mxu0 %v4031
        %v4531 = vpop.f32.mrb[0].mxu0
        %v4532 = vadd.f32 0.0, %v4531
        %v4533 = vpop.f32.mrb[0].mxu0
        %4534 = vmatprep.mubr.f32.mxu0 0.0
        %4535 = vmatmul.mubr.f32.gmra.mrb[0].mxu0 %v4034
        %v4536 = vpop.f32.mrb[0].mxu0
        %v4537 = vadd.f32 0.0, %v4536
        %v4538 = vpop.f32.mrb[0].mxu0
        %4539 = vmatprep.mubr.f32.mxu0 0.0
        %4540 = vmatmul.mubr.f32.gmra.mrb[0].mxu0 %v4037
        %v4541 = vpop.f32.mrb[0].mxu0
        %v4542 = vadd.f32 0.0, %v4541
        %v4543 = vpop.f32.mrb[0].mxu0
        %4544 = vmatprep.mubr.f32.mxu0 0.0
        %4545 = vmatmul.mubr.f32.gmra.mrb[0].mxu0 %v4040
        %v4546 = vpop.f32.mrb[0].mxu0
        %v4547 = vadd.f32 0.0, %v4546
        %v4548 = vpop.f32.mrb[0].mxu0
        %4549 = vmatprep.mubr.f32.mxu0 0.0
        %4550 = vmatmul.mubr.f32.gmra.mrb[0].mxu0 %v4043
        %v4551 = vpop.f32.mrb[0].mxu0
        %v4552 = vadd.f32 0.0, %v4551
        %v4553 = vpop.f32.mrb[0].mxu0
        %4554 = vmatprep.mubr.f32.mxu0 0.0
        %4555 = vmatmul.mubr.f32.gmra.mrb[0].mxu0 %v4046
        %v4556 = vpop.f32.mrb[0].mxu0
        %v4557 = vadd.f32 0.0, %v4556
        %v4558 = vpop.f32.mrb[0].mxu0
        %4559 = vmatprep.mubr.f32.mxu0 0.0
        %4560 = vmatmul.mubr.f32.gmra.mrb[0].mxu0 %v4049
        %v4561 = vpop.f32.mrb[0].mxu0
        %v4562 = vadd.f32 0.0, %v4561
        %v4563 = vpop.f32.mrb[0].mxu0
        %4564 = vmatprep.mubr.f32.mxu0 0.0
        %4565 = vmatmul.mubr.f32.gmra.mrb[0].mxu0 %v4052
        %v4566 = vpop.f32.mrb[0].mxu0
        %v4567 = vadd.f32 0.0, %v4566
        %v4568 = vpop.f32.mrb[0].mxu0
        %4569 = vmatprep.mubr.f32.mxu0 0.0
        %4570 = vmatmul.mubr.f32.gmra.mrb[0].mxu0 %v4055
        %v4571 = vpop.f32.mrb[0].mxu0
        %v4572 = vadd.f32 0.0, %v4571
        %v4573 = vpop.f32.mrb[0].mxu0
        %4574 = vmatprep.mubr.f32.mxu0 0.0
        %4575 = vmatmul.mubr.f32.gmra.mrb[0].mxu0 %v4058
        %v4576 = vpop.f32.mrb[0].mxu0
        %v4577 = vadd.f32 0.0, %v4576
        %v4578 = vpop.f32.mrb[0].mxu0
        %4579 = vmatprep.mubr.f32.mxu0 0.0
        %4580 = vmatmul.mubr.f32.gmra.mrb[0].mxu0 %v4061
        %v4581 = vpop.f32.mrb[0].mxu0
        %v4582 = vadd.f32 0.0, %v4581
        %v4583 = vpop.f32.mrb[0].mxu0
        %4584 = vmatprep.mubr.f32.mxu0 0.0
        %4585 = vmatmul.mubr.f32.gmra.mrb[0].mxu0 %v4064
        %v4586 = vpop.f32.mrb[0].mxu0
        %v4587 = vadd.f32 0.0, %v4586
        %v4588 = vpop.f32.mrb[0].mxu0
        %4589 = vmatprep.mubr.f32.mxu0 0.0
        %4590 = vmatmul.mubr.f32.gmra.mrb[0].mxu0 %v4067
        %v4591 = vpop.f32.mrb[0].mxu0
        %v4592 = vadd.f32 0.0, %v4591
        %v4593 = vpop.f32.mrb[0].mxu0
        %4594 = vmatprep.mubr.f32.mxu0 0.0
        %4595 = vmatmul.mubr.f32.gmra.mrb[0].mxu0 %v4070
        %v4596 = vpop.f32.mrb[0].mxu0
        %v4597 = vadd.f32 0.0, %v4596
        %v4598 = vpop.f32.mrb[0].mxu0
        %4599 = vmatprep.mubr.f32.mxu0 0.0
        %4600 = vmatmul.mubr.f32.gmra.mrb[0].mxu0 %v4073
        %v4601 = vpop.f32.mrb[0].mxu0
        %v4602 = vadd.f32 0.0, %v4601
        %v4603 = vpop.f32.mrb[0].mxu0
        %4604 = vmatprep.mubr.f32.mxu0 0.0
        %4605 = vmatmul.mubr.f32.gmra.mrb[0].mxu0 %v4076
        %v4606 = vpop.f32.mrb[0].mxu0
        %v4607 = vadd.f32 0.0, %v4606
        %v4608 = vpop.f32.mrb[0].mxu0
        %4609 = vmatprep.mubr.f32.mxu0 0.0
        %4610 = vmatmul.mubr.f32.gmra.mrb[0].mxu0 %v4079
        %v4611 = vpop.f32.mrb[0].mxu0
        %v4612 = vadd.f32 0.0, %v4611
        %v4613 = vpop.f32.mrb[0].mxu0
        %4614 = vmatprep.mubr.f32.mxu0 0.0
        %4615 = vmatmul.mubr.f32.gmra.mrb[0].mxu0 %v4082
        %v4616 = vpop.f32.mrb[0].mxu0
        %v4617 = vadd.f32 0.0, %v4616
        %v4618 = vpop.f32.mrb[0].mxu0
        %4619 = vmatprep.mubr.f32.mxu0 0.0
        %4620 = vmatmul.mubr.f32.gmra.mrb[0].mxu0 %v4085
        %v4621 = vpop.f32.mrb[0].mxu0
        %v4622 = vadd.f32 0.0, %v4621
        %v4623 = vpop.f32.mrb[0].mxu0
        %4624 = vmatprep.mubr.f32.mxu0 0.0
        %4625 = vmatmul.mubr.f32.gmra.mrb[0].mxu0 %v4088
        %v4626 = vpop.f32.mrb[0].mxu0
        %v4627 = vadd.f32 0.0, %v4626
        %v4628 = vpop.f32.mrb[0].mxu0
        %4629 = vmatprep.mubr.f32.mxu0 0.0
        %4630 = vmatmul.mubr.f32.gmra.mrb[0].mxu0 %v4091
        %v4631 = vpop.f32.mrb[0].mxu0
        %v4632 = vadd.f32 0.0, %v4631
        %v4633 = vpop.f32.mrb[0].mxu0
        %4634 = vmatprep.mubr.f32.mxu0 0.0
        %4635 = vmatmul.mubr.f32.gmra.mrb[0].mxu0 %v4094
        %v4636 = vpop.f32.mrb[0].mxu0
        %v4637 = vadd.f32 0.0, %v4636
        %v4638 = vpop.f32.mrb[0].mxu0
        %4639 = vmatprep.mubr.f32.mxu0 0.0
        %4640 = vmatmul.mubr.f32.gmra.mrb[0].mxu0 %v4097
        %v4641 = vpop.f32.mrb[0].mxu0
        %v4642 = vadd.f32 0.0, %v4641
        %v4643 = vpop.f32.mrb[0].mxu0
        %4644 = vmatprep.mubr.f32.mxu0 0.0
        %4645 = vmatmul.mubr.f32.gmra.mrb[0].mxu0 %v4100
        %v4646 = vpop.f32.mrb[0].mxu0
        %v4647 = vadd.f32 0.0, %v4646
        %v4648 = vpop.f32.mrb[0].mxu0
        %4649 = vmatprep.mubr.f32.mxu0 0.0
        %4650 = vmatmul.mubr.f32.gmra.mrb[0].mxu0 %v4103
        %v4651 = vpop.f32.mrb[0].mxu0
        %v4652 = vadd.f32 0.0, %v4651
        %v4653 = vpop.f32.mrb[0].mxu0
        %4654 = vmatprep.mubr.f32.mxu0 0.0
        %4655 = vmatmul.mubr.f32.gmra.mrb[0].mxu0 %v4106
        %v4656 = vpop.f32.mrb[0].mxu0
        %v4657 = vadd.f32 0.0, %v4656
        %v4658 = vpop.f32.mrb[0].mxu0
        %4659 = vmatprep.mubr.f32.mxu0 0.0
        %4660 = vmatmul.mubr.f32.gmra.mrb[0].mxu0 %v4109
        %v4661 = vpop.f32.mrb[0].mxu0
        %v4662 = vadd.f32 0.0, %v4661
        %v4663 = vpop.f32.mrb[0].mxu0
        %4664 = vmatprep.mubr.f32.mxu0 0.0
        %4665 = vmatmul.mubr.f32.gmra.mrb[0].mxu0 %v4112
        %v4666 = vpop.f32.mrb[0].mxu0
        %v4667 = vadd.f32 0.0, %v4666
        %v4668 = vpop.f32.mrb[0].mxu0
        %4669 = vmatprep.mubr.f32.mxu0 0.0
        %4670 = vmatmul.mubr.f32.gmra.mrb[0].mxu0 %v4115
        %v4671 = vpop.f32.mrb[0].mxu0
        %v4672 = vadd.f32 0.0, %v4671
        %v4673 = vpop.f32.mrb[0].mxu0
        %4674 = vmatprep.mubr.f32.mxu0 0.0
        %4675 = vmatmul.mubr.f32.gmra.mrb[0].mxu0 %v4118
        %v4676 = vpop.f32.mrb[0].mxu0
        %v4677 = vadd.f32 0.0, %v4676
        %v4678 = vpop.f32.mrb[0].mxu0
        %4679 = vmatprep.mubr.f32.mxu0 0.0
        %4680 = vmatmul.mubr.f32.gmra.mrb[0].mxu0 %v4121
        %v4681 = vpop.f32.mrb[0].mxu0
        %v4682 = vadd.f32 0.0, %v4681
        %v4683 = vpop.f32.mrb[0].mxu0
        %4684 = vmatprep.mubr.f32.mxu0 0.0
        %4685 = vmatmul.mubr.f32.gmra.mrb[0].mxu0 %v4124
        %v4686 = vpop.f32.mrb[0].mxu0
        %v4687 = vadd.f32 0.0, %v4686
        %v4688 = vpop.f32.mrb[0].mxu0
        %4689 = vmatprep.mubr.f32.mxu0 0.0
        %4690 = vmatmul.mubr.f32.gmra.mrb[0].mxu0 %v4127
        %v4691 = vpop.f32.mrb[0].mxu0
        %v4692 = vadd.f32 0.0, %v4691
        %v4693 = vpop.f32.mrb[0].mxu0
        %4694 = vmatprep.mubr.f32.mxu0 0.0
        %4695 = vmatmul.mubr.f32.gmra.mrb[0].mxu0 %v4130
        %v4696 = vpop.f32.mrb[0].mxu0
        %v4697 = vadd.f32 0.0, %v4696
        %v4698 = vpop.f32.mrb[0].mxu0
        %4699 = vmatprep.mubr.f32.mxu0 0.0
        %4700 = vmatmul.mubr.f32.gmra.mrb[0].mxu0 %v4133
        %v4701 = vpop.f32.mrb[0].mxu0
        %v4702 = vadd.f32 0.0, %v4701
        %v4703 = vpop.f32.mrb[0].mxu0
        %4704 = vmatprep.mubr.f32.mxu0 0.0
        %4705 = vmatmul.mubr.f32.gmra.mrb[0].mxu0 %v4136
        %v4706 = vpop.f32.mrb[0].mxu0
        %v4707 = vadd.f32 0.0, %v4706
        %v4708 = vpop.f32.mrb[0].mxu0
        %4709 = vmatprep.mubr.f32.mxu0 0.0
        %4710 = vmatmul.mubr.f32.gmra.mrb[0].mxu0 %v4139
        %v4711 = vpop.f32.mrb[0].mxu0
        %v4712 = vadd.f32 0.0, %v4711
        %v4713 = vpop.f32.mrb[0].mxu0
        %4714 = vmatprep.mubr.f32.mxu0 0.0
        %4715 = vmatmul.mubr.f32.gmra.mrb[0].mxu0 %v4142
        %v4716 = vpop.f32.mrb[0].mxu0
        %v4717 = vadd.f32 0.0, %v4716
        %v4718 = vpop.f32.mrb[0].mxu0
        %4719 = vmatprep.mubr.f32.mxu0 0.0
        %4720 = vmatmul.mubr.f32.gmra.mrb[0].mxu0 %v4145
        %v4721 = vpop.f32.mrb[0].mxu0
        %v4722 = vadd.f32 0.0, %v4721
        %v4723 = vpop.f32.mrb[0].mxu0
        %4724 = vmatprep.mubr.f32.mxu0 0.0
        %4725 = vmatmul.mubr.f32.gmra.mrb[0].mxu0 %v4148
        %v4726 = vpop.f32.mrb[0].mxu0
        %v4727 = vadd.f32 0.0, %v4726
        %v4728 = vpop.f32.mrb[0].mxu0
        %4729 = vmatprep.mubr.f32.mxu0 0.0
        %4730 = vmatmul.mubr.f32.gmra.mrb[0].mxu0 %v4151
        %v4731 = vpop.f32.mrb[0].mxu0
        %v4732 = vadd.f32 0.0, %v4731
        %v4733 = vpop.f32.mrb[0].mxu0
        %4734 = vmatprep.mubr.f32.mxu0 0.0
        %4735 = vmatmul.mubr.f32.gmra.mrb[0].mxu0 %v4154
        %v4736 = vpop.f32.mrb[0].mxu0
        %v4737 = vadd.f32 0.0, %v4736
        %v4738 = vpop.f32.mrb[0].mxu0
        %4739 = vmatprep.mubr.f32.mxu0 0.0
        %4740 = vmatmul.mubr.f32.gmra.mrb[0].mxu0 %v4157
        %v4741 = vpop.f32.mrb[0].mxu0
        %v4742 = vadd.f32 0.0, %v4741
        %v4743 = vpop.f32.mrb[0].mxu0
        %4744 = vmatprep.mubr.f32.mxu0 0.0
        %4745 = vmatmul.mubr.f32.gmra.mrb[0].mxu0 %v4160
        %v4746 = vpop.f32.mrb[0].mxu0
        %v4747 = vadd.f32 0.0, %v4746
        %v4748 = vpop.f32.mrb[0].mxu0
        %4749 = vmatprep.mubr.f32.mxu0 0.0
        %4750 = vmatmul.mubr.f32.gmra.mrb[0].mxu0 %v4163
        %v4751 = vpop.f32.mrb[0].mxu0
        %v4752 = vadd.f32 0.0, %v4751
        %v4753 = vpop.f32.mrb[0].mxu0
        %4754 = vmatprep.mubr.f32.mxu0 0.0
        %4755 = vmatmul.mubr.f32.gmra.mrb[0].mxu0 %v4166
        %v4756 = vpop.f32.mrb[0].mxu0
        %v4757 = vadd.f32 0.0, %v4756
        %v4758 = vpop.f32.mrb[0].mxu0
        %4759 = vmatprep.mubr.f32.mxu0 0.0
        %4760 = vmatmul.mubr.f32.gmra.mrb[0].mxu0 %v4169
        %v4761 = vpop.f32.mrb[0].mxu0
        %v4762 = vadd.f32 0.0, %v4761
        %v4763 = vpop.f32.mrb[0].mxu0
        %4764 = vmatprep.mubr.f32.mxu0 0.0
        %4765 = vmatmul.mubr.f32.gmra.mrb[0].mxu0 %v4172
        %v4766 = vpop.f32.mrb[0].mxu0
        %v4767 = vadd.f32 0.0, %v4766
        %v4768 = vpop.f32.mrb[0].mxu0
        %4769 = vmatprep.mubr.f32.mxu0 0.0
        %4770 = vmatmul.mubr.f32.gmra.mrb[0].mxu0 %v4175
        %v4771 = vpop.f32.mrb[0].mxu0
        %v4772 = vadd.f32 0.0, %v4771
        %v4773 = vpop.f32.mrb[0].mxu0
        %4774 = vmatprep.mubr.f32.mxu0 0.0
        %4775 = vmatmul.mubr.f32.gmra.mrb[0].mxu0 %v4178
        %v4776 = vpop.f32.mrb[0].mxu0
        %v4777 = vadd.f32 0.0, %v4776
        %v4778 = vpop.f32.mrb[0].mxu0
        %4779 = vmatprep.mubr.f32.mxu0 0.0
        %4780 = vmatmul.mubr.f32.gmra.mrb[0].mxu0 %v4181
        %v4781 = vpop.f32.mrb[0].mxu0
        %v4782 = vadd.f32 0.0, %v4781
        %v4783 = vpop.f32.mrb[0].mxu0
        %4784 = vmatprep.mubr.f32.mxu0 0.0
        %4785 = vmatmul.mubr.f32.gmra.mrb[0].mxu0 %v4184
        %v4786 = vpop.f32.mrb[0].mxu0
        %v4787 = vadd.f32 0.0, %v4786
        %v4788 = vpop.f32.mrb[0].mxu0
        %4789 = vmatprep.mubr.f32.mxu0 0.0
        %4790 = vmatmul.mubr.f32.gmra.mrb[0].mxu0 %v4187
        %v4791 = vpop.f32.mrb[0].mxu0
        %v4792 = vadd.f32 0.0, %v4791
        %v4793 = vpop.f32.mrb[0].mxu0
        %4794 = vmatprep.mubr.f32.mxu0 0.0
        %4795 = vmatmul.mubr.f32.gmra.mrb[0].mxu0 %v4190
        %v4796 = vpop.f32.mrb[0].mxu0
        %v4797 = vadd.f32 0.0, %v4796
        %v4798 = vpop.f32.mrb[0].mxu0
        %4799 = vmatprep.mubr.f32.mxu0 0.0
        %4800 = vmatmul.mubr.f32.gmra.mrb[0].mxu0 %v4193
        %v4801 = vpop.f32.mrb[0].mxu0
        %v4802 = vadd.f32 0.0, %v4801
        %v4803 = vpop.f32.mrb[0].mxu0
        %4804 = vmatprep.mubr.f32.mxu0 0.0
        %4805 = vmatmul.mubr.f32.gmra.mrb[0].mxu0 %v4196
        %v4806 = vpop.f32.mrb[0].mxu0
        %v4807 = vadd.f32 0.0, %v4806
        %v4808 = vpop.f32.mrb[0].mxu0
        %4809 = vmatprep.mubr.f32.mxu0 0.0
        %4810 = vmatmul.mubr.f32.gmra.mrb[0].mxu0 %v4199
        %v4811 = vpop.f32.mrb[0].mxu0
        %v4812 = vadd.f32 0.0, %v4811
        %v4813 = vpop.f32.mrb[0].mxu0
        %4814 = vmatprep.mubr.f32.mxu0 0.0
        %4815 = vmatmul.mubr.f32.gmra.mrb[0].mxu0 %v4202
        %v4816 = vpop.f32.mrb[0].mxu0
        %v4817 = vadd.f32 0.0, %v4816
        %v4818 = vpop.f32.mrb[0].mxu0
        %4819 = vmatprep.mubr.f32.mxu0 0.0
        %4820 = vmatmul.mubr.f32.gmra.mrb[0].mxu0 %v4205
        %v4821 = vpop.f32.mrb[0].mxu0
        %v4822 = vadd.f32 0.0, %v4821
        %v4823 = vpop.f32.mrb[0].mxu0
        %4824 = vmatprep.mubr.f32.mxu0 0.0
        %4825 = vmatmul.mubr.f32.gmra.mrb[0].mxu0 %v4208
        %v4826 = vpop.f32.mrb[0].mxu0
        %v4827 = vadd.f32 0.0, %v4826
        %v4828 = vpop.f32.mrb[0].mxu0
        %4829 = vmatprep.mubr.f32.mxu0 0.0
        %4830 = vmatmul.mubr.f32.gmra.mrb[0].mxu0 %v4211
        %v4831 = vpop.f32.mrb[0].mxu0
        %v4832 = vadd.f32 0.0, %v4831
        %v4833 = vpop.f32.mrb[0].mxu0
        %4834 = vmatprep.mubr.f32.mxu0 0.0
        %4835 = vmatmul.mubr.f32.gmra.mrb[0].mxu0 %v4214
        %v4836 = vpop.f32.mrb[0].mxu0
        %v4837 = vadd.f32 0.0, %v4836
        %v4838 = vpop.f32.mrb[0].mxu0
        %4839 = vmatprep.mubr.f32.mxu0 0.0
        %4840 = vmatmul.mubr.f32.gmra.mrb[0].mxu0 %v4217
        %v4841 = vpop.f32.mrb[0].mxu0
        %v4842 = vadd.f32 0.0, %v4841
        %v4843 = vpop.f32.mrb[0].mxu0
        %4844 = vmatprep.mubr.f32.mxu0 0.0
        %4845 = vmatmul.mubr.f32.gmra.mrb[0].mxu0 %v4220
        %v4846 = vpop.f32.mrb[0].mxu0
        %v4847 = vadd.f32 0.0, %v4846
        %v4848 = vpop.f32.mrb[0].mxu0
        %4849 = vmatprep.mubr.f32.mxu0 0.0
        %4850 = vmatmul.mubr.f32.gmra.mrb[0].mxu0 %v4223
        %v4851 = vpop.f32.mrb[0].mxu0
        %v4852 = vadd.f32 0.0, %v4851
        %v4853 = vpop.f32.mrb[0].mxu0
        %4854 = vdwg.mxu0
        %v4855 = vmax.f32 %v3210, %v4292
        %v4856 = vmax.f32 %v3215, %v4297
        %v4857 = vmax.f32 %v3220, %v4302
        %v4858 = vmax.f32 %v3225, %v4307
        %v4859 = vmax.f32 %v3230, %v4312
        %v4860 = vmax.f32 %v3235, %v4317
        %v4861 = vmax.f32 %v3240, %v4322
        %v4862 = vmax.f32 %v3245, %v4327
        %v4863 = vmax.f32 %v3250, %v4332
        %v4864 = vmax.f32 %v3255, %v4337
        %v4865 = vmax.f32 %v3260, %v4342
        %v4866 = vmax.f32 %v3265, %v4347
        %v4867 = vmax.f32 %v3270, %v4352
        %v4868 = vmax.f32 %v3275, %v4357
        %v4869 = vmax.f32 %v3280, %v4362
        %v4870 = vmax.f32 %v3285, %v4367
        %v4871 = vmax.f32 %v3290, %v4372
        %v4872 = vmax.f32 %v3295, %v4377
        %v4873 = vmax.f32 %v3300, %v4382
        %v4874 = vmax.f32 %v3305, %v4387
        %v4875 = vmax.f32 %v3310, %v4392
        %v4876 = vmax.f32 %v3315, %v4397
        %v4877 = vmax.f32 %v3320, %v4402
        %v4878 = vmax.f32 %v3325, %v4407
        %v4879 = vmax.f32 %v3330, %v4412
        %v4880 = vmax.f32 %v3335, %v4417
        %v4881 = vmax.f32 %v3340, %v4422
        %v4882 = vmax.f32 %v3345, %v4427
        %v4883 = vmax.f32 %v3350, %v4432
        %v4884 = vmax.f32 %v3355, %v4437
        %v4885 = vmax.f32 %v3360, %v4442
        %v4886 = vmax.f32 %v3365, %v4447
        %v4887 = vmax.f32 %v3370, %v4452
        %v4888 = vmax.f32 %v3375, %v4457
        %v4889 = vmax.f32 %v3380, %v4462
        %v4890 = vmax.f32 %v3385, %v4467
        %v4891 = vmax.f32 %v3390, %v4472
        %v4892 = vmax.f32 %v3395, %v4477
        %v4893 = vmax.f32 %v3400, %v4482
        %v4894 = vmax.f32 %v3405, %v4487
        %v4895 = vmax.f32 %v3410, %v4492
        %v4896 = vmax.f32 %v3415, %v4497
        %v4897 = vmax.f32 %v3420, %v4502
        %v4898 = vmax.f32 %v3425, %v4507
        %v4899 = vmax.f32 %v3430, %v4512
        %v4900 = vmax.f32 %v3435, %v4517
        %v4901 = vmax.f32 %v3440, %v4522
        %v4902 = vmax.f32 %v3445, %v4527
        %v4903 = vmax.f32 %v3450, %v4532
        %v4904 = vmax.f32 %v3455, %v4537
        %v4905 = vmax.f32 %v3460, %v4542
        %v4906 = vmax.f32 %v3465, %v4547
        %v4907 = vmax.f32 %v3470, %v4552
        %v4908 = vmax.f32 %v3475, %v4557
        %v4909 = vmax.f32 %v3480, %v4562
        %v4910 = vmax.f32 %v3485, %v4567
        %v4911 = vmax.f32 %v3490, %v4572
        %v4912 = vmax.f32 %v3495, %v4577
        %v4913 = vmax.f32 %v3500, %v4582
        %v4914 = vmax.f32 %v3505, %v4587
        %v4915 = vmax.f32 %v3510, %v4592
        %v4916 = vmax.f32 %v3515, %v4597
        %v4917 = vmax.f32 %v3520, %v4602
        %v4918 = vmax.f32 %v3525, %v4607
        %v4919 = vmax.f32 %v3530, %v4612
        %v4920 = vmax.f32 %v3535, %v4617
        %v4921 = vmax.f32 %v3540, %v4622
        %v4922 = vmax.f32 %v3545, %v4627
        %v4923 = vmax.f32 %v3550, %v4632
        %v4924 = vmax.f32 %v3555, %v4637
        %v4925 = vmax.f32 %v3560, %v4642
        %v4926 = vmax.f32 %v3565, %v4647
        %v4927 = vmax.f32 %v3570, %v4652
        %v4928 = vmax.f32 %v3575, %v4657
        %v4929 = vmax.f32 %v3580, %v4662
        %v4930 = vmax.f32 %v3585, %v4667
        %v4931 = vmax.f32 %v3590, %v4672
        %v4932 = vmax.f32 %v3595, %v4677
        %v4933 = vmax.f32 %v3600, %v4682
        %v4934 = vmax.f32 %v3605, %v4687
        %v4935 = vmax.f32 %v3610, %v4692
        %v4936 = vmax.f32 %v3615, %v4697
        %v4937 = vmax.f32 %v3620, %v4702
        %v4938 = vmax.f32 %v3625, %v4707
        %v4939 = vmax.f32 %v3630, %v4712
        %v4940 = vmax.f32 %v3635, %v4717
        %v4941 = vmax.f32 %v3640, %v4722
        %v4942 = vmax.f32 %v3645, %v4727
        %v4943 = vmax.f32 %v3650, %v4732
        %v4944 = vmax.f32 %v3655, %v4737
        %v4945 = vmax.f32 %v3660, %v4742
        %v4946 = vmax.f32 %v3665, %v4747
        %v4947 = vmax.f32 %v3670, %v4752
        %v4948 = vmax.f32 %v3675, %v4757
        %v4949 = vmax.f32 %v3680, %v4762
        %v4950 = vmax.f32 %v3685, %v4767
        %v4951 = vmax.f32 %v3690, %v4772
        %v4952 = vmax.f32 %v3695, %v4777
        %v4953 = vmax.f32 %v3700, %v4782
        %v4954 = vmax.f32 %v3705, %v4787
        %v4955 = vmax.f32 %v3710, %v4792
        %v4956 = vmax.f32 %v3715, %v4797
        %v4957 = vmax.f32 %v3720, %v4802
        %v4958 = vmax.f32 %v3725, %v4807
        %v4959 = vmax.f32 %v3730, %v4812
        %v4960 = vmax.f32 %v3735, %v4817
        %v4961 = vmax.f32 %v3740, %v4822
        %v4962 = vmax.f32 %v3745, %v4827
        %v4963 = vmax.f32 %v3750, %v4832
        %v4964 = vmax.f32 %v3755, %v4837
        %v4965 = vmax.f32 %v3760, %v4842
        %v4966 = vmax.f32 %v3765, %v4847
        %v4967 = vmax.f32 %v3770, %v4852
        %v4968 = vmax.f32 %v2578, %v4855
        %v4969 = vmax.f32 %v2579, %v4856
        %v4970 = vmax.f32 %v2580, %v4857
        %v4971 = vmax.f32 %v2581, %v4858
        %v4972 = vmax.f32 %v2582, %v4859
        %v4973 = vmax.f32 %v2583, %v4860
        %v4974 = vmax.f32 %v2584, %v4861
        %v4975 = vmax.f32 %v2585, %v4862
        %v4976 = vmax.f32 %v2586, %v4863
        %v4977 = vmax.f32 %v2587, %v4864
        %v4978 = vmax.f32 %v2588, %v4865
        %v4979 = vmax.f32 %v2589, %v4866
        %v4980 = vmax.f32 %v2590, %v4867
        %v4981 = vmax.f32 %v2591, %v4868
        %v4982 = vmax.f32 %v2592, %v4869
        %v4983 = vmax.f32 %v2593, %v4870
        %v4984 = vmax.f32 %v2594, %v4871
        %v4985 = vmax.f32 %v2595, %v4872
        %v4986 = vmax.f32 %v2596, %v4873
        %v4987 = vmax.f32 %v2597, %v4874
        %v4988 = vmax.f32 %v2598, %v4875
        %v4989 = vmax.f32 %v2599, %v4876
        %v4990 = vmax.f32 %v2600, %v4877
        %v4991 = vmax.f32 %v2601, %v4878
        %v4992 = vmax.f32 %v2602, %v4879
        %v4993 = vmax.f32 %v2603, %v4880
        %v4994 = vmax.f32 %v2604, %v4881
        %v4995 = vmax.f32 %v2605, %v4882
        %v4996 = vmax.f32 %v2606, %v4883
        %v4997 = vmax.f32 %v2607, %v4884
        %v4998 = vmax.f32 %v2608, %v4885
        %v4999 = vmax.f32 %v2609, %v4886
        %v5000 = vmax.f32 %v2610, %v4887
        %v5001 = vmax.f32 %v2611, %v4888
        %v5002 = vmax.f32 %v2612, %v4889
        %v5003 = vmax.f32 %v2613, %v4890
        %v5004 = vmax.f32 %v2614, %v4891
        %v5005 = vmax.f32 %v2615, %v4892
        %v5006 = vmax.f32 %v2616, %v4893
        %v5007 = vmax.f32 %v2617, %v4894
        %v5008 = vmax.f32 %v2618, %v4895
        %v5009 = vmax.f32 %v2619, %v4896
        %v5010 = vmax.f32 %v2620, %v4897
        %v5011 = vmax.f32 %v2621, %v4898
        %v5012 = vmax.f32 %v2622, %v4899
        %v5013 = vmax.f32 %v2623, %v4900
        %v5014 = vmax.f32 %v2624, %v4901
        %v5015 = vmax.f32 %v2625, %v4902
        %v5016 = vmax.f32 %v2626, %v4903
        %v5017 = vmax.f32 %v2627, %v4904
        %v5018 = vmax.f32 %v2628, %v4905
        %v5019 = vmax.f32 %v2629, %v4906
        %v5020 = vmax.f32 %v2630, %v4907
        %v5021 = vmax.f32 %v2631, %v4908
        %v5022 = vmax.f32 %v2632, %v4909
        %v5023 = vmax.f32 %v2633, %v4910
        %v5024 = vmax.f32 %v2634, %v4911
        %v5025 = vmax.f32 %v2635, %v4912
        %v5026 = vmax.f32 %v2636, %v4913
        %v5027 = vmax.f32 %v2637, %v4914
        %v5028 = vmax.f32 %v2638, %v4915
        %v5029 = vmax.f32 %v2639, %v4916
        %v5030 = vmax.f32 %v2640, %v4917
        %v5031 = vmax.f32 %v2641, %v4918
        %v5032 = vmax.f32 %v2642, %v4919
        %v5033 = vmax.f32 %v2643, %v4920
        %v5034 = vmax.f32 %v2644, %v4921
        %v5035 = vmax.f32 %v2645, %v4922
        %v5036 = vmax.f32 %v2646, %v4923
        %v5037 = vmax.f32 %v2647, %v4924
        %v5038 = vmax.f32 %v2648, %v4925
        %v5039 = vmax.f32 %v2649, %v4926
        %v5040 = vmax.f32 %v2650, %v4927
        %v5041 = vmax.f32 %v2651, %v4928
        %v5042 = vmax.f32 %v2652, %v4929
        %v5043 = vmax.f32 %v2653, %v4930
        %v5044 = vmax.f32 %v2654, %v4931
        %v5045 = vmax.f32 %v2655, %v4932
        %v5046 = vmax.f32 %v2656, %v4933
        %v5047 = vmax.f32 %v2657, %v4934
        %v5048 = vmax.f32 %v2658, %v4935
        %v5049 = vmax.f32 %v2659, %v4936
        %v5050 = vmax.f32 %v2660, %v4937
        %v5051 = vmax.f32 %v2661, %v4938
        %v5052 = vmax.f32 %v2662, %v4939
        %v5053 = vmax.f32 %v2663, %v4940
        %v5054 = vmax.f32 %v2664, %v4941
        %v5055 = vmax.f32 %v2665, %v4942
        %v5056 = vmax.f32 %v2666, %v4943
        %v5057 = vmax.f32 %v2667, %v4944
        %v5058 = vmax.f32 %v2668, %v4945
        %v5059 = vmax.f32 %v2669, %v4946
        %v5060 = vmax.f32 %v2670, %v4947
        %v5061 = vmax.f32 %v2671, %v4948
        %v5062 = vmax.f32 %v2672, %v4949
        %v5063 = vmax.f32 %v2673, %v4950
        %v5064 = vmax.f32 %v2674, %v4951
        %v5065 = vmax.f32 %v2675, %v4952
        %v5066 = vmax.f32 %v2676, %v4953
        %v5067 = vmax.f32 %v2677, %v4954
        %v5068 = vmax.f32 %v2678, %v4955
        %v5069 = vmax.f32 %v2679, %v4956
        %v5070 = vmax.f32 %v2680, %v4957
        %v5071 = vmax.f32 %v2681, %v4958
        %v5072 = vmax.f32 %v2682, %v4959
        %v5073 = vmax.f32 %v2683, %v4960
        %v5074 = vmax.f32 %v2684, %v4961
        %v5075 = vmax.f32 %v2685, %v4962
        %v5076 = vmax.f32 %v2686, %v4963
        %v5077 = vmax.f32 %v2687, %v4964
        %v5078 = vmax.f32 %v2688, %v4965
        %v5079 = vmax.f32 %v2689, %v4966
        %v5080 = vmax.f32 %v2690, %v4967
        %v5081 = vld [vmem:[%s5] sm:$0x1]
        %v5083 = vlaneseq
        %v5084 = vshrl.u32 %v5083, 7
        %v5085 = vsub.s32 0, %v5084
        %v5086 = vrot.slane %v5081, %v5085
        %v5088 = vadd.f32 %v4968, %v5086
        %v5089 = vadd.f32 %v4969, %v5086
        %v5090 = vadd.f32 %v4970, %v5086
        %v5091 = vadd.f32 %v4971, %v5086
        %v5092 = vadd.f32 %v4972, %v5086
        %v5093 = vadd.f32 %v4973, %v5086
        %v5094 = vadd.f32 %v4974, %v5086
        %v5095 = vadd.f32 %v4975, %v5086
        %v5096 = vadd.f32 %v4976, %v5086
        %v5097 = vadd.f32 %v4977, %v5086
        %v5098 = vadd.f32 %v4978, %v5086
        %v5099 = vadd.f32 %v4979, %v5086
        %v5100 = vadd.f32 %v4980, %v5086
        %v5101 = vadd.f32 %v4981, %v5086
        %v5102 = vadd.f32 %v4982, %v5086
        %v5103 = vadd.f32 %v4983, %v5086
        %v5104 = vadd.f32 %v4984, %v5086
        %v5105 = vadd.f32 %v4985, %v5086
        %v5106 = vadd.f32 %v4986, %v5086
        %v5107 = vadd.f32 %v4987, %v5086
        %v5108 = vadd.f32 %v4988, %v5086
        %v5109 = vadd.f32 %v4989, %v5086
        %v5110 = vadd.f32 %v4990, %v5086
        %v5111 = vadd.f32 %v4991, %v5086
        %v5112 = vadd.f32 %v4992, %v5086
        %v5113 = vadd.f32 %v4993, %v5086
        %v5114 = vadd.f32 %v4994, %v5086
        %v5115 = vadd.f32 %v4995, %v5086
        %v5116 = vadd.f32 %v4996, %v5086
        %v5117 = vadd.f32 %v4997, %v5086
        %v5118 = vadd.f32 %v4998, %v5086
        %v5119 = vadd.f32 %v4999, %v5086
        %v5120 = vadd.f32 %v5000, %v5086
        %v5121 = vadd.f32 %v5001, %v5086
        %v5122 = vadd.f32 %v5002, %v5086
        %v5123 = vadd.f32 %v5003, %v5086
        %v5124 = vadd.f32 %v5004, %v5086
        %v5125 = vadd.f32 %v5005, %v5086
        %v5126 = vadd.f32 %v5006, %v5086
        %v5127 = vadd.f32 %v5007, %v5086
        %v5128 = vadd.f32 %v5008, %v5086
        %v5129 = vadd.f32 %v5009, %v5086
        %v5130 = vadd.f32 %v5010, %v5086
        %v5131 = vadd.f32 %v5011, %v5086
        %v5132 = vadd.f32 %v5012, %v5086
        %v5133 = vadd.f32 %v5013, %v5086
        %v5134 = vadd.f32 %v5014, %v5086
        %v5135 = vadd.f32 %v5015, %v5086
        %v5136 = vadd.f32 %v5016, %v5086
        %v5137 = vadd.f32 %v5017, %v5086
        %v5138 = vadd.f32 %v5018, %v5086
        %v5139 = vadd.f32 %v5019, %v5086
        %v5140 = vadd.f32 %v5020, %v5086
        %v5141 = vadd.f32 %v5021, %v5086
        %v5142 = vadd.f32 %v5022, %v5086
        %v5143 = vadd.f32 %v5023, %v5086
        %v5144 = vadd.f32 %v5024, %v5086
        %v5145 = vadd.f32 %v5025, %v5086
        %v5146 = vadd.f32 %v5026, %v5086
        %v5147 = vadd.f32 %v5027, %v5086
        %v5148 = vadd.f32 %v5028, %v5086
        %v5149 = vadd.f32 %v5029, %v5086
        %v5150 = vadd.f32 %v5030, %v5086
        %v5151 = vadd.f32 %v5031, %v5086
        %v5152 = vadd.f32 %v5032, %v5086
        %v5153 = vadd.f32 %v5033, %v5086
        %v5154 = vadd.f32 %v5034, %v5086
        %v5155 = vadd.f32 %v5035, %v5086
        %v5156 = vadd.f32 %v5036, %v5086
        %v5157 = vadd.f32 %v5037, %v5086
        %v5158 = vadd.f32 %v5038, %v5086
        %v5159 = vadd.f32 %v5039, %v5086
        %v5160 = vadd.f32 %v5040, %v5086
        %v5161 = vadd.f32 %v5041, %v5086
        %v5162 = vadd.f32 %v5042, %v5086
        %v5163 = vadd.f32 %v5043, %v5086
        %v5164 = vadd.f32 %v5044, %v5086
        %v5165 = vadd.f32 %v5045, %v5086
        %v5166 = vadd.f32 %v5046, %v5086
        %v5167 = vadd.f32 %v5047, %v5086
        %v5168 = vadd.f32 %v5048, %v5086
        %v5169 = vadd.f32 %v5049, %v5086
        %v5170 = vadd.f32 %v5050, %v5086
        %v5171 = vadd.f32 %v5051, %v5086
        %v5172 = vadd.f32 %v5052, %v5086
        %v5173 = vadd.f32 %v5053, %v5086
        %v5174 = vadd.f32 %v5054, %v5086
        %v5175 = vadd.f32 %v5055, %v5086
        %v5176 = vadd.f32 %v5056, %v5086
        %v5177 = vadd.f32 %v5057, %v5086
        %v5178 = vadd.f32 %v5058, %v5086
        %v5179 = vadd.f32 %v5059, %v5086
        %v5180 = vadd.f32 %v5060, %v5086
        %v5181 = vadd.f32 %v5061, %v5086
        %v5182 = vadd.f32 %v5062, %v5086
        %v5183 = vadd.f32 %v5063, %v5086
        %v5184 = vadd.f32 %v5064, %v5086
        %v5185 = vadd.f32 %v5065, %v5086
        %v5186 = vadd.f32 %v5066, %v5086
        %v5187 = vadd.f32 %v5067, %v5086
        %v5188 = vadd.f32 %v5068, %v5086
        %v5189 = vadd.f32 %v5069, %v5086
        %v5190 = vadd.f32 %v5070, %v5086
        %v5191 = vadd.f32 %v5071, %v5086
        %v5192 = vadd.f32 %v5072, %v5086
        %v5193 = vadd.f32 %v5073, %v5086
        %v5194 = vadd.f32 %v5074, %v5086
        %v5195 = vadd.f32 %v5075, %v5086
        %v5196 = vadd.f32 %v5076, %v5086
        %v5197 = vadd.f32 %v5077, %v5086
        %v5198 = vadd.f32 %v5078, %v5086
        %v5199 = vadd.f32 %v5079, %v5086
        %v5200 = vadd.f32 %v5080, %v5086
        %v5201 = vmax.f32 %v5088, 0.0
        %v5202 = vmax.f32 %v5089, 0.0
        %v5203 = vmax.f32 %v5090, 0.0
        %v5204 = vmax.f32 %v5091, 0.0
        %v5205 = vmax.f32 %v5092, 0.0
        %v5206 = vmax.f32 %v5093, 0.0
        %v5207 = vmax.f32 %v5094, 0.0
        %v5208 = vmax.f32 %v5095, 0.0
        %v5209 = vmax.f32 %v5096, 0.0
        %v5210 = vmax.f32 %v5097, 0.0
        %v5211 = vmax.f32 %v5098, 0.0
        %v5212 = vmax.f32 %v5099, 0.0
        %v5213 = vmax.f32 %v5100, 0.0
        %v5214 = vmax.f32 %v5101, 0.0
        %v5215 = vmax.f32 %v5102, 0.0
        %v5216 = vmax.f32 %v5103, 0.0
        %v5217 = vmax.f32 %v5104, 0.0
        %v5218 = vmax.f32 %v5105, 0.0
        %v5219 = vmax.f32 %v5106, 0.0
        %v5220 = vmax.f32 %v5107, 0.0
        %v5221 = vmax.f32 %v5108, 0.0
        %v5222 = vmax.f32 %v5109, 0.0
        %v5223 = vmax.f32 %v5110, 0.0
        %v5224 = vmax.f32 %v5111, 0.0
        %v5225 = vmax.f32 %v5112, 0.0
        %v5226 = vmax.f32 %v5113, 0.0
        %v5227 = vmax.f32 %v5114, 0.0
        %v5228 = vmax.f32 %v5115, 0.0
        %v5229 = vmax.f32 %v5116, 0.0
        %v5230 = vmax.f32 %v5117, 0.0
        %v5231 = vmax.f32 %v5118, 0.0
        %v5232 = vmax.f32 %v5119, 0.0
        %v5233 = vmax.f32 %v5120, 0.0
        %v5234 = vmax.f32 %v5121, 0.0
        %v5235 = vmax.f32 %v5122, 0.0
        %v5236 = vmax.f32 %v5123, 0.0
        %v5237 = vmax.f32 %v5124, 0.0
        %v5238 = vmax.f32 %v5125, 0.0
        %v5239 = vmax.f32 %v5126, 0.0
        %v5240 = vmax.f32 %v5127, 0.0
        %v5241 = vmax.f32 %v5128, 0.0
        %v5242 = vmax.f32 %v5129, 0.0
        %v5243 = vmax.f32 %v5130, 0.0
        %v5244 = vmax.f32 %v5131, 0.0
        %v5245 = vmax.f32 %v5132, 0.0
        %v5246 = vmax.f32 %v5133, 0.0
        %v5247 = vmax.f32 %v5134, 0.0
        %v5248 = vmax.f32 %v5135, 0.0
        %v5249 = vmax.f32 %v5136, 0.0
        %v5250 = vmax.f32 %v5137, 0.0
        %v5251 = vmax.f32 %v5138, 0.0
        %v5252 = vmax.f32 %v5139, 0.0
        %v5253 = vmax.f32 %v5140, 0.0
        %v5254 = vmax.f32 %v5141, 0.0
        %v5255 = vmax.f32 %v5142, 0.0
        %v5256 = vmax.f32 %v5143, 0.0
        %v5257 = vmax.f32 %v5144, 0.0
        %v5258 = vmax.f32 %v5145, 0.0
        %v5259 = vmax.f32 %v5146, 0.0
        %v5260 = vmax.f32 %v5147, 0.0
        %v5261 = vmax.f32 %v5148, 0.0
        %v5262 = vmax.f32 %v5149, 0.0
        %v5263 = vmax.f32 %v5150, 0.0
        %v5264 = vmax.f32 %v5151, 0.0
        %v5265 = vmax.f32 %v5152, 0.0
        %v5266 = vmax.f32 %v5153, 0.0
        %v5267 = vmax.f32 %v5154, 0.0
        %v5268 = vmax.f32 %v5155, 0.0
        %v5269 = vmax.f32 %v5156, 0.0
        %v5270 = vmax.f32 %v5157, 0.0
        %v5271 = vmax.f32 %v5158, 0.0
        %v5272 = vmax.f32 %v5159, 0.0
        %v5273 = vmax.f32 %v5160, 0.0
        %v5274 = vmax.f32 %v5161, 0.0
        %v5275 = vmax.f32 %v5162, 0.0
        %v5276 = vmax.f32 %v5163, 0.0
        %v5277 = vmax.f32 %v5164, 0.0
        %v5278 = vmax.f32 %v5165, 0.0
        %v5279 = vmax.f32 %v5166, 0.0
        %v5280 = vmax.f32 %v5167, 0.0
        %v5281 = vmax.f32 %v5168, 0.0
        %v5282 = vmax.f32 %v5169, 0.0
        %v5283 = vmax.f32 %v5170, 0.0
        %v5284 = vmax.f32 %v5171, 0.0
        %v5285 = vmax.f32 %v5172, 0.0
        %v5286 = vmax.f32 %v5173, 0.0
        %v5287 = vmax.f32 %v5174, 0.0
        %v5288 = vmax.f32 %v5175, 0.0
        %v5289 = vmax.f32 %v5176, 0.0
        %v5290 = vmax.f32 %v5177, 0.0
        %v5291 = vmax.f32 %v5178, 0.0
        %v5292 = vmax.f32 %v5179, 0.0
        %v5293 = vmax.f32 %v5180, 0.0
        %v5294 = vmax.f32 %v5181, 0.0
        %v5295 = vmax.f32 %v5182, 0.0
        %v5296 = vmax.f32 %v5183, 0.0
        %v5297 = vmax.f32 %v5184, 0.0
        %v5298 = vmax.f32 %v5185, 0.0
        %v5299 = vmax.f32 %v5186, 0.0
        %v5300 = vmax.f32 %v5187, 0.0
        %v5301 = vmax.f32 %v5188, 0.0
        %v5302 = vmax.f32 %v5189, 0.0
        %v5303 = vmax.f32 %v5190, 0.0
        %v5304 = vmax.f32 %v5191, 0.0
        %v5305 = vmax.f32 %v5192, 0.0
        %v5306 = vmax.f32 %v5193, 0.0
        %v5307 = vmax.f32 %v5194, 0.0
        %v5308 = vmax.f32 %v5195, 0.0
        %v5309 = vmax.f32 %v5196, 0.0
        %v5310 = vmax.f32 %v5197, 0.0
        %v5311 = vmax.f32 %v5198, 0.0
        %v5312 = vmax.f32 %v5199, 0.0
        %v5313 = vmax.f32 %v5200, 0.0
        %vm5314 = vcmask 48128
        %5315 = vst.msk [vmem:[%s337] sm:$0xff] %vm5314, %v5201
        %5316 = vst.msk [vmem:[%s337 + $0x8] sm:$0xff] %vm5314, %v5202
        %5317 = vst.msk [vmem:[%s337 + $0x10] sm:$0xff] %vm5314, %v5203
        %5318 = vst.msk [vmem:[%s337 + $0x18] sm:$0xff] %vm5314, %v5204
        %5319 = vst.msk [vmem:[%s337 + $0x20] sm:$0xff] %vm5314, %v5205
        %5320 = vst.msk [vmem:[%s337 + $0x28] sm:$0xff] %vm5314, %v5206
        %5321 = vst.msk [vmem:[%s337 + $0x30] sm:$0xff] %vm5314, %v5207
        %5322 = vst.msk [vmem:[%s337 + $0x38] sm:$0xff] %vm5314, %v5208
        %5323 = vst.msk [vmem:[%s337 + $0x40] sm:$0xff] %vm5314, %v5209
        %5324 = vst.msk [vmem:[%s337 + $0x48] sm:$0xff] %vm5314, %v5210
        %5325 = vst.msk [vmem:[%s337 + $0x50] sm:$0xff] %vm5314, %v5211
        %5326 = vst.msk [vmem:[%s337 + $0x58] sm:$0xff] %vm5314, %v5212
        %5327 = vst.msk [vmem:[%s337 + $0x60] sm:$0xff] %vm5314, %v5213
        %5328 = vst.msk [vmem:[%s337 + $0x68] sm:$0xff] %vm5314, %v5214
        %5329 = vst.msk [vmem:[%s337 + $0x70] sm:$0xff] %vm5314, %v5215
        %5330 = vst.msk [vmem:[%s337 + $0x78] sm:$0xff] %vm5314, %v5216
        %5331 = vst.msk [vmem:[%s337 + $0x80] sm:$0xff] %vm5314, %v5217
        %5332 = vst.msk [vmem:[%s337 + $0x88] sm:$0xff] %vm5314, %v5218
        %5333 = vst.msk [vmem:[%s337 + $0x90] sm:$0xff] %vm5314, %v5219
        %5334 = vst.msk [vmem:[%s337 + $0x98] sm:$0xff] %vm5314, %v5220
        %5335 = vst.msk [vmem:[%s337 + $0xa0] sm:$0xff] %vm5314, %v5221
        %5336 = vst.msk [vmem:[%s337 + $0xa8] sm:$0xff] %vm5314, %v5222
        %5337 = vst.msk [vmem:[%s337 + $0xb0] sm:$0xff] %vm5314, %v5223
        %5338 = vst.msk [vmem:[%s337 + $0xb8] sm:$0xff] %vm5314, %v5224
        %5339 = vst.msk [vmem:[%s337 + $0xc0] sm:$0xff] %vm5314, %v5225
        %5340 = vst.msk [vmem:[%s337 + $0xc8] sm:$0xff] %vm5314, %v5226
        %5341 = vst.msk [vmem:[%s337 + $0xd0] sm:$0xff] %vm5314, %v5227
        %5342 = vst.msk [vmem:[%s337 + $0xd8] sm:$0xff] %vm5314, %v5228
        %5343 = vst.msk [vmem:[%s337 + $0xe0] sm:$0xff] %vm5314, %v5229
        %5344 = vst.msk [vmem:[%s337 + $0xe8] sm:$0xff] %vm5314, %v5230
        %5345 = vst.msk [vmem:[%s337 + $0xf0] sm:$0xff] %vm5314, %v5231
        %5346 = vst.msk [vmem:[%s337 + $0xf8] sm:$0xff] %vm5314, %v5232
        %5347 = vst.msk [vmem:[%s337 + $0x100] sm:$0xff] %vm5314, %v5233
        %5348 = vst.msk [vmem:[%s337 + $0x108] sm:$0xff] %vm5314, %v5234
        %5349 = vst.msk [vmem:[%s337 + $0x110] sm:$0xff] %vm5314, %v5235
        %5350 = vst.msk [vmem:[%s337 + $0x118] sm:$0xff] %vm5314, %v5236
        %5351 = vst.msk [vmem:[%s337 + $0x120] sm:$0xff] %vm5314, %v5237
        %5352 = vst.msk [vmem:[%s337 + $0x128] sm:$0xff] %vm5314, %v5238
        %5353 = vst.msk [vmem:[%s337 + $0x130] sm:$0xff] %vm5314, %v5239
        %5354 = vst.msk [vmem:[%s337 + $0x138] sm:$0xff] %vm5314, %v5240
        %5355 = vst.msk [vmem:[%s337 + $0x140] sm:$0xff] %vm5314, %v5241
        %5356 = vst.msk [vmem:[%s337 + $0x148] sm:$0xff] %vm5314, %v5242
        %5357 = vst.msk [vmem:[%s337 + $0x150] sm:$0xff] %vm5314, %v5243
        %5358 = vst.msk [vmem:[%s337 + $0x158] sm:$0xff] %vm5314, %v5244
        %5359 = vst.msk [vmem:[%s337 + $0x160] sm:$0xff] %vm5314, %v5245
        %5360 = vst.msk [vmem:[%s337 + $0x168] sm:$0xff] %vm5314, %v5246
        %5361 = vst.msk [vmem:[%s337 + $0x170] sm:$0xff] %vm5314, %v5247
        %5362 = vst.msk [vmem:[%s337 + $0x178] sm:$0xff] %vm5314, %v5248
        %5363 = vst.msk [vmem:[%s337 + $0x180] sm:$0xff] %vm5314, %v5249
        %5364 = vst.msk [vmem:[%s337 + $0x188] sm:$0xff] %vm5314, %v5250
        %5365 = vst.msk [vmem:[%s337 + $0x190] sm:$0xff] %vm5314, %v5251
        %5366 = vst.msk [vmem:[%s337 + $0x198] sm:$0xff] %vm5314, %v5252
        %5367 = vst.msk [vmem:[%s337 + $0x1a0] sm:$0xff] %vm5314, %v5253
        %5368 = vst.msk [vmem:[%s337 + $0x1a8] sm:$0xff] %vm5314, %v5254
        %5369 = vst.msk [vmem:[%s337 + $0x1b0] sm:$0xff] %vm5314, %v5255
        %5370 = vst.msk [vmem:[%s337 + $0x1b8] sm:$0xff] %vm5314, %v5256
        %5371 = vst.msk [vmem:[%s337 + $0x1c0] sm:$0xff] %vm5314, %v5257
        %5372 = vst.msk [vmem:[%s337 + $0x1c8] sm:$0xff] %vm5314, %v5258
        %5373 = vst.msk [vmem:[%s337 + $0x1d0] sm:$0xff] %vm5314, %v5259
        %5374 = vst.msk [vmem:[%s337 + $0x1d8] sm:$0xff] %vm5314, %v5260
        %5375 = vst.msk [vmem:[%s337 + $0x1e0] sm:$0xff] %vm5314, %v5261
        %5376 = vst.msk [vmem:[%s337 + $0x1e8] sm:$0xff] %vm5314, %v5262
        %5377 = vst.msk [vmem:[%s337 + $0x1f0] sm:$0xff] %vm5314, %v5263
        %5378 = vst.msk [vmem:[%s337 + $0x1f8] sm:$0xff] %vm5314, %v5264
        %5379 = vst.msk [vmem:[%s337 + $0x200] sm:$0xff] %vm5314, %v5265
        %5380 = vst.msk [vmem:[%s337 + $0x208] sm:$0xff] %vm5314, %v5266
        %5381 = vst.msk [vmem:[%s337 + $0x210] sm:$0xff] %vm5314, %v5267
        %5382 = vst.msk [vmem:[%s337 + $0x218] sm:$0xff] %vm5314, %v5268
        %5383 = vst.msk [vmem:[%s337 + $0x220] sm:$0xff] %vm5314, %v5269
        %5384 = vst.msk [vmem:[%s337 + $0x228] sm:$0xff] %vm5314, %v5270
        %5385 = vst.msk [vmem:[%s337 + $0x230] sm:$0xff] %vm5314, %v5271
        %5386 = vst.msk [vmem:[%s337 + $0x238] sm:$0xff] %vm5314, %v5272
        %5387 = vst.msk [vmem:[%s337 + $0x240] sm:$0xff] %vm5314, %v5273
        %5388 = vst.msk [vmem:[%s337 + $0x248] sm:$0xff] %vm5314, %v5274
        %5389 = vst.msk [vmem:[%s337 + $0x250] sm:$0xff] %vm5314, %v5275
        %5390 = vst.msk [vmem:[%s337 + $0x258] sm:$0xff] %vm5314, %v5276
        %5391 = vst.msk [vmem:[%s337 + $0x260] sm:$0xff] %vm5314, %v5277
        %5392 = vst.msk [vmem:[%s337 + $0x268] sm:$0xff] %vm5314, %v5278
        %5393 = vst.msk [vmem:[%s337 + $0x270] sm:$0xff] %vm5314, %v5279
        %5394 = vst.msk [vmem:[%s337 + $0x278] sm:$0xff] %vm5314, %v5280
        %5395 = vst.msk [vmem:[%s337 + $0x280] sm:$0xff] %vm5314, %v5281
        %5396 = vst.msk [vmem:[%s337 + $0x288] sm:$0xff] %vm5314, %v5282
        %5397 = vst.msk [vmem:[%s337 + $0x290] sm:$0xff] %vm5314, %v5283
        %5398 = vst.msk [vmem:[%s337 + $0x298] sm:$0xff] %vm5314, %v5284
        %5399 = vst.msk [vmem:[%s337 + $0x2a0] sm:$0xff] %vm5314, %v5285
        %5400 = vst.msk [vmem:[%s337 + $0x2a8] sm:$0xff] %vm5314, %v5286
        %5401 = vst.msk [vmem:[%s337 + $0x2b0] sm:$0xff] %vm5314, %v5287
        %5402 = vst.msk [vmem:[%s337 + $0x2b8] sm:$0xff] %vm5314, %v5288
        %5403 = vst.msk [vmem:[%s337 + $0x2c0] sm:$0xff] %vm5314, %v5289
        %5404 = vst.msk [vmem:[%s337 + $0x2c8] sm:$0xff] %vm5314, %v5290
        %5405 = vst.msk [vmem:[%s337 + $0x2d0] sm:$0xff] %vm5314, %v5291
        %5406 = vst.msk [vmem:[%s337 + $0x2d8] sm:$0xff] %vm5314, %v5292
        %5407 = vst.msk [vmem:[%s337 + $0x2e0] sm:$0xff] %vm5314, %v5293
        %5408 = vst.msk [vmem:[%s337 + $0x2e8] sm:$0xff] %vm5314, %v5294
        %5409 = vst.msk [vmem:[%s337 + $0x2f0] sm:$0xff] %vm5314, %v5295
        %5410 = vst.msk [vmem:[%s337 + $0x2f8] sm:$0xff] %vm5314, %v5296
        %5411 = vst.msk [vmem:[%s337 + $0x300] sm:$0xff] %vm5314, %v5297
        %5412 = vst.msk [vmem:[%s337 + $0x308] sm:$0xff] %vm5314, %v5298
        %5413 = vst.msk [vmem:[%s337 + $0x310] sm:$0xff] %vm5314, %v5299
        %5414 = vst.msk [vmem:[%s337 + $0x318] sm:$0xff] %vm5314, %v5300
        %5415 = vst.msk [vmem:[%s337 + $0x320] sm:$0xff] %vm5314, %v5301
        %5416 = vst.msk [vmem:[%s337 + $0x328] sm:$0xff] %vm5314, %v5302
        %5417 = vst.msk [vmem:[%s337 + $0x330] sm:$0xff] %vm5314, %v5303
        %5418 = vst.msk [vmem:[%s337 + $0x338] sm:$0xff] %vm5314, %v5304
        %5419 = vst.msk [vmem:[%s337 + $0x340] sm:$0xff] %vm5314, %v5305
        %5420 = vst.msk [vmem:[%s337 + $0x348] sm:$0xff] %vm5314, %v5306
        %5421 = vst.msk [vmem:[%s337 + $0x350] sm:$0xff] %vm5314, %v5307
        %5422 = vst.msk [vmem:[%s337 + $0x358] sm:$0xff] %vm5314, %v5308
        %5423 = vst.msk [vmem:[%s337 + $0x360] sm:$0xff] %vm5314, %v5309
        %5424 = vst.msk [vmem:[%s337 + $0x368] sm:$0xff] %vm5314, %v5310
        %5425 = vst.msk [vmem:[%s337 + $0x370] sm:$0xff] %vm5314, %v5311
        %5426 = vst.msk [vmem:[%s337 + $0x378] sm:$0xff] %vm5314, %v5312
        %5427 = vst.msk [vmem:[%s337 + $0x380] sm:$0xff] %vm5314, %v5313
        %s5428 = sand.u32 %s171, 1
        %s5429 = sand.u32 %s171, 1
        %s5430 = smul.addr %s5429, 904
        %s5431 = scalar_lea.vmem [#allocation2], %s5430
        // Predicated region
        $region45: #{m1_forward.3} parent=43 // pred_check
          %p5432 = pneg %p181
        $region46: #{m1_forward.3} parent=43 // pred_check_branch
          %5434 = sbr.rel (%p5432) target = $region48
        $region47: #{m1_forward.3} parent=43 // pred_region
          %s5435 = smul.u32 113, %s17
          %s5436 = ssub.s32 225, %s5435
          %p5437 = scmp.lt.s32.totalorder %s5436, 113
          %s5438 = scalar_select %p5437, %s5436, 113
          %s5439 = smul.u32 128, %s5438
          %p5440 = scmp.ne.s32.totalorder 0, %s5439
          %s5441 = smul.addr %s5435, 8
          %s5442 = scalar_lea.vmem %s6, %s5441
          // Predicated region
          $region49: #{m1_forward.3} parent=47 // pred_check
            %p5443 = pneg %p5440
          $region50: #{m1_forward.3} parent=47 // pred_check_branch
            %5445 = sbr.rel (%p5443) target = $region52
          $region51: #{m1_forward.3} parent=47 // pred_region
            // Predicated region
            $region53: #{m1_forward.3} parent=51 // pred_check
              _
            $region54: #{m1_forward.3} parent=51 // pred_check_branch
              %5447 = sbr.rel (0) target = $region56
            $region55: #{m1_forward.3} parent=51 // pred_region
              // Predicated region
              $region75: #{m1_forward.3} parent=55 // pred_check
                _
              $region76: #{m1_forward.3} parent=55 // pred_check_branch
                %5622 = sbr.rel (0) target = $region78
              $region77: #{m1_forward.3} parent=55 // pred_region
                %s5623 = sshrl.u32 %s5438, 6
                // While loop
                $region79: #{m1_forward.3} parent=77 // loop_pre_header
                  _
                $region80: #{m1_forward.3} parent=77 // loop_header
                  %s5625 = sphi 0, %s5627
                  %p5626 = scmp.ge.s32.totalorder %s5625, %s5623
                  %s5630 = sphi 0, %s5763
                  %s5631 = sphi %s5431, %s5766
                  %s5632 = sphi %s5442, %s5767
                $region81: #{m1_forward.3} parent=77 // loop_header_branch
                  %5629 = sbr.rel (%p5626) target = $region85
                $region82: #{m1_forward.3} parent=77 // loop_body
                  %v5633 = vld [vmem:[%s5631] sm:$0xff]
                  %5634 = vst [vmem:[%s5632] sm:$0xff] %v5633
                  %v5635 = vld [vmem:[%s5631 + $0x8] sm:$0xff]
                  %5636 = vst [vmem:[%s5632 + $0x8] sm:$0xff] %v5635
                  %v5637 = vld [vmem:[%s5631 + $0x10] sm:$0xff]
                  %5638 = vst [vmem:[%s5632 + $0x10] sm:$0xff] %v5637
                  %v5639 = vld [vmem:[%s5631 + $0x18] sm:$0xff]
                  %5640 = vst [vmem:[%s5632 + $0x18] sm:$0xff] %v5639
                  %v5641 = vld [vmem:[%s5631 + $0x20] sm:$0xff]
                  %5642 = vst [vmem:[%s5632 + $0x20] sm:$0xff] %v5641
                  %v5643 = vld [vmem:[%s5631 + $0x28] sm:$0xff]
                  %5644 = vst [vmem:[%s5632 + $0x28] sm:$0xff] %v5643
                  %v5645 = vld [vmem:[%s5631 + $0x30] sm:$0xff]
                  %5646 = vst [vmem:[%s5632 + $0x30] sm:$0xff] %v5645
                  %v5647 = vld [vmem:[%s5631 + $0x38] sm:$0xff]
                  %5648 = vst [vmem:[%s5632 + $0x38] sm:$0xff] %v5647
                  %v5649 = vld [vmem:[%s5631 + $0x40] sm:$0xff]
                  %5650 = vst [vmem:[%s5632 + $0x40] sm:$0xff] %v5649
                  %v5651 = vld [vmem:[%s5631 + $0x48] sm:$0xff]
                  %5652 = vst [vmem:[%s5632 + $0x48] sm:$0xff] %v5651
                  %v5653 = vld [vmem:[%s5631 + $0x50] sm:$0xff]
                  %5654 = vst [vmem:[%s5632 + $0x50] sm:$0xff] %v5653
                  %v5655 = vld [vmem:[%s5631 + $0x58] sm:$0xff]
                  %5656 = vst [vmem:[%s5632 + $0x58] sm:$0xff] %v5655
                  %v5657 = vld [vmem:[%s5631 + $0x60] sm:$0xff]
                  %5658 = vst [vmem:[%s5632 + $0x60] sm:$0xff] %v5657
                  %v5659 = vld [vmem:[%s5631 + $0x68] sm:$0xff]
                  %5660 = vst [vmem:[%s5632 + $0x68] sm:$0xff] %v5659
                  %v5661 = vld [vmem:[%s5631 + $0x70] sm:$0xff]
                  %5662 = vst [vmem:[%s5632 + $0x70] sm:$0xff] %v5661
                  %v5663 = vld [vmem:[%s5631 + $0x78] sm:$0xff]
                  %5664 = vst [vmem:[%s5632 + $0x78] sm:$0xff] %v5663
                  %v5665 = vld [vmem:[%s5631 + $0x80] sm:$0xff]
                  %5666 = vst [vmem:[%s5632 + $0x80] sm:$0xff] %v5665
                  %v5667 = vld [vmem:[%s5631 + $0x88] sm:$0xff]
                  %5668 = vst [vmem:[%s5632 + $0x88] sm:$0xff] %v5667
                  %v5669 = vld [vmem:[%s5631 + $0x90] sm:$0xff]
                  %5670 = vst [vmem:[%s5632 + $0x90] sm:$0xff] %v5669
                  %v5671 = vld [vmem:[%s5631 + $0x98] sm:$0xff]
                  %5672 = vst [vmem:[%s5632 + $0x98] sm:$0xff] %v5671
                  %v5673 = vld [vmem:[%s5631 + $0xa0] sm:$0xff]
                  %5674 = vst [vmem:[%s5632 + $0xa0] sm:$0xff] %v5673
                  %v5675 = vld [vmem:[%s5631 + $0xa8] sm:$0xff]
                  %5676 = vst [vmem:[%s5632 + $0xa8] sm:$0xff] %v5675
                  %v5677 = vld [vmem:[%s5631 + $0xb0] sm:$0xff]
                  %5678 = vst [vmem:[%s5632 + $0xb0] sm:$0xff] %v5677
                  %v5679 = vld [vmem:[%s5631 + $0xb8] sm:$0xff]
                  %5680 = vst [vmem:[%s5632 + $0xb8] sm:$0xff] %v5679
                  %v5681 = vld [vmem:[%s5631 + $0xc0] sm:$0xff]
                  %5682 = vst [vmem:[%s5632 + $0xc0] sm:$0xff] %v5681
                  %v5683 = vld [vmem:[%s5631 + $0xc8] sm:$0xff]
                  %5684 = vst [vmem:[%s5632 + $0xc8] sm:$0xff] %v5683
                  %v5685 = vld [vmem:[%s5631 + $0xd0] sm:$0xff]
                  %5686 = vst [vmem:[%s5632 + $0xd0] sm:$0xff] %v5685
                  %v5687 = vld [vmem:[%s5631 + $0xd8] sm:$0xff]
                  %5688 = vst [vmem:[%s5632 + $0xd8] sm:$0xff] %v5687
                  %v5689 = vld [vmem:[%s5631 + $0xe0] sm:$0xff]
                  %5690 = vst [vmem:[%s5632 + $0xe0] sm:$0xff] %v5689
                  %v5691 = vld [vmem:[%s5631 + $0xe8] sm:$0xff]
                  %5692 = vst [vmem:[%s5632 + $0xe8] sm:$0xff] %v5691
                  %v5693 = vld [vmem:[%s5631 + $0xf0] sm:$0xff]
                  %5694 = vst [vmem:[%s5632 + $0xf0] sm:$0xff] %v5693
                  %v5695 = vld [vmem:[%s5631 + $0xf8] sm:$0xff]
                  %5696 = vst [vmem:[%s5632 + $0xf8] sm:$0xff] %v5695
                  %v5697 = vld [vmem:[%s5631 + $0x100] sm:$0xff]
                  %5698 = vst [vmem:[%s5632 + $0x100] sm:$0xff] %v5697
                  %v5699 = vld [vmem:[%s5631 + $0x108] sm:$0xff]
                  %5700 = vst [vmem:[%s5632 + $0x108] sm:$0xff] %v5699
                  %v5701 = vld [vmem:[%s5631 + $0x110] sm:$0xff]
                  %5702 = vst [vmem:[%s5632 + $0x110] sm:$0xff] %v5701
                  %v5703 = vld [vmem:[%s5631 + $0x118] sm:$0xff]
                  %5704 = vst [vmem:[%s5632 + $0x118] sm:$0xff] %v5703
                  %v5705 = vld [vmem:[%s5631 + $0x120] sm:$0xff]
                  %5706 = vst [vmem:[%s5632 + $0x120] sm:$0xff] %v5705
                  %v5707 = vld [vmem:[%s5631 + $0x128] sm:$0xff]
                  %5708 = vst [vmem:[%s5632 + $0x128] sm:$0xff] %v5707
                  %v5709 = vld [vmem:[%s5631 + $0x130] sm:$0xff]
                  %5710 = vst [vmem:[%s5632 + $0x130] sm:$0xff] %v5709
                  %v5711 = vld [vmem:[%s5631 + $0x138] sm:$0xff]
                  %5712 = vst [vmem:[%s5632 + $0x138] sm:$0xff] %v5711
                  %v5713 = vld [vmem:[%s5631 + $0x140] sm:$0xff]
                  %5714 = vst [vmem:[%s5632 + $0x140] sm:$0xff] %v5713
                  %v5715 = vld [vmem:[%s5631 + $0x148] sm:$0xff]
                  %5716 = vst [vmem:[%s5632 + $0x148] sm:$0xff] %v5715
                  %v5717 = vld [vmem:[%s5631 + $0x150] sm:$0xff]
                  %5718 = vst [vmem:[%s5632 + $0x150] sm:$0xff] %v5717
                  %v5719 = vld [vmem:[%s5631 + $0x158] sm:$0xff]
                  %5720 = vst [vmem:[%s5632 + $0x158] sm:$0xff] %v5719
                  %v5721 = vld [vmem:[%s5631 + $0x160] sm:$0xff]
                  %5722 = vst [vmem:[%s5632 + $0x160] sm:$0xff] %v5721
                  %v5723 = vld [vmem:[%s5631 + $0x168] sm:$0xff]
                  %5724 = vst [vmem:[%s5632 + $0x168] sm:$0xff] %v5723
                  %v5725 = vld [vmem:[%s5631 + $0x170] sm:$0xff]
                  %5726 = vst [vmem:[%s5632 + $0x170] sm:$0xff] %v5725
                  %v5727 = vld [vmem:[%s5631 + $0x178] sm:$0xff]
                  %5728 = vst [vmem:[%s5632 + $0x178] sm:$0xff] %v5727
                  %v5729 = vld [vmem:[%s5631 + $0x180] sm:$0xff]
                  %5730 = vst [vmem:[%s5632 + $0x180] sm:$0xff] %v5729
                  %v5731 = vld [vmem:[%s5631 + $0x188] sm:$0xff]
                  %5732 = vst [vmem:[%s5632 + $0x188] sm:$0xff] %v5731
                  %v5733 = vld [vmem:[%s5631 + $0x190] sm:$0xff]
                  %5734 = vst [vmem:[%s5632 + $0x190] sm:$0xff] %v5733
                  %v5735 = vld [vmem:[%s5631 + $0x198] sm:$0xff]
                  %5736 = vst [vmem:[%s5632 + $0x198] sm:$0xff] %v5735
                  %v5737 = vld [vmem:[%s5631 + $0x1a0] sm:$0xff]
                  %5738 = vst [vmem:[%s5632 + $0x1a0] sm:$0xff] %v5737
                  %v5739 = vld [vmem:[%s5631 + $0x1a8] sm:$0xff]
                  %5740 = vst [vmem:[%s5632 + $0x1a8] sm:$0xff] %v5739
                  %v5741 = vld [vmem:[%s5631 + $0x1b0] sm:$0xff]
                  %5742 = vst [vmem:[%s5632 + $0x1b0] sm:$0xff] %v5741
                  %v5743 = vld [vmem:[%s5631 + $0x1b8] sm:$0xff]
                  %5744 = vst [vmem:[%s5632 + $0x1b8] sm:$0xff] %v5743
                  %v5745 = vld [vmem:[%s5631 + $0x1c0] sm:$0xff]
                  %5746 = vst [vmem:[%s5632 + $0x1c0] sm:$0xff] %v5745
                  %v5747 = vld [vmem:[%s5631 + $0x1c8] sm:$0xff]
                  %5748 = vst [vmem:[%s5632 + $0x1c8] sm:$0xff] %v5747
                  %v5749 = vld [vmem:[%s5631 + $0x1d0] sm:$0xff]
                  %5750 = vst [vmem:[%s5632 + $0x1d0] sm:$0xff] %v5749
                  %v5751 = vld [vmem:[%s5631 + $0x1d8] sm:$0xff]
                  %5752 = vst [vmem:[%s5632 + $0x1d8] sm:$0xff] %v5751
                  %v5753 = vld [vmem:[%s5631 + $0x1e0] sm:$0xff]
                  %5754 = vst [vmem:[%s5632 + $0x1e0] sm:$0xff] %v5753
                  %v5755 = vld [vmem:[%s5631 + $0x1e8] sm:$0xff]
                  %5756 = vst [vmem:[%s5632 + $0x1e8] sm:$0xff] %v5755
                  %v5757 = vld [vmem:[%s5631 + $0x1f0] sm:$0xff]
                  %5758 = vst [vmem:[%s5632 + $0x1f0] sm:$0xff] %v5757
                  %v5759 = vld [vmem:[%s5631 + $0x1f8] sm:$0xff]
                  %5760 = vst [vmem:[%s5632 + $0x1f8] sm:$0xff] %v5759
                  %s5761 = sadd.s32 1, %s5630
                  %p5762 = scmp.ge.s32.totalorder %s5761, %s5623
                  %s5763 = scalar_select %p5762, 0, %s5761
                  %s5764 = smul.u32 %s5763, 512
                  %s5765 = smul.u32 %s5763, 512
                  %s5766 = scalar_lea.vmem %s5431, %s5764 [#allocation2]
                  %s5767 = scalar_lea.vmem %s5442, %s5765
                $region83: #{m1_forward.3} parent=77 // loop_footer
                  %s5627 = sadd.s32 %s5625, 1
                $region84: #{m1_forward.3} parent=77 // loop_footer_branch
                  %5624 = sbr.rel target = $region80
                $region85: #{m1_forward.3} parent=77 // loop_exit
                  _
                %s5768 = sshrl.u32 %s5438, 6
                %s5769 = sand.u32 %s5438, 63
                %s5770 = smul.u32 %s5768, 64
                %s5771 = smul.u32 8, %s5770
                %s5772 = scalar_lea.vmem %s5431, %s5771 [#allocation2]
                %s5773 = smul.u32 8, %s5770
                %s5774 = scalar_lea.vmem %s5442, %s5773
                // While loop
                $region86: #{m1_forward.3} parent=77 // loop_pre_header
                  _
                $region87: #{m1_forward.3} parent=77 // loop_header
                  %s5776 = sphi 0, %s5778
                  %p5777 = scmp.ge.s32.totalorder %s5776, %s5769
                  %s5781 = sphi 0, %s5788
                  %s5782 = sphi %s5772, %s5791
                  %s5783 = sphi %s5774, %s5792
                $region88: #{m1_forward.3} parent=77 // loop_header_branch
                  %5780 = sbr.rel (%p5777) target = $region92
                $region89: #{m1_forward.3} parent=77 // loop_body
                  %v5784 = vld [vmem:[%s5782] sm:$0xff]
                  %5785 = vst [vmem:[%s5783] sm:$0xff] %v5784
                  %s5786 = sadd.s32 1, %s5781
                  %p5787 = scmp.ge.s32.totalorder %s5786, %s5769
                  %s5788 = scalar_select %p5787, 0, %s5786
                  %s5789 = smul.u32 %s5788, 8
                  %s5790 = smul.u32 %s5788, 8
                  %s5791 = scalar_lea.vmem %s5772, %s5789 [#allocation2]
                  %s5792 = scalar_lea.vmem %s5774, %s5790
                $region90: #{m1_forward.3} parent=77 // loop_footer
                  %s5778 = sadd.s32 %s5776, 1
                $region91: #{m1_forward.3} parent=77 // loop_footer_branch
                  %5775 = sbr.rel target = $region87
                $region92: #{m1_forward.3} parent=77 // loop_exit
                  _
              $region78: #{m1_forward.3} parent=55 // pred_fallthru
                _
              // Predicated region
              $region93: #{m1_forward.3} parent=55 // pred_check
                _
              $region94: #{m1_forward.3} parent=55 // pred_check_branch
                %5794 = sbr.rel target = $region96
              $region95: #{m1_forward.3} parent=55 // pred_region
                _
              $region96: #{m1_forward.3} parent=55 // pred_fallthru
                _
            $region56: #{m1_forward.3} parent=51 // pred_fallthru
              _
            // Predicated region
            $region57: #{m1_forward.3} parent=51 // pred_check
              _
            $region58: #{m1_forward.3} parent=51 // pred_check_branch
              %5449 = sbr.rel target = $region60
            $region59: #{m1_forward.3} parent=51 // pred_region
              %s5451 = sshrl.u32 %s5438, 6
              // While loop
              $region61: #{m1_forward.3} parent=59 // loop_pre_header
                _
              $region62: #{m1_forward.3} parent=59 // loop_header
                %s5453 = sphi 0, %s5455
                %p5454 = scmp.ge.s32.totalorder %s5453, %s5451
                %s5458 = sphi 0, %s5591
                %s5459 = sphi %s5431, %s5594
                %s5460 = sphi %s5442, %s5595
              $region63: #{m1_forward.3} parent=59 // loop_header_branch
                %5457 = sbr.rel (%p5454) target = $region67
              $region64: #{m1_forward.3} parent=59 // loop_body
                %v5461 = vld [vmem:[%s5459] sm:$0xff]
                %5462 = vst [vmem:[%s5460] sm:$0xff] %v5461
                %v5463 = vld [vmem:[%s5459 + $0x8] sm:$0xff]
                %5464 = vst [vmem:[%s5460 + $0x8] sm:$0xff] %v5463
                %v5465 = vld [vmem:[%s5459 + $0x10] sm:$0xff]
                %5466 = vst [vmem:[%s5460 + $0x10] sm:$0xff] %v5465
                %v5467 = vld [vmem:[%s5459 + $0x18] sm:$0xff]
                %5468 = vst [vmem:[%s5460 + $0x18] sm:$0xff] %v5467
                %v5469 = vld [vmem:[%s5459 + $0x20] sm:$0xff]
                %5470 = vst [vmem:[%s5460 + $0x20] sm:$0xff] %v5469
                %v5471 = vld [vmem:[%s5459 + $0x28] sm:$0xff]
                %5472 = vst [vmem:[%s5460 + $0x28] sm:$0xff] %v5471
                %v5473 = vld [vmem:[%s5459 + $0x30] sm:$0xff]
                %5474 = vst [vmem:[%s5460 + $0x30] sm:$0xff] %v5473
                %v5475 = vld [vmem:[%s5459 + $0x38] sm:$0xff]
                %5476 = vst [vmem:[%s5460 + $0x38] sm:$0xff] %v5475
                %v5477 = vld [vmem:[%s5459 + $0x40] sm:$0xff]
                %5478 = vst [vmem:[%s5460 + $0x40] sm:$0xff] %v5477
                %v5479 = vld [vmem:[%s5459 + $0x48] sm:$0xff]
                %5480 = vst [vmem:[%s5460 + $0x48] sm:$0xff] %v5479
                %v5481 = vld [vmem:[%s5459 + $0x50] sm:$0xff]
                %5482 = vst [vmem:[%s5460 + $0x50] sm:$0xff] %v5481
                %v5483 = vld [vmem:[%s5459 + $0x58] sm:$0xff]
                %5484 = vst [vmem:[%s5460 + $0x58] sm:$0xff] %v5483
                %v5485 = vld [vmem:[%s5459 + $0x60] sm:$0xff]
                %5486 = vst [vmem:[%s5460 + $0x60] sm:$0xff] %v5485
                %v5487 = vld [vmem:[%s5459 + $0x68] sm:$0xff]
                %5488 = vst [vmem:[%s5460 + $0x68] sm:$0xff] %v5487
                %v5489 = vld [vmem:[%s5459 + $0x70] sm:$0xff]
                %5490 = vst [vmem:[%s5460 + $0x70] sm:$0xff] %v5489
                %v5491 = vld [vmem:[%s5459 + $0x78] sm:$0xff]
                %5492 = vst [vmem:[%s5460 + $0x78] sm:$0xff] %v5491
                %v5493 = vld [vmem:[%s5459 + $0x80] sm:$0xff]
                %5494 = vst [vmem:[%s5460 + $0x80] sm:$0xff] %v5493
                %v5495 = vld [vmem:[%s5459 + $0x88] sm:$0xff]
                %5496 = vst [vmem:[%s5460 + $0x88] sm:$0xff] %v5495
                %v5497 = vld [vmem:[%s5459 + $0x90] sm:$0xff]
                %5498 = vst [vmem:[%s5460 + $0x90] sm:$0xff] %v5497
                %v5499 = vld [vmem:[%s5459 + $0x98] sm:$0xff]
                %5500 = vst [vmem:[%s5460 + $0x98] sm:$0xff] %v5499
                %v5501 = vld [vmem:[%s5459 + $0xa0] sm:$0xff]
                %5502 = vst [vmem:[%s5460 + $0xa0] sm:$0xff] %v5501
                %v5503 = vld [vmem:[%s5459 + $0xa8] sm:$0xff]
                %5504 = vst [vmem:[%s5460 + $0xa8] sm:$0xff] %v5503
                %v5505 = vld [vmem:[%s5459 + $0xb0] sm:$0xff]
                %5506 = vst [vmem:[%s5460 + $0xb0] sm:$0xff] %v5505
                %v5507 = vld [vmem:[%s5459 + $0xb8] sm:$0xff]
                %5508 = vst [vmem:[%s5460 + $0xb8] sm:$0xff] %v5507
                %v5509 = vld [vmem:[%s5459 + $0xc0] sm:$0xff]
                %5510 = vst [vmem:[%s5460 + $0xc0] sm:$0xff] %v5509
                %v5511 = vld [vmem:[%s5459 + $0xc8] sm:$0xff]
                %5512 = vst [vmem:[%s5460 + $0xc8] sm:$0xff] %v5511
                %v5513 = vld [vmem:[%s5459 + $0xd0] sm:$0xff]
                %5514 = vst [vmem:[%s5460 + $0xd0] sm:$0xff] %v5513
                %v5515 = vld [vmem:[%s5459 + $0xd8] sm:$0xff]
                %5516 = vst [vmem:[%s5460 + $0xd8] sm:$0xff] %v5515
                %v5517 = vld [vmem:[%s5459 + $0xe0] sm:$0xff]
                %5518 = vst [vmem:[%s5460 + $0xe0] sm:$0xff] %v5517
                %v5519 = vld [vmem:[%s5459 + $0xe8] sm:$0xff]
                %5520 = vst [vmem:[%s5460 + $0xe8] sm:$0xff] %v5519
                %v5521 = vld [vmem:[%s5459 + $0xf0] sm:$0xff]
                %5522 = vst [vmem:[%s5460 + $0xf0] sm:$0xff] %v5521
                %v5523 = vld [vmem:[%s5459 + $0xf8] sm:$0xff]
                %5524 = vst [vmem:[%s5460 + $0xf8] sm:$0xff] %v5523
                %v5525 = vld [vmem:[%s5459 + $0x100] sm:$0xff]
                %5526 = vst [vmem:[%s5460 + $0x100] sm:$0xff] %v5525
                %v5527 = vld [vmem:[%s5459 + $0x108] sm:$0xff]
                %5528 = vst [vmem:[%s5460 + $0x108] sm:$0xff] %v5527
                %v5529 = vld [vmem:[%s5459 + $0x110] sm:$0xff]
                %5530 = vst [vmem:[%s5460 + $0x110] sm:$0xff] %v5529
                %v5531 = vld [vmem:[%s5459 + $0x118] sm:$0xff]
                %5532 = vst [vmem:[%s5460 + $0x118] sm:$0xff] %v5531
                %v5533 = vld [vmem:[%s5459 + $0x120] sm:$0xff]
                %5534 = vst [vmem:[%s5460 + $0x120] sm:$0xff] %v5533
                %v5535 = vld [vmem:[%s5459 + $0x128] sm:$0xff]
                %5536 = vst [vmem:[%s5460 + $0x128] sm:$0xff] %v5535
                %v5537 = vld [vmem:[%s5459 + $0x130] sm:$0xff]
                %5538 = vst [vmem:[%s5460 + $0x130] sm:$0xff] %v5537
                %v5539 = vld [vmem:[%s5459 + $0x138] sm:$0xff]
                %5540 = vst [vmem:[%s5460 + $0x138] sm:$0xff] %v5539
                %v5541 = vld [vmem:[%s5459 + $0x140] sm:$0xff]
                %5542 = vst [vmem:[%s5460 + $0x140] sm:$0xff] %v5541
                %v5543 = vld [vmem:[%s5459 + $0x148] sm:$0xff]
                %5544 = vst [vmem:[%s5460 + $0x148] sm:$0xff] %v5543
                %v5545 = vld [vmem:[%s5459 + $0x150] sm:$0xff]
                %5546 = vst [vmem:[%s5460 + $0x150] sm:$0xff] %v5545
                %v5547 = vld [vmem:[%s5459 + $0x158] sm:$0xff]
                %5548 = vst [vmem:[%s5460 + $0x158] sm:$0xff] %v5547
                %v5549 = vld [vmem:[%s5459 + $0x160] sm:$0xff]
                %5550 = vst [vmem:[%s5460 + $0x160] sm:$0xff] %v5549
                %v5551 = vld [vmem:[%s5459 + $0x168] sm:$0xff]
                %5552 = vst [vmem:[%s5460 + $0x168] sm:$0xff] %v5551
                %v5553 = vld [vmem:[%s5459 + $0x170] sm:$0xff]
                %5554 = vst [vmem:[%s5460 + $0x170] sm:$0xff] %v5553
                %v5555 = vld [vmem:[%s5459 + $0x178] sm:$0xff]
                %5556 = vst [vmem:[%s5460 + $0x178] sm:$0xff] %v5555
                %v5557 = vld [vmem:[%s5459 + $0x180] sm:$0xff]
                %5558 = vst [vmem:[%s5460 + $0x180] sm:$0xff] %v5557
                %v5559 = vld [vmem:[%s5459 + $0x188] sm:$0xff]
                %5560 = vst [vmem:[%s5460 + $0x188] sm:$0xff] %v5559
                %v5561 = vld [vmem:[%s5459 + $0x190] sm:$0xff]
                %5562 = vst [vmem:[%s5460 + $0x190] sm:$0xff] %v5561
                %v5563 = vld [vmem:[%s5459 + $0x198] sm:$0xff]
                %5564 = vst [vmem:[%s5460 + $0x198] sm:$0xff] %v5563
                %v5565 = vld [vmem:[%s5459 + $0x1a0] sm:$0xff]
                %5566 = vst [vmem:[%s5460 + $0x1a0] sm:$0xff] %v5565
                %v5567 = vld [vmem:[%s5459 + $0x1a8] sm:$0xff]
                %5568 = vst [vmem:[%s5460 + $0x1a8] sm:$0xff] %v5567
                %v5569 = vld [vmem:[%s5459 + $0x1b0] sm:$0xff]
                %5570 = vst [vmem:[%s5460 + $0x1b0] sm:$0xff] %v5569
                %v5571 = vld [vmem:[%s5459 + $0x1b8] sm:$0xff]
                %5572 = vst [vmem:[%s5460 + $0x1b8] sm:$0xff] %v5571
                %v5573 = vld [vmem:[%s5459 + $0x1c0] sm:$0xff]
                %5574 = vst [vmem:[%s5460 + $0x1c0] sm:$0xff] %v5573
                %v5575 = vld [vmem:[%s5459 + $0x1c8] sm:$0xff]
                %5576 = vst [vmem:[%s5460 + $0x1c8] sm:$0xff] %v5575
                %v5577 = vld [vmem:[%s5459 + $0x1d0] sm:$0xff]
                %5578 = vst [vmem:[%s5460 + $0x1d0] sm:$0xff] %v5577
                %v5579 = vld [vmem:[%s5459 + $0x1d8] sm:$0xff]
                %5580 = vst [vmem:[%s5460 + $0x1d8] sm:$0xff] %v5579
                %v5581 = vld [vmem:[%s5459 + $0x1e0] sm:$0xff]
                %5582 = vst [vmem:[%s5460 + $0x1e0] sm:$0xff] %v5581
                %v5583 = vld [vmem:[%s5459 + $0x1e8] sm:$0xff]
                %5584 = vst [vmem:[%s5460 + $0x1e8] sm:$0xff] %v5583
                %v5585 = vld [vmem:[%s5459 + $0x1f0] sm:$0xff]
                %5586 = vst [vmem:[%s5460 + $0x1f0] sm:$0xff] %v5585
                %v5587 = vld [vmem:[%s5459 + $0x1f8] sm:$0xff]
                %5588 = vst [vmem:[%s5460 + $0x1f8] sm:$0xff] %v5587
                %s5589 = sadd.s32 1, %s5458
                %p5590 = scmp.ge.s32.totalorder %s5589, %s5451
                %s5591 = scalar_select %p5590, 0, %s5589
                %s5592 = smul.u32 %s5591, 512
                %s5593 = smul.u32 %s5591, 512
                %s5594 = scalar_lea.vmem %s5431, %s5592 [#allocation2]
                %s5595 = scalar_lea.vmem %s5442, %s5593
              $region65: #{m1_forward.3} parent=59 // loop_footer
                %s5455 = sadd.s32 %s5453, 1
              $region66: #{m1_forward.3} parent=59 // loop_footer_branch
                %5452 = sbr.rel target = $region62
              $region67: #{m1_forward.3} parent=59 // loop_exit
                _
              %s5596 = sshrl.u32 %s5438, 6
              %s5597 = sand.u32 %s5438, 63
              %s5598 = smul.u32 %s5596, 64
              %s5599 = smul.u32 8, %s5598
              %s5600 = scalar_lea.vmem %s5431, %s5599 [#allocation2]
              %s5601 = smul.u32 8, %s5598
              %s5602 = scalar_lea.vmem %s5442, %s5601
              // While loop
              $region68: #{m1_forward.3} parent=59 // loop_pre_header
                _
              $region69: #{m1_forward.3} parent=59 // loop_header
                %s5604 = sphi 0, %s5606
                %p5605 = scmp.ge.s32.totalorder %s5604, %s5597
                %s5609 = sphi 0, %s5616
                %s5610 = sphi %s5600, %s5619
                %s5611 = sphi %s5602, %s5620
              $region70: #{m1_forward.3} parent=59 // loop_header_branch
                %5608 = sbr.rel (%p5605) target = $region74
              $region71: #{m1_forward.3} parent=59 // loop_body
                %v5612 = vld [vmem:[%s5610] sm:$0xff]
                %5613 = vst [vmem:[%s5611] sm:$0xff] %v5612
                %s5614 = sadd.s32 1, %s5609
                %p5615 = scmp.ge.s32.totalorder %s5614, %s5597
                %s5616 = scalar_select %p5615, 0, %s5614
                %s5617 = smul.u32 %s5616, 8
                %s5618 = smul.u32 %s5616, 8
                %s5619 = scalar_lea.vmem %s5600, %s5617 [#allocation2]
                %s5620 = scalar_lea.vmem %s5602, %s5618
              $region72: #{m1_forward.3} parent=59 // loop_footer
                %s5606 = sadd.s32 %s5604, 1
              $region73: #{m1_forward.3} parent=59 // loop_footer_branch
                %5603 = sbr.rel target = $region69
              $region74: #{m1_forward.3} parent=59 // loop_exit
                _
            $region60: #{m1_forward.3} parent=51 // pred_fallthru
              _
          $region52: #{m1_forward.3} parent=47 // pred_fallthru
            _
          %5795 = vnop
        $region48: #{m1_forward.3} parent=43 // pred_fallthru
          _
      $region44: #{m1_forward.3} parent=5 // pred_fallthru
        _
      %p5796 = scmp.le.s32.totalorder 2, %s12
      // Predicated region
      $region97: #{m1_forward.3} parent=5 // pred_check
        %p5797 = pneg %p5796
      $region98: #{m1_forward.3} parent=5 // pred_check_branch
        %5799 = sbr.rel (%p5797) target = $region100
      $region99: #{m1_forward.3} parent=5 // pred_region
        %s5800 = ssub.s32 %s12, 2
        // Predicated region
        $region101: #{m1_forward.3} parent=99 // pred_check
          %p5801 = pneg %p187
        $region102: #{m1_forward.3} parent=99 // pred_check_branch
          %5803 = sbr.rel (%p5801) target = $region104
        $region103: #{m1_forward.3} parent=99 // pred_region
          %s5804 = sand.u32 %s172, 1
          %s5805 = sand.u32 %s172, 1
          %s5806 = smul.addr %s5805, 904
          %s5807 = scalar_lea.vmem [#allocation2], %s5806
        $region104: #{m1_forward.3} parent=99 // pred_fallthru
          _
      $region100: #{m1_forward.3} parent=5 // pred_fallthru
        _
    $region6: #{m1_forward.3} parent=1 // loop_footer
      %s16 = sadd.s32 1, %s12
    $region7: #{m1_forward.3} parent=1 // loop_footer_branch
      %11 = sbr.rel target = $region3
    $region8: #{m1_forward.3} parent=1 // loop_exit
      _

// kernel: m1_forward.4
$region0: #{m1_forward.4}
  #allocation0 [shape = 'u32[]', space=smem, size = 0x4, offset = 0x4, fixed_abs, tag = 'smem constant byte address 0x4 - core index']
  #allocation1 [shape = 'u32[144,128]{1,0:T(1,128)}', space=vmem, size = 0x12000, scoped, tag = 'internal scratch']
  %s0 = inlined_call_operand.vmem [shape: f32[338,150], index: 0, kind: input, shape index: {}]
  %s1 = inlined_call_operand.vmem [shape: f32[338,150], index: 1, kind: input, shape index: {}]
  %s2 = inlined_call_operand.vmem [shape: f32[338,150], index: 2, kind: input, shape index: {}]
  %s3 = inlined_call_operand.vmem [shape: f32[338,150], index: 3, kind: input, shape index: {}]
  %s4 = inlined_call_operand.vmem [shape: f32[150,16], index: 4, kind: input, shape index: {}]
  %s5 = inlined_call_operand.vmem [shape: f32[1,16], index: 5, kind: input, shape index: {}]
  %s6 = inlined_call_operand.vmem [shape: f32[338,16], index: 6, kind: output, shape index: {}]
  %s7 = sld [smem:[#allocation0]]
  $region105: #{m1_forward.4} parent=0
    _
  %s9 = ssub.s32 1, %s7
  %s10 = scalar_select 0, %s9, %s7
  $region1: #{m1_forward.4} parent=0
    #allocation2 [shape = 'u8[180224]{0}', space=vmem, size = 0x2c000, scoped, tag = 'output window, operand 0']
    loop: start=0, step=1, limit=4
    $region2: #{m1_forward.4} parent=1 // loop_pre_header
      _
    $region3: #{m1_forward.4} parent=1 // loop_header
      %s12 = sphi 0, %s16
      %p13 = scmp.ge.s32.totalorder %s12, 4
      %s22 = sphi 0, %s24
      %s25 = sphi 0, %s22
      %s26 = sphi 0, %s25
      %s42 = sphi 0, %s26
      %s48 = sphi 0, %s50
      %s51 = sphi 0, %s48
      %s52 = sphi 0, %s51
      %s68 = sphi 0, %s52
      %s74 = sphi 0, %s76
      %s77 = sphi 0, %s74
      %s78 = sphi 0, %s77
      %s94 = sphi 0, %s78
      %s100 = sphi 0, %s102
      %s103 = sphi 0, %s100
      %s104 = sphi 0, %s103
      %s120 = sphi 0, %s104
      %s124 = sphi 0, %s124
      %s126 = sphi 0, %s124
      %s127 = sphi 0, %s126
      %s141 = sphi 0, %s127
      %s145 = sphi 0, %s145
      %s147 = sphi 0, %s145
      %s148 = sphi 0, %s147
      %s162 = sphi 0, %s148
      %s168 = sphi 0, %s170
      %s171 = sphi 0, %s168
      %s172 = sphi 0, %s171
      %s188 = sphi 0, %s172
    $region4: #{m1_forward.4} parent=1 // loop_header_branch
      %15 = sbr.rel (%p13) target = $region8
    $region5: #{m1_forward.4} parent=1 // loop_body
      %s17 = ssub.s32 %s12, 1
      %s18 = ssub.s32 %s12, 2
      %s19 = sadd.s32 %s12, 1
      %s20 = ssub.s32 %s12, %s19
      %p21 = scmp.eq.s32.totalorder %s20, 0
      %s23 = sadd.s32 %s22, 1
      %s24 = scalar_select %p21, %s22, %s23
      %p27 = pneg %p21
      %p28 = scmp.eq.s32.totalorder %s12, 1
      %p29 = por %p27, %p28
      %p30 = scmp.ne.s32.totalorder %s22, %s25
      %p31 = scmp.eq.s32.totalorder %s12, 0
      %p32 = por %p30, %p31
      %p33 = scmp.ne.s32.totalorder %s22, %s25
      %p34 = scmp.eq.s32.totalorder %s17, 1
      %p35 = por %p33, %p34
      %p36 = scmp.ne.s32.totalorder %s25, %s26
      %p37 = scmp.eq.s32.totalorder %s17, 0
      %p38 = por %p36, %p37
      %p39 = scmp.ne.s32.totalorder %s25, %s26
      %p40 = scmp.eq.s32.totalorder %s18, 1
      %p41 = por %p39, %p40
      %p43 = scmp.ne.s32.totalorder %s26, %s42
      %p44 = scmp.eq.s32.totalorder %s18, 0
      %p45 = por %p43, %p44
      %s46 = ssub.s32 %s12, %s19
      %p47 = scmp.eq.s32.totalorder %s46, 0
      %s49 = sadd.s32 %s48, 1
      %s50 = scalar_select %p47, %s48, %s49
      %p53 = pneg %p47
      %p54 = scmp.eq.s32.totalorder %s12, 1
      %p55 = por %p53, %p54
      %p56 = scmp.ne.s32.totalorder %s48, %s51
      %p57 = scmp.eq.s32.totalorder %s12, 0
      %p58 = por %p56, %p57
      %p59 = scmp.ne.s32.totalorder %s48, %s51
      %p60 = scmp.eq.s32.totalorder %s17, 1
      %p61 = por %p59, %p60
      %p62 = scmp.ne.s32.totalorder %s51, %s52
      %p63 = scmp.eq.s32.totalorder %s17, 0
      %p64 = por %p62, %p63
      %p65 = scmp.ne.s32.totalorder %s51, %s52
      %p66 = scmp.eq.s32.totalorder %s18, 1
      %p67 = por %p65, %p66
      %p69 = scmp.ne.s32.totalorder %s52, %s68
      %p70 = scmp.eq.s32.totalorder %s18, 0
      %p71 = por %p69, %p70
      %s72 = ssub.s32 %s12, %s19
      %p73 = scmp.eq.s32.totalorder %s72, 0
      %s75 = sadd.s32 %s74, 1
      %s76 = scalar_select %p73, %s74, %s75
      %p79 = pneg %p73
      %p80 = scmp.eq.s32.totalorder %s12, 1
      %p81 = por %p79, %p80
      %p82 = scmp.ne.s32.totalorder %s74, %s77
      %p83 = scmp.eq.s32.totalorder %s12, 0
      %p84 = por %p82, %p83
      %p85 = scmp.ne.s32.totalorder %s74, %s77
      %p86 = scmp.eq.s32.totalorder %s17, 1
      %p87 = por %p85, %p86
      %p88 = scmp.ne.s32.totalorder %s77, %s78
      %p89 = scmp.eq.s32.totalorder %s17, 0
      %p90 = por %p88, %p89
      %p91 = scmp.ne.s32.totalorder %s77, %s78
      %p92 = scmp.eq.s32.totalorder %s18, 1
      %p93 = por %p91, %p92
      %p95 = scmp.ne.s32.totalorder %s78, %s94
      %p96 = scmp.eq.s32.totalorder %s18, 0
      %p97 = por %p95, %p96
      %s98 = ssub.s32 %s12, %s19
      %p99 = scmp.eq.s32.totalorder %s98, 0
      %s101 = sadd.s32 %s100, 1
      %s102 = scalar_select %p99, %s100, %s101
      %p105 = pneg %p99
      %p106 = scmp.eq.s32.totalorder %s12, 1
      %p107 = por %p105, %p106
      %p108 = scmp.ne.s32.totalorder %s100, %s103
      %p109 = scmp.eq.s32.totalorder %s12, 0
      %p110 = por %p108, %p109
      %p111 = scmp.ne.s32.totalorder %s100, %s103
      %p112 = scmp.eq.s32.totalorder %s17, 1
      %p113 = por %p111, %p112
      %p114 = scmp.ne.s32.totalorder %s103, %s104
      %p115 = scmp.eq.s32.totalorder %s17, 0
      %p116 = por %p114, %p115
      %p117 = scmp.ne.s32.totalorder %s103, %s104
      %p118 = scmp.eq.s32.totalorder %s18, 1
      %p119 = por %p117, %p118
      %p121 = scmp.ne.s32.totalorder %s104, %s120
      %p122 = scmp.eq.s32.totalorder %s18, 0
      %p123 = por %p121, %p122
      %s125 = sadd.s32 %s124, 1
      %p128 = scmp.eq.s32.totalorder %s12, 1
      %p129 = scmp.ne.s32.totalorder %s124, %s126
      %p130 = scmp.eq.s32.totalorder %s12, 0
      %p131 = por %p129, %p130
      %p132 = scmp.ne.s32.totalorder %s124, %s126
      %p133 = scmp.eq.s32.totalorder %s17, 1
      %p134 = por %p132, %p133
      %p135 = scmp.ne.s32.totalorder %s126, %s127
      %p136 = scmp.eq.s32.totalorder %s17, 0
      %p137 = por %p135, %p136
      %p138 = scmp.ne.s32.totalorder %s126, %s127
      %p139 = scmp.eq.s32.totalorder %s18, 1
      %p140 = por %p138, %p139
      %p142 = scmp.ne.s32.totalorder %s127, %s141
      %p143 = scmp.eq.s32.totalorder %s18, 0
      %p144 = por %p142, %p143
      %s146 = sadd.s32 %s145, 1
      %p149 = scmp.eq.s32.totalorder %s12, 1
      %p150 = scmp.ne.s32.totalorder %s145, %s147
      %p151 = scmp.eq.s32.totalorder %s12, 0
      %p152 = por %p150, %p151
      %p153 = scmp.ne.s32.totalorder %s145, %s147
      %p154 = scmp.eq.s32.totalorder %s17, 1
      %p155 = por %p153, %p154
      %p156 = scmp.ne.s32.totalorder %s147, %s148
      %p157 = scmp.eq.s32.totalorder %s17, 0
      %p158 = por %p156, %p157
      %p159 = scmp.ne.s32.totalorder %s147, %s148
      %p160 = scmp.eq.s32.totalorder %s18, 1
      %p161 = por %p159, %p160
      %p163 = scmp.ne.s32.totalorder %s148, %s162
      %p164 = scmp.eq.s32.totalorder %s18, 0
      %p165 = por %p163, %p164
      %s166 = ssub.s32 %s12, %s19
      %p167 = scmp.eq.s32.totalorder %s166, 0
      %s169 = sadd.s32 %s168, 1
      %s170 = scalar_select %p167, %s168, %s169
      %p173 = pneg %p167
      %p174 = scmp.eq.s32.totalorder %s12, 1
      %p175 = por %p173, %p174
      %p176 = scmp.ne.s32.totalorder %s168, %s171
      %p177 = scmp.eq.s32.totalorder %s12, 0
      %p178 = por %p176, %p177
      %p179 = scmp.ne.s32.totalorder %s168, %s171
      %p180 = scmp.eq.s32.totalorder %s17, 1
      %p181 = por %p179, %p180
      %p182 = scmp.ne.s32.totalorder %s171, %s172
      %p183 = scmp.eq.s32.totalorder %s17, 0
      %p184 = por %p182, %p183
      %p185 = scmp.ne.s32.totalorder %s171, %s172
      %p186 = scmp.eq.s32.totalorder %s18, 1
      %p187 = por %p185, %p186
      %p189 = scmp.ne.s32.totalorder %s172, %s188
      %p190 = scmp.eq.s32.totalorder %s18, 0
      %p191 = por %p189, %p190
      %p192 = scmp.le.s32.totalorder 1, %s12
      %p193 = scmp.lt.s32.totalorder %s12, 3
      %p194 = pnand %p192, %p193
      %p195 = pneg %p194
      // Predicated region
      $region9: #{m1_forward.4} parent=5 // pred_check
        _
      $region10: #{m1_forward.4} parent=5 // pred_check_branch
        %197 = sbr.rel (%p194) target = $region12
      $region11: #{m1_forward.4} parent=5 // pred_region
        %s198 = ssub.s32 %s12, 1
        // Predicated region
        $region13: #{m1_forward.4} parent=11 // pred_check
          %p199 = pneg %p137
        $region14: #{m1_forward.4} parent=11 // pred_check_branch
          %201 = sbr.rel (%p199) target = $region16
        $region15: #{m1_forward.4} parent=11 // pred_region
          _
        $region16: #{m1_forward.4} parent=11 // pred_fallthru
          _
        // Predicated region
        $region17: #{m1_forward.4} parent=11 // pred_check
          %p202 = pneg %p158
        $region18: #{m1_forward.4} parent=11 // pred_check_branch
          %204 = sbr.rel (%p202) target = $region20
        $region19: #{m1_forward.4} parent=11 // pred_region
          _
        $region20: #{m1_forward.4} parent=11 // pred_fallthru
          _
      $region12: #{m1_forward.4} parent=5 // pred_fallthru
        _
      %p205 = scmp.lt.s32.totalorder %s12, 2
      // Predicated region
      $region21: #{m1_forward.4} parent=5 // pred_check
        %p206 = pneg %p205
      $region22: #{m1_forward.4} parent=5 // pred_check_branch
        %208 = sbr.rel (%p206) target = $region24
      $region23: #{m1_forward.4} parent=5 // pred_region
        // Predicated region
        $region25: #{m1_forward.4} parent=23 // pred_check
          %p209 = pneg %p32
        $region26: #{m1_forward.4} parent=23 // pred_check_branch
          %211 = sbr.rel (%p209) target = $region28
        $region27: #{m1_forward.4} parent=23 // pred_region
          %s212 = smul.u32 22, %s12
          %s213 = ssub.s32 43, %s212
          %p214 = scmp.lt.s32.totalorder %s213, 22
          %s215 = scalar_select %p214, %s213, 22
          %s216 = smul.u32 128, %s215
          %s217 = smul.u32 %s216, 2
          %p218 = scmp.lt.s32.totalorder %s212, 42
          %s219 = scalar_select %p218, %s212, 42
          %s220 = smul.addr %s219, 2
          %s221 = smul.addr %s220, 8
          %s222 = scalar_lea.vmem %s0, %s221
          %s223 = smul.u32 22, %s12
          %s224 = ssub.s32 43, %s223
          %p225 = scmp.lt.s32.totalorder %s224, 22
          %s226 = scalar_select %p225, %s224, 22
          %s227 = smul.u32 128, %s226
          %s228 = smul.u32 %s227, 2
        $region28: #{m1_forward.4} parent=23 // pred_fallthru
          _
        // Predicated region
        $region29: #{m1_forward.4} parent=23 // pred_check
          %p229 = pneg %p58
        $region30: #{m1_forward.4} parent=23 // pred_check_branch
          %231 = sbr.rel (%p229) target = $region32
        $region31: #{m1_forward.4} parent=23 // pred_region
          %s232 = smul.u32 22, %s12
          %s233 = ssub.s32 43, %s232
          %p234 = scmp.lt.s32.totalorder %s233, 22
          %s235 = scalar_select %p234, %s233, 22
          %s236 = smul.u32 128, %s235
          %s237 = smul.u32 %s236, 2
          %p238 = scmp.lt.s32.totalorder %s232, 42
          %s239 = scalar_select %p238, %s232, 42
          %s240 = smul.addr %s239, 2
          %s241 = smul.addr %s240, 8
          %s242 = scalar_lea.vmem %s1, %s241
          %s243 = smul.u32 22, %s12
          %s244 = ssub.s32 43, %s243
          %p245 = scmp.lt.s32.totalorder %s244, 22
          %s246 = scalar_select %p245, %s244, 22
          %s247 = smul.u32 128, %s246
          %s248 = smul.u32 %s247, 2
        $region32: #{m1_forward.4} parent=23 // pred_fallthru
          _
        // Predicated region
        $region33: #{m1_forward.4} parent=23 // pred_check
          %p249 = pneg %p84
        $region34: #{m1_forward.4} parent=23 // pred_check_branch
          %251 = sbr.rel (%p249) target = $region36
        $region35: #{m1_forward.4} parent=23 // pred_region
          %s252 = smul.u32 22, %s12
          %s253 = ssub.s32 43, %s252
          %p254 = scmp.lt.s32.totalorder %s253, 22
          %s255 = scalar_select %p254, %s253, 22
          %s256 = smul.u32 128, %s255
          %s257 = smul.u32 %s256, 2
          %p258 = scmp.lt.s32.totalorder %s252, 42
          %s259 = scalar_select %p258, %s252, 42
          %s260 = smul.addr %s259, 2
          %s261 = smul.addr %s260, 8
          %s262 = scalar_lea.vmem %s2, %s261
          %s263 = smul.u32 22, %s12
          %s264 = ssub.s32 43, %s263
          %p265 = scmp.lt.s32.totalorder %s264, 22
          %s266 = scalar_select %p265, %s264, 22
          %s267 = smul.u32 128, %s266
          %s268 = smul.u32 %s267, 2
        $region36: #{m1_forward.4} parent=23 // pred_fallthru
          _
        // Predicated region
        $region37: #{m1_forward.4} parent=23 // pred_check
          %p269 = pneg %p110
        $region38: #{m1_forward.4} parent=23 // pred_check_branch
          %271 = sbr.rel (%p269) target = $region40
        $region39: #{m1_forward.4} parent=23 // pred_region
          %s272 = smul.u32 22, %s12
          %s273 = ssub.s32 43, %s272
          %p274 = scmp.lt.s32.totalorder %s273, 22
          %s275 = scalar_select %p274, %s273, 22
          %s276 = smul.u32 128, %s275
          %s277 = smul.u32 %s276, 2
          %p278 = scmp.lt.s32.totalorder %s272, 42
          %s279 = scalar_select %p278, %s272, 42
          %s280 = smul.addr %s279, 2
          %s281 = smul.addr %s280, 8
          %s282 = scalar_lea.vmem %s3, %s281
          %s283 = smul.u32 22, %s12
          %s284 = ssub.s32 43, %s283
          %p285 = scmp.lt.s32.totalorder %s284, 22
          %s286 = scalar_select %p285, %s284, 22
          %s287 = smul.u32 128, %s286
          %s288 = smul.u32 %s287, 2
        $region40: #{m1_forward.4} parent=23 // pred_fallthru
          _
      $region24: #{m1_forward.4} parent=5 // pred_fallthru
        _
      %p289 = scmp.le.s32.totalorder 1, %s12
      %p290 = scmp.lt.s32.totalorder %s12, 3
      %p291 = pnand %p289, %p290
      %p292 = pneg %p291
      // Predicated region
      $region41: #{m1_forward.4} parent=5 // pred_check
        _
      $region42: #{m1_forward.4} parent=5 // pred_check_branch
        %294 = sbr.rel (%p291) target = $region44
      $region43: #{m1_forward.4} parent=5 // pred_region
        %s295 = ssub.s32 %s12, 1
        %s296 = smul.u32 22, %s17
        %s297 = ssub.s32 43, %s296
        %p298 = scmp.lt.s32.totalorder %s297, 22
        %s299 = scalar_select %p298, %s297, 22
        %s300 = smul.u32 128, %s299
        %s301 = smul.u32 %s300, 2
        %p302 = scmp.lt.s32.totalorder %s296, 42
        %s303 = scalar_select %p302, %s296, 42
        %s304 = smul.addr %s303, 2
        %s305 = smul.addr %s304, 8
        %s306 = scalar_lea.vmem %s0, %s305
        %p307 = pneg %p38
        %p308 = pneg %p35
        %s309 = smul.u32 22, %s17
        %s310 = ssub.s32 43, %s309
        %p311 = scmp.lt.s32.totalorder %s310, 22
        %s312 = scalar_select %p311, %s310, 22
        %s313 = smul.u32 128, %s312
        %s314 = smul.u32 %s313, 2
        %p315 = scmp.lt.s32.totalorder %s309, 42
        %s316 = scalar_select %p315, %s309, 42
        %s317 = smul.addr %s316, 2
        %s318 = smul.addr %s317, 8
        %s319 = scalar_lea.vmem %s1, %s318
        %p320 = pneg %p64
        %p321 = pneg %p61
        %s322 = smul.u32 22, %s17
        %s323 = ssub.s32 43, %s322
        %p324 = scmp.lt.s32.totalorder %s323, 22
        %s325 = scalar_select %p324, %s323, 22
        %s326 = smul.u32 128, %s325
        %s327 = smul.u32 %s326, 2
        %p328 = scmp.lt.s32.totalorder %s322, 42
        %s329 = scalar_select %p328, %s322, 42
        %s330 = smul.addr %s329, 2
        %s331 = smul.addr %s330, 8
        %s332 = scalar_lea.vmem %s2, %s331
        %p333 = pneg %p90
        %p334 = pneg %p87
        %s335 = smul.u32 22, %s17
        %s336 = ssub.s32 43, %s335
        %p337 = scmp.lt.s32.totalorder %s336, 22
        %s338 = scalar_select %p337, %s336, 22
        %s339 = smul.u32 128, %s338
        %s340 = smul.u32 %s339, 2
        %p341 = scmp.lt.s32.totalorder %s335, 42
        %s342 = scalar_select %p341, %s335, 42
        %s343 = smul.addr %s342, 2
        %s344 = smul.addr %s343, 8
        %s345 = scalar_lea.vmem %s3, %s344
        %p346 = pneg %p116
        %p347 = pneg %p113
        %p348 = pneg %p137
        %p349 = pneg %p134
        %p350 = pneg %p158
        %p351 = pneg %p155
        %p352 = pneg %p184
        %p353 = pneg %p181
        %s354 = sand.u32 %s171, 1
        %s355 = sand.u32 %s171, 1
        %s356 = smul.addr %s355, 176
        %s357 = scalar_lea.vmem [#allocation2], %s356
        %s358 = smul.u32 22, %s17
        %s359 = ssub.s32 43, %s358
        %p360 = scmp.lt.s32.totalorder %s359, 22
        %s361 = scalar_select %p360, %s359, 22
        %s362 = smul.u32 128, %s361
        %s363 = smul.u32 %s362, 2
        %p364 = scmp.lt.s32.totalorder %s358, 42
        %s365 = scalar_select %p364, %s358, 42
        %s366 = smul.addr %s365, 2
        %s367 = smul.addr %s366, 8
        %s368 = scalar_lea.vmem %s0, %s367
        %s369 = smul.u32 22, %s17
        %s370 = ssub.s32 43, %s369
        %p371 = scmp.lt.s32.totalorder %s370, 22
        %s372 = scalar_select %p371, %s370, 22
        %s373 = smul.u32 128, %s372
        %s374 = smul.u32 %s373, 2
        %s375 = smul.u32 22, %s17
        %s376 = ssub.s32 43, %s375
        %p377 = scmp.lt.s32.totalorder %s376, 22
        %s378 = scalar_select %p377, %s376, 22
        %s379 = smul.u32 128, %s378
        %s380 = smul.u32 %s379, 2
        %p381 = scmp.lt.s32.totalorder %s375, 42
        %s382 = scalar_select %p381, %s375, 42
        %s383 = smul.addr %s382, 2
        %s384 = smul.addr %s383, 8
        %s385 = scalar_lea.vmem %s1, %s384
        %s386 = smul.u32 22, %s17
        %s387 = ssub.s32 43, %s386
        %p388 = scmp.lt.s32.totalorder %s387, 22
        %s389 = scalar_select %p388, %s387, 22
        %s390 = smul.u32 128, %s389
        %s391 = smul.u32 %s390, 2
        %s392 = smul.u32 22, %s17
        %s393 = ssub.s32 43, %s392
        %p394 = scmp.lt.s32.totalorder %s393, 22
        %s395 = scalar_select %p394, %s393, 22
        %s396 = smul.u32 128, %s395
        %s397 = smul.u32 %s396, 2
        %p398 = scmp.lt.s32.totalorder %s392, 42
        %s399 = scalar_select %p398, %s392, 42
        %s400 = smul.addr %s399, 2
        %s401 = smul.addr %s400, 8
        %s402 = scalar_lea.vmem %s2, %s401
        %s403 = smul.u32 22, %s17
        %s404 = ssub.s32 43, %s403
        %p405 = scmp.lt.s32.totalorder %s404, 22
        %s406 = scalar_select %p405, %s404, 22
        %s407 = smul.u32 128, %s406
        %s408 = smul.u32 %s407, 2
        %s409 = smul.u32 22, %s17
        %s410 = ssub.s32 43, %s409
        %p411 = scmp.lt.s32.totalorder %s410, 22
        %s412 = scalar_select %p411, %s410, 22
        %s413 = smul.u32 128, %s412
        %s414 = smul.u32 %s413, 2
        %p415 = scmp.lt.s32.totalorder %s409, 42
        %s416 = scalar_select %p415, %s409, 42
        %s417 = smul.addr %s416, 2
        %s418 = smul.addr %s417, 8
        %s419 = scalar_lea.vmem %s3, %s418
        %s420 = smul.u32 22, %s17
        %s421 = ssub.s32 43, %s420
        %p422 = scmp.lt.s32.totalorder %s421, 22
        %s423 = scalar_select %p422, %s421, 22
        %s424 = smul.u32 128, %s423
        %s425 = smul.u32 %s424, 2
        %s426 = smul.u32 22, %s17
        %s427 = ssub.s32 43, %s426
        %p428 = scmp.lt.s32.totalorder %s427, 22
        %s429 = scalar_select %p428, %s427, 22
        %s430 = smul.u32 128, %s429
        %v431 = vld [vmem:[%s368] sm:$0xff]
        %v432 = vld [vmem:[%s368 + $0x8] sm:$0xff]
        %v433 = vld [vmem:[%s368 + $0x10] sm:$0xff]
        %v434 = vld [vmem:[%s368 + $0x18] sm:$0xff]
        %v435 = vld [vmem:[%s368 + $0x20] sm:$0xff]
        %v436 = vld [vmem:[%s368 + $0x28] sm:$0xff]
        %v437 = vld [vmem:[%s368 + $0x30] sm:$0xff]
        %v438 = vld [vmem:[%s368 + $0x38] sm:$0xff]
        %v439 = vld [vmem:[%s368 + $0x40] sm:$0xff]
        %v440 = vld [vmem:[%s368 + $0x48] sm:$0xff]
        %v441 = vld [vmem:[%s368 + $0x50] sm:$0xff]
        %v442 = vld [vmem:[%s368 + $0x58] sm:$0xff]
        %v443 = vld [vmem:[%s368 + $0x60] sm:$0xff]
        %v444 = vld [vmem:[%s368 + $0x68] sm:$0xff]
        %v445 = vld [vmem:[%s368 + $0x70] sm:$0xff]
        %v446 = vld [vmem:[%s368 + $0x78] sm:$0xff]
        %v447 = vld [vmem:[%s368 + $0x80] sm:$0xff]
        %v448 = vld [vmem:[%s368 + $0x88] sm:$0xff]
        %v449 = vld [vmem:[%s368 + $0x90] sm:$0xff]
        %v450 = vld [vmem:[%s368 + $0x98] sm:$0xff]
        %v451 = vld [vmem:[%s368 + $0xa0] sm:$0xff]
        %v452 = vld [vmem:[%s368 + $0xa8] sm:$0xff]
        %v453 = vld [vmem:[%s368 + $0xb0] sm:$0xff]
        %v454 = vld [vmem:[%s368 + $0xb8] sm:$0xff]
        %v455 = vld [vmem:[%s368 + $0xc0] sm:$0xff]
        %v456 = vld [vmem:[%s368 + $0xc8] sm:$0xff]
        %v457 = vld [vmem:[%s368 + $0xd0] sm:$0xff]
        %v458 = vld [vmem:[%s368 + $0xd8] sm:$0xff]
        %v459 = vld [vmem:[%s368 + $0xe0] sm:$0xff]
        %v460 = vld [vmem:[%s368 + $0xe8] sm:$0xff]
        %v461 = vld [vmem:[%s368 + $0xf0] sm:$0xff]
        %v462 = vld [vmem:[%s368 + $0xf8] sm:$0xff]
        %v463 = vld [vmem:[%s368 + $0x100] sm:$0xff]
        %v464 = vld [vmem:[%s368 + $0x108] sm:$0xff]
        %v465 = vld [vmem:[%s368 + $0x110] sm:$0xff]
        %v466 = vld [vmem:[%s368 + $0x118] sm:$0xff]
        %v467 = vld [vmem:[%s368 + $0x120] sm:$0xff]
        %v468 = vld [vmem:[%s368 + $0x128] sm:$0xff]
        %v469 = vld [vmem:[%s368 + $0x130] sm:$0xff]
        %v470 = vld [vmem:[%s368 + $0x138] sm:$0xff]
        %v471 = vld [vmem:[%s368 + $0x140] sm:$0xff]
        %v472 = vld [vmem:[%s368 + $0x148] sm:$0xff]
        %v473 = vld [vmem:[%s368 + $0x150] sm:$0xff]
        %v474 = vld [vmem:[%s368 + $0x158] sm:$0xff]
        %v475 = vld [vmem:[%s4] sm:$0xff]
        %v476 = vld [vmem:[%s4 + $0x8] sm:$0xff]
        %v477 = vld [vmem:[%s4 + $0x10] sm:$0xff]
        %v478 = vld [vmem:[%s4 + $0x18] sm:$0xff]
        %v479 = vld [vmem:[%s4 + $0x20] sm:$0xff]
        %v480 = vld [vmem:[%s4 + $0x28] sm:$0xff]
        %v481 = vld [vmem:[%s4 + $0x30] sm:$0xff]
        %v482 = vld [vmem:[%s4 + $0x38] sm:$0xff]
        %v483 = vld [vmem:[%s4 + $0x40] sm:$0xff]
        %v484 = vld [vmem:[%s4 + $0x48] sm:$0xff]
        %v485 = vld [vmem:[%s4 + $0x50] sm:$0xff]
        %v486 = vld [vmem:[%s4 + $0x58] sm:$0xff]
        %v487 = vld [vmem:[%s4 + $0x60] sm:$0xff]
        %v488 = vld [vmem:[%s4 + $0x68] sm:$0xff]
        %v489 = vld [vmem:[%s4 + $0x70] sm:$0xff]
        %v490 = vld [vmem:[%s4 + $0x78] sm:$0xff]
        %v491 = vld [vmem:[%s4 + $0x80] sm:$0xff]
        %v492 = vld [vmem:[%s4 + $0x88] sm:$0xff]
        %v493 = vld [vmem:[%s4 + $0x90] sm:$0x3f]
        %vm494 = vcmask 179200
        %v496 = vsel %vm494, %v432, 0
        %v499 = vsel %vm494, %v434, 0
        %v502 = vsel %vm494, %v436, 0
        %v505 = vsel %vm494, %v438, 0
        %v508 = vsel %vm494, %v440, 0
        %v511 = vsel %vm494, %v442, 0
        %v514 = vsel %vm494, %v444, 0
        %v517 = vsel %vm494, %v446, 0
        %v520 = vsel %vm494, %v448, 0
        %v523 = vsel %vm494, %v450, 0
        %v526 = vsel %vm494, %v452, 0
        %v529 = vsel %vm494, %v454, 0
        %v532 = vsel %vm494, %v456, 0
        %v535 = vsel %vm494, %v458, 0
        %v538 = vsel %vm494, %v460, 0
        %v541 = vsel %vm494, %v462, 0
        %v544 = vsel %vm494, %v464, 0
        %v547 = vsel %vm494, %v466, 0
        %v550 = vsel %vm494, %v468, 0
        %v553 = vsel %vm494, %v470, 0
        %v556 = vsel %vm494, %v472, 0
        %v559 = vsel %vm494, %v474, 0
        %vm561 = vcmask 1045504
        %v563 = vsel %vm561, %v493, 0
        %565 = vmatprep.subr.mxu0 0.0
        %566 = vmatpush1.msra.mxu0 %v475
        %567 = vmatprep.subr.mxu0 0.0
        %568 = vmatpush1.msra.mxu0 %v476
        %569 = vmatprep.subr.mxu0 0.0
        %570 = vmatpush1.msra.mxu0 %v477
        %571 = vmatprep.subr.mxu0 0.0
        %572 = vmatpush1.msra.mxu0 %v478
        %573 = vmatprep.subr.mxu0 0.0
        %574 = vmatpush1.msra.mxu0 %v479
        %575 = vmatprep.subr.mxu0 0.0
        %576 = vmatpush1.msra.mxu0 %v480
        %577 = vmatprep.subr.mxu0 0.0
        %578 = vmatpush1.msra.mxu0 %v481
        %579 = vmatprep.subr.mxu0 0.0
        %580 = vmatpush1.msra.mxu0 %v482
        %581 = vmatprep.subr.mxu0 0.0
        %582 = vmatpush1.msra.mxu0 %v483
        %583 = vmatprep.subr.mxu0 0.0
        %584 = vmatpush1.msra.mxu0 %v484
        %585 = vmatprep.subr.mxu0 0.0
        %586 = vmatpush1.msra.mxu0 %v485
        %587 = vmatprep.subr.mxu0 0.0
        %588 = vmatpush1.msra.mxu0 %v486
        %589 = vmatprep.subr.mxu0 0.0
        %590 = vmatpush1.msra.mxu0 %v487
        %591 = vmatprep.subr.mxu0 0.0
        %592 = vmatpush1.msra.mxu0 %v488
        %593 = vmatprep.subr.mxu0 0.0
        %594 = vmatpush1.msra.mxu0 %v489
        %595 = vmatprep.subr.mxu0 0.0
        %596 = vmatpush1.msra.mxu0 %v490
        %597 = vmatprep.subr.mxu0 0.0
        %598 = vmatpush1.msra.mxu0 %v491
        %599 = vmatprep.subr.mxu0 0.0
        %600 = vmatpush1.msra.mxu0 %v492
        %601 = vmatprep.subr.mxu0 0.0
        %602 = vmatpush1.msra.mxu0 %v563
        %603 = vmatprep.subr.mxu0 0.0
        %604 = vmatpush1.msra.mxu0 0.0
        %605 = vmatprep.subr.mxu0 0.0
        %606 = vmatpush1.msra.mxu0 0.0
        %607 = vmatprep.subr.mxu0 0.0
        %608 = vmatpush1.msra.mxu0 0.0
        %609 = vmatprep.subr.mxu0 0.0
        %610 = vmatpush1.msra.mxu0 0.0
        %611 = vmatprep.subr.mxu0 0.0
        %612 = vmatpush1.msra.mxu0 0.0
        %613 = vmatprep.subr.mxu0 0.0
        %614 = vmatpush1.msra.mxu0 0.0
        %615 = vmatprep.subr.mxu0 0.0
        %616 = vmatpush1.msra.mxu0 0.0
        %617 = vmatprep.subr.mxu0 0.0
        %618 = vmatpush1.msra.mxu0 0.0
        %619 = vmatprep.subr.mxu0 0.0
        %620 = vmatpush1.msra.mxu0 0.0
        %621 = vmatprep.subr.mxu0 0.0
        %622 = vmatpush1.msra.mxu0 0.0
        %623 = vmatprep.subr.mxu0 0.0
        %624 = vmatpush1.msra.mxu0 0.0
        %625 = vmatprep.subr.mxu0 0.0
        %626 = vmatpush1.msra.mxu0 0.0
        %627 = vmatprep.subr.mxu0 0.0
        %628 = vmatpush1.msra.mxu0 0.0
        %629 = vmatprep.mubr.f32.mxu0 %v496
        %630 = vmatmul.mubr.f32.gmra.mrb[0].mxu0 %v431
        %v631 = vpop.f32.mrb[0].mxu0
        %v632 = vadd.f32 0.0, %v631
        %v633 = vpop.f32.mrb[0].mxu0
        %634 = vmatprep.mubr.f32.mxu0 %v499
        %635 = vmatmul.mubr.f32.gmra.mrb[0].mxu0 %v433
        %v636 = vpop.f32.mrb[0].mxu0
        %v637 = vadd.f32 0.0, %v636
        %v638 = vpop.f32.mrb[0].mxu0
        %639 = vmatprep.mubr.f32.mxu0 %v502
        %640 = vmatmul.mubr.f32.gmra.mrb[0].mxu0 %v435
        %v641 = vpop.f32.mrb[0].mxu0
        %v642 = vadd.f32 0.0, %v641
        %v643 = vpop.f32.mrb[0].mxu0
        %644 = vmatprep.mubr.f32.mxu0 %v505
        %645 = vmatmul.mubr.f32.gmra.mrb[0].mxu0 %v437
        %v646 = vpop.f32.mrb[0].mxu0
        %v647 = vadd.f32 0.0, %v646
        %v648 = vpop.f32.mrb[0].mxu0
        %649 = vmatprep.mubr.f32.mxu0 %v508
        %650 = vmatmul.mubr.f32.gmra.mrb[0].mxu0 %v439
        %v651 = vpop.f32.mrb[0].mxu0
        %v652 = vadd.f32 0.0, %v651
        %v653 = vpop.f32.mrb[0].mxu0
        %654 = vmatprep.mubr.f32.mxu0 %v511
        %655 = vmatmul.mubr.f32.gmra.mrb[0].mxu0 %v441
        %v656 = vpop.f32.mrb[0].mxu0
        %v657 = vadd.f32 0.0, %v656
        %v658 = vpop.f32.mrb[0].mxu0
        %659 = vmatprep.mubr.f32.mxu0 %v514
        %660 = vmatmul.mubr.f32.gmra.mrb[0].mxu0 %v443
        %v661 = vpop.f32.mrb[0].mxu0
        %v662 = vadd.f32 0.0, %v661
        %v663 = vpop.f32.mrb[0].mxu0
        %664 = vmatprep.mubr.f32.mxu0 %v517
        %665 = vmatmul.mubr.f32.gmra.mrb[0].mxu0 %v445
        %v666 = vpop.f32.mrb[0].mxu0
        %v667 = vadd.f32 0.0, %v666
        %v668 = vpop.f32.mrb[0].mxu0
        %669 = vmatprep.mubr.f32.mxu0 %v520
        %670 = vmatmul.mubr.f32.gmra.mrb[0].mxu0 %v447
        %v671 = vpop.f32.mrb[0].mxu0
        %v672 = vadd.f32 0.0, %v671
        %v673 = vpop.f32.mrb[0].mxu0
        %674 = vmatprep.mubr.f32.mxu0 %v523
        %675 = vmatmul.mubr.f32.gmra.mrb[0].mxu0 %v449
        %v676 = vpop.f32.mrb[0].mxu0
        %v677 = vadd.f32 0.0, %v676
        %v678 = vpop.f32.mrb[0].mxu0
        %679 = vmatprep.mubr.f32.mxu0 %v526
        %680 = vmatmul.mubr.f32.gmra.mrb[0].mxu0 %v451
        %v681 = vpop.f32.mrb[0].mxu0
        %v682 = vadd.f32 0.0, %v681
        %v683 = vpop.f32.mrb[0].mxu0
        %684 = vmatprep.mubr.f32.mxu0 %v529
        %685 = vmatmul.mubr.f32.gmra.mrb[0].mxu0 %v453
        %v686 = vpop.f32.mrb[0].mxu0
        %v687 = vadd.f32 0.0, %v686
        %v688 = vpop.f32.mrb[0].mxu0
        %689 = vmatprep.mubr.f32.mxu0 %v532
        %690 = vmatmul.mubr.f32.gmra.mrb[0].mxu0 %v455
        %v691 = vpop.f32.mrb[0].mxu0
        %v692 = vadd.f32 0.0, %v691
        %v693 = vpop.f32.mrb[0].mxu0
        %694 = vmatprep.mubr.f32.mxu0 %v535
        %695 = vmatmul.mubr.f32.gmra.mrb[0].mxu0 %v457
        %v696 = vpop.f32.mrb[0].mxu0
        %v697 = vadd.f32 0.0, %v696
        %v698 = vpop.f32.mrb[0].mxu0
        %699 = vmatprep.mubr.f32.mxu0 %v538
        %700 = vmatmul.mubr.f32.gmra.mrb[0].mxu0 %v459
        %v701 = vpop.f32.mrb[0].mxu0
        %v702 = vadd.f32 0.0, %v701
        %v703 = vpop.f32.mrb[0].mxu0
        %704 = vmatprep.mubr.f32.mxu0 %v541
        %705 = vmatmul.mubr.f32.gmra.mrb[0].mxu0 %v461
        %v706 = vpop.f32.mrb[0].mxu0
        %v707 = vadd.f32 0.0, %v706
        %v708 = vpop.f32.mrb[0].mxu0
        %709 = vmatprep.mubr.f32.mxu0 %v544
        %710 = vmatmul.mubr.f32.gmra.mrb[0].mxu0 %v463
        %v711 = vpop.f32.mrb[0].mxu0
        %v712 = vadd.f32 0.0, %v711
        %v713 = vpop.f32.mrb[0].mxu0
        %714 = vmatprep.mubr.f32.mxu0 %v547
        %715 = vmatmul.mubr.f32.gmra.mrb[0].mxu0 %v465
        %v716 = vpop.f32.mrb[0].mxu0
        %v717 = vadd.f32 0.0, %v716
        %v718 = vpop.f32.mrb[0].mxu0
        %719 = vmatprep.mubr.f32.mxu0 %v550
        %720 = vmatmul.mubr.f32.gmra.mrb[0].mxu0 %v467
        %v721 = vpop.f32.mrb[0].mxu0
        %v722 = vadd.f32 0.0, %v721
        %v723 = vpop.f32.mrb[0].mxu0
        %724 = vmatprep.mubr.f32.mxu0 %v553
        %725 = vmatmul.mubr.f32.gmra.mrb[0].mxu0 %v469
        %v726 = vpop.f32.mrb[0].mxu0
        %v727 = vadd.f32 0.0, %v726
        %v728 = vpop.f32.mrb[0].mxu0
        %729 = vmatprep.mubr.f32.mxu0 %v556
        %730 = vmatmul.mubr.f32.gmra.mrb[0].mxu0 %v471
        %v731 = vpop.f32.mrb[0].mxu0
        %v732 = vadd.f32 0.0, %v731
        %v733 = vpop.f32.mrb[0].mxu0
        %734 = vmatprep.mubr.f32.mxu0 %v559
        %735 = vmatmul.mubr.f32.gmra.mrb[0].mxu0 %v473
        %v736 = vpop.f32.mrb[0].mxu0
        %v737 = vadd.f32 0.0, %v736
        %v738 = vpop.f32.mrb[0].mxu0
        %739 = vdwg.mxu0
        %v740 = vld [vmem:[%s385] sm:$0xff]
        %v741 = vld [vmem:[%s385 + $0x8] sm:$0xff]
        %v742 = vld [vmem:[%s385 + $0x10] sm:$0xff]
        %v743 = vld [vmem:[%s385 + $0x18] sm:$0xff]
        %v744 = vld [vmem:[%s385 + $0x20] sm:$0xff]
        %v745 = vld [vmem:[%s385 + $0x28] sm:$0xff]
        %v746 = vld [vmem:[%s385 + $0x30] sm:$0xff]
        %v747 = vld [vmem:[%s385 + $0x38] sm:$0xff]
        %v748 = vld [vmem:[%s385 + $0x40] sm:$0xff]
        %v749 = vld [vmem:[%s385 + $0x48] sm:$0xff]
        %v750 = vld [vmem:[%s385 + $0x50] sm:$0xff]
        %v751 = vld [vmem:[%s385 + $0x58] sm:$0xff]
        %v752 = vld [vmem:[%s385 + $0x60] sm:$0xff]
        %v753 = vld [vmem:[%s385 + $0x68] sm:$0xff]
        %v754 = vld [vmem:[%s385 + $0x70] sm:$0xff]
        %v755 = vld [vmem:[%s385 + $0x78] sm:$0xff]
        %v756 = vld [vmem:[%s385 + $0x80] sm:$0xff]
        %v757 = vld [vmem:[%s385 + $0x88] sm:$0xff]
        %v758 = vld [vmem:[%s385 + $0x90] sm:$0xff]
        %v759 = vld [vmem:[%s385 + $0x98] sm:$0xff]
        %v760 = vld [vmem:[%s385 + $0xa0] sm:$0xff]
        %v761 = vld [vmem:[%s385 + $0xa8] sm:$0xff]
        %v762 = vld [vmem:[%s385 + $0xb0] sm:$0xff]
        %v763 = vld [vmem:[%s385 + $0xb8] sm:$0xff]
        %v764 = vld [vmem:[%s385 + $0xc0] sm:$0xff]
        %v765 = vld [vmem:[%s385 + $0xc8] sm:$0xff]
        %v766 = vld [vmem:[%s385 + $0xd0] sm:$0xff]
        %v767 = vld [vmem:[%s385 + $0xd8] sm:$0xff]
        %v768 = vld [vmem:[%s385 + $0xe0] sm:$0xff]
        %v769 = vld [vmem:[%s385 + $0xe8] sm:$0xff]
        %v770 = vld [vmem:[%s385 + $0xf0] sm:$0xff]
        %v771 = vld [vmem:[%s385 + $0xf8] sm:$0xff]
        %v772 = vld [vmem:[%s385 + $0x100] sm:$0xff]
        %v773 = vld [vmem:[%s385 + $0x108] sm:$0xff]
        %v774 = vld [vmem:[%s385 + $0x110] sm:$0xff]
        %v775 = vld [vmem:[%s385 + $0x118] sm:$0xff]
        %v776 = vld [vmem:[%s385 + $0x120] sm:$0xff]
        %v777 = vld [vmem:[%s385 + $0x128] sm:$0xff]
        %v778 = vld [vmem:[%s385 + $0x130] sm:$0xff]
        %v779 = vld [vmem:[%s385 + $0x138] sm:$0xff]
        %v780 = vld [vmem:[%s385 + $0x140] sm:$0xff]
        %v781 = vld [vmem:[%s385 + $0x148] sm:$0xff]
        %v782 = vld [vmem:[%s385 + $0x150] sm:$0xff]
        %v783 = vld [vmem:[%s385 + $0x158] sm:$0xff]
        %v785 = vsel %vm494, %v741, 0
        %v788 = vsel %vm494, %v743, 0
        %v791 = vsel %vm494, %v745, 0
        %v794 = vsel %vm494, %v747, 0
        %v797 = vsel %vm494, %v749, 0
        %v800 = vsel %vm494, %v751, 0
        %v803 = vsel %vm494, %v753, 0
        %v806 = vsel %vm494, %v755, 0
        %v809 = vsel %vm494, %v757, 0
        %v812 = vsel %vm494, %v759, 0
        %v815 = vsel %vm494, %v761, 0
        %v818 = vsel %vm494, %v763, 0
        %v821 = vsel %vm494, %v765, 0
        %v824 = vsel %vm494, %v767, 0
        %v827 = vsel %vm494, %v769, 0
        %v830 = vsel %vm494, %v771, 0
        %v833 = vsel %vm494, %v773, 0
        %v836 = vsel %vm494, %v775, 0
        %v839 = vsel %vm494, %v777, 0
        %v842 = vsel %vm494, %v779, 0
        %v845 = vsel %vm494, %v781, 0
        %v848 = vsel %vm494, %v783, 0
        %850 = vmatprep.subr.mxu0 0.0
        %851 = vmatpush1.msra.mxu0 %v475
        %852 = vmatprep.subr.mxu0 0.0
        %853 = vmatpush1.msra.mxu0 %v476
        %854 = vmatprep.subr.mxu0 0.0
        %855 = vmatpush1.msra.mxu0 %v477
        %856 = vmatprep.subr.mxu0 0.0
        %857 = vmatpush1.msra.mxu0 %v478
        %858 = vmatprep.subr.mxu0 0.0
        %859 = vmatpush1.msra.mxu0 %v479
        %860 = vmatprep.subr.mxu0 0.0
        %861 = vmatpush1.msra.mxu0 %v480
        %862 = vmatprep.subr.mxu0 0.0
        %863 = vmatpush1.msra.mxu0 %v481
        %864 = vmatprep.subr.mxu0 0.0
        %865 = vmatpush1.msra.mxu0 %v482
        %866 = vmatprep.subr.mxu0 0.0
        %867 = vmatpush1.msra.mxu0 %v483
        %868 = vmatprep.subr.mxu0 0.0
        %869 = vmatpush1.msra.mxu0 %v484
        %870 = vmatprep.subr.mxu0 0.0
        %871 = vmatpush1.msra.mxu0 %v485
        %872 = vmatprep.subr.mxu0 0.0
        %873 = vmatpush1.msra.mxu0 %v486
        %874 = vmatprep.subr.mxu0 0.0
        %875 = vmatpush1.msra.mxu0 %v487
        %876 = vmatprep.subr.mxu0 0.0
        %877 = vmatpush1.msra.mxu0 %v488
        %878 = vmatprep.subr.mxu0 0.0
        %879 = vmatpush1.msra.mxu0 %v489
        %880 = vmatprep.subr.mxu0 0.0
        %881 = vmatpush1.msra.mxu0 %v490
        %882 = vmatprep.subr.mxu0 0.0
        %883 = vmatpush1.msra.mxu0 %v491
        %884 = vmatprep.subr.mxu0 0.0
        %885 = vmatpush1.msra.mxu0 %v492
        %886 = vmatprep.subr.mxu0 0.0
        %887 = vmatpush1.msra.mxu0 %v563
        %888 = vmatprep.subr.mxu0 0.0
        %889 = vmatpush1.msra.mxu0 0.0
        %890 = vmatprep.subr.mxu0 0.0
        %891 = vmatpush1.msra.mxu0 0.0
        %892 = vmatprep.subr.mxu0 0.0
        %893 = vmatpush1.msra.mxu0 0.0
        %894 = vmatprep.subr.mxu0 0.0
        %895 = vmatpush1.msra.mxu0 0.0
        %896 = vmatprep.subr.mxu0 0.0
        %897 = vmatpush1.msra.mxu0 0.0
        %898 = vmatprep.subr.mxu0 0.0
        %899 = vmatpush1.msra.mxu0 0.0
        %900 = vmatprep.subr.mxu0 0.0
        %901 = vmatpush1.msra.mxu0 0.0
        %902 = vmatprep.subr.mxu0 0.0
        %903 = vmatpush1.msra.mxu0 0.0
        %904 = vmatprep.subr.mxu0 0.0
        %905 = vmatpush1.msra.mxu0 0.0
        %906 = vmatprep.subr.mxu0 0.0
        %907 = vmatpush1.msra.mxu0 0.0
        %908 = vmatprep.subr.mxu0 0.0
        %909 = vmatpush1.msra.mxu0 0.0
        %910 = vmatprep.subr.mxu0 0.0
        %911 = vmatpush1.msra.mxu0 0.0
        %912 = vmatprep.subr.mxu0 0.0
        %913 = vmatpush1.msra.mxu0 0.0
        %914 = vmatprep.mubr.f32.mxu0 %v785
        %915 = vmatmul.mubr.f32.gmra.mrb[0].mxu0 %v740
        %v916 = vpop.f32.mrb[0].mxu0
        %v917 = vadd.f32 0.0, %v916
        %v918 = vpop.f32.mrb[0].mxu0
        %919 = vmatprep.mubr.f32.mxu0 %v788
        %920 = vmatmul.mubr.f32.gmra.mrb[0].mxu0 %v742
        %v921 = vpop.f32.mrb[0].mxu0
        %v922 = vadd.f32 0.0, %v921
        %v923 = vpop.f32.mrb[0].mxu0
        %924 = vmatprep.mubr.f32.mxu0 %v791
        %925 = vmatmul.mubr.f32.gmra.mrb[0].mxu0 %v744
        %v926 = vpop.f32.mrb[0].mxu0
        %v927 = vadd.f32 0.0, %v926
        %v928 = vpop.f32.mrb[0].mxu0
        %929 = vmatprep.mubr.f32.mxu0 %v794
        %930 = vmatmul.mubr.f32.gmra.mrb[0].mxu0 %v746
        %v931 = vpop.f32.mrb[0].mxu0
        %v932 = vadd.f32 0.0, %v931
        %v933 = vpop.f32.mrb[0].mxu0
        %934 = vmatprep.mubr.f32.mxu0 %v797
        %935 = vmatmul.mubr.f32.gmra.mrb[0].mxu0 %v748
        %v936 = vpop.f32.mrb[0].mxu0
        %v937 = vadd.f32 0.0, %v936
        %v938 = vpop.f32.mrb[0].mxu0
        %939 = vmatprep.mubr.f32.mxu0 %v800
        %940 = vmatmul.mubr.f32.gmra.mrb[0].mxu0 %v750
        %v941 = vpop.f32.mrb[0].mxu0
        %v942 = vadd.f32 0.0, %v941
        %v943 = vpop.f32.mrb[0].mxu0
        %944 = vmatprep.mubr.f32.mxu0 %v803
        %945 = vmatmul.mubr.f32.gmra.mrb[0].mxu0 %v752
        %v946 = vpop.f32.mrb[0].mxu0
        %v947 = vadd.f32 0.0, %v946
        %v948 = vpop.f32.mrb[0].mxu0
        %949 = vmatprep.mubr.f32.mxu0 %v806
        %950 = vmatmul.mubr.f32.gmra.mrb[0].mxu0 %v754
        %v951 = vpop.f32.mrb[0].mxu0
        %v952 = vadd.f32 0.0, %v951
        %v953 = vpop.f32.mrb[0].mxu0
        %954 = vmatprep.mubr.f32.mxu0 %v809
        %955 = vmatmul.mubr.f32.gmra.mrb[0].mxu0 %v756
        %v956 = vpop.f32.mrb[0].mxu0
        %v957 = vadd.f32 0.0, %v956
        %v958 = vpop.f32.mrb[0].mxu0
        %959 = vmatprep.mubr.f32.mxu0 %v812
        %960 = vmatmul.mubr.f32.gmra.mrb[0].mxu0 %v758
        %v961 = vpop.f32.mrb[0].mxu0
        %v962 = vadd.f32 0.0, %v961
        %v963 = vpop.f32.mrb[0].mxu0
        %964 = vmatprep.mubr.f32.mxu0 %v815
        %965 = vmatmul.mubr.f32.gmra.mrb[0].mxu0 %v760
        %v966 = vpop.f32.mrb[0].mxu0
        %v967 = vadd.f32 0.0, %v966
        %v968 = vpop.f32.mrb[0].mxu0
        %969 = vmatprep.mubr.f32.mxu0 %v818
        %970 = vmatmul.mubr.f32.gmra.mrb[0].mxu0 %v762
        %v971 = vpop.f32.mrb[0].mxu0
        %v972 = vadd.f32 0.0, %v971
        %v973 = vpop.f32.mrb[0].mxu0
        %974 = vmatprep.mubr.f32.mxu0 %v821
        %975 = vmatmul.mubr.f32.gmra.mrb[0].mxu0 %v764
        %v976 = vpop.f32.mrb[0].mxu0
        %v977 = vadd.f32 0.0, %v976
        %v978 = vpop.f32.mrb[0].mxu0
        %979 = vmatprep.mubr.f32.mxu0 %v824
        %980 = vmatmul.mubr.f32.gmra.mrb[0].mxu0 %v766
        %v981 = vpop.f32.mrb[0].mxu0
        %v982 = vadd.f32 0.0, %v981
        %v983 = vpop.f32.mrb[0].mxu0
        %984 = vmatprep.mubr.f32.mxu0 %v827
        %985 = vmatmul.mubr.f32.gmra.mrb[0].mxu0 %v768
        %v986 = vpop.f32.mrb[0].mxu0
        %v987 = vadd.f32 0.0, %v986
        %v988 = vpop.f32.mrb[0].mxu0
        %989 = vmatprep.mubr.f32.mxu0 %v830
        %990 = vmatmul.mubr.f32.gmra.mrb[0].mxu0 %v770
        %v991 = vpop.f32.mrb[0].mxu0
        %v992 = vadd.f32 0.0, %v991
        %v993 = vpop.f32.mrb[0].mxu0
        %994 = vmatprep.mubr.f32.mxu0 %v833
        %995 = vmatmul.mubr.f32.gmra.mrb[0].mxu0 %v772
        %v996 = vpop.f32.mrb[0].mxu0
        %v997 = vadd.f32 0.0, %v996
        %v998 = vpop.f32.mrb[0].mxu0
        %999 = vmatprep.mubr.f32.mxu0 %v836
        %1000 = vmatmul.mubr.f32.gmra.mrb[0].mxu0 %v774
        %v1001 = vpop.f32.mrb[0].mxu0
        %v1002 = vadd.f32 0.0, %v1001
        %v1003 = vpop.f32.mrb[0].mxu0
        %1004 = vmatprep.mubr.f32.mxu0 %v839
        %1005 = vmatmul.mubr.f32.gmra.mrb[0].mxu0 %v776
        %v1006 = vpop.f32.mrb[0].mxu0
        %v1007 = vadd.f32 0.0, %v1006
        %v1008 = vpop.f32.mrb[0].mxu0
        %1009 = vmatprep.mubr.f32.mxu0 %v842
        %1010 = vmatmul.mubr.f32.gmra.mrb[0].mxu0 %v778
        %v1011 = vpop.f32.mrb[0].mxu0
        %v1012 = vadd.f32 0.0, %v1011
        %v1013 = vpop.f32.mrb[0].mxu0
        %1014 = vmatprep.mubr.f32.mxu0 %v845
        %1015 = vmatmul.mubr.f32.gmra.mrb[0].mxu0 %v780
        %v1016 = vpop.f32.mrb[0].mxu0
        %v1017 = vadd.f32 0.0, %v1016
        %v1018 = vpop.f32.mrb[0].mxu0
        %1019 = vmatprep.mubr.f32.mxu0 %v848
        %1020 = vmatmul.mubr.f32.gmra.mrb[0].mxu0 %v782
        %v1021 = vpop.f32.mrb[0].mxu0
        %v1022 = vadd.f32 0.0, %v1021
        %v1023 = vpop.f32.mrb[0].mxu0
        %1024 = vdwg.mxu0
        %v1025 = vmax.f32 %v632, %v917
        %v1026 = vmax.f32 %v637, %v922
        %v1027 = vmax.f32 %v642, %v927
        %v1028 = vmax.f32 %v647, %v932
        %v1029 = vmax.f32 %v652, %v937
        %v1030 = vmax.f32 %v657, %v942
        %v1031 = vmax.f32 %v662, %v947
        %v1032 = vmax.f32 %v667, %v952
        %v1033 = vmax.f32 %v672, %v957
        %v1034 = vmax.f32 %v677, %v962
        %v1035 = vmax.f32 %v682, %v967
        %v1036 = vmax.f32 %v687, %v972
        %v1037 = vmax.f32 %v692, %v977
        %v1038 = vmax.f32 %v697, %v982
        %v1039 = vmax.f32 %v702, %v987
        %v1040 = vmax.f32 %v707, %v992
        %v1041 = vmax.f32 %v712, %v997
        %v1042 = vmax.f32 %v717, %v1002
        %v1043 = vmax.f32 %v722, %v1007
        %v1044 = vmax.f32 %v727, %v1012
        %v1045 = vmax.f32 %v732, %v1017
        %v1046 = vmax.f32 %v737, %v1022
        %v1047 = vld [vmem:[%s402] sm:$0xff]
        %v1048 = vld [vmem:[%s402 + $0x8] sm:$0xff]
        %v1049 = vld [vmem:[%s402 + $0x10] sm:$0xff]
        %v1050 = vld [vmem:[%s402 + $0x18] sm:$0xff]
        %v1051 = vld [vmem:[%s402 + $0x20] sm:$0xff]
        %v1052 = vld [vmem:[%s402 + $0x28] sm:$0xff]
        %v1053 = vld [vmem:[%s402 + $0x30] sm:$0xff]
        %v1054 = vld [vmem:[%s402 + $0x38] sm:$0xff]
        %v1055 = vld [vmem:[%s402 + $0x40] sm:$0xff]
        %v1056 = vld [vmem:[%s402 + $0x48] sm:$0xff]
        %v1057 = vld [vmem:[%s402 + $0x50] sm:$0xff]
        %v1058 = vld [vmem:[%s402 + $0x58] sm:$0xff]
        %v1059 = vld [vmem:[%s402 + $0x60] sm:$0xff]
        %v1060 = vld [vmem:[%s402 + $0x68] sm:$0xff]
        %v1061 = vld [vmem:[%s402 + $0x70] sm:$0xff]
        %v1062 = vld [vmem:[%s402 + $0x78] sm:$0xff]
        %v1063 = vld [vmem:[%s402 + $0x80] sm:$0xff]
        %v1064 = vld [vmem:[%s402 + $0x88] sm:$0xff]
        %v1065 = vld [vmem:[%s402 + $0x90] sm:$0xff]
        %v1066 = vld [vmem:[%s402 + $0x98] sm:$0xff]
        %v1067 = vld [vmem:[%s402 + $0xa0] sm:$0xff]
        %v1068 = vld [vmem:[%s402 + $0xa8] sm:$0xff]
        %v1069 = vld [vmem:[%s402 + $0xb0] sm:$0xff]
        %v1070 = vld [vmem:[%s402 + $0xb8] sm:$0xff]
        %v1071 = vld [vmem:[%s402 + $0xc0] sm:$0xff]
        %v1072 = vld [vmem:[%s402 + $0xc8] sm:$0xff]
        %v1073 = vld [vmem:[%s402 + $0xd0] sm:$0xff]
        %v1074 = vld [vmem:[%s402 + $0xd8] sm:$0xff]
        %v1075 = vld [vmem:[%s402 + $0xe0] sm:$0xff]
        %v1076 = vld [vmem:[%s402 + $0xe8] sm:$0xff]
        %v1077 = vld [vmem:[%s402 + $0xf0] sm:$0xff]
        %v1078 = vld [vmem:[%s402 + $0xf8] sm:$0xff]
        %v1079 = vld [vmem:[%s402 + $0x100] sm:$0xff]
        %v1080 = vld [vmem:[%s402 + $0x108] sm:$0xff]
        %v1081 = vld [vmem:[%s402 + $0x110] sm:$0xff]
        %v1082 = vld [vmem:[%s402 + $0x118] sm:$0xff]
        %v1083 = vld [vmem:[%s402 + $0x120] sm:$0xff]
        %v1084 = vld [vmem:[%s402 + $0x128] sm:$0xff]
        %v1085 = vld [vmem:[%s402 + $0x130] sm:$0xff]
        %v1086 = vld [vmem:[%s402 + $0x138] sm:$0xff]
        %v1087 = vld [vmem:[%s402 + $0x140] sm:$0xff]
        %v1088 = vld [vmem:[%s402 + $0x148] sm:$0xff]
        %v1089 = vld [vmem:[%s402 + $0x150] sm:$0xff]
        %v1090 = vld [vmem:[%s402 + $0x158] sm:$0xff]
        %v1092 = vsel %vm494, %v1048, 0
        %v1095 = vsel %vm494, %v1050, 0
        %v1098 = vsel %vm494, %v1052, 0
        %v1101 = vsel %vm494, %v1054, 0
        %v1104 = vsel %vm494, %v1056, 0
        %v1107 = vsel %vm494, %v1058, 0
        %v1110 = vsel %vm494, %v1060, 0
        %v1113 = vsel %vm494, %v1062, 0
        %v1116 = vsel %vm494, %v1064, 0
        %v1119 = vsel %vm494, %v1066, 0
        %v1122 = vsel %vm494, %v1068, 0
        %v1125 = vsel %vm494, %v1070, 0
        %v1128 = vsel %vm494, %v1072, 0
        %v1131 = vsel %vm494, %v1074, 0
        %v1134 = vsel %vm494, %v1076, 0
        %v1137 = vsel %vm494, %v1078, 0
        %v1140 = vsel %vm494, %v1080, 0
        %v1143 = vsel %vm494, %v1082, 0
        %v1146 = vsel %vm494, %v1084, 0
        %v1149 = vsel %vm494, %v1086, 0
        %v1152 = vsel %vm494, %v1088, 0
        %v1155 = vsel %vm494, %v1090, 0
        %1157 = vmatprep.subr.mxu0 0.0
        %1158 = vmatpush1.msra.mxu0 %v475
        %1159 = vmatprep.subr.mxu0 0.0
        %1160 = vmatpush1.msra.mxu0 %v476
        %1161 = vmatprep.subr.mxu0 0.0
        %1162 = vmatpush1.msra.mxu0 %v477
        %1163 = vmatprep.subr.mxu0 0.0
        %1164 = vmatpush1.msra.mxu0 %v478
        %1165 = vmatprep.subr.mxu0 0.0
        %1166 = vmatpush1.msra.mxu0 %v479
        %1167 = vmatprep.subr.mxu0 0.0
        %1168 = vmatpush1.msra.mxu0 %v480
        %1169 = vmatprep.subr.mxu0 0.0
        %1170 = vmatpush1.msra.mxu0 %v481
        %1171 = vmatprep.subr.mxu0 0.0
        %1172 = vmatpush1.msra.mxu0 %v482
        %1173 = vmatprep.subr.mxu0 0.0
        %1174 = vmatpush1.msra.mxu0 %v483
        %1175 = vmatprep.subr.mxu0 0.0
        %1176 = vmatpush1.msra.mxu0 %v484
        %1177 = vmatprep.subr.mxu0 0.0
        %1178 = vmatpush1.msra.mxu0 %v485
        %1179 = vmatprep.subr.mxu0 0.0
        %1180 = vmatpush1.msra.mxu0 %v486
        %1181 = vmatprep.subr.mxu0 0.0
        %1182 = vmatpush1.msra.mxu0 %v487
        %1183 = vmatprep.subr.mxu0 0.0
        %1184 = vmatpush1.msra.mxu0 %v488
        %1185 = vmatprep.subr.mxu0 0.0
        %1186 = vmatpush1.msra.mxu0 %v489
        %1187 = vmatprep.subr.mxu0 0.0
        %1188 = vmatpush1.msra.mxu0 %v490
        %1189 = vmatprep.subr.mxu0 0.0
        %1190 = vmatpush1.msra.mxu0 %v491
        %1191 = vmatprep.subr.mxu0 0.0
        %1192 = vmatpush1.msra.mxu0 %v492
        %1193 = vmatprep.subr.mxu0 0.0
        %1194 = vmatpush1.msra.mxu0 %v563
        %1195 = vmatprep.subr.mxu0 0.0
        %1196 = vmatpush1.msra.mxu0 0.0
        %1197 = vmatprep.subr.mxu0 0.0
        %1198 = vmatpush1.msra.mxu0 0.0
        %1199 = vmatprep.subr.mxu0 0.0
        %1200 = vmatpush1.msra.mxu0 0.0
        %1201 = vmatprep.subr.mxu0 0.0
        %1202 = vmatpush1.msra.mxu0 0.0
        %1203 = vmatprep.subr.mxu0 0.0
        %1204 = vmatpush1.msra.mxu0 0.0
        %1205 = vmatprep.subr.mxu0 0.0
        %1206 = vmatpush1.msra.mxu0 0.0
        %1207 = vmatprep.subr.mxu0 0.0
        %1208 = vmatpush1.msra.mxu0 0.0
        %1209 = vmatprep.subr.mxu0 0.0
        %1210 = vmatpush1.msra.mxu0 0.0
        %1211 = vmatprep.subr.mxu0 0.0
        %1212 = vmatpush1.msra.mxu0 0.0
        %1213 = vmatprep.subr.mxu0 0.0
        %1214 = vmatpush1.msra.mxu0 0.0
        %1215 = vmatprep.subr.mxu0 0.0
        %1216 = vmatpush1.msra.mxu0 0.0
        %1217 = vmatprep.subr.mxu0 0.0
        %1218 = vmatpush1.msra.mxu0 0.0
        %1219 = vmatprep.subr.mxu0 0.0
        %1220 = vmatpush1.msra.mxu0 0.0
        %1221 = vmatprep.mubr.f32.mxu0 %v1092
        %1222 = vmatmul.mubr.f32.gmra.mrb[0].mxu0 %v1047
        %v1223 = vpop.f32.mrb[0].mxu0
        %v1224 = vadd.f32 0.0, %v1223
        %v1225 = vpop.f32.mrb[0].mxu0
        %1226 = vmatprep.mubr.f32.mxu0 %v1095
        %1227 = vmatmul.mubr.f32.gmra.mrb[0].mxu0 %v1049
        %v1228 = vpop.f32.mrb[0].mxu0
        %v1229 = vadd.f32 0.0, %v1228
        %v1230 = vpop.f32.mrb[0].mxu0
        %1231 = vmatprep.mubr.f32.mxu0 %v1098
        %1232 = vmatmul.mubr.f32.gmra.mrb[0].mxu0 %v1051
        %v1233 = vpop.f32.mrb[0].mxu0
        %v1234 = vadd.f32 0.0, %v1233
        %v1235 = vpop.f32.mrb[0].mxu0
        %1236 = vmatprep.mubr.f32.mxu0 %v1101
        %1237 = vmatmul.mubr.f32.gmra.mrb[0].mxu0 %v1053
        %v1238 = vpop.f32.mrb[0].mxu0
        %v1239 = vadd.f32 0.0, %v1238
        %v1240 = vpop.f32.mrb[0].mxu0
        %1241 = vmatprep.mubr.f32.mxu0 %v1104
        %1242 = vmatmul.mubr.f32.gmra.mrb[0].mxu0 %v1055
        %v1243 = vpop.f32.mrb[0].mxu0
        %v1244 = vadd.f32 0.0, %v1243
        %v1245 = vpop.f32.mrb[0].mxu0
        %1246 = vmatprep.mubr.f32.mxu0 %v1107
        %1247 = vmatmul.mubr.f32.gmra.mrb[0].mxu0 %v1057
        %v1248 = vpop.f32.mrb[0].mxu0
        %v1249 = vadd.f32 0.0, %v1248
        %v1250 = vpop.f32.mrb[0].mxu0
        %1251 = vmatprep.mubr.f32.mxu0 %v1110
        %1252 = vmatmul.mubr.f32.gmra.mrb[0].mxu0 %v1059
        %v1253 = vpop.f32.mrb[0].mxu0
        %v1254 = vadd.f32 0.0, %v1253
        %v1255 = vpop.f32.mrb[0].mxu0
        %1256 = vmatprep.mubr.f32.mxu0 %v1113
        %1257 = vmatmul.mubr.f32.gmra.mrb[0].mxu0 %v1061
        %v1258 = vpop.f32.mrb[0].mxu0
        %v1259 = vadd.f32 0.0, %v1258
        %v1260 = vpop.f32.mrb[0].mxu0
        %1261 = vmatprep.mubr.f32.mxu0 %v1116
        %1262 = vmatmul.mubr.f32.gmra.mrb[0].mxu0 %v1063
        %v1263 = vpop.f32.mrb[0].mxu0
        %v1264 = vadd.f32 0.0, %v1263
        %v1265 = vpop.f32.mrb[0].mxu0
        %1266 = vmatprep.mubr.f32.mxu0 %v1119
        %1267 = vmatmul.mubr.f32.gmra.mrb[0].mxu0 %v1065
        %v1268 = vpop.f32.mrb[0].mxu0
        %v1269 = vadd.f32 0.0, %v1268
        %v1270 = vpop.f32.mrb[0].mxu0
        %1271 = vmatprep.mubr.f32.mxu0 %v1122
        %1272 = vmatmul.mubr.f32.gmra.mrb[0].mxu0 %v1067
        %v1273 = vpop.f32.mrb[0].mxu0
        %v1274 = vadd.f32 0.0, %v1273
        %v1275 = vpop.f32.mrb[0].mxu0
        %1276 = vmatprep.mubr.f32.mxu0 %v1125
        %1277 = vmatmul.mubr.f32.gmra.mrb[0].mxu0 %v1069
        %v1278 = vpop.f32.mrb[0].mxu0
        %v1279 = vadd.f32 0.0, %v1278
        %v1280 = vpop.f32.mrb[0].mxu0
        %1281 = vmatprep.mubr.f32.mxu0 %v1128
        %1282 = vmatmul.mubr.f32.gmra.mrb[0].mxu0 %v1071
        %v1283 = vpop.f32.mrb[0].mxu0
        %v1284 = vadd.f32 0.0, %v1283
        %v1285 = vpop.f32.mrb[0].mxu0
        %1286 = vmatprep.mubr.f32.mxu0 %v1131
        %1287 = vmatmul.mubr.f32.gmra.mrb[0].mxu0 %v1073
        %v1288 = vpop.f32.mrb[0].mxu0
        %v1289 = vadd.f32 0.0, %v1288
        %v1290 = vpop.f32.mrb[0].mxu0
        %1291 = vmatprep.mubr.f32.mxu0 %v1134
        %1292 = vmatmul.mubr.f32.gmra.mrb[0].mxu0 %v1075
        %v1293 = vpop.f32.mrb[0].mxu0
        %v1294 = vadd.f32 0.0, %v1293
        %v1295 = vpop.f32.mrb[0].mxu0
        %1296 = vmatprep.mubr.f32.mxu0 %v1137
        %1297 = vmatmul.mubr.f32.gmra.mrb[0].mxu0 %v1077
        %v1298 = vpop.f32.mrb[0].mxu0
        %v1299 = vadd.f32 0.0, %v1298
        %v1300 = vpop.f32.mrb[0].mxu0
        %1301 = vmatprep.mubr.f32.mxu0 %v1140
        %1302 = vmatmul.mubr.f32.gmra.mrb[0].mxu0 %v1079
        %v1303 = vpop.f32.mrb[0].mxu0
        %v1304 = vadd.f32 0.0, %v1303
        %v1305 = vpop.f32.mrb[0].mxu0
        %1306 = vmatprep.mubr.f32.mxu0 %v1143
        %1307 = vmatmul.mubr.f32.gmra.mrb[0].mxu0 %v1081
        %v1308 = vpop.f32.mrb[0].mxu0
        %v1309 = vadd.f32 0.0, %v1308
        %v1310 = vpop.f32.mrb[0].mxu0
        %1311 = vmatprep.mubr.f32.mxu0 %v1146
        %1312 = vmatmul.mubr.f32.gmra.mrb[0].mxu0 %v1083
        %v1313 = vpop.f32.mrb[0].mxu0
        %v1314 = vadd.f32 0.0, %v1313
        %v1315 = vpop.f32.mrb[0].mxu0
        %1316 = vmatprep.mubr.f32.mxu0 %v1149
        %1317 = vmatmul.mubr.f32.gmra.mrb[0].mxu0 %v1085
        %v1318 = vpop.f32.mrb[0].mxu0
        %v1319 = vadd.f32 0.0, %v1318
        %v1320 = vpop.f32.mrb[0].mxu0
        %1321 = vmatprep.mubr.f32.mxu0 %v1152
        %1322 = vmatmul.mubr.f32.gmra.mrb[0].mxu0 %v1087
        %v1323 = vpop.f32.mrb[0].mxu0
        %v1324 = vadd.f32 0.0, %v1323
        %v1325 = vpop.f32.mrb[0].mxu0
        %1326 = vmatprep.mubr.f32.mxu0 %v1155
        %1327 = vmatmul.mubr.f32.gmra.mrb[0].mxu0 %v1089
        %v1328 = vpop.f32.mrb[0].mxu0
        %v1329 = vadd.f32 0.0, %v1328
        %v1330 = vpop.f32.mrb[0].mxu0
        %1331 = vdwg.mxu0
        %v1332 = vld [vmem:[%s419] sm:$0xff]
        %v1333 = vld [vmem:[%s419 + $0x8] sm:$0xff]
        %v1334 = vld [vmem:[%s419 + $0x10] sm:$0xff]
        %v1335 = vld [vmem:[%s419 + $0x18] sm:$0xff]
        %v1336 = vld [vmem:[%s419 + $0x20] sm:$0xff]
        %v1337 = vld [vmem:[%s419 + $0x28] sm:$0xff]
        %v1338 = vld [vmem:[%s419 + $0x30] sm:$0xff]
        %v1339 = vld [vmem:[%s419 + $0x38] sm:$0xff]
        %v1340 = vld [vmem:[%s419 + $0x40] sm:$0xff]
        %v1341 = vld [vmem:[%s419 + $0x48] sm:$0xff]
        %v1342 = vld [vmem:[%s419 + $0x50] sm:$0xff]
        %v1343 = vld [vmem:[%s419 + $0x58] sm:$0xff]
        %v1344 = vld [vmem:[%s419 + $0x60] sm:$0xff]
        %v1345 = vld [vmem:[%s419 + $0x68] sm:$0xff]
        %v1346 = vld [vmem:[%s419 + $0x70] sm:$0xff]
        %v1347 = vld [vmem:[%s419 + $0x78] sm:$0xff]
        %v1348 = vld [vmem:[%s419 + $0x80] sm:$0xff]
        %v1349 = vld [vmem:[%s419 + $0x88] sm:$0xff]
        %v1350 = vld [vmem:[%s419 + $0x90] sm:$0xff]
        %v1351 = vld [vmem:[%s419 + $0x98] sm:$0xff]
        %v1352 = vld [vmem:[%s419 + $0xa0] sm:$0xff]
        %v1353 = vld [vmem:[%s419 + $0xa8] sm:$0xff]
        %v1354 = vld [vmem:[%s419 + $0xb0] sm:$0xff]
        %v1355 = vld [vmem:[%s419 + $0xb8] sm:$0xff]
        %v1356 = vld [vmem:[%s419 + $0xc0] sm:$0xff]
        %v1357 = vld [vmem:[%s419 + $0xc8] sm:$0xff]
        %v1358 = vld [vmem:[%s419 + $0xd0] sm:$0xff]
        %v1359 = vld [vmem:[%s419 + $0xd8] sm:$0xff]
        %v1360 = vld [vmem:[%s419 + $0xe0] sm:$0xff]
        %v1361 = vld [vmem:[%s419 + $0xe8] sm:$0xff]
        %v1362 = vld [vmem:[%s419 + $0xf0] sm:$0xff]
        %v1363 = vld [vmem:[%s419 + $0xf8] sm:$0xff]
        %v1364 = vld [vmem:[%s419 + $0x100] sm:$0xff]
        %v1365 = vld [vmem:[%s419 + $0x108] sm:$0xff]
        %v1366 = vld [vmem:[%s419 + $0x110] sm:$0xff]
        %v1367 = vld [vmem:[%s419 + $0x118] sm:$0xff]
        %v1368 = vld [vmem:[%s419 + $0x120] sm:$0xff]
        %v1369 = vld [vmem:[%s419 + $0x128] sm:$0xff]
        %v1370 = vld [vmem:[%s419 + $0x130] sm:$0xff]
        %v1371 = vld [vmem:[%s419 + $0x138] sm:$0xff]
        %v1372 = vld [vmem:[%s419 + $0x140] sm:$0xff]
        %v1373 = vld [vmem:[%s419 + $0x148] sm:$0xff]
        %v1374 = vld [vmem:[%s419 + $0x150] sm:$0xff]
        %v1375 = vld [vmem:[%s419 + $0x158] sm:$0xff]
        %v1377 = vsel %vm494, %v1333, 0
        %v1380 = vsel %vm494, %v1335, 0
        %v1383 = vsel %vm494, %v1337, 0
        %v1386 = vsel %vm494, %v1339, 0
        %v1389 = vsel %vm494, %v1341, 0
        %v1392 = vsel %vm494, %v1343, 0
        %v1395 = vsel %vm494, %v1345, 0
        %v1398 = vsel %vm494, %v1347, 0
        %v1401 = vsel %vm494, %v1349, 0
        %v1404 = vsel %vm494, %v1351, 0
        %v1407 = vsel %vm494, %v1353, 0
        %v1410 = vsel %vm494, %v1355, 0
        %v1413 = vsel %vm494, %v1357, 0
        %v1416 = vsel %vm494, %v1359, 0
        %v1419 = vsel %vm494, %v1361, 0
        %v1422 = vsel %vm494, %v1363, 0
        %v1425 = vsel %vm494, %v1365, 0
        %v1428 = vsel %vm494, %v1367, 0
        %v1431 = vsel %vm494, %v1369, 0
        %v1434 = vsel %vm494, %v1371, 0
        %v1437 = vsel %vm494, %v1373, 0
        %v1440 = vsel %vm494, %v1375, 0
        %1442 = vmatprep.subr.mxu0 0.0
        %1443 = vmatpush1.msra.mxu0 %v475
        %1444 = vmatprep.subr.mxu0 0.0
        %1445 = vmatpush1.msra.mxu0 %v476
        %1446 = vmatprep.subr.mxu0 0.0
        %1447 = vmatpush1.msra.mxu0 %v477
        %1448 = vmatprep.subr.mxu0 0.0
        %1449 = vmatpush1.msra.mxu0 %v478
        %1450 = vmatprep.subr.mxu0 0.0
        %1451 = vmatpush1.msra.mxu0 %v479
        %1452 = vmatprep.subr.mxu0 0.0
        %1453 = vmatpush1.msra.mxu0 %v480
        %1454 = vmatprep.subr.mxu0 0.0
        %1455 = vmatpush1.msra.mxu0 %v481
        %1456 = vmatprep.subr.mxu0 0.0
        %1457 = vmatpush1.msra.mxu0 %v482
        %1458 = vmatprep.subr.mxu0 0.0
        %1459 = vmatpush1.msra.mxu0 %v483
        %1460 = vmatprep.subr.mxu0 0.0
        %1461 = vmatpush1.msra.mxu0 %v484
        %1462 = vmatprep.subr.mxu0 0.0
        %1463 = vmatpush1.msra.mxu0 %v485
        %1464 = vmatprep.subr.mxu0 0.0
        %1465 = vmatpush1.msra.mxu0 %v486
        %1466 = vmatprep.subr.mxu0 0.0
        %1467 = vmatpush1.msra.mxu0 %v487
        %1468 = vmatprep.subr.mxu0 0.0
        %1469 = vmatpush1.msra.mxu0 %v488
        %1470 = vmatprep.subr.mxu0 0.0
        %1471 = vmatpush1.msra.mxu0 %v489
        %1472 = vmatprep.subr.mxu0 0.0
        %1473 = vmatpush1.msra.mxu0 %v490
        %1474 = vmatprep.subr.mxu0 0.0
        %1475 = vmatpush1.msra.mxu0 %v491
        %1476 = vmatprep.subr.mxu0 0.0
        %1477 = vmatpush1.msra.mxu0 %v492
        %1478 = vmatprep.subr.mxu0 0.0
        %1479 = vmatpush1.msra.mxu0 %v563
        %1480 = vmatprep.subr.mxu0 0.0
        %1481 = vmatpush1.msra.mxu0 0.0
        %1482 = vmatprep.subr.mxu0 0.0
        %1483 = vmatpush1.msra.mxu0 0.0
        %1484 = vmatprep.subr.mxu0 0.0
        %1485 = vmatpush1.msra.mxu0 0.0
        %1486 = vmatprep.subr.mxu0 0.0
        %1487 = vmatpush1.msra.mxu0 0.0
        %1488 = vmatprep.subr.mxu0 0.0
        %1489 = vmatpush1.msra.mxu0 0.0
        %1490 = vmatprep.subr.mxu0 0.0
        %1491 = vmatpush1.msra.mxu0 0.0
        %1492 = vmatprep.subr.mxu0 0.0
        %1493 = vmatpush1.msra.mxu0 0.0
        %1494 = vmatprep.subr.mxu0 0.0
        %1495 = vmatpush1.msra.mxu0 0.0
        %1496 = vmatprep.subr.mxu0 0.0
        %1497 = vmatpush1.msra.mxu0 0.0
        %1498 = vmatprep.subr.mxu0 0.0
        %1499 = vmatpush1.msra.mxu0 0.0
        %1500 = vmatprep.subr.mxu0 0.0
        %1501 = vmatpush1.msra.mxu0 0.0
        %1502 = vmatprep.subr.mxu0 0.0
        %1503 = vmatpush1.msra.mxu0 0.0
        %1504 = vmatprep.subr.mxu0 0.0
        %1505 = vmatpush1.msra.mxu0 0.0
        %1506 = vmatprep.mubr.f32.mxu0 %v1377
        %1507 = vmatmul.mubr.f32.gmra.mrb[0].mxu0 %v1332
        %v1508 = vpop.f32.mrb[0].mxu0
        %v1509 = vadd.f32 0.0, %v1508
        %v1510 = vpop.f32.mrb[0].mxu0
        %1511 = vmatprep.mubr.f32.mxu0 %v1380
        %1512 = vmatmul.mubr.f32.gmra.mrb[0].mxu0 %v1334
        %v1513 = vpop.f32.mrb[0].mxu0
        %v1514 = vadd.f32 0.0, %v1513
        %v1515 = vpop.f32.mrb[0].mxu0
        %1516 = vmatprep.mubr.f32.mxu0 %v1383
        %1517 = vmatmul.mubr.f32.gmra.mrb[0].mxu0 %v1336
        %v1518 = vpop.f32.mrb[0].mxu0
        %v1519 = vadd.f32 0.0, %v1518
        %v1520 = vpop.f32.mrb[0].mxu0
        %1521 = vmatprep.mubr.f32.mxu0 %v1386
        %1522 = vmatmul.mubr.f32.gmra.mrb[0].mxu0 %v1338
        %v1523 = vpop.f32.mrb[0].mxu0
        %v1524 = vadd.f32 0.0, %v1523
        %v1525 = vpop.f32.mrb[0].mxu0
        %1526 = vmatprep.mubr.f32.mxu0 %v1389
        %1527 = vmatmul.mubr.f32.gmra.mrb[0].mxu0 %v1340
        %v1528 = vpop.f32.mrb[0].mxu0
        %v1529 = vadd.f32 0.0, %v1528
        %v1530 = vpop.f32.mrb[0].mxu0
        %1531 = vmatprep.mubr.f32.mxu0 %v1392
        %1532 = vmatmul.mubr.f32.gmra.mrb[0].mxu0 %v1342
        %v1533 = vpop.f32.mrb[0].mxu0
        %v1534 = vadd.f32 0.0, %v1533
        %v1535 = vpop.f32.mrb[0].mxu0
        %1536 = vmatprep.mubr.f32.mxu0 %v1395
        %1537 = vmatmul.mubr.f32.gmra.mrb[0].mxu0 %v1344
        %v1538 = vpop.f32.mrb[0].mxu0
        %v1539 = vadd.f32 0.0, %v1538
        %v1540 = vpop.f32.mrb[0].mxu0
        %1541 = vmatprep.mubr.f32.mxu0 %v1398
        %1542 = vmatmul.mubr.f32.gmra.mrb[0].mxu0 %v1346
        %v1543 = vpop.f32.mrb[0].mxu0
        %v1544 = vadd.f32 0.0, %v1543
        %v1545 = vpop.f32.mrb[0].mxu0
        %1546 = vmatprep.mubr.f32.mxu0 %v1401
        %1547 = vmatmul.mubr.f32.gmra.mrb[0].mxu0 %v1348
        %v1548 = vpop.f32.mrb[0].mxu0
        %v1549 = vadd.f32 0.0, %v1548
        %v1550 = vpop.f32.mrb[0].mxu0
        %1551 = vmatprep.mubr.f32.mxu0 %v1404
        %1552 = vmatmul.mubr.f32.gmra.mrb[0].mxu0 %v1350
        %v1553 = vpop.f32.mrb[0].mxu0
        %v1554 = vadd.f32 0.0, %v1553
        %v1555 = vpop.f32.mrb[0].mxu0
        %1556 = vmatprep.mubr.f32.mxu0 %v1407
        %1557 = vmatmul.mubr.f32.gmra.mrb[0].mxu0 %v1352
        %v1558 = vpop.f32.mrb[0].mxu0
        %v1559 = vadd.f32 0.0, %v1558
        %v1560 = vpop.f32.mrb[0].mxu0
        %1561 = vmatprep.mubr.f32.mxu0 %v1410
        %1562 = vmatmul.mubr.f32.gmra.mrb[0].mxu0 %v1354
        %v1563 = vpop.f32.mrb[0].mxu0
        %v1564 = vadd.f32 0.0, %v1563
        %v1565 = vpop.f32.mrb[0].mxu0
        %1566 = vmatprep.mubr.f32.mxu0 %v1413
        %1567 = vmatmul.mubr.f32.gmra.mrb[0].mxu0 %v1356
        %v1568 = vpop.f32.mrb[0].mxu0
        %v1569 = vadd.f32 0.0, %v1568
        %v1570 = vpop.f32.mrb[0].mxu0
        %1571 = vmatprep.mubr.f32.mxu0 %v1416
        %1572 = vmatmul.mubr.f32.gmra.mrb[0].mxu0 %v1358
        %v1573 = vpop.f32.mrb[0].mxu0
        %v1574 = vadd.f32 0.0, %v1573
        %v1575 = vpop.f32.mrb[0].mxu0
        %1576 = vmatprep.mubr.f32.mxu0 %v1419
        %1577 = vmatmul.mubr.f32.gmra.mrb[0].mxu0 %v1360
        %v1578 = vpop.f32.mrb[0].mxu0
        %v1579 = vadd.f32 0.0, %v1578
        %v1580 = vpop.f32.mrb[0].mxu0
        %1581 = vmatprep.mubr.f32.mxu0 %v1422
        %1582 = vmatmul.mubr.f32.gmra.mrb[0].mxu0 %v1362
        %v1583 = vpop.f32.mrb[0].mxu0
        %v1584 = vadd.f32 0.0, %v1583
        %v1585 = vpop.f32.mrb[0].mxu0
        %1586 = vmatprep.mubr.f32.mxu0 %v1425
        %1587 = vmatmul.mubr.f32.gmra.mrb[0].mxu0 %v1364
        %v1588 = vpop.f32.mrb[0].mxu0
        %v1589 = vadd.f32 0.0, %v1588
        %v1590 = vpop.f32.mrb[0].mxu0
        %1591 = vmatprep.mubr.f32.mxu0 %v1428
        %1592 = vmatmul.mubr.f32.gmra.mrb[0].mxu0 %v1366
        %v1593 = vpop.f32.mrb[0].mxu0
        %v1594 = vadd.f32 0.0, %v1593
        %v1595 = vpop.f32.mrb[0].mxu0
        %1596 = vmatprep.mubr.f32.mxu0 %v1431
        %1597 = vmatmul.mubr.f32.gmra.mrb[0].mxu0 %v1368
        %v1598 = vpop.f32.mrb[0].mxu0
        %v1599 = vadd.f32 0.0, %v1598
        %v1600 = vpop.f32.mrb[0].mxu0
        %1601 = vmatprep.mubr.f32.mxu0 %v1434
        %1602 = vmatmul.mubr.f32.gmra.mrb[0].mxu0 %v1370
        %v1603 = vpop.f32.mrb[0].mxu0
        %v1604 = vadd.f32 0.0, %v1603
        %v1605 = vpop.f32.mrb[0].mxu0
        %1606 = vmatprep.mubr.f32.mxu0 %v1437
        %1607 = vmatmul.mubr.f32.gmra.mrb[0].mxu0 %v1372
        %v1608 = vpop.f32.mrb[0].mxu0
        %v1609 = vadd.f32 0.0, %v1608
        %v1610 = vpop.f32.mrb[0].mxu0
        %1611 = vmatprep.mubr.f32.mxu0 %v1440
        %1612 = vmatmul.mubr.f32.gmra.mrb[0].mxu0 %v1374
        %v1613 = vpop.f32.mrb[0].mxu0
        %v1614 = vadd.f32 0.0, %v1613
        %v1615 = vpop.f32.mrb[0].mxu0
        %1616 = vdwg.mxu0
        %v1617 = vmax.f32 %v1224, %v1509
        %v1618 = vmax.f32 %v1229, %v1514
        %v1619 = vmax.f32 %v1234, %v1519
        %v1620 = vmax.f32 %v1239, %v1524
        %v1621 = vmax.f32 %v1244, %v1529
        %v1622 = vmax.f32 %v1249, %v1534
        %v1623 = vmax.f32 %v1254, %v1539
        %v1624 = vmax.f32 %v1259, %v1544
        %v1625 = vmax.f32 %v1264, %v1549
        %v1626 = vmax.f32 %v1269, %v1554
        %v1627 = vmax.f32 %v1274, %v1559
        %v1628 = vmax.f32 %v1279, %v1564
        %v1629 = vmax.f32 %v1284, %v1569
        %v1630 = vmax.f32 %v1289, %v1574
        %v1631 = vmax.f32 %v1294, %v1579
        %v1632 = vmax.f32 %v1299, %v1584
        %v1633 = vmax.f32 %v1304, %v1589
        %v1634 = vmax.f32 %v1309, %v1594
        %v1635 = vmax.f32 %v1314, %v1599
        %v1636 = vmax.f32 %v1319, %v1604
        %v1637 = vmax.f32 %v1324, %v1609
        %v1638 = vmax.f32 %v1329, %v1614
        %v1639 = vmax.f32 %v1025, %v1617
        %v1640 = vmax.f32 %v1026, %v1618
        %v1641 = vmax.f32 %v1027, %v1619
        %v1642 = vmax.f32 %v1028, %v1620
        %v1643 = vmax.f32 %v1029, %v1621
        %v1644 = vmax.f32 %v1030, %v1622
        %v1645 = vmax.f32 %v1031, %v1623
        %v1646 = vmax.f32 %v1032, %v1624
        %v1647 = vmax.f32 %v1033, %v1625
        %v1648 = vmax.f32 %v1034, %v1626
        %v1649 = vmax.f32 %v1035, %v1627
        %v1650 = vmax.f32 %v1036, %v1628
        %v1651 = vmax.f32 %v1037, %v1629
        %v1652 = vmax.f32 %v1038, %v1630
        %v1653 = vmax.f32 %v1039, %v1631
        %v1654 = vmax.f32 %v1040, %v1632
        %v1655 = vmax.f32 %v1041, %v1633
        %v1656 = vmax.f32 %v1042, %v1634
        %v1657 = vmax.f32 %v1043, %v1635
        %v1658 = vmax.f32 %v1044, %v1636
        %v1659 = vmax.f32 %v1045, %v1637
        %v1660 = vmax.f32 %v1046, %v1638
        %v1661 = vld [vmem:[%s5] sm:$0x1]
        %v1663 = vlaneseq
        %v1664 = vshrl.u32 %v1663, 7
        %v1665 = vsub.s32 0, %v1664
        %v1666 = vrot.slane %v1661, %v1665
        %v1668 = vadd.f32 %v1639, %v1666
        %v1669 = vadd.f32 %v1640, %v1666
        %v1670 = vadd.f32 %v1641, %v1666
        %v1671 = vadd.f32 %v1642, %v1666
        %v1672 = vadd.f32 %v1643, %v1666
        %v1673 = vadd.f32 %v1644, %v1666
        %v1674 = vadd.f32 %v1645, %v1666
        %v1675 = vadd.f32 %v1646, %v1666
        %v1676 = vadd.f32 %v1647, %v1666
        %v1677 = vadd.f32 %v1648, %v1666
        %v1678 = vadd.f32 %v1649, %v1666
        %v1679 = vadd.f32 %v1650, %v1666
        %v1680 = vadd.f32 %v1651, %v1666
        %v1681 = vadd.f32 %v1652, %v1666
        %v1682 = vadd.f32 %v1653, %v1666
        %v1683 = vadd.f32 %v1654, %v1666
        %v1684 = vadd.f32 %v1655, %v1666
        %v1685 = vadd.f32 %v1656, %v1666
        %v1686 = vadd.f32 %v1657, %v1666
        %v1687 = vadd.f32 %v1658, %v1666
        %v1688 = vadd.f32 %v1659, %v1666
        %v1689 = vadd.f32 %v1660, %v1666
        %v1690 = vmax.f32 %v1668, 0.0
        %v1691 = vmax.f32 %v1669, 0.0
        %v1692 = vmax.f32 %v1670, 0.0
        %v1693 = vmax.f32 %v1671, 0.0
        %v1694 = vmax.f32 %v1672, 0.0
        %v1695 = vmax.f32 %v1673, 0.0
        %v1696 = vmax.f32 %v1674, 0.0
        %v1697 = vmax.f32 %v1675, 0.0
        %v1698 = vmax.f32 %v1676, 0.0
        %v1699 = vmax.f32 %v1677, 0.0
        %v1700 = vmax.f32 %v1678, 0.0
        %v1701 = vmax.f32 %v1679, 0.0
        %v1702 = vmax.f32 %v1680, 0.0
        %v1703 = vmax.f32 %v1681, 0.0
        %v1704 = vmax.f32 %v1682, 0.0
        %v1705 = vmax.f32 %v1683, 0.0
        %v1706 = vmax.f32 %v1684, 0.0
        %v1707 = vmax.f32 %v1685, 0.0
        %v1708 = vmax.f32 %v1686, 0.0
        %v1709 = vmax.f32 %v1687, 0.0
        %v1710 = vmax.f32 %v1688, 0.0
        %v1711 = vmax.f32 %v1689, 0.0
        %vm1712 = vcmask 130048
        %1713 = vst.msk [vmem:[%s357] sm:$0xff] %vm1712, %v1690
        %1714 = vst.msk [vmem:[%s357 + $0x8] sm:$0xff] %vm1712, %v1691
        %1715 = vst.msk [vmem:[%s357 + $0x10] sm:$0xff] %vm1712, %v1692
        %1716 = vst.msk [vmem:[%s357 + $0x18] sm:$0xff] %vm1712, %v1693
        %1717 = vst.msk [vmem:[%s357 + $0x20] sm:$0xff] %vm1712, %v1694
        %1718 = vst.msk [vmem:[%s357 + $0x28] sm:$0xff] %vm1712, %v1695
        %1719 = vst.msk [vmem:[%s357 + $0x30] sm:$0xff] %vm1712, %v1696
        %1720 = vst.msk [vmem:[%s357 + $0x38] sm:$0xff] %vm1712, %v1697
        %1721 = vst.msk [vmem:[%s357 + $0x40] sm:$0xff] %vm1712, %v1698
        %1722 = vst.msk [vmem:[%s357 + $0x48] sm:$0xff] %vm1712, %v1699
        %1723 = vst.msk [vmem:[%s357 + $0x50] sm:$0xff] %vm1712, %v1700
        %1724 = vst.msk [vmem:[%s357 + $0x58] sm:$0xff] %vm1712, %v1701
        %1725 = vst.msk [vmem:[%s357 + $0x60] sm:$0xff] %vm1712, %v1702
        %1726 = vst.msk [vmem:[%s357 + $0x68] sm:$0xff] %vm1712, %v1703
        %1727 = vst.msk [vmem:[%s357 + $0x70] sm:$0xff] %vm1712, %v1704
        %1728 = vst.msk [vmem:[%s357 + $0x78] sm:$0xff] %vm1712, %v1705
        %1729 = vst.msk [vmem:[%s357 + $0x80] sm:$0xff] %vm1712, %v1706
        %1730 = vst.msk [vmem:[%s357 + $0x88] sm:$0xff] %vm1712, %v1707
        %1731 = vst.msk [vmem:[%s357 + $0x90] sm:$0xff] %vm1712, %v1708
        %1732 = vst.msk [vmem:[%s357 + $0x98] sm:$0xff] %vm1712, %v1709
        %1733 = vst.msk [vmem:[%s357 + $0xa0] sm:$0xff] %vm1712, %v1710
        %1734 = vst.msk [vmem:[%s357 + $0xa8] sm:$0xff] %vm1712, %v1711
        %s1735 = sand.u32 %s171, 1
        %s1736 = sand.u32 %s171, 1
        %s1737 = smul.addr %s1736, 176
        %s1738 = scalar_lea.vmem [#allocation2], %s1737
        // Predicated region
        $region45: #{m1_forward.4} parent=43 // pred_check
          %p1739 = pneg %p181
        $region46: #{m1_forward.4} parent=43 // pred_check_branch
          %1741 = sbr.rel (%p1739) target = $region48
        $region47: #{m1_forward.4} parent=43 // pred_region
          %s1742 = smul.u32 22, %s17
          %s1743 = ssub.s32 43, %s1742
          %p1744 = scmp.lt.s32.totalorder %s1743, 22
          %s1745 = scalar_select %p1744, %s1743, 22
          %s1746 = smul.u32 128, %s1745
          %p1747 = scmp.ne.s32.totalorder 0, %s1746
          %s1748 = smul.addr %s1742, 8
          %s1749 = scalar_lea.vmem %s6, %s1748
          // Predicated region
          $region49: #{m1_forward.4} parent=47 // pred_check
            %p1750 = pneg %p1747
          $region50: #{m1_forward.4} parent=47 // pred_check_branch
            %1752 = sbr.rel (%p1750) target = $region52
          $region51: #{m1_forward.4} parent=47 // pred_region
            // Predicated region
            $region53: #{m1_forward.4} parent=51 // pred_check
              _
            $region54: #{m1_forward.4} parent=51 // pred_check_branch
              %1754 = sbr.rel (0) target = $region56
            $region55: #{m1_forward.4} parent=51 // pred_region
              // Predicated region
              $region75: #{m1_forward.4} parent=55 // pred_check
                _
              $region76: #{m1_forward.4} parent=55 // pred_check_branch
                %1846 = sbr.rel (0) target = $region78
              $region77: #{m1_forward.4} parent=55 // pred_region
                %s1847 = sdiv.u32.pop %s1745, 22
                %s1848 = srem.u32.pop %s1745, 22
                // While loop
                $region79: #{m1_forward.4} parent=77 // loop_pre_header
                  _
                $region80: #{m1_forward.4} parent=77 // loop_header
                  %s1850 = sphi 0, %s1852
                  %p1851 = scmp.ge.s32.totalorder %s1850, %s1847
                  %s1855 = sphi 0, %s1904
                  %s1856 = sphi %s1738, %s1907
                  %s1857 = sphi %s1749, %s1908
                $region81: #{m1_forward.4} parent=77 // loop_header_branch
                  %1854 = sbr.rel (%p1851) target = $region85
                $region82: #{m1_forward.4} parent=77 // loop_body
                  %v1858 = vld [vmem:[%s1856] sm:$0xff]
                  %1859 = vst [vmem:[%s1857] sm:$0xff] %v1858
                  %v1860 = vld [vmem:[%s1856 + $0x8] sm:$0xff]
                  %1861 = vst [vmem:[%s1857 + $0x8] sm:$0xff] %v1860
                  %v1862 = vld [vmem:[%s1856 + $0x10] sm:$0xff]
                  %1863 = vst [vmem:[%s1857 + $0x10] sm:$0xff] %v1862
                  %v1864 = vld [vmem:[%s1856 + $0x18] sm:$0xff]
                  %1865 = vst [vmem:[%s1857 + $0x18] sm:$0xff] %v1864
                  %v1866 = vld [vmem:[%s1856 + $0x20] sm:$0xff]
                  %1867 = vst [vmem:[%s1857 + $0x20] sm:$0xff] %v1866
                  %v1868 = vld [vmem:[%s1856 + $0x28] sm:$0xff]
                  %1869 = vst [vmem:[%s1857 + $0x28] sm:$0xff] %v1868
                  %v1870 = vld [vmem:[%s1856 + $0x30] sm:$0xff]
                  %1871 = vst [vmem:[%s1857 + $0x30] sm:$0xff] %v1870
                  %v1872 = vld [vmem:[%s1856 + $0x38] sm:$0xff]
                  %1873 = vst [vmem:[%s1857 + $0x38] sm:$0xff] %v1872
                  %v1874 = vld [vmem:[%s1856 + $0x40] sm:$0xff]
                  %1875 = vst [vmem:[%s1857 + $0x40] sm:$0xff] %v1874
                  %v1876 = vld [vmem:[%s1856 + $0x48] sm:$0xff]
                  %1877 = vst [vmem:[%s1857 + $0x48] sm:$0xff] %v1876
                  %v1878 = vld [vmem:[%s1856 + $0x50] sm:$0xff]
                  %1879 = vst [vmem:[%s1857 + $0x50] sm:$0xff] %v1878
                  %v1880 = vld [vmem:[%s1856 + $0x58] sm:$0xff]
                  %1881 = vst [vmem:[%s1857 + $0x58] sm:$0xff] %v1880
                  %v1882 = vld [vmem:[%s1856 + $0x60] sm:$0xff]
                  %1883 = vst [vmem:[%s1857 + $0x60] sm:$0xff] %v1882
                  %v1884 = vld [vmem:[%s1856 + $0x68] sm:$0xff]
                  %1885 = vst [vmem:[%s1857 + $0x68] sm:$0xff] %v1884
                  %v1886 = vld [vmem:[%s1856 + $0x70] sm:$0xff]
                  %1887 = vst [vmem:[%s1857 + $0x70] sm:$0xff] %v1886
                  %v1888 = vld [vmem:[%s1856 + $0x78] sm:$0xff]
                  %1889 = vst [vmem:[%s1857 + $0x78] sm:$0xff] %v1888
                  %v1890 = vld [vmem:[%s1856 + $0x80] sm:$0xff]
                  %1891 = vst [vmem:[%s1857 + $0x80] sm:$0xff] %v1890
                  %v1892 = vld [vmem:[%s1856 + $0x88] sm:$0xff]
                  %1893 = vst [vmem:[%s1857 + $0x88] sm:$0xff] %v1892
                  %v1894 = vld [vmem:[%s1856 + $0x90] sm:$0xff]
                  %1895 = vst [vmem:[%s1857 + $0x90] sm:$0xff] %v1894
                  %v1896 = vld [vmem:[%s1856 + $0x98] sm:$0xff]
                  %1897 = vst [vmem:[%s1857 + $0x98] sm:$0xff] %v1896
                  %v1898 = vld [vmem:[%s1856 + $0xa0] sm:$0xff]
                  %1899 = vst [vmem:[%s1857 + $0xa0] sm:$0xff] %v1898
                  %v1900 = vld [vmem:[%s1856 + $0xa8] sm:$0xff]
                  %1901 = vst [vmem:[%s1857 + $0xa8] sm:$0xff] %v1900
                  %s1902 = sadd.s32 1, %s1855
                  %p1903 = scmp.ge.s32.totalorder %s1902, %s1847
                  %s1904 = scalar_select %p1903, 0, %s1902
                  %s1905 = smul.u32 %s1904, 176
                  %s1906 = smul.u32 %s1904, 176
                  %s1907 = scalar_lea.vmem %s1738, %s1905 [#allocation2]
                  %s1908 = scalar_lea.vmem %s1749, %s1906
                $region83: #{m1_forward.4} parent=77 // loop_footer
                  %s1852 = sadd.s32 %s1850, 1
                $region84: #{m1_forward.4} parent=77 // loop_footer_branch
                  %1849 = sbr.rel target = $region80
                $region85: #{m1_forward.4} parent=77 // loop_exit
                  _
                %s1909 = sdiv.u32.pop %s1745, 22
                %s1910 = srem.u32.pop %s1745, 22
                %s1911 = smul.u32 %s1909, 22
                %s1912 = smul.u32 8, %s1911
                %s1913 = scalar_lea.vmem %s1738, %s1912 [#allocation2]
                %s1914 = smul.u32 8, %s1911
                %s1915 = scalar_lea.vmem %s1749, %s1914
                // While loop
                $region86: #{m1_forward.4} parent=77 // loop_pre_header
                  _
                $region87: #{m1_forward.4} parent=77 // loop_header
                  %s1917 = sphi 0, %s1919
                  %p1918 = scmp.ge.s32.totalorder %s1917, %s1910
                  %s1922 = sphi 0, %s1929
                  %s1923 = sphi %s1913, %s1932
                  %s1924 = sphi %s1915, %s1933
                $region88: #{m1_forward.4} parent=77 // loop_header_branch
                  %1921 = sbr.rel (%p1918) target = $region92
                $region89: #{m1_forward.4} parent=77 // loop_body
                  %v1925 = vld [vmem:[%s1923] sm:$0xff]
                  %1926 = vst [vmem:[%s1924] sm:$0xff] %v1925
                  %s1927 = sadd.s32 1, %s1922
                  %p1928 = scmp.ge.s32.totalorder %s1927, %s1910
                  %s1929 = scalar_select %p1928, 0, %s1927
                  %s1930 = smul.u32 %s1929, 8
                  %s1931 = smul.u32 %s1929, 8
                  %s1932 = scalar_lea.vmem %s1913, %s1930 [#allocation2]
                  %s1933 = scalar_lea.vmem %s1915, %s1931
                $region90: #{m1_forward.4} parent=77 // loop_footer
                  %s1919 = sadd.s32 %s1917, 1
                $region91: #{m1_forward.4} parent=77 // loop_footer_branch
                  %1916 = sbr.rel target = $region87
                $region92: #{m1_forward.4} parent=77 // loop_exit
                  _
              $region78: #{m1_forward.4} parent=55 // pred_fallthru
                _
              // Predicated region
              $region93: #{m1_forward.4} parent=55 // pred_check
                _
              $region94: #{m1_forward.4} parent=55 // pred_check_branch
                %1935 = sbr.rel target = $region96
              $region95: #{m1_forward.4} parent=55 // pred_region
                _
              $region96: #{m1_forward.4} parent=55 // pred_fallthru
                _
            $region56: #{m1_forward.4} parent=51 // pred_fallthru
              _
            // Predicated region
            $region57: #{m1_forward.4} parent=51 // pred_check
              _
            $region58: #{m1_forward.4} parent=51 // pred_check_branch
              %1756 = sbr.rel target = $region60
            $region59: #{m1_forward.4} parent=51 // pred_region
              %s1758 = sdiv.u32.pop %s1745, 22
              %s1759 = srem.u32.pop %s1745, 22
              // While loop
              $region61: #{m1_forward.4} parent=59 // loop_pre_header
                _
              $region62: #{m1_forward.4} parent=59 // loop_header
                %s1761 = sphi 0, %s1763
                %p1762 = scmp.ge.s32.totalorder %s1761, %s1758
                %s1766 = sphi 0, %s1815
                %s1767 = sphi %s1738, %s1818
                %s1768 = sphi %s1749, %s1819
              $region63: #{m1_forward.4} parent=59 // loop_header_branch
                %1765 = sbr.rel (%p1762) target = $region67
              $region64: #{m1_forward.4} parent=59 // loop_body
                %v1769 = vld [vmem:[%s1767] sm:$0xff]
                %1770 = vst [vmem:[%s1768] sm:$0xff] %v1769
                %v1771 = vld [vmem:[%s1767 + $0x8] sm:$0xff]
                %1772 = vst [vmem:[%s1768 + $0x8] sm:$0xff] %v1771
                %v1773 = vld [vmem:[%s1767 + $0x10] sm:$0xff]
                %1774 = vst [vmem:[%s1768 + $0x10] sm:$0xff] %v1773
                %v1775 = vld [vmem:[%s1767 + $0x18] sm:$0xff]
                %1776 = vst [vmem:[%s1768 + $0x18] sm:$0xff] %v1775
                %v1777 = vld [vmem:[%s1767 + $0x20] sm:$0xff]
                %1778 = vst [vmem:[%s1768 + $0x20] sm:$0xff] %v1777
                %v1779 = vld [vmem:[%s1767 + $0x28] sm:$0xff]
                %1780 = vst [vmem:[%s1768 + $0x28] sm:$0xff] %v1779
                %v1781 = vld [vmem:[%s1767 + $0x30] sm:$0xff]
                %1782 = vst [vmem:[%s1768 + $0x30] sm:$0xff] %v1781
                %v1783 = vld [vmem:[%s1767 + $0x38] sm:$0xff]
                %1784 = vst [vmem:[%s1768 + $0x38] sm:$0xff] %v1783
                %v1785 = vld [vmem:[%s1767 + $0x40] sm:$0xff]
                %1786 = vst [vmem:[%s1768 + $0x40] sm:$0xff] %v1785
                %v1787 = vld [vmem:[%s1767 + $0x48] sm:$0xff]
                %1788 = vst [vmem:[%s1768 + $0x48] sm:$0xff] %v1787
                %v1789 = vld [vmem:[%s1767 + $0x50] sm:$0xff]
                %1790 = vst [vmem:[%s1768 + $0x50] sm:$0xff] %v1789
                %v1791 = vld [vmem:[%s1767 + $0x58] sm:$0xff]
                %1792 = vst [vmem:[%s1768 + $0x58] sm:$0xff] %v1791
                %v1793 = vld [vmem:[%s1767 + $0x60] sm:$0xff]
                %1794 = vst [vmem:[%s1768 + $0x60] sm:$0xff] %v1793
                %v1795 = vld [vmem:[%s1767 + $0x68] sm:$0xff]
                %1796 = vst [vmem:[%s1768 + $0x68] sm:$0xff] %v1795
                %v1797 = vld [vmem:[%s1767 + $0x70] sm:$0xff]
                %1798 = vst [vmem:[%s1768 + $0x70] sm:$0xff] %v1797
                %v1799 = vld [vmem:[%s1767 + $0x78] sm:$0xff]
                %1800 = vst [vmem:[%s1768 + $0x78] sm:$0xff] %v1799
                %v1801 = vld [vmem:[%s1767 + $0x80] sm:$0xff]
                %1802 = vst [vmem:[%s1768 + $0x80] sm:$0xff] %v1801
                %v1803 = vld [vmem:[%s1767 + $0x88] sm:$0xff]
                %1804 = vst [vmem:[%s1768 + $0x88] sm:$0xff] %v1803
                %v1805 = vld [vmem:[%s1767 + $0x90] sm:$0xff]
                %1806 = vst [vmem:[%s1768 + $0x90] sm:$0xff] %v1805
                %v1807 = vld [vmem:[%s1767 + $0x98] sm:$0xff]
                %1808 = vst [vmem:[%s1768 + $0x98] sm:$0xff] %v1807
                %v1809 = vld [vmem:[%s1767 + $0xa0] sm:$0xff]
                %1810 = vst [vmem:[%s1768 + $0xa0] sm:$0xff] %v1809
                %v1811 = vld [vmem:[%s1767 + $0xa8] sm:$0xff]
                %1812 = vst [vmem:[%s1768 + $0xa8] sm:$0xff] %v1811
                %s1813 = sadd.s32 1, %s1766
                %p1814 = scmp.ge.s32.totalorder %s1813, %s1758
                %s1815 = scalar_select %p1814, 0, %s1813
                %s1816 = smul.u32 %s1815, 176
                %s1817 = smul.u32 %s1815, 176
                %s1818 = scalar_lea.vmem %s1738, %s1816 [#allocation2]
                %s1819 = scalar_lea.vmem %s1749, %s1817
              $region65: #{m1_forward.4} parent=59 // loop_footer
                %s1763 = sadd.s32 %s1761, 1
              $region66: #{m1_forward.4} parent=59 // loop_footer_branch
                %1760 = sbr.rel target = $region62
              $region67: #{m1_forward.4} parent=59 // loop_exit
                _
              %s1820 = sdiv.u32.pop %s1745, 22
              %s1821 = srem.u32.pop %s1745, 22
              %s1822 = smul.u32 %s1820, 22
              %s1823 = smul.u32 8, %s1822
              %s1824 = scalar_lea.vmem %s1738, %s1823 [#allocation2]
              %s1825 = smul.u32 8, %s1822
              %s1826 = scalar_lea.vmem %s1749, %s1825
              // While loop
              $region68: #{m1_forward.4} parent=59 // loop_pre_header
                _
              $region69: #{m1_forward.4} parent=59 // loop_header
                %s1828 = sphi 0, %s1830
                %p1829 = scmp.ge.s32.totalorder %s1828, %s1821
                %s1833 = sphi 0, %s1840
                %s1834 = sphi %s1824, %s1843
                %s1835 = sphi %s1826, %s1844
              $region70: #{m1_forward.4} parent=59 // loop_header_branch
                %1832 = sbr.rel (%p1829) target = $region74
              $region71: #{m1_forward.4} parent=59 // loop_body
                %v1836 = vld [vmem:[%s1834] sm:$0xff]
                %1837 = vst [vmem:[%s1835] sm:$0xff] %v1836
                %s1838 = sadd.s32 1, %s1833
                %p1839 = scmp.ge.s32.totalorder %s1838, %s1821
                %s1840 = scalar_select %p1839, 0, %s1838
                %s1841 = smul.u32 %s1840, 8
                %s1842 = smul.u32 %s1840, 8
                %s1843 = scalar_lea.vmem %s1824, %s1841 [#allocation2]
                %s1844 = scalar_lea.vmem %s1826, %s1842
              $region72: #{m1_forward.4} parent=59 // loop_footer
                %s1830 = sadd.s32 %s1828, 1
              $region73: #{m1_forward.4} parent=59 // loop_footer_branch
                %1827 = sbr.rel target = $region69
              $region74: #{m1_forward.4} parent=59 // loop_exit
                _
            $region60: #{m1_forward.4} parent=51 // pred_fallthru
              _
          $region52: #{m1_forward.4} parent=47 // pred_fallthru
            _
          %1936 = vnop
        $region48: #{m1_forward.4} parent=43 // pred_fallthru
          _
      $region44: #{m1_forward.4} parent=5 // pred_fallthru
        _
      %p1937 = scmp.le.s32.totalorder 2, %s12
      // Predicated region
      $region97: #{m1_forward.4} parent=5 // pred_check
        %p1938 = pneg %p1937
      $region98: #{m1_forward.4} parent=5 // pred_check_branch
        %1940 = sbr.rel (%p1938) target = $region100
      $region99: #{m1_forward.4} parent=5 // pred_region
        %s1941 = ssub.s32 %s12, 2
        // Predicated region
        $region101: #{m1_forward.4} parent=99 // pred_check
          %p1942 = pneg %p187
        $region102: #{m1_forward.4} parent=99 // pred_check_branch
          %1944 = sbr.rel (%p1942) target = $region104
        $region103: #{m1_forward.4} parent=99 // pred_region
          %s1945 = sand.u32 %s172, 1
          %s1946 = sand.u32 %s172, 1
          %s1947 = smul.addr %s1946, 176
          %s1948 = scalar_lea.vmem [#allocation2], %s1947
        $region104: #{m1_forward.4} parent=99 // pred_fallthru
          _
      $region100: #{m1_forward.4} parent=5 // pred_fallthru
        _
    $region6: #{m1_forward.4} parent=1 // loop_footer
      %s16 = sadd.s32 1, %s12
    $region7: #{m1_forward.4} parent=1 // loop_footer_branch
      %11 = sbr.rel target = $region3
    $region8: #{m1_forward.4} parent=1 // loop_exit
      _

// kernel: m1_forward.5
$region0: #{m1_forward.5}
  #allocation0 [shape = 'u32[]', space=smem, size = 0x4, offset = 0x4, fixed_abs, tag = 'smem constant byte address 0x4 - core index']
  #allocation1 [shape = 'u32[144,128]{1,0:T(1,128)}', space=vmem, size = 0x12000, scoped, tag = 'internal scratch']
  %s0 = inlined_call_operand.vmem [shape: f32[2,2704], index: 0, kind: input, shape index: {}]
  %s1 = inlined_call_operand.vmem [shape: f32[2704,256], index: 1, kind: input, shape index: {}]
  %s2 = inlined_call_operand.vmem [shape: f32[1,256], index: 2, kind: input, shape index: {}]
  %s3 = inlined_call_operand.vmem [shape: f32[256,64], index: 3, kind: input, shape index: {}]
  %s4 = inlined_call_operand.vmem [shape: f32[1,64], index: 4, kind: input, shape index: {}]
  %s5 = inlined_call_operand.vmem [shape: f32[64,9], index: 5, kind: input, shape index: {}]
  %s6 = inlined_call_operand.vmem [shape: f32[1,9], index: 6, kind: input, shape index: {}]
  %s7 = inlined_call_operand.hbm [shape: f32[2,9], index: 7, kind: output, shape index: {}]
  %s8 = sld [smem:[#allocation0]]
  $region38: #{m1_forward.5} parent=0
    _
  %s10 = ssub.s32 1, %s8
  %s11 = scalar_select 0, %s10, %s8
  $region1: #{m1_forward.5} parent=0
    #allocation2 [shape = 'u8[1024]{0}', space=vmem, size = 0x400, scoped, tag = 'output window, operand 0, single buffered']
    #allocation3 [shape = 's32[1]{0}', space=sflag, size = 0x4, scoped, tag = 'scoped memory for m1_forward.5']
    %12 = vsyncpa [#allocation3], 0
    // Predicated region
    $region2: #{m1_forward.5} parent=1 // pred_check
      _
    $region3: #{m1_forward.5} parent=1 // pred_check_branch
      %14 = sbr.rel (0) target = $region5
    $region4: #{m1_forward.5} parent=1 // pred_region
      _
    $region5: #{m1_forward.5} parent=1 // pred_fallthru
      _
    // Predicated region
    $region6: #{m1_forward.5} parent=1 // pred_check
      _
    $region7: #{m1_forward.5} parent=1 // pred_check_branch
      %16 = sbr.rel (0) target = $region9
    $region8: #{m1_forward.5} parent=1 // pred_region
      _
    $region9: #{m1_forward.5} parent=1 // pred_fallthru
      _
    // Predicated region
    $region10: #{m1_forward.5} parent=1 // pred_check
      _
    $region11: #{m1_forward.5} parent=1 // pred_check_branch
      %18 = sbr.rel (0) target = $region13
    $region12: #{m1_forward.5} parent=1 // pred_region
      _
    $region13: #{m1_forward.5} parent=1 // pred_fallthru
      _
    // Predicated region
    $region14: #{m1_forward.5} parent=1 // pred_check
      _
    $region15: #{m1_forward.5} parent=1 // pred_check_branch
      %20 = sbr.rel (0) target = $region17
    $region16: #{m1_forward.5} parent=1 // pred_region
      _
    $region17: #{m1_forward.5} parent=1 // pred_fallthru
      _
    // Predicated region
    $region18: #{m1_forward.5} parent=1 // pred_check
      _
    $region19: #{m1_forward.5} parent=1 // pred_check_branch
      %22 = sbr.rel (0) target = $region21
    $region20: #{m1_forward.5} parent=1 // pred_region
      _
    $region21: #{m1_forward.5} parent=1 // pred_fallthru
      _
    // Predicated region
    $region22: #{m1_forward.5} parent=1 // pred_check
      _
    $region23: #{m1_forward.5} parent=1 // pred_check_branch
      %24 = sbr.rel (0) target = $region25
    $region24: #{m1_forward.5} parent=1 // pred_region
      _
    $region25: #{m1_forward.5} parent=1 // pred_fallthru
      _
    // Predicated region
    $region26: #{m1_forward.5} parent=1 // pred_check
      _
    $region27: #{m1_forward.5} parent=1 // pred_check_branch
      %26 = sbr.rel (0) target = $region29
    $region28: #{m1_forward.5} parent=1 // pred_region
      _
    $region29: #{m1_forward.5} parent=1 // pred_fallthru
      _
    %v27 = vld [vmem:[%s0] sm:$0xff]
    %v28 = vld [vmem:[%s0 + $0x8] sm:$0xff]
    %v29 = vld [vmem:[%s0 + $0x10] sm:$0xff]
    %v30 = vld [vmem:[%s0 + $0x18] sm:$0xff]
    %v31 = vld [vmem:[%s0 + $0x20] sm:$0xff]
    %v32 = vld [vmem:[%s0 + $0x28] sm:$0xf]
    %v33 = vld [vmem:[%s1] sm:$0xff]
    %v34 = vld [vmem:[%s1 + $0x8] sm:$0xff]
    %v35 = vld [vmem:[%s1 + $0x10] sm:$0xff]
    %v36 = vld [vmem:[%s1 + $0x18] sm:$0xff]
    %v37 = vld [vmem:[%s1 + $0x20] sm:$0xff]
    %v38 = vld [vmem:[%s1 + $0x28] sm:$0xff]
    %v39 = vld [vmem:[%s1 + $0x30] sm:$0xff]
    %v40 = vld [vmem:[%s1 + $0x38] sm:$0xff]
    %v41 = vld [vmem:[%s1 + $0x40] sm:$0xff]
    %v42 = vld [vmem:[%s1 + $0x48] sm:$0xff]
    %v43 = vld [vmem:[%s1 + $0x50] sm:$0xff]
    %v44 = vld [vmem:[%s1 + $0x58] sm:$0xff]
    %v45 = vld [vmem:[%s1 + $0x60] sm:$0xff]
    %v46 = vld [vmem:[%s1 + $0x68] sm:$0xff]
    %v47 = vld [vmem:[%s1 + $0x70] sm:$0xff]
    %v48 = vld [vmem:[%s1 + $0x78] sm:$0xff]
    %v49 = vld [vmem:[%s1 + $0x80] sm:$0xff]
    %v50 = vld [vmem:[%s1 + $0x88] sm:$0xff]
    %v51 = vld [vmem:[%s1 + $0x90] sm:$0xff]
    %v52 = vld [vmem:[%s1 + $0x98] sm:$0xff]
    %v53 = vld [vmem:[%s1 + $0xa0] sm:$0xff]
    %v54 = vld [vmem:[%s1 + $0xa8] sm:$0xff]
    %v55 = vld [vmem:[%s1 + $0xb0] sm:$0xff]
    %v56 = vld [vmem:[%s1 + $0xb8] sm:$0xff]
    %v57 = vld [vmem:[%s1 + $0xc0] sm:$0xff]
    %v58 = vld [vmem:[%s1 + $0xc8] sm:$0xff]
    %v59 = vld [vmem:[%s1 + $0xd0] sm:$0xff]
    %v60 = vld [vmem:[%s1 + $0xd8] sm:$0xff]
    %v61 = vld [vmem:[%s1 + $0xe0] sm:$0xff]
    %v62 = vld [vmem:[%s1 + $0xe8] sm:$0xff]
    %v63 = vld [vmem:[%s1 + $0xf0] sm:$0xff]
    %v64 = vld [vmem:[%s1 + $0xf8] sm:$0xff]
    %v65 = vld [vmem:[%s1 + $0x100] sm:$0xff]
    %v66 = vld [vmem:[%s1 + $0x108] sm:$0xff]
    %v67 = vld [vmem:[%s1 + $0x110] sm:$0xff]
    %v68 = vld [vmem:[%s1 + $0x118] sm:$0xff]
    %v69 = vld [vmem:[%s1 + $0x120] sm:$0xff]
    %v70 = vld [vmem:[%s1 + $0x128] sm:$0xff]
    %v71 = vld [vmem:[%s1 + $0x130] sm:$0xff]
    %v72 = vld [vmem:[%s1 + $0x138] sm:$0xff]
    %v73 = vld [vmem:[%s1 + $0x140] sm:$0xff]
    %v74 = vld [vmem:[%s1 + $0x148] sm:$0xff]
    %v75 = vld [vmem:[%s1 + $0x150] sm:$0xff]
    %v76 = vld [vmem:[%s1 + $0x158] sm:$0xff]
    %v77 = vld [vmem:[%s1 + $0x160] sm:$0xff]
    %v78 = vld [vmem:[%s1 + $0x168] sm:$0xff]
    %v79 = vld [vmem:[%s1 + $0x170] sm:$0xff]
    %v80 = vld [vmem:[%s1 + $0x178] sm:$0xff]
    %v81 = vld [vmem:[%s1 + $0x180] sm:$0xff]
    %v82 = vld [vmem:[%s1 + $0x188] sm:$0xff]
    %v83 = vld [vmem:[%s1 + $0x190] sm:$0xff]
    %v84 = vld [vmem:[%s1 + $0x198] sm:$0xff]
    %v85 = vld [vmem:[%s1 + $0x1a0] sm:$0xff]
    %v86 = vld [vmem:[%s1 + $0x1a8] sm:$0xff]
    %v87 = vld [vmem:[%s1 + $0x1b0] sm:$0xff]
    %v88 = vld [vmem:[%s1 + $0x1b8] sm:$0xff]
    %v89 = vld [vmem:[%s1 + $0x1c0] sm:$0xff]
    %v90 = vld [vmem:[%s1 + $0x1c8] sm:$0xff]
    %v91 = vld [vmem:[%s1 + $0x1d0] sm:$0xff]
    %v92 = vld [vmem:[%s1 + $0x1d8] sm:$0xff]
    %v93 = vld [vmem:[%s1 + $0x1e0] sm:$0xff]
    %v94 = vld [vmem:[%s1 + $0x1e8] sm:$0xff]
    %v95 = vld [vmem:[%s1 + $0x1f0] sm:$0xff]
    %v96 = vld [vmem:[%s1 + $0x1f8] sm:$0xff]
    %v97 = vld [vmem:[%s1 + $0x200] sm:$0xff]
    %v98 = vld [vmem:[%s1 + $0x208] sm:$0xff]
    %v99 = vld [vmem:[%s1 + $0x210] sm:$0xff]
    %v100 = vld [vmem:[%s1 + $0x218] sm:$0xff]
    %v101 = vld [vmem:[%s1 + $0x220] sm:$0xff]
    %v102 = vld [vmem:[%s1 + $0x228] sm:$0xff]
    %v103 = vld [vmem:[%s1 + $0x230] sm:$0xff]
    %v104 = vld [vmem:[%s1 + $0x238] sm:$0xff]
    %v105 = vld [vmem:[%s1 + $0x240] sm:$0xff]
    %v106 = vld [vmem:[%s1 + $0x248] sm:$0xff]
    %v107 = vld [vmem:[%s1 + $0x250] sm:$0xff]
    %v108 = vld [vmem:[%s1 + $0x258] sm:$0xff]
    %v109 = vld [vmem:[%s1 + $0x260] sm:$0xff]
    %v110 = vld [vmem:[%s1 + $0x268] sm:$0xff]
    %v111 = vld [vmem:[%s1 + $0x270] sm:$0xff]
    %v112 = vld [vmem:[%s1 + $0x278] sm:$0xff]
    %v113 = vld [vmem:[%s1 + $0x280] sm:$0xff]
    %v114 = vld [vmem:[%s1 + $0x288] sm:$0xff]
    %v115 = vld [vmem:[%s1 + $0x290] sm:$0xff]
    %v116 = vld [vmem:[%s1 + $0x298] sm:$0xff]
    %v117 = vld [vmem:[%s1 + $0x2a0] sm:$0xff]
    %v118 = vld [vmem:[%s1 + $0x2a8] sm:$0xff]
    %v119 = vld [vmem:[%s1 + $0x2b0] sm:$0xff]
    %v120 = vld [vmem:[%s1 + $0x2b8] sm:$0xff]
    %v121 = vld [vmem:[%s1 + $0x2c0] sm:$0xff]
    %v122 = vld [vmem:[%s1 + $0x2c8] sm:$0xff]
    %v123 = vld [vmem:[%s1 + $0x2d0] sm:$0xff]
    %v124 = vld [vmem:[%s1 + $0x2d8] sm:$0xff]
    %v125 = vld [vmem:[%s1 + $0x2e0] sm:$0xff]
    %v126 = vld [vmem:[%s1 + $0x2e8] sm:$0xff]
    %v127 = vld [vmem:[%s1 + $0x2f0] sm:$0xff]
    %v128 = vld [vmem:[%s1 + $0x2f8] sm:$0xff]
    %v129 = vld [vmem:[%s1 + $0x300] sm:$0xff]
    %v130 = vld [vmem:[%s1 + $0x308] sm:$0xff]
    %v131 = vld [vmem:[%s1 + $0x310] sm:$0xff]
    %v132 = vld [vmem:[%s1 + $0x318] sm:$0xff]
    %v133 = vld [vmem:[%s1 + $0x320] sm:$0xff]
    %v134 = vld [vmem:[%s1 + $0x328] sm:$0xff]
    %v135 = vld [vmem:[%s1 + $0x330] sm:$0xff]
    %v136 = vld [vmem:[%s1 + $0x338] sm:$0xff]
    %v137 = vld [vmem:[%s1 + $0x340] sm:$0xff]
    %v138 = vld [vmem:[%s1 + $0x348] sm:$0xff]
    %v139 = vld [vmem:[%s1 + $0x350] sm:$0xff]
    %v140 = vld [vmem:[%s1 + $0x358] sm:$0xff]
    %v141 = vld [vmem:[%s1 + $0x360] sm:$0xff]
    %v142 = vld [vmem:[%s1 + $0x368] sm:$0xff]
    %v143 = vld [vmem:[%s1 + $0x370] sm:$0xff]
    %v144 = vld [vmem:[%s1 + $0x378] sm:$0xff]
    %v145 = vld [vmem:[%s1 + $0x380] sm:$0xff]
    %v146 = vld [vmem:[%s1 + $0x388] sm:$0xff]
    %v147 = vld [vmem:[%s1 + $0x390] sm:$0xff]
    %v148 = vld [vmem:[%s1 + $0x398] sm:$0xff]
    %v149 = vld [vmem:[%s1 + $0x3a0] sm:$0xff]
    %v150 = vld [vmem:[%s1 + $0x3a8] sm:$0xff]
    %v151 = vld [vmem:[%s1 + $0x3b0] sm:$0xff]
    %v152 = vld [vmem:[%s1 + $0x3b8] sm:$0xff]
    %v153 = vld [vmem:[%s1 + $0x3c0] sm:$0xff]
    %v154 = vld [vmem:[%s1 + $0x3c8] sm:$0xff]
    %v155 = vld [vmem:[%s1 + $0x3d0] sm:$0xff]
    %v156 = vld [vmem:[%s1 + $0x3d8] sm:$0xff]
    %v157 = vld [vmem:[%s1 + $0x3e0] sm:$0xff]
    %v158 = vld [vmem:[%s1 + $0x3e8] sm:$0xff]
    %v159 = vld [vmem:[%s1 + $0x3f0] sm:$0xff]
    %v160 = vld [vmem:[%s1 + $0x3f8] sm:$0xff]
    %v161 = vld [vmem:[%s1 + $0x400] sm:$0xff]
    %v162 = vld [vmem:[%s1 + $0x408] sm:$0xff]
    %v163 = vld [vmem:[%s1 + $0x410] sm:$0xff]
    %v164 = vld [vmem:[%s1 + $0x418] sm:$0xff]
    %v165 = vld [vmem:[%s1 + $0x420] sm:$0xff]
    %v166 = vld [vmem:[%s1 + $0x428] sm:$0xff]
    %v167 = vld [vmem:[%s1 + $0x430] sm:$0xff]
    %v168 = vld [vmem:[%s1 + $0x438] sm:$0xff]
    %v169 = vld [vmem:[%s1 + $0x440] sm:$0xff]
    %v170 = vld [vmem:[%s1 + $0x448] sm:$0xff]
    %v171 = vld [vmem:[%s1 + $0x450] sm:$0xff]
    %v172 = vld [vmem:[%s1 + $0x458] sm:$0xff]
    %v173 = vld [vmem:[%s1 + $0x460] sm:$0xff]
    %v174 = vld [vmem:[%s1 + $0x468] sm:$0xff]
    %v175 = vld [vmem:[%s1 + $0x470] sm:$0xff]
    %v176 = vld [vmem:[%s1 + $0x478] sm:$0xff]
    %v177 = vld [vmem:[%s1 + $0x480] sm:$0xff]
    %v178 = vld [vmem:[%s1 + $0x488] sm:$0xff]
    %v179 = vld [vmem:[%s1 + $0x490] sm:$0xff]
    %v180 = vld [vmem:[%s1 + $0x498] sm:$0xff]
    %v181 = vld [vmem:[%s1 + $0x4a0] sm:$0xff]
    %v182 = vld [vmem:[%s1 + $0x4a8] sm:$0xff]
    %v183 = vld [vmem:[%s1 + $0x4b0] sm:$0xff]
    %v184 = vld [vmem:[%s1 + $0x4b8] sm:$0xff]
    %v185 = vld [vmem:[%s1 + $0x4c0] sm:$0xff]
    %v186 = vld [vmem:[%s1 + $0x4c8] sm:$0xff]
    %v187 = vld [vmem:[%s1 + $0x4d0] sm:$0xff]
    %v188 = vld [vmem:[%s1 + $0x4d8] sm:$0xff]
    %v189 = vld [vmem:[%s1 + $0x4e0] sm:$0xff]
    %v190 = vld [vmem:[%s1 + $0x4e8] sm:$0xff]
    %v191 = vld [vmem:[%s1 + $0x4f0] sm:$0xff]
    %v192 = vld [vmem:[%s1 + $0x4f8] sm:$0xff]
    %v193 = vld [vmem:[%s1 + $0x500] sm:$0xff]
    %v194 = vld [vmem:[%s1 + $0x508] sm:$0xff]
    %v195 = vld [vmem:[%s1 + $0x510] sm:$0xff]
    %v196 = vld [vmem:[%s1 + $0x518] sm:$0xff]
    %v197 = vld [vmem:[%s1 + $0x520] sm:$0xff]
    %v198 = vld [vmem:[%s1 + $0x528] sm:$0xff]
    %v199 = vld [vmem:[%s1 + $0x530] sm:$0xff]
    %v200 = vld [vmem:[%s1 + $0x538] sm:$0xff]
    %v201 = vld [vmem:[%s1 + $0x540] sm:$0xff]
    %v202 = vld [vmem:[%s1 + $0x548] sm:$0xff]
    %v203 = vld [vmem:[%s1 + $0x550] sm:$0xff]
    %v204 = vld [vmem:[%s1 + $0x558] sm:$0xff]
    %v205 = vld [vmem:[%s1 + $0x560] sm:$0xff]
    %v206 = vld [vmem:[%s1 + $0x568] sm:$0xff]
    %v207 = vld [vmem:[%s1 + $0x570] sm:$0xff]
    %v208 = vld [vmem:[%s1 + $0x578] sm:$0xff]
    %v209 = vld [vmem:[%s1 + $0x580] sm:$0xff]
    %v210 = vld [vmem:[%s1 + $0x588] sm:$0xff]
    %v211 = vld [vmem:[%s1 + $0x590] sm:$0xff]
    %v212 = vld [vmem:[%s1 + $0x598] sm:$0xff]
    %v213 = vld [vmem:[%s1 + $0x5a0] sm:$0xff]
    %v214 = vld [vmem:[%s1 + $0x5a8] sm:$0xff]
    %v215 = vld [vmem:[%s1 + $0x5b0] sm:$0xff]
    %v216 = vld [vmem:[%s1 + $0x5b8] sm:$0xff]
    %v217 = vld [vmem:[%s1 + $0x5c0] sm:$0xff]
    %v218 = vld [vmem:[%s1 + $0x5c8] sm:$0xff]
    %v219 = vld [vmem:[%s1 + $0x5d0] sm:$0xff]
    %v220 = vld [vmem:[%s1 + $0x5d8] sm:$0xff]
    %v221 = vld [vmem:[%s1 + $0x5e0] sm:$0xff]
    %v222 = vld [vmem:[%s1 + $0x5e8] sm:$0xff]
    %v223 = vld [vmem:[%s1 + $0x5f0] sm:$0xff]
    %v224 = vld [vmem:[%s1 + $0x5f8] sm:$0xff]
    %v225 = vld [vmem:[%s1 + $0x600] sm:$0xff]
    %v226 = vld [vmem:[%s1 + $0x608] sm:$0xff]
    %v227 = vld [vmem:[%s1 + $0x610] sm:$0xff]
    %v228 = vld [vmem:[%s1 + $0x618] sm:$0xff]
    %v229 = vld [vmem:[%s1 + $0x620] sm:$0xff]
    %v230 = vld [vmem:[%s1 + $0x628] sm:$0xff]
    %v231 = vld [vmem:[%s1 + $0x630] sm:$0xff]
    %v232 = vld [vmem:[%s1 + $0x638] sm:$0xff]
    %v233 = vld [vmem:[%s1 + $0x640] sm:$0xff]
    %v234 = vld [vmem:[%s1 + $0x648] sm:$0xff]
    %v235 = vld [vmem:[%s1 + $0x650] sm:$0xff]
    %v236 = vld [vmem:[%s1 + $0x658] sm:$0xff]
    %v237 = vld [vmem:[%s1 + $0x660] sm:$0xff]
    %v238 = vld [vmem:[%s1 + $0x668] sm:$0xff]
    %v239 = vld [vmem:[%s1 + $0x670] sm:$0xff]
    %v240 = vld [vmem:[%s1 + $0x678] sm:$0xff]
    %v241 = vld [vmem:[%s1 + $0x680] sm:$0xff]
    %v242 = vld [vmem:[%s1 + $0x688] sm:$0xff]
    %v243 = vld [vmem:[%s1 + $0x690] sm:$0xff]
    %v244 = vld [vmem:[%s1 + $0x698] sm:$0xff]
    %v245 = vld [vmem:[%s1 + $0x6a0] sm:$0xff]
    %v246 = vld [vmem:[%s1 + $0x6a8] sm:$0xff]
    %v247 = vld [vmem:[%s1 + $0x6b0] sm:$0xff]
    %v248 = vld [vmem:[%s1 + $0x6b8] sm:$0xff]
    %v249 = vld [vmem:[%s1 + $0x6c0] sm:$0xff]
    %v250 = vld [vmem:[%s1 + $0x6c8] sm:$0xff]
    %v251 = vld [vmem:[%s1 + $0x6d0] sm:$0xff]
    %v252 = vld [vmem:[%s1 + $0x6d8] sm:$0xff]
    %v253 = vld [vmem:[%s1 + $0x6e0] sm:$0xff]
    %v254 = vld [vmem:[%s1 + $0x6e8] sm:$0xff]
    %v255 = vld [vmem:[%s1 + $0x6f0] sm:$0xff]
    %v256 = vld [vmem:[%s1 + $0x6f8] sm:$0xff]
    %v257 = vld [vmem:[%s1 + $0x700] sm:$0xff]
    %v258 = vld [vmem:[%s1 + $0x708] sm:$0xff]
    %v259 = vld [vmem:[%s1 + $0x710] sm:$0xff]
    %v260 = vld [vmem:[%s1 + $0x718] sm:$0xff]
    %v261 = vld [vmem:[%s1 + $0x720] sm:$0xff]
    %v262 = vld [vmem:[%s1 + $0x728] sm:$0xff]
    %v263 = vld [vmem:[%s1 + $0x730] sm:$0xff]
    %v264 = vld [vmem:[%s1 + $0x738] sm:$0xff]
    %v265 = vld [vmem:[%s1 + $0x740] sm:$0xff]
    %v266 = vld [vmem:[%s1 + $0x748] sm:$0xff]
    %v267 = vld [vmem:[%s1 + $0x750] sm:$0xff]
    %v268 = vld [vmem:[%s1 + $0x758] sm:$0xff]
    %v269 = vld [vmem:[%s1 + $0x760] sm:$0xff]
    %v270 = vld [vmem:[%s1 + $0x768] sm:$0xff]
    %v271 = vld [vmem:[%s1 + $0x770] sm:$0xff]
    %v272 = vld [vmem:[%s1 + $0x778] sm:$0xff]
    %v273 = vld [vmem:[%s1 + $0x780] sm:$0xff]
    %v274 = vld [vmem:[%s1 + $0x788] sm:$0xff]
    %v275 = vld [vmem:[%s1 + $0x790] sm:$0xff]
    %v276 = vld [vmem:[%s1 + $0x798] sm:$0xff]
    %v277 = vld [vmem:[%s1 + $0x7a0] sm:$0xff]
    %v278 = vld [vmem:[%s1 + $0x7a8] sm:$0xff]
    %v279 = vld [vmem:[%s1 + $0x7b0] sm:$0xff]
    %v280 = vld [vmem:[%s1 + $0x7b8] sm:$0xff]
    %v281 = vld [vmem:[%s1 + $0x7c0] sm:$0xff]
    %v282 = vld [vmem:[%s1 + $0x7c8] sm:$0xff]
    %v283 = vld [vmem:[%s1 + $0x7d0] sm:$0xff]
    %v284 = vld [vmem:[%s1 + $0x7d8] sm:$0xff]
    %v285 = vld [vmem:[%s1 + $0x7e0] sm:$0xff]
    %v286 = vld [vmem:[%s1 + $0x7e8] sm:$0xff]
    %v287 = vld [vmem:[%s1 + $0x7f0] sm:$0xff]
    %v288 = vld [vmem:[%s1 + $0x7f8] sm:$0xff]
    %v289 = vld [vmem:[%s1 + $0x800] sm:$0xff]
    %v290 = vld [vmem:[%s1 + $0x808] sm:$0xff]
    %v291 = vld [vmem:[%s1 + $0x810] sm:$0xff]
    %v292 = vld [vmem:[%s1 + $0x818] sm:$0xff]
    %v293 = vld [vmem:[%s1 + $0x820] sm:$0xff]
    %v294 = vld [vmem:[%s1 + $0x828] sm:$0xff]
    %v295 = vld [vmem:[%s1 + $0x830] sm:$0xff]
    %v296 = vld [vmem:[%s1 + $0x838] sm:$0xff]
    %v297 = vld [vmem:[%s1 + $0x840] sm:$0xff]
    %v298 = vld [vmem:[%s1 + $0x848] sm:$0xff]
    %v299 = vld [vmem:[%s1 + $0x850] sm:$0xff]
    %v300 = vld [vmem:[%s1 + $0x858] sm:$0xff]
    %v301 = vld [vmem:[%s1 + $0x860] sm:$0xff]
    %v302 = vld [vmem:[%s1 + $0x868] sm:$0xff]
    %v303 = vld [vmem:[%s1 + $0x870] sm:$0xff]
    %v304 = vld [vmem:[%s1 + $0x878] sm:$0xff]
    %v305 = vld [vmem:[%s1 + $0x880] sm:$0xff]
    %v306 = vld [vmem:[%s1 + $0x888] sm:$0xff]
    %v307 = vld [vmem:[%s1 + $0x890] sm:$0xff]
    %v308 = vld [vmem:[%s1 + $0x898] sm:$0xff]
    %v309 = vld [vmem:[%s1 + $0x8a0] sm:$0xff]
    %v310 = vld [vmem:[%s1 + $0x8a8] sm:$0xff]
    %v311 = vld [vmem:[%s1 + $0x8b0] sm:$0xff]
    %v312 = vld [vmem:[%s1 + $0x8b8] sm:$0xff]
    %v313 = vld [vmem:[%s1 + $0x8c0] sm:$0xff]
    %v314 = vld [vmem:[%s1 + $0x8c8] sm:$0xff]
    %v315 = vld [vmem:[%s1 + $0x8d0] sm:$0xff]
    %v316 = vld [vmem:[%s1 + $0x8d8] sm:$0xff]
    %v317 = vld [vmem:[%s1 + $0x8e0] sm:$0xff]
    %v318 = vld [vmem:[%s1 + $0x8e8] sm:$0xff]
    %v319 = vld [vmem:[%s1 + $0x8f0] sm:$0xff]
    %v320 = vld [vmem:[%s1 + $0x8f8] sm:$0xff]
    %v321 = vld [vmem:[%s1 + $0x900] sm:$0xff]
    %v322 = vld [vmem:[%s1 + $0x908] sm:$0xff]
    %v323 = vld [vmem:[%s1 + $0x910] sm:$0xff]
    %v324 = vld [vmem:[%s1 + $0x918] sm:$0xff]
    %v325 = vld [vmem:[%s1 + $0x920] sm:$0xff]
    %v326 = vld [vmem:[%s1 + $0x928] sm:$0xff]
    %v327 = vld [vmem:[%s1 + $0x930] sm:$0xff]
    %v328 = vld [vmem:[%s1 + $0x938] sm:$0xff]
    %v329 = vld [vmem:[%s1 + $0x940] sm:$0xff]
    %v330 = vld [vmem:[%s1 + $0x948] sm:$0xff]
    %v331 = vld [vmem:[%s1 + $0x950] sm:$0xff]
    %v332 = vld [vmem:[%s1 + $0x958] sm:$0xff]
    %v333 = vld [vmem:[%s1 + $0x960] sm:$0xff]
    %v334 = vld [vmem:[%s1 + $0x968] sm:$0xff]
    %v335 = vld [vmem:[%s1 + $0x970] sm:$0xff]
    %v336 = vld [vmem:[%s1 + $0x978] sm:$0xff]
    %v337 = vld [vmem:[%s1 + $0x980] sm:$0xff]
    %v338 = vld [vmem:[%s1 + $0x988] sm:$0xff]
    %v339 = vld [vmem:[%s1 + $0x990] sm:$0xff]
    %v340 = vld [vmem:[%s1 + $0x998] sm:$0xff]
    %v341 = vld [vmem:[%s1 + $0x9a0] sm:$0xff]
    %v342 = vld [vmem:[%s1 + $0x9a8] sm:$0xff]
    %v343 = vld [vmem:[%s1 + $0x9b0] sm:$0xff]
    %v344 = vld [vmem:[%s1 + $0x9b8] sm:$0xff]
    %v345 = vld [vmem:[%s1 + $0x9c0] sm:$0xff]
    %v346 = vld [vmem:[%s1 + $0x9c8] sm:$0xff]
    %v347 = vld [vmem:[%s1 + $0x9d0] sm:$0xff]
    %v348 = vld [vmem:[%s1 + $0x9d8] sm:$0xff]
    %v349 = vld [vmem:[%s1 + $0x9e0] sm:$0xff]
    %v350 = vld [vmem:[%s1 + $0x9e8] sm:$0xff]
    %v351 = vld [vmem:[%s1 + $0x9f0] sm:$0xff]
    %v352 = vld [vmem:[%s1 + $0x9f8] sm:$0xff]
    %v353 = vld [vmem:[%s1 + $0xa00] sm:$0xff]
    %v354 = vld [vmem:[%s1 + $0xa08] sm:$0xff]
    %v355 = vld [vmem:[%s1 + $0xa10] sm:$0xff]
    %v356 = vld [vmem:[%s1 + $0xa18] sm:$0xff]
    %v357 = vld [vmem:[%s1 + $0xa20] sm:$0xff]
    %v358 = vld [vmem:[%s1 + $0xa28] sm:$0xff]
    %v359 = vld [vmem:[%s1 + $0xa30] sm:$0xff]
    %v360 = vld [vmem:[%s1 + $0xa38] sm:$0xff]
    %v361 = vld [vmem:[%s1 + $0xa40] sm:$0xff]
    %v362 = vld [vmem:[%s1 + $0xa48] sm:$0xff]
    %v363 = vld [vmem:[%s1 + $0xa50] sm:$0xff]
    %v364 = vld [vmem:[%s1 + $0xa58] sm:$0xff]
    %v365 = vld [vmem:[%s1 + $0xa60] sm:$0xff]
    %v366 = vld [vmem:[%s1 + $0xa68] sm:$0xff]
    %v367 = vld [vmem:[%s1 + $0xa70] sm:$0xff]
    %v368 = vld [vmem:[%s1 + $0xa78] sm:$0xff]
    %v369 = vld [vmem:[%s1 + $0xa80] sm:$0xff]
    %v370 = vld [vmem:[%s1 + $0xa88] sm:$0xff]
    %v371 = vld [vmem:[%s1 + $0xa90] sm:$0xff]
    %v372 = vld [vmem:[%s1 + $0xa98] sm:$0xff]
    %v373 = vld [vmem:[%s1 + $0xaa0] sm:$0xff]
    %v374 = vld [vmem:[%s1 + $0xaa8] sm:$0xff]
    %v375 = vld [vmem:[%s1 + $0xab0] sm:$0xff]
    %v376 = vld [vmem:[%s1 + $0xab8] sm:$0xff]
    %v377 = vld [vmem:[%s1 + $0xac0] sm:$0xff]
    %v378 = vld [vmem:[%s1 + $0xac8] sm:$0xff]
    %v379 = vld [vmem:[%s1 + $0xad0] sm:$0xff]
    %v380 = vld [vmem:[%s1 + $0xad8] sm:$0xff]
    %v381 = vld [vmem:[%s1 + $0xae0] sm:$0xff]
    %v382 = vld [vmem:[%s1 + $0xae8] sm:$0xff]
    %v383 = vld [vmem:[%s1 + $0xaf0] sm:$0xff]
    %v384 = vld [vmem:[%s1 + $0xaf8] sm:$0xff]
    %v385 = vld [vmem:[%s1 + $0xb00] sm:$0xff]
    %v386 = vld [vmem:[%s1 + $0xb08] sm:$0xff]
    %v387 = vld [vmem:[%s1 + $0xb10] sm:$0xff]
    %v388 = vld [vmem:[%s1 + $0xb18] sm:$0xff]
    %v389 = vld [vmem:[%s1 + $0xb20] sm:$0xff]
    %v390 = vld [vmem:[%s1 + $0xb28] sm:$0xff]
    %v391 = vld [vmem:[%s1 + $0xb30] sm:$0xff]
    %v392 = vld [vmem:[%s1 + $0xb38] sm:$0xff]
    %v393 = vld [vmem:[%s1 + $0xb40] sm:$0xff]
    %v394 = vld [vmem:[%s1 + $0xb48] sm:$0xff]
    %v395 = vld [vmem:[%s1 + $0xb50] sm:$0xff]
    %v396 = vld [vmem:[%s1 + $0xb58] sm:$0xff]
    %v397 = vld [vmem:[%s1 + $0xb60] sm:$0xff]
    %v398 = vld [vmem:[%s1 + $0xb68] sm:$0xff]
    %v399 = vld [vmem:[%s1 + $0xb70] sm:$0xff]
    %v400 = vld [vmem:[%s1 + $0xb78] sm:$0xff]
    %v401 = vld [vmem:[%s1 + $0xb80] sm:$0xff]
    %v402 = vld [vmem:[%s1 + $0xb88] sm:$0xff]
    %v403 = vld [vmem:[%s1 + $0xb90] sm:$0xff]
    %v404 = vld [vmem:[%s1 + $0xb98] sm:$0xff]
    %v405 = vld [vmem:[%s1 + $0xba0] sm:$0xff]
    %v406 = vld [vmem:[%s1 + $0xba8] sm:$0xff]
    %v407 = vld [vmem:[%s1 + $0xbb0] sm:$0xff]
    %v408 = vld [vmem:[%s1 + $0xbb8] sm:$0xff]
    %v409 = vld [vmem:[%s1 + $0xbc0] sm:$0xff]
    %v410 = vld [vmem:[%s1 + $0xbc8] sm:$0xff]
    %v411 = vld [vmem:[%s1 + $0xbd0] sm:$0xff]
    %v412 = vld [vmem:[%s1 + $0xbd8] sm:$0xff]
    %v413 = vld [vmem:[%s1 + $0xbe0] sm:$0xff]
    %v414 = vld [vmem:[%s1 + $0xbe8] sm:$0xff]
    %v415 = vld [vmem:[%s1 + $0xbf0] sm:$0xff]
    %v416 = vld [vmem:[%s1 + $0xbf8] sm:$0xff]
    %v417 = vld [vmem:[%s1 + $0xc00] sm:$0xff]
    %v418 = vld [vmem:[%s1 + $0xc08] sm:$0xff]
    %v419 = vld [vmem:[%s1 + $0xc10] sm:$0xff]
    %v420 = vld [vmem:[%s1 + $0xc18] sm:$0xff]
    %v421 = vld [vmem:[%s1 + $0xc20] sm:$0xff]
    %v422 = vld [vmem:[%s1 + $0xc28] sm:$0xff]
    %v423 = vld [vmem:[%s1 + $0xc30] sm:$0xff]
    %v424 = vld [vmem:[%s1 + $0xc38] sm:$0xff]
    %v425 = vld [vmem:[%s1 + $0xc40] sm:$0xff]
    %v426 = vld [vmem:[%s1 + $0xc48] sm:$0xff]
    %v427 = vld [vmem:[%s1 + $0xc50] sm:$0xff]
    %v428 = vld [vmem:[%s1 + $0xc58] sm:$0xff]
    %v429 = vld [vmem:[%s1 + $0xc60] sm:$0xff]
    %v430 = vld [vmem:[%s1 + $0xc68] sm:$0xff]
    %v431 = vld [vmem:[%s1 + $0xc70] sm:$0xff]
    %v432 = vld [vmem:[%s1 + $0xc78] sm:$0xff]
    %v433 = vld [vmem:[%s1 + $0xc80] sm:$0xff]
    %v434 = vld [vmem:[%s1 + $0xc88] sm:$0xff]
    %v435 = vld [vmem:[%s1 + $0xc90] sm:$0xff]
    %v436 = vld [vmem:[%s1 + $0xc98] sm:$0xff]
    %v437 = vld [vmem:[%s1 + $0xca0] sm:$0xff]
    %v438 = vld [vmem:[%s1 + $0xca8] sm:$0xff]
    %v439 = vld [vmem:[%s1 + $0xcb0] sm:$0xff]
    %v440 = vld [vmem:[%s1 + $0xcb8] sm:$0xff]
    %v441 = vld [vmem:[%s1 + $0xcc0] sm:$0xff]
    %v442 = vld [vmem:[%s1 + $0xcc8] sm:$0xff]
    %v443 = vld [vmem:[%s1 + $0xcd0] sm:$0xff]
    %v444 = vld [vmem:[%s1 + $0xcd8] sm:$0xff]
    %v445 = vld [vmem:[%s1 + $0xce0] sm:$0xff]
    %v446 = vld [vmem:[%s1 + $0xce8] sm:$0xff]
    %v447 = vld [vmem:[%s1 + $0xcf0] sm:$0xff]
    %v448 = vld [vmem:[%s1 + $0xcf8] sm:$0xff]
    %v449 = vld [vmem:[%s1 + $0xd00] sm:$0xff]
    %v450 = vld [vmem:[%s1 + $0xd08] sm:$0xff]
    %v451 = vld [vmem:[%s1 + $0xd10] sm:$0xff]
    %v452 = vld [vmem:[%s1 + $0xd18] sm:$0xff]
    %v453 = vld [vmem:[%s1 + $0xd20] sm:$0xff]
    %v454 = vld [vmem:[%s1 + $0xd28] sm:$0xff]
    %v455 = vld [vmem:[%s1 + $0xd30] sm:$0xff]
    %v456 = vld [vmem:[%s1 + $0xd38] sm:$0xff]
    %v457 = vld [vmem:[%s1 + $0xd40] sm:$0xff]
    %v458 = vld [vmem:[%s1 + $0xd48] sm:$0xff]
    %v459 = vld [vmem:[%s1 + $0xd50] sm:$0xff]
    %v460 = vld [vmem:[%s1 + $0xd58] sm:$0xff]
    %v461 = vld [vmem:[%s1 + $0xd60] sm:$0xff]
    %v462 = vld [vmem:[%s1 + $0xd68] sm:$0xff]
    %v463 = vld [vmem:[%s1 + $0xd70] sm:$0xff]
    %v464 = vld [vmem:[%s1 + $0xd78] sm:$0xff]
    %v465 = vld [vmem:[%s1 + $0xd80] sm:$0xff]
    %v466 = vld [vmem:[%s1 + $0xd88] sm:$0xff]
    %v467 = vld [vmem:[%s1 + $0xd90] sm:$0xff]
    %v468 = vld [vmem:[%s1 + $0xd98] sm:$0xff]
    %v469 = vld [vmem:[%s1 + $0xda0] sm:$0xff]
    %v470 = vld [vmem:[%s1 + $0xda8] sm:$0xff]
    %v471 = vld [vmem:[%s1 + $0xdb0] sm:$0xff]
    %v472 = vld [vmem:[%s1 + $0xdb8] sm:$0xff]
    %v473 = vld [vmem:[%s1 + $0xdc0] sm:$0xff]
    %v474 = vld [vmem:[%s1 + $0xdc8] sm:$0xff]
    %v475 = vld [vmem:[%s1 + $0xdd0] sm:$0xff]
    %v476 = vld [vmem:[%s1 + $0xdd8] sm:$0xff]
    %v477 = vld [vmem:[%s1 + $0xde0] sm:$0xff]
    %v478 = vld [vmem:[%s1 + $0xde8] sm:$0xff]
    %v479 = vld [vmem:[%s1 + $0xdf0] sm:$0xff]
    %v480 = vld [vmem:[%s1 + $0xdf8] sm:$0xff]
    %v481 = vld [vmem:[%s1 + $0xe00] sm:$0xff]
    %v482 = vld [vmem:[%s1 + $0xe08] sm:$0xff]
    %v483 = vld [vmem:[%s1 + $0xe10] sm:$0xff]
    %v484 = vld [vmem:[%s1 + $0xe18] sm:$0xff]
    %v485 = vld [vmem:[%s1 + $0xe20] sm:$0xff]
    %v486 = vld [vmem:[%s1 + $0xe28] sm:$0xff]
    %v487 = vld [vmem:[%s1 + $0xe30] sm:$0xff]
    %v488 = vld [vmem:[%s1 + $0xe38] sm:$0xff]
    %v489 = vld [vmem:[%s1 + $0xe40] sm:$0xff]
    %v490 = vld [vmem:[%s1 + $0xe48] sm:$0xff]
    %v491 = vld [vmem:[%s1 + $0xe50] sm:$0xff]
    %v492 = vld [vmem:[%s1 + $0xe58] sm:$0xff]
    %v493 = vld [vmem:[%s1 + $0xe60] sm:$0xff]
    %v494 = vld [vmem:[%s1 + $0xe68] sm:$0xff]
    %v495 = vld [vmem:[%s1 + $0xe70] sm:$0xff]
    %v496 = vld [vmem:[%s1 + $0xe78] sm:$0xff]
    %v497 = vld [vmem:[%s1 + $0xe80] sm:$0xff]
    %v498 = vld [vmem:[%s1 + $0xe88] sm:$0xff]
    %v499 = vld [vmem:[%s1 + $0xe90] sm:$0xff]
    %v500 = vld [vmem:[%s1 + $0xe98] sm:$0xff]
    %v501 = vld [vmem:[%s1 + $0xea0] sm:$0xff]
    %v502 = vld [vmem:[%s1 + $0xea8] sm:$0xff]
    %v503 = vld [vmem:[%s1 + $0xeb0] sm:$0xff]
    %v504 = vld [vmem:[%s1 + $0xeb8] sm:$0xff]
    %v505 = vld [vmem:[%s1 + $0xec0] sm:$0xff]
    %v506 = vld [vmem:[%s1 + $0xec8] sm:$0xff]
    %v507 = vld [vmem:[%s1 + $0xed0] sm:$0xff]
    %v508 = vld [vmem:[%s1 + $0xed8] sm:$0xff]
    %v509 = vld [vmem:[%s1 + $0xee0] sm:$0xff]
    %v510 = vld [vmem:[%s1 + $0xee8] sm:$0xff]
    %v511 = vld [vmem:[%s1 + $0xef0] sm:$0xff]
    %v512 = vld [vmem:[%s1 + $0xef8] sm:$0xff]
    %v513 = vld [vmem:[%s1 + $0xf00] sm:$0xff]
    %v514 = vld [vmem:[%s1 + $0xf08] sm:$0xff]
    %v515 = vld [vmem:[%s1 + $0xf10] sm:$0xff]
    %v516 = vld [vmem:[%s1 + $0xf18] sm:$0xff]
    %v517 = vld [vmem:[%s1 + $0xf20] sm:$0xff]
    %v518 = vld [vmem:[%s1 + $0xf28] sm:$0xff]
    %v519 = vld [vmem:[%s1 + $0xf30] sm:$0xff]
    %v520 = vld [vmem:[%s1 + $0xf38] sm:$0xff]
    %v521 = vld [vmem:[%s1 + $0xf40] sm:$0xff]
    %v522 = vld [vmem:[%s1 + $0xf48] sm:$0xff]
    %v523 = vld [vmem:[%s1 + $0xf50] sm:$0xff]
    %v524 = vld [vmem:[%s1 + $0xf58] sm:$0xff]
    %v525 = vld [vmem:[%s1 + $0xf60] sm:$0xff]
    %v526 = vld [vmem:[%s1 + $0xf68] sm:$0xff]
    %v527 = vld [vmem:[%s1 + $0xf70] sm:$0xff]
    %v528 = vld [vmem:[%s1 + $0xf78] sm:$0xff]
    %v529 = vld [vmem:[%s1 + $0xf80] sm:$0xff]
    %v530 = vld [vmem:[%s1 + $0xf88] sm:$0xff]
    %v531 = vld [vmem:[%s1 + $0xf90] sm:$0xff]
    %v532 = vld [vmem:[%s1 + $0xf98] sm:$0xff]
    %v533 = vld [vmem:[%s1 + $0xfa0] sm:$0xff]
    %v534 = vld [vmem:[%s1 + $0xfa8] sm:$0xff]
    %v535 = vld [vmem:[%s1 + $0xfb0] sm:$0xff]
    %v536 = vld [vmem:[%s1 + $0xfb8] sm:$0xff]
    %v537 = vld [vmem:[%s1 + $0xfc0] sm:$0xff]
    %v538 = vld [vmem:[%s1 + $0xfc8] sm:$0xff]
    %v539 = vld [vmem:[%s1 + $0xfd0] sm:$0xff]
    %v540 = vld [vmem:[%s1 + $0xfd8] sm:$0xff]
    %v541 = vld [vmem:[%s1 + $0xfe0] sm:$0xff]
    %v542 = vld [vmem:[%s1 + $0xfe8] sm:$0xff]
    %v543 = vld [vmem:[%s1 + $0xff0] sm:$0xff]
    %v544 = vld [vmem:[%s1 + $0xff8] sm:$0xff]
    %v545 = vld [vmem:[%s1 + $0x1000] sm:$0xff]
    %v546 = vld [vmem:[%s1 + $0x1008] sm:$0xff]
    %v547 = vld [vmem:[%s1 + $0x1010] sm:$0xff]
    %v548 = vld [vmem:[%s1 + $0x1018] sm:$0xff]
    %v549 = vld [vmem:[%s1 + $0x1020] sm:$0xff]
    %v550 = vld [vmem:[%s1 + $0x1028] sm:$0xff]
    %v551 = vld [vmem:[%s1 + $0x1030] sm:$0xff]
    %v552 = vld [vmem:[%s1 + $0x1038] sm:$0xff]
    %v553 = vld [vmem:[%s1 + $0x1040] sm:$0xff]
    %v554 = vld [vmem:[%s1 + $0x1048] sm:$0xff]
    %v555 = vld [vmem:[%s1 + $0x1050] sm:$0xff]
    %v556 = vld [vmem:[%s1 + $0x1058] sm:$0xff]
    %v557 = vld [vmem:[%s1 + $0x1060] sm:$0xff]
    %v558 = vld [vmem:[%s1 + $0x1068] sm:$0xff]
    %v559 = vld [vmem:[%s1 + $0x1070] sm:$0xff]
    %v560 = vld [vmem:[%s1 + $0x1078] sm:$0xff]
    %v561 = vld [vmem:[%s1 + $0x1080] sm:$0xff]
    %v562 = vld [vmem:[%s1 + $0x1088] sm:$0xff]
    %v563 = vld [vmem:[%s1 + $0x1090] sm:$0xff]
    %v564 = vld [vmem:[%s1 + $0x1098] sm:$0xff]
    %v565 = vld [vmem:[%s1 + $0x10a0] sm:$0xff]
    %v566 = vld [vmem:[%s1 + $0x10a8] sm:$0xff]
    %v567 = vld [vmem:[%s1 + $0x10b0] sm:$0xff]
    %v568 = vld [vmem:[%s1 + $0x10b8] sm:$0xff]
    %v569 = vld [vmem:[%s1 + $0x10c0] sm:$0xff]
    %v570 = vld [vmem:[%s1 + $0x10c8] sm:$0xff]
    %v571 = vld [vmem:[%s1 + $0x10d0] sm:$0xff]
    %v572 = vld [vmem:[%s1 + $0x10d8] sm:$0xff]
    %v573 = vld [vmem:[%s1 + $0x10e0] sm:$0xff]
    %v574 = vld [vmem:[%s1 + $0x10e8] sm:$0xff]
    %v575 = vld [vmem:[%s1 + $0x10f0] sm:$0xff]
    %v576 = vld [vmem:[%s1 + $0x10f8] sm:$0xff]
    %v577 = vld [vmem:[%s1 + $0x1100] sm:$0xff]
    %v578 = vld [vmem:[%s1 + $0x1108] sm:$0xff]
    %v579 = vld [vmem:[%s1 + $0x1110] sm:$0xff]
    %v580 = vld [vmem:[%s1 + $0x1118] sm:$0xff]
    %v581 = vld [vmem:[%s1 + $0x1120] sm:$0xff]
    %v582 = vld [vmem:[%s1 + $0x1128] sm:$0xff]
    %v583 = vld [vmem:[%s1 + $0x1130] sm:$0xff]
    %v584 = vld [vmem:[%s1 + $0x1138] sm:$0xff]
    %v585 = vld [vmem:[%s1 + $0x1140] sm:$0xff]
    %v586 = vld [vmem:[%s1 + $0x1148] sm:$0xff]
    %v587 = vld [vmem:[%s1 + $0x1150] sm:$0xff]
    %v588 = vld [vmem:[%s1 + $0x1158] sm:$0xff]
    %v589 = vld [vmem:[%s1 + $0x1160] sm:$0xff]
    %v590 = vld [vmem:[%s1 + $0x1168] sm:$0xff]
    %v591 = vld [vmem:[%s1 + $0x1170] sm:$0xff]
    %v592 = vld [vmem:[%s1 + $0x1178] sm:$0xff]
    %v593 = vld [vmem:[%s1 + $0x1180] sm:$0xff]
    %v594 = vld [vmem:[%s1 + $0x1188] sm:$0xff]
    %v595 = vld [vmem:[%s1 + $0x1190] sm:$0xff]
    %v596 = vld [vmem:[%s1 + $0x1198] sm:$0xff]
    %v597 = vld [vmem:[%s1 + $0x11a0] sm:$0xff]
    %v598 = vld [vmem:[%s1 + $0x11a8] sm:$0xff]
    %v599 = vld [vmem:[%s1 + $0x11b0] sm:$0xff]
    %v600 = vld [vmem:[%s1 + $0x11b8] sm:$0xff]
    %v601 = vld [vmem:[%s1 + $0x11c0] sm:$0xff]
    %v602 = vld [vmem:[%s1 + $0x11c8] sm:$0xff]
    %v603 = vld [vmem:[%s1 + $0x11d0] sm:$0xff]
    %v604 = vld [vmem:[%s1 + $0x11d8] sm:$0xff]
    %v605 = vld [vmem:[%s1 + $0x11e0] sm:$0xff]
    %v606 = vld [vmem:[%s1 + $0x11e8] sm:$0xff]
    %v607 = vld [vmem:[%s1 + $0x11f0] sm:$0xff]
    %v608 = vld [vmem:[%s1 + $0x11f8] sm:$0xff]
    %v609 = vld [vmem:[%s1 + $0x1200] sm:$0xff]
    %v610 = vld [vmem:[%s1 + $0x1208] sm:$0xff]
    %v611 = vld [vmem:[%s1 + $0x1210] sm:$0xff]
    %v612 = vld [vmem:[%s1 + $0x1218] sm:$0xff]
    %v613 = vld [vmem:[%s1 + $0x1220] sm:$0xff]
    %v614 = vld [vmem:[%s1 + $0x1228] sm:$0xff]
    %v615 = vld [vmem:[%s1 + $0x1230] sm:$0xff]
    %v616 = vld [vmem:[%s1 + $0x1238] sm:$0xff]
    %v617 = vld [vmem:[%s1 + $0x1240] sm:$0xff]
    %v618 = vld [vmem:[%s1 + $0x1248] sm:$0xff]
    %v619 = vld [vmem:[%s1 + $0x1250] sm:$0xff]
    %v620 = vld [vmem:[%s1 + $0x1258] sm:$0xff]
    %v621 = vld [vmem:[%s1 + $0x1260] sm:$0xff]
    %v622 = vld [vmem:[%s1 + $0x1268] sm:$0xff]
    %v623 = vld [vmem:[%s1 + $0x1270] sm:$0xff]
    %v624 = vld [vmem:[%s1 + $0x1278] sm:$0xff]
    %v625 = vld [vmem:[%s1 + $0x1280] sm:$0xff]
    %v626 = vld [vmem:[%s1 + $0x1288] sm:$0xff]
    %v627 = vld [vmem:[%s1 + $0x1290] sm:$0xff]
    %v628 = vld [vmem:[%s1 + $0x1298] sm:$0xff]
    %v629 = vld [vmem:[%s1 + $0x12a0] sm:$0xff]
    %v630 = vld [vmem:[%s1 + $0x12a8] sm:$0xff]
    %v631 = vld [vmem:[%s1 + $0x12b0] sm:$0xff]
    %v632 = vld [vmem:[%s1 + $0x12b8] sm:$0xff]
    %v633 = vld [vmem:[%s1 + $0x12c0] sm:$0xff]
    %v634 = vld [vmem:[%s1 + $0x12c8] sm:$0xff]
    %v635 = vld [vmem:[%s1 + $0x12d0] sm:$0xff]
    %v636 = vld [vmem:[%s1 + $0x12d8] sm:$0xff]
    %v637 = vld [vmem:[%s1 + $0x12e0] sm:$0xff]
    %v638 = vld [vmem:[%s1 + $0x12e8] sm:$0xff]
    %v639 = vld [vmem:[%s1 + $0x12f0] sm:$0xff]
    %v640 = vld [vmem:[%s1 + $0x12f8] sm:$0xff]
    %v641 = vld [vmem:[%s1 + $0x1300] sm:$0xff]
    %v642 = vld [vmem:[%s1 + $0x1308] sm:$0xff]
    %v643 = vld [vmem:[%s1 + $0x1310] sm:$0xff]
    %v644 = vld [vmem:[%s1 + $0x1318] sm:$0xff]
    %v645 = vld [vmem:[%s1 + $0x1320] sm:$0xff]
    %v646 = vld [vmem:[%s1 + $0x1328] sm:$0xff]
    %v647 = vld [vmem:[%s1 + $0x1330] sm:$0xff]
    %v648 = vld [vmem:[%s1 + $0x1338] sm:$0xff]
    %v649 = vld [vmem:[%s1 + $0x1340] sm:$0xff]
    %v650 = vld [vmem:[%s1 + $0x1348] sm:$0xff]
    %v651 = vld [vmem:[%s1 + $0x1350] sm:$0xff]
    %v652 = vld [vmem:[%s1 + $0x1358] sm:$0xff]
    %v653 = vld [vmem:[%s1 + $0x1360] sm:$0xff]
    %v654 = vld [vmem:[%s1 + $0x1368] sm:$0xff]
    %v655 = vld [vmem:[%s1 + $0x1370] sm:$0xff]
    %v656 = vld [vmem:[%s1 + $0x1378] sm:$0xff]
    %v657 = vld [vmem:[%s1 + $0x1380] sm:$0xff]
    %v658 = vld [vmem:[%s1 + $0x1388] sm:$0xff]
    %v659 = vld [vmem:[%s1 + $0x1390] sm:$0xff]
    %v660 = vld [vmem:[%s1 + $0x1398] sm:$0xff]
    %v661 = vld [vmem:[%s1 + $0x13a0] sm:$0xff]
    %v662 = vld [vmem:[%s1 + $0x13a8] sm:$0xff]
    %v663 = vld [vmem:[%s1 + $0x13b0] sm:$0xff]
    %v664 = vld [vmem:[%s1 + $0x13b8] sm:$0xff]
    %v665 = vld [vmem:[%s1 + $0x13c0] sm:$0xff]
    %v666 = vld [vmem:[%s1 + $0x13c8] sm:$0xff]
    %v667 = vld [vmem:[%s1 + $0x13d0] sm:$0xff]
    %v668 = vld [vmem:[%s1 + $0x13d8] sm:$0xff]
    %v669 = vld [vmem:[%s1 + $0x13e0] sm:$0xff]
    %v670 = vld [vmem:[%s1 + $0x13e8] sm:$0xff]
    %v671 = vld [vmem:[%s1 + $0x13f0] sm:$0xff]
    %v672 = vld [vmem:[%s1 + $0x13f8] sm:$0xff]
    %v673 = vld [vmem:[%s1 + $0x1400] sm:$0xff]
    %v674 = vld [vmem:[%s1 + $0x1408] sm:$0xff]
    %v675 = vld [vmem:[%s1 + $0x1410] sm:$0xff]
    %v676 = vld [vmem:[%s1 + $0x1418] sm:$0xff]
    %v677 = vld [vmem:[%s1 + $0x1420] sm:$0xff]
    %v678 = vld [vmem:[%s1 + $0x1428] sm:$0xff]
    %v679 = vld [vmem:[%s1 + $0x1430] sm:$0xff]
    %v680 = vld [vmem:[%s1 + $0x1438] sm:$0xff]
    %v681 = vld [vmem:[%s1 + $0x1440] sm:$0xff]
    %v682 = vld [vmem:[%s1 + $0x1448] sm:$0xff]
    %v683 = vld [vmem:[%s1 + $0x1450] sm:$0xff]
    %v684 = vld [vmem:[%s1 + $0x1458] sm:$0xff]
    %v685 = vld [vmem:[%s1 + $0x1460] sm:$0xff]
    %v686 = vld [vmem:[%s1 + $0x1468] sm:$0xff]
    %v687 = vld [vmem:[%s1 + $0x1470] sm:$0xff]
    %v688 = vld [vmem:[%s1 + $0x1478] sm:$0xff]
    %v689 = vld [vmem:[%s1 + $0x1480] sm:$0xff]
    %v690 = vld [vmem:[%s1 + $0x1488] sm:$0xff]
    %v691 = vld [vmem:[%s1 + $0x1490] sm:$0xff]
    %v692 = vld [vmem:[%s1 + $0x1498] sm:$0xff]
    %v693 = vld [vmem:[%s1 + $0x14a0] sm:$0xff]
    %v694 = vld [vmem:[%s1 + $0x14a8] sm:$0xff]
    %v695 = vld [vmem:[%s1 + $0x14b0] sm:$0xff]
    %v696 = vld [vmem:[%s1 + $0x14b8] sm:$0xff]
    %v697 = vld [vmem:[%s1 + $0x14c0] sm:$0xff]
    %v698 = vld [vmem:[%s1 + $0x14c8] sm:$0xff]
    %v699 = vld [vmem:[%s1 + $0x14d0] sm:$0xff]
    %v700 = vld [vmem:[%s1 + $0x14d8] sm:$0xff]
    %v701 = vld [vmem:[%s1 + $0x14e0] sm:$0xff]
    %v702 = vld [vmem:[%s1 + $0x14e8] sm:$0xff]
    %v703 = vld [vmem:[%s1 + $0x14f0] sm:$0xff]
    %v704 = vld [vmem:[%s1 + $0x14f8] sm:$0xff]
    %v705 = vld [vmem:[%s1 + $0x1500] sm:$0xff]
    %v706 = vld [vmem:[%s1 + $0x1508] sm:$0xff]
    %v707 = vld [vmem:[%s1 + $0x1510] sm:$0xff]
    %v708 = vld [vmem:[%s1 + $0x1518] sm:$0xff]
    %v709 = vld [vmem:[%s2] sm:$0x3]
    %v711 = vlaneseq
    %v712 = vshrl.u32 %v711, 7
    %v713 = vsub.s32 0, %v712
    %v714 = vrot.slane %v709, %v713
    %v715 = vlaneseq
    %v716 = vshrl.u32 %v715, 7
    %v717 = vsub.s32 1, %v716
    %v718 = vrot.slane %v709, %v717
    %v727 = vcombine.high %v27, %v27
    %v729 = vunpack.c.l.s4 1983009808
    %v730 = vunpack.c.0.s8 %v729
    %v731 = vlaneseq
    %v732 = vshrl.u32 %v731, 7
    %v733 = vsub.s32 %v730, %v732
    %v734 = vrot.slane %v27, %v733
    %v736 = vunpack.c.l.s4 1983009808
    %v737 = vunpack.c.0.s8 %v736
    %v738 = vlaneseq
    %v739 = vshrl.u32 %v738, 7
    %v740 = vsub.s32 %v737, %v739
    %v741 = vrot.slane %v727, %v740
    %v742 = vcombine.high %v734, %v734
    %v743 = vcombine.high %v741, %v741
    %v744 = vcombine.high %v28, %v28
    %v746 = vunpack.c.l.s4 1983009808
    %v747 = vunpack.c.0.s8 %v746
    %v748 = vlaneseq
    %v749 = vshrl.u32 %v748, 7
    %v750 = vsub.s32 %v747, %v749
    %v751 = vrot.slane %v28, %v750
    %v753 = vunpack.c.l.s4 1983009808
    %v754 = vunpack.c.0.s8 %v753
    %v755 = vlaneseq
    %v756 = vshrl.u32 %v755, 7
    %v757 = vsub.s32 %v754, %v756
    %v758 = vrot.slane %v744, %v757
    %v759 = vcombine.high %v751, %v751
    %v760 = vcombine.high %v758, %v758
    %v761 = vcombine.high %v29, %v29
    %v763 = vunpack.c.l.s4 1983009808
    %v764 = vunpack.c.0.s8 %v763
    %v765 = vlaneseq
    %v766 = vshrl.u32 %v765, 7
    %v767 = vsub.s32 %v764, %v766
    %v768 = vrot.slane %v29, %v767
    %v770 = vunpack.c.l.s4 1983009808
    %v771 = vunpack.c.0.s8 %v770
    %v772 = vlaneseq
    %v773 = vshrl.u32 %v772, 7
    %v774 = vsub.s32 %v771, %v773
    %v775 = vrot.slane %v761, %v774
    %v776 = vcombine.high %v768, %v768
    %v777 = vcombine.high %v775, %v775
    %v778 = vcombine.high %v30, %v30
    %v780 = vunpack.c.l.s4 1983009808
    %v781 = vunpack.c.0.s8 %v780
    %v782 = vlaneseq
    %v783 = vshrl.u32 %v782, 7
    %v784 = vsub.s32 %v781, %v783
    %v785 = vrot.slane %v30, %v784
    %v787 = vunpack.c.l.s4 1983009808
    %v788 = vunpack.c.0.s8 %v787
    %v789 = vlaneseq
    %v790 = vshrl.u32 %v789, 7
    %v791 = vsub.s32 %v788, %v790
    %v792 = vrot.slane %v778, %v791
    %v793 = vcombine.high %v785, %v785
    %v794 = vcombine.high %v792, %v792
    %v795 = vcombine.high %v31, %v31
    %v797 = vunpack.c.l.s4 1983009808
    %v798 = vunpack.c.0.s8 %v797
    %v799 = vlaneseq
    %v800 = vshrl.u32 %v799, 7
    %v801 = vsub.s32 %v798, %v800
    %v802 = vrot.slane %v31, %v801
    %v804 = vunpack.c.l.s4 1983009808
    %v805 = vunpack.c.0.s8 %v804
    %v806 = vlaneseq
    %v807 = vshrl.u32 %v806, 7
    %v808 = vsub.s32 %v805, %v807
    %v809 = vrot.slane %v795, %v808
    %v810 = vcombine.high %v802, %v802
    %v811 = vcombine.high %v809, %v809
    %v813 = vunpack.c.l.s4 1983009808
    %v814 = vunpack.c.0.s8 %v813
    %v815 = vlaneseq
    %v816 = vshrl.u32 %v815, 7
    %v817 = vsub.s32 %v814, %v816
    %v818 = vrot.slane %v32, %v817
    %v819 = vcombine.high %v818, %v818
    %vm841 = vcmask 130048
    %v842 = vsel %vm841, %v819, 0
    %844 = vmatprep.subr.mxu0 %v34
    %845 = vmatpush1.msra.mxu0 %v33
    %846 = vmatprep.subr.mxu0 %v36
    %847 = vmatpush1.msra.mxu0 %v35
    %848 = vmatprep.subr.mxu0 %v38
    %849 = vmatpush1.msra.mxu0 %v37
    %850 = vmatprep.subr.mxu0 %v40
    %851 = vmatpush1.msra.mxu0 %v39
    %852 = vmatprep.subr.mxu0 %v42
    %853 = vmatpush1.msra.mxu0 %v41
    %854 = vmatprep.subr.mxu0 %v44
    %855 = vmatpush1.msra.mxu0 %v43
    %856 = vmatprep.subr.mxu0 %v46
    %857 = vmatpush1.msra.mxu0 %v45
    %858 = vmatprep.subr.mxu0 %v48
    %859 = vmatpush1.msra.mxu0 %v47
    %860 = vmatprep.subr.mxu0 %v50
    %861 = vmatpush1.msra.mxu0 %v49
    %862 = vmatprep.subr.mxu0 %v52
    %863 = vmatpush1.msra.mxu0 %v51
    %864 = vmatprep.subr.mxu0 %v54
    %865 = vmatpush1.msra.mxu0 %v53
    %866 = vmatprep.subr.mxu0 %v56
    %867 = vmatpush1.msra.mxu0 %v55
    %868 = vmatprep.subr.mxu0 %v58
    %869 = vmatpush1.msra.mxu0 %v57
    %870 = vmatprep.subr.mxu0 %v60
    %871 = vmatpush1.msra.mxu0 %v59
    %872 = vmatprep.subr.mxu0 %v62
    %873 = vmatpush1.msra.mxu0 %v61
    %874 = vmatprep.subr.mxu0 %v64
    %875 = vmatpush1.msra.mxu0 %v63
    %876 = vmatprep.subr.mxu0 %v66
    %877 = vmatpush1.msra.mxu0 %v65
    %878 = vmatprep.subr.mxu0 %v68
    %879 = vmatpush1.msra.mxu0 %v67
    %880 = vmatprep.subr.mxu0 %v70
    %881 = vmatpush1.msra.mxu0 %v69
    %882 = vmatprep.subr.mxu0 %v72
    %883 = vmatpush1.msra.mxu0 %v71
    %884 = vmatprep.subr.mxu0 %v74
    %885 = vmatpush1.msra.mxu0 %v73
    %886 = vmatprep.subr.mxu0 %v76
    %887 = vmatpush1.msra.mxu0 %v75
    %888 = vmatprep.subr.mxu0 %v78
    %889 = vmatpush1.msra.mxu0 %v77
    %890 = vmatprep.subr.mxu0 %v80
    %891 = vmatpush1.msra.mxu0 %v79
    %892 = vmatprep.subr.mxu0 %v82
    %893 = vmatpush1.msra.mxu0 %v81
    %894 = vmatprep.subr.mxu0 %v84
    %895 = vmatpush1.msra.mxu0 %v83
    %896 = vmatprep.subr.mxu0 %v86
    %897 = vmatpush1.msra.mxu0 %v85
    %898 = vmatprep.subr.mxu0 %v88
    %899 = vmatpush1.msra.mxu0 %v87
    %900 = vmatprep.subr.mxu0 %v90
    %901 = vmatpush1.msra.mxu0 %v89
    %902 = vmatprep.subr.mxu0 %v92
    %903 = vmatpush1.msra.mxu0 %v91
    %904 = vmatprep.subr.mxu0 %v94
    %905 = vmatpush1.msra.mxu0 %v93
    %906 = vmatprep.subr.mxu0 %v96
    %907 = vmatpush1.msra.mxu0 %v95
    %908 = vmatprep.mubr.f32.mxu0 %v742
    %909 = vmatmul.mubr.f32.gmra.mrb[0].mxu0 %v734
    %v910 = vpop.f32.mrb[0].mxu0
    %v911 = vadd.f32 %v714, %v910
    %v912 = vpop.f32.mrb[0].mxu0
    %v913 = vadd.f32 %v718, %v912
    %914 = vdwg.mxu0
    %915 = vmatprep.subr.mxu0 %v98
    %916 = vmatpush1.msra.mxu0 %v97
    %917 = vmatprep.subr.mxu0 %v100
    %918 = vmatpush1.msra.mxu0 %v99
    %919 = vmatprep.subr.mxu0 %v102
    %920 = vmatpush1.msra.mxu0 %v101
    %921 = vmatprep.subr.mxu0 %v104
    %922 = vmatpush1.msra.mxu0 %v103
    %923 = vmatprep.subr.mxu0 %v106
    %924 = vmatpush1.msra.mxu0 %v105
    %925 = vmatprep.subr.mxu0 %v108
    %926 = vmatpush1.msra.mxu0 %v107
    %927 = vmatprep.subr.mxu0 %v110
    %928 = vmatpush1.msra.mxu0 %v109
    %929 = vmatprep.subr.mxu0 %v112
    %930 = vmatpush1.msra.mxu0 %v111
    %931 = vmatprep.subr.mxu0 %v114
    %932 = vmatpush1.msra.mxu0 %v113
    %933 = vmatprep.subr.mxu0 %v116
    %934 = vmatpush1.msra.mxu0 %v115
    %935 = vmatprep.subr.mxu0 %v118
    %936 = vmatpush1.msra.mxu0 %v117
    %937 = vmatprep.subr.mxu0 %v120
    %938 = vmatpush1.msra.mxu0 %v119
    %939 = vmatprep.subr.mxu0 %v122
    %940 = vmatpush1.msra.mxu0 %v121
    %941 = vmatprep.subr.mxu0 %v124
    %942 = vmatpush1.msra.mxu0 %v123
    %943 = vmatprep.subr.mxu0 %v126
    %944 = vmatpush1.msra.mxu0 %v125
    %945 = vmatprep.subr.mxu0 %v128
    %946 = vmatpush1.msra.mxu0 %v127
    %947 = vmatprep.subr.mxu0 %v130
    %948 = vmatpush1.msra.mxu0 %v129
    %949 = vmatprep.subr.mxu0 %v132
    %950 = vmatpush1.msra.mxu0 %v131
    %951 = vmatprep.subr.mxu0 %v134
    %952 = vmatpush1.msra.mxu0 %v133
    %953 = vmatprep.subr.mxu0 %v136
    %954 = vmatpush1.msra.mxu0 %v135
    %955 = vmatprep.subr.mxu0 %v138
    %956 = vmatpush1.msra.mxu0 %v137
    %957 = vmatprep.subr.mxu0 %v140
    %958 = vmatpush1.msra.mxu0 %v139
    %959 = vmatprep.subr.mxu0 %v142
    %960 = vmatpush1.msra.mxu0 %v141
    %961 = vmatprep.subr.mxu0 %v144
    %962 = vmatpush1.msra.mxu0 %v143
    %963 = vmatprep.subr.mxu0 %v146
    %964 = vmatpush1.msra.mxu0 %v145
    %965 = vmatprep.subr.mxu0 %v148
    %966 = vmatpush1.msra.mxu0 %v147
    %967 = vmatprep.subr.mxu0 %v150
    %968 = vmatpush1.msra.mxu0 %v149
    %969 = vmatprep.subr.mxu0 %v152
    %970 = vmatpush1.msra.mxu0 %v151
    %971 = vmatprep.subr.mxu0 %v154
    %972 = vmatpush1.msra.mxu0 %v153
    %973 = vmatprep.subr.mxu0 %v156
    %974 = vmatpush1.msra.mxu0 %v155
    %975 = vmatprep.subr.mxu0 %v158
    %976 = vmatpush1.msra.mxu0 %v157
    %977 = vmatprep.subr.mxu0 %v160
    %978 = vmatpush1.msra.mxu0 %v159
    %979 = vmatprep.mubr.f32.mxu0 %v743
    %980 = vmatmul.mubr.f32.gmra.mrb[0].mxu0 %v741
    %v981 = vpop.f32.mrb[0].mxu0
    %v982 = vadd.f32 %v911, %v981
    %v983 = vpop.f32.mrb[0].mxu0
    %v984 = vadd.f32 %v913, %v983
    %985 = vdwg.mxu0
    %986 = vmatprep.subr.mxu0 %v162
    %987 = vmatpush1.msra.mxu0 %v161
    %988 = vmatprep.subr.mxu0 %v164
    %989 = vmatpush1.msra.mxu0 %v163
    %990 = vmatprep.subr.mxu0 %v166
    %991 = vmatpush1.msra.mxu0 %v165
    %992 = vmatprep.subr.mxu0 %v168
    %993 = vmatpush1.msra.mxu0 %v167
    %994 = vmatprep.subr.mxu0 %v170
    %995 = vmatpush1.msra.mxu0 %v169
    %996 = vmatprep.subr.mxu0 %v172
    %997 = vmatpush1.msra.mxu0 %v171
    %998 = vmatprep.subr.mxu0 %v174
    %999 = vmatpush1.msra.mxu0 %v173
    %1000 = vmatprep.subr.mxu0 %v176
    %1001 = vmatpush1.msra.mxu0 %v175
    %1002 = vmatprep.subr.mxu0 %v178
    %1003 = vmatpush1.msra.mxu0 %v177
    %1004 = vmatprep.subr.mxu0 %v180
    %1005 = vmatpush1.msra.mxu0 %v179
    %1006 = vmatprep.subr.mxu0 %v182
    %1007 = vmatpush1.msra.mxu0 %v181
    %1008 = vmatprep.subr.mxu0 %v184
    %1009 = vmatpush1.msra.mxu0 %v183
    %1010 = vmatprep.subr.mxu0 %v186
    %1011 = vmatpush1.msra.mxu0 %v185
    %1012 = vmatprep.subr.mxu0 %v188
    %1013 = vmatpush1.msra.mxu0 %v187
    %1014 = vmatprep.subr.mxu0 %v190
    %1015 = vmatpush1.msra.mxu0 %v189
    %1016 = vmatprep.subr.mxu0 %v192
    %1017 = vmatpush1.msra.mxu0 %v191
    %1018 = vmatprep.subr.mxu0 %v194
    %1019 = vmatpush1.msra.mxu0 %v193
    %1020 = vmatprep.subr.mxu0 %v196
    %1021 = vmatpush1.msra.mxu0 %v195
    %1022 = vmatprep.subr.mxu0 %v198
    %1023 = vmatpush1.msra.mxu0 %v197
    %1024 = vmatprep.subr.mxu0 %v200
    %1025 = vmatpush1.msra.mxu0 %v199
    %1026 = vmatprep.subr.mxu0 %v202
    %1027 = vmatpush1.msra.mxu0 %v201
    %1028 = vmatprep.subr.mxu0 %v204
    %1029 = vmatpush1.msra.mxu0 %v203
    %1030 = vmatprep.subr.mxu0 %v206
    %1031 = vmatpush1.msra.mxu0 %v205
    %1032 = vmatprep.subr.mxu0 %v208
    %1033 = vmatpush1.msra.mxu0 %v207
    %1034 = vmatprep.subr.mxu0 %v210
    %1035 = vmatpush1.msra.mxu0 %v209
    %1036 = vmatprep.subr.mxu0 %v212
    %1037 = vmatpush1.msra.mxu0 %v211
    %1038 = vmatprep.subr.mxu0 %v214
    %1039 = vmatpush1.msra.mxu0 %v213
    %1040 = vmatprep.subr.mxu0 %v216
    %1041 = vmatpush1.msra.mxu0 %v215
    %1042 = vmatprep.subr.mxu0 %v218
    %1043 = vmatpush1.msra.mxu0 %v217
    %1044 = vmatprep.subr.mxu0 %v220
    %1045 = vmatpush1.msra.mxu0 %v219
    %1046 = vmatprep.subr.mxu0 %v222
    %1047 = vmatpush1.msra.mxu0 %v221
    %1048 = vmatprep.subr.mxu0 %v224
    %1049 = vmatpush1.msra.mxu0 %v223
    %1050 = vmatprep.mubr.f32.mxu0 %v759
    %1051 = vmatmul.mubr.f32.gmra.mrb[0].mxu0 %v751
    %v1052 = vpop.f32.mrb[0].mxu0
    %v1053 = vadd.f32 %v982, %v1052
    %v1054 = vpop.f32.mrb[0].mxu0
    %v1055 = vadd.f32 %v984, %v1054
    %1056 = vdwg.mxu0
    %1057 = vmatprep.subr.mxu0 %v226
    %1058 = vmatpush1.msra.mxu0 %v225
    %1059 = vmatprep.subr.mxu0 %v228
    %1060 = vmatpush1.msra.mxu0 %v227
    %1061 = vmatprep.subr.mxu0 %v230
    %1062 = vmatpush1.msra.mxu0 %v229
    %1063 = vmatprep.subr.mxu0 %v232
    %1064 = vmatpush1.msra.mxu0 %v231
    %1065 = vmatprep.subr.mxu0 %v234
    %1066 = vmatpush1.msra.mxu0 %v233
    %1067 = vmatprep.subr.mxu0 %v236
    %1068 = vmatpush1.msra.mxu0 %v235
    %1069 = vmatprep.subr.mxu0 %v238
    %1070 = vmatpush1.msra.mxu0 %v237
    %1071 = vmatprep.subr.mxu0 %v240
    %1072 = vmatpush1.msra.mxu0 %v239
    %1073 = vmatprep.subr.mxu0 %v242
    %1074 = vmatpush1.msra.mxu0 %v241
    %1075 = vmatprep.subr.mxu0 %v244
    %1076 = vmatpush1.msra.mxu0 %v243
    %1077 = vmatprep.subr.mxu0 %v246
    %1078 = vmatpush1.msra.mxu0 %v245
    %1079 = vmatprep.subr.mxu0 %v248
    %1080 = vmatpush1.msra.mxu0 %v247
    %1081 = vmatprep.subr.mxu0 %v250
    %1082 = vmatpush1.msra.mxu0 %v249
    %1083 = vmatprep.subr.mxu0 %v252
    %1084 = vmatpush1.msra.mxu0 %v251
    %1085 = vmatprep.subr.mxu0 %v254
    %1086 = vmatpush1.msra.mxu0 %v253
    %1087 = vmatprep.subr.mxu0 %v256
    %1088 = vmatpush1.msra.mxu0 %v255
    %1089 = vmatprep.subr.mxu0 %v258
    %1090 = vmatpush1.msra.mxu0 %v257
    %1091 = vmatprep.subr.mxu0 %v260
    %1092 = vmatpush1.msra.mxu0 %v259
    %1093 = vmatprep.subr.mxu0 %v262
    %1094 = vmatpush1.msra.mxu0 %v261
    %1095 = vmatprep.subr.mxu0 %v264
    %1096 = vmatpush1.msra.mxu0 %v263
    %1097 = vmatprep.subr.mxu0 %v266
    %1098 = vmatpush1.msra.mxu0 %v265
    %1099 = vmatprep.subr.mxu0 %v268
    %1100 = vmatpush1.msra.mxu0 %v267
    %1101 = vmatprep.subr.mxu0 %v270
    %1102 = vmatpush1.msra.mxu0 %v269
    %1103 = vmatprep.subr.mxu0 %v272
    %1104 = vmatpush1.msra.mxu0 %v271
    %1105 = vmatprep.subr.mxu0 %v274
    %1106 = vmatpush1.msra.mxu0 %v273
    %1107 = vmatprep.subr.mxu0 %v276
    %1108 = vmatpush1.msra.mxu0 %v275
    %1109 = vmatprep.subr.mxu0 %v278
    %1110 = vmatpush1.msra.mxu0 %v277
    %1111 = vmatprep.subr.mxu0 %v280
    %1112 = vmatpush1.msra.mxu0 %v279
    %1113 = vmatprep.subr.mxu0 %v282
    %1114 = vmatpush1.msra.mxu0 %v281
    %1115 = vmatprep.subr.mxu0 %v284
    %1116 = vmatpush1.msra.mxu0 %v283
    %1117 = vmatprep.subr.mxu0 %v286
    %1118 = vmatpush1.msra.mxu0 %v285
    %1119 = vmatprep.subr.mxu0 %v288
    %1120 = vmatpush1.msra.mxu0 %v287
    %1121 = vmatprep.mubr.f32.mxu0 %v760
    %1122 = vmatmul.mubr.f32.gmra.mrb[0].mxu0 %v758
    %v1123 = vpop.f32.mrb[0].mxu0
    %v1124 = vadd.f32 %v1053, %v1123
    %v1125 = vpop.f32.mrb[0].mxu0
    %v1126 = vadd.f32 %v1055, %v1125
    %1127 = vdwg.mxu0
    %1128 = vmatprep.subr.mxu0 %v290
    %1129 = vmatpush1.msra.mxu0 %v289
    %1130 = vmatprep.subr.mxu0 %v292
    %1131 = vmatpush1.msra.mxu0 %v291
    %1132 = vmatprep.subr.mxu0 %v294
    %1133 = vmatpush1.msra.mxu0 %v293
    %1134 = vmatprep.subr.mxu0 %v296
    %1135 = vmatpush1.msra.mxu0 %v295
    %1136 = vmatprep.subr.mxu0 %v298
    %1137 = vmatpush1.msra.mxu0 %v297
    %1138 = vmatprep.subr.mxu0 %v300
    %1139 = vmatpush1.msra.mxu0 %v299
    %1140 = vmatprep.subr.mxu0 %v302
    %1141 = vmatpush1.msra.mxu0 %v301
    %1142 = vmatprep.subr.mxu0 %v304
    %1143 = vmatpush1.msra.mxu0 %v303
    %1144 = vmatprep.subr.mxu0 %v306
    %1145 = vmatpush1.msra.mxu0 %v305
    %1146 = vmatprep.subr.mxu0 %v308
    %1147 = vmatpush1.msra.mxu0 %v307
    %1148 = vmatprep.subr.mxu0 %v310
    %1149 = vmatpush1.msra.mxu0 %v309
    %1150 = vmatprep.subr.mxu0 %v312
    %1151 = vmatpush1.msra.mxu0 %v311
    %1152 = vmatprep.subr.mxu0 %v314
    %1153 = vmatpush1.msra.mxu0 %v313
    %1154 = vmatprep.subr.mxu0 %v316
    %1155 = vmatpush1.msra.mxu0 %v315
    %1156 = vmatprep.subr.mxu0 %v318
    %1157 = vmatpush1.msra.mxu0 %v317
    %1158 = vmatprep.subr.mxu0 %v320
    %1159 = vmatpush1.msra.mxu0 %v319
    %1160 = vmatprep.subr.mxu0 %v322
    %1161 = vmatpush1.msra.mxu0 %v321
    %1162 = vmatprep.subr.mxu0 %v324
    %1163 = vmatpush1.msra.mxu0 %v323
    %1164 = vmatprep.subr.mxu0 %v326
    %1165 = vmatpush1.msra.mxu0 %v325
    %1166 = vmatprep.subr.mxu0 %v328
    %1167 = vmatpush1.msra.mxu0 %v327
    %1168 = vmatprep.subr.mxu0 %v330
    %1169 = vmatpush1.msra.mxu0 %v329
    %1170 = vmatprep.subr.mxu0 %v332
    %1171 = vmatpush1.msra.mxu0 %v331
    %1172 = vmatprep.subr.mxu0 %v334
    %1173 = vmatpush1.msra.mxu0 %v333
    %1174 = vmatprep.subr.mxu0 %v336
    %1175 = vmatpush1.msra.mxu0 %v335
    %1176 = vmatprep.subr.mxu0 %v338
    %1177 = vmatpush1.msra.mxu0 %v337
    %1178 = vmatprep.subr.mxu0 %v340
    %1179 = vmatpush1.msra.mxu0 %v339
    %1180 = vmatprep.subr.mxu0 %v342
    %1181 = vmatpush1.msra.mxu0 %v341
    %1182 = vmatprep.subr.mxu0 %v344
    %1183 = vmatpush1.msra.mxu0 %v343
    %1184 = vmatprep.subr.mxu0 %v346
    %1185 = vmatpush1.msra.mxu0 %v345
    %1186 = vmatprep.subr.mxu0 %v348
    %1187 = vmatpush1.msra.mxu0 %v347
    %1188 = vmatprep.subr.mxu0 %v350
    %1189 = vmatpush1.msra.mxu0 %v349
    %1190 = vmatprep.subr.mxu0 %v352
    %1191 = vmatpush1.msra.mxu0 %v351
    %1192 = vmatprep.mubr.f32.mxu0 %v776
    %1193 = vmatmul.mubr.f32.gmra.mrb[0].mxu0 %v768
    %v1194 = vpop.f32.mrb[0].mxu0
    %v1195 = vadd.f32 %v1124, %v1194
    %v1196 = vpop.f32.mrb[0].mxu0
    %v1197 = vadd.f32 %v1126, %v1196
    %1198 = vdwg.mxu0
    %1199 = vmatprep.subr.mxu0 %v354
    %1200 = vmatpush1.msra.mxu0 %v353
    %1201 = vmatprep.subr.mxu0 %v356
    %1202 = vmatpush1.msra.mxu0 %v355
    %1203 = vmatprep.subr.mxu0 %v358
    %1204 = vmatpush1.msra.mxu0 %v357
    %1205 = vmatprep.subr.mxu0 %v360
    %1206 = vmatpush1.msra.mxu0 %v359
    %1207 = vmatprep.subr.mxu0 %v362
    %1208 = vmatpush1.msra.mxu0 %v361
    %1209 = vmatprep.subr.mxu0 %v364
    %1210 = vmatpush1.msra.mxu0 %v363
    %1211 = vmatprep.subr.mxu0 %v366
    %1212 = vmatpush1.msra.mxu0 %v365
    %1213 = vmatprep.subr.mxu0 %v368
    %1214 = vmatpush1.msra.mxu0 %v367
    %1215 = vmatprep.subr.mxu0 %v370
    %1216 = vmatpush1.msra.mxu0 %v369
    %1217 = vmatprep.subr.mxu0 %v372
    %1218 = vmatpush1.msra.mxu0 %v371
    %1219 = vmatprep.subr.mxu0 %v374
    %1220 = vmatpush1.msra.mxu0 %v373
    %1221 = vmatprep.subr.mxu0 %v376
    %1222 = vmatpush1.msra.mxu0 %v375
    %1223 = vmatprep.subr.mxu0 %v378
    %1224 = vmatpush1.msra.mxu0 %v377
    %1225 = vmatprep.subr.mxu0 %v380
    %1226 = vmatpush1.msra.mxu0 %v379
    %1227 = vmatprep.subr.mxu0 %v382
    %1228 = vmatpush1.msra.mxu0 %v381
    %1229 = vmatprep.subr.mxu0 %v384
    %1230 = vmatpush1.msra.mxu0 %v383
    %1231 = vmatprep.subr.mxu0 %v386
    %1232 = vmatpush1.msra.mxu0 %v385
    %1233 = vmatprep.subr.mxu0 %v388
    %1234 = vmatpush1.msra.mxu0 %v387
    %1235 = vmatprep.subr.mxu0 %v390
    %1236 = vmatpush1.msra.mxu0 %v389
    %1237 = vmatprep.subr.mxu0 %v392
    %1238 = vmatpush1.msra.mxu0 %v391
    %1239 = vmatprep.subr.mxu0 %v394
    %1240 = vmatpush1.msra.mxu0 %v393
    %1241 = vmatprep.subr.mxu0 %v396
    %1242 = vmatpush1.msra.mxu0 %v395
    %1243 = vmatprep.subr.mxu0 %v398
    %1244 = vmatpush1.msra.mxu0 %v397
    %1245 = vmatprep.subr.mxu0 %v400
    %1246 = vmatpush1.msra.mxu0 %v399
    %1247 = vmatprep.subr.mxu0 %v402
    %1248 = vmatpush1.msra.mxu0 %v401
    %1249 = vmatprep.subr.mxu0 %v404
    %1250 = vmatpush1.msra.mxu0 %v403
    %1251 = vmatprep.subr.mxu0 %v406
    %1252 = vmatpush1.msra.mxu0 %v405
    %1253 = vmatprep.subr.mxu0 %v408
    %1254 = vmatpush1.msra.mxu0 %v407
    %1255 = vmatprep.subr.mxu0 %v410
    %1256 = vmatpush1.msra.mxu0 %v409
    %1257 = vmatprep.subr.mxu0 %v412
    %1258 = vmatpush1.msra.mxu0 %v411
    %1259 = vmatprep.subr.mxu0 %v414
    %1260 = vmatpush1.msra.mxu0 %v413
    %1261 = vmatprep.subr.mxu0 %v416
    %1262 = vmatpush1.msra.mxu0 %v415
    %1263 = vmatprep.mubr.f32.mxu0 %v777
    %1264 = vmatmul.mubr.f32.gmra.mrb[0].mxu0 %v775
    %v1265 = vpop.f32.mrb[0].mxu0
    %v1266 = vadd.f32 %v1195, %v1265
    %v1267 = vpop.f32.mrb[0].mxu0
    %v1268 = vadd.f32 %v1197, %v1267
    %1269 = vdwg.mxu0
    %1270 = vmatprep.subr.mxu0 %v418
    %1271 = vmatpush1.msra.mxu0 %v417
    %1272 = vmatprep.subr.mxu0 %v420
    %1273 = vmatpush1.msra.mxu0 %v419
    %1274 = vmatprep.subr.mxu0 %v422
    %1275 = vmatpush1.msra.mxu0 %v421
    %1276 = vmatprep.subr.mxu0 %v424
    %1277 = vmatpush1.msra.mxu0 %v423
    %1278 = vmatprep.subr.mxu0 %v426
    %1279 = vmatpush1.msra.mxu0 %v425
    %1280 = vmatprep.subr.mxu0 %v428
    %1281 = vmatpush1.msra.mxu0 %v427
    %1282 = vmatprep.subr.mxu0 %v430
    %1283 = vmatpush1.msra.mxu0 %v429
    %1284 = vmatprep.subr.mxu0 %v432
    %1285 = vmatpush1.msra.mxu0 %v431
    %1286 = vmatprep.subr.mxu0 %v434
    %1287 = vmatpush1.msra.mxu0 %v433
    %1288 = vmatprep.subr.mxu0 %v436
    %1289 = vmatpush1.msra.mxu0 %v435
    %1290 = vmatprep.subr.mxu0 %v438
    %1291 = vmatpush1.msra.mxu0 %v437
    %1292 = vmatprep.subr.mxu0 %v440
    %1293 = vmatpush1.msra.mxu0 %v439
    %1294 = vmatprep.subr.mxu0 %v442
    %1295 = vmatpush1.msra.mxu0 %v441
    %1296 = vmatprep.subr.mxu0 %v444
    %1297 = vmatpush1.msra.mxu0 %v443
    %1298 = vmatprep.subr.mxu0 %v446
    %1299 = vmatpush1.msra.mxu0 %v445
    %1300 = vmatprep.subr.mxu0 %v448
    %1301 = vmatpush1.msra.mxu0 %v447
    %1302 = vmatprep.subr.mxu0 %v450
    %1303 = vmatpush1.msra.mxu0 %v449
    %1304 = vmatprep.subr.mxu0 %v452
    %1305 = vmatpush1.msra.mxu0 %v451
    %1306 = vmatprep.subr.mxu0 %v454
    %1307 = vmatpush1.msra.mxu0 %v453
    %1308 = vmatprep.subr.mxu0 %v456
    %1309 = vmatpush1.msra.mxu0 %v455
    %1310 = vmatprep.subr.mxu0 %v458
    %1311 = vmatpush1.msra.mxu0 %v457
    %1312 = vmatprep.subr.mxu0 %v460
    %1313 = vmatpush1.msra.mxu0 %v459
    %1314 = vmatprep.subr.mxu0 %v462
    %1315 = vmatpush1.msra.mxu0 %v461
    %1316 = vmatprep.subr.mxu0 %v464
    %1317 = vmatpush1.msra.mxu0 %v463
    %1318 = vmatprep.subr.mxu0 %v466
    %1319 = vmatpush1.msra.mxu0 %v465
    %1320 = vmatprep.subr.mxu0 %v468
    %1321 = vmatpush1.msra.mxu0 %v467
    %1322 = vmatprep.subr.mxu0 %v470
    %1323 = vmatpush1.msra.mxu0 %v469
    %1324 = vmatprep.subr.mxu0 %v472
    %1325 = vmatpush1.msra.mxu0 %v471
    %1326 = vmatprep.subr.mxu0 %v474
    %1327 = vmatpush1.msra.mxu0 %v473
    %1328 = vmatprep.subr.mxu0 %v476
    %1329 = vmatpush1.msra.mxu0 %v475
    %1330 = vmatprep.subr.mxu0 %v478
    %1331 = vmatpush1.msra.mxu0 %v477
    %1332 = vmatprep.subr.mxu0 %v480
    %1333 = vmatpush1.msra.mxu0 %v479
    %1334 = vmatprep.mubr.f32.mxu0 %v793
    %1335 = vmatmul.mubr.f32.gmra.mrb[0].mxu0 %v785
    %v1336 = vpop.f32.mrb[0].mxu0
    %v1337 = vadd.f32 %v1266, %v1336
    %v1338 = vpop.f32.mrb[0].mxu0
    %v1339 = vadd.f32 %v1268, %v1338
    %1340 = vdwg.mxu0
    %1341 = vmatprep.subr.mxu0 %v482
    %1342 = vmatpush1.msra.mxu0 %v481
    %1343 = vmatprep.subr.mxu0 %v484
    %1344 = vmatpush1.msra.mxu0 %v483
    %1345 = vmatprep.subr.mxu0 %v486
    %1346 = vmatpush1.msra.mxu0 %v485
    %1347 = vmatprep.subr.mxu0 %v488
    %1348 = vmatpush1.msra.mxu0 %v487
    %1349 = vmatprep.subr.mxu0 %v490
    %1350 = vmatpush1.msra.mxu0 %v489
    %1351 = vmatprep.subr.mxu0 %v492
    %1352 = vmatpush1.msra.mxu0 %v491
    %1353 = vmatprep.subr.mxu0 %v494
    %1354 = vmatpush1.msra.mxu0 %v493
    %1355 = vmatprep.subr.mxu0 %v496
    %1356 = vmatpush1.msra.mxu0 %v495
    %1357 = vmatprep.subr.mxu0 %v498
    %1358 = vmatpush1.msra.mxu0 %v497
    %1359 = vmatprep.subr.mxu0 %v500
    %1360 = vmatpush1.msra.mxu0 %v499
    %1361 = vmatprep.subr.mxu0 %v502
    %1362 = vmatpush1.msra.mxu0 %v501
    %1363 = vmatprep.subr.mxu0 %v504
    %1364 = vmatpush1.msra.mxu0 %v503
    %1365 = vmatprep.subr.mxu0 %v506
    %1366 = vmatpush1.msra.mxu0 %v505
    %1367 = vmatprep.subr.mxu0 %v508
    %1368 = vmatpush1.msra.mxu0 %v507
    %1369 = vmatprep.subr.mxu0 %v510
    %1370 = vmatpush1.msra.mxu0 %v509
    %1371 = vmatprep.subr.mxu0 %v512
    %1372 = vmatpush1.msra.mxu0 %v511
    %1373 = vmatprep.subr.mxu0 %v514
    %1374 = vmatpush1.msra.mxu0 %v513
    %1375 = vmatprep.subr.mxu0 %v516
    %1376 = vmatpush1.msra.mxu0 %v515
    %1377 = vmatprep.subr.mxu0 %v518
    %1378 = vmatpush1.msra.mxu0 %v517
    %1379 = vmatprep.subr.mxu0 %v520
    %1380 = vmatpush1.msra.mxu0 %v519
    %1381 = vmatprep.subr.mxu0 %v522
    %1382 = vmatpush1.msra.mxu0 %v521
    %1383 = vmatprep.subr.mxu0 %v524
    %1384 = vmatpush1.msra.mxu0 %v523
    %1385 = vmatprep.subr.mxu0 %v526
    %1386 = vmatpush1.msra.mxu0 %v525
    %1387 = vmatprep.subr.mxu0 %v528
    %1388 = vmatpush1.msra.mxu0 %v527
    %1389 = vmatprep.subr.mxu0 %v530
    %1390 = vmatpush1.msra.mxu0 %v529
    %1391 = vmatprep.subr.mxu0 %v532
    %1392 = vmatpush1.msra.mxu0 %v531
    %1393 = vmatprep.subr.mxu0 %v534
    %1394 = vmatpush1.msra.mxu0 %v533
    %1395 = vmatprep.subr.mxu0 %v536
    %1396 = vmatpush1.msra.mxu0 %v535
    %1397 = vmatprep.subr.mxu0 %v538
    %1398 = vmatpush1.msra.mxu0 %v537
    %1399 = vmatprep.subr.mxu0 %v540
    %1400 = vmatpush1.msra.mxu0 %v539
    %1401 = vmatprep.subr.mxu0 %v542
    %1402 = vmatpush1.msra.mxu0 %v541
    %1403 = vmatprep.subr.mxu0 %v544
    %1404 = vmatpush1.msra.mxu0 %v543
    %1405 = vmatprep.mubr.f32.mxu0 %v794
    %1406 = vmatmul.mubr.f32.gmra.mrb[0].mxu0 %v792
    %v1407 = vpop.f32.mrb[0].mxu0
    %v1408 = vadd.f32 %v1337, %v1407
    %v1409 = vpop.f32.mrb[0].mxu0
    %v1410 = vadd.f32 %v1339, %v1409
    %1411 = vdwg.mxu0
    %1412 = vmatprep.subr.mxu0 %v546
    %1413 = vmatpush1.msra.mxu0 %v545
    %1414 = vmatprep.subr.mxu0 %v548
    %1415 = vmatpush1.msra.mxu0 %v547
    %1416 = vmatprep.subr.mxu0 %v550
    %1417 = vmatpush1.msra.mxu0 %v549
    %1418 = vmatprep.subr.mxu0 %v552
    %1419 = vmatpush1.msra.mxu0 %v551
    %1420 = vmatprep.subr.mxu0 %v554
    %1421 = vmatpush1.msra.mxu0 %v553
    %1422 = vmatprep.subr.mxu0 %v556
    %1423 = vmatpush1.msra.mxu0 %v555
    %1424 = vmatprep.subr.mxu0 %v558
    %1425 = vmatpush1.msra.mxu0 %v557
    %1426 = vmatprep.subr.mxu0 %v560
    %1427 = vmatpush1.msra.mxu0 %v559
    %1428 = vmatprep.subr.mxu0 %v562
    %1429 = vmatpush1.msra.mxu0 %v561
    %1430 = vmatprep.subr.mxu0 %v564
    %1431 = vmatpush1.msra.mxu0 %v563
    %1432 = vmatprep.subr.mxu0 %v566
    %1433 = vmatpush1.msra.mxu0 %v565
    %1434 = vmatprep.subr.mxu0 %v568
    %1435 = vmatpush1.msra.mxu0 %v567
    %1436 = vmatprep.subr.mxu0 %v570
    %1437 = vmatpush1.msra.mxu0 %v569
    %1438 = vmatprep.subr.mxu0 %v572
    %1439 = vmatpush1.msra.mxu0 %v571
    %1440 = vmatprep.subr.mxu0 %v574
    %1441 = vmatpush1.msra.mxu0 %v573
    %1442 = vmatprep.subr.mxu0 %v576
    %1443 = vmatpush1.msra.mxu0 %v575
    %1444 = vmatprep.subr.mxu0 %v578
    %1445 = vmatpush1.msra.mxu0 %v577
    %1446 = vmatprep.subr.mxu0 %v580
    %1447 = vmatpush1.msra.mxu0 %v579
    %1448 = vmatprep.subr.mxu0 %v582
    %1449 = vmatpush1.msra.mxu0 %v581
    %1450 = vmatprep.subr.mxu0 %v584
    %1451 = vmatpush1.msra.mxu0 %v583
    %1452 = vmatprep.subr.mxu0 %v586
    %1453 = vmatpush1.msra.mxu0 %v585
    %1454 = vmatprep.subr.mxu0 %v588
    %1455 = vmatpush1.msra.mxu0 %v587
    %1456 = vmatprep.subr.mxu0 %v590
    %1457 = vmatpush1.msra.mxu0 %v589
    %1458 = vmatprep.subr.mxu0 %v592
    %1459 = vmatpush1.msra.mxu0 %v591
    %1460 = vmatprep.subr.mxu0 %v594
    %1461 = vmatpush1.msra.mxu0 %v593
    %1462 = vmatprep.subr.mxu0 %v596
    %1463 = vmatpush1.msra.mxu0 %v595
    %1464 = vmatprep.subr.mxu0 %v598
    %1465 = vmatpush1.msra.mxu0 %v597
    %1466 = vmatprep.subr.mxu0 %v600
    %1467 = vmatpush1.msra.mxu0 %v599
    %1468 = vmatprep.subr.mxu0 %v602
    %1469 = vmatpush1.msra.mxu0 %v601
    %1470 = vmatprep.subr.mxu0 %v604
    %1471 = vmatpush1.msra.mxu0 %v603
    %1472 = vmatprep.subr.mxu0 %v606
    %1473 = vmatpush1.msra.mxu0 %v605
    %1474 = vmatprep.subr.mxu0 %v608
    %1475 = vmatpush1.msra.mxu0 %v607
    %1476 = vmatprep.mubr.f32.mxu0 %v810
    %1477 = vmatmul.mubr.f32.gmra.mrb[0].mxu0 %v802
    %v1478 = vpop.f32.mrb[0].mxu0
    %v1479 = vadd.f32 %v1408, %v1478
    %v1480 = vpop.f32.mrb[0].mxu0
    %v1481 = vadd.f32 %v1410, %v1480
    %1482 = vdwg.mxu0
    %1483 = vmatprep.subr.mxu0 %v610
    %1484 = vmatpush1.msra.mxu0 %v609
    %1485 = vmatprep.subr.mxu0 %v612
    %1486 = vmatpush1.msra.mxu0 %v611
    %1487 = vmatprep.subr.mxu0 %v614
    %1488 = vmatpush1.msra.mxu0 %v613
    %1489 = vmatprep.subr.mxu0 %v616
    %1490 = vmatpush1.msra.mxu0 %v615
    %1491 = vmatprep.subr.mxu0 %v618
    %1492 = vmatpush1.msra.mxu0 %v617
    %1493 = vmatprep.subr.mxu0 %v620
    %1494 = vmatpush1.msra.mxu0 %v619
    %1495 = vmatprep.subr.mxu0 %v622
    %1496 = vmatpush1.msra.mxu0 %v621
    %1497 = vmatprep.subr.mxu0 %v624
    %1498 = vmatpush1.msra.mxu0 %v623
    %1499 = vmatprep.subr.mxu0 %v626
    %1500 = vmatpush1.msra.mxu0 %v625
    %1501 = vmatprep.subr.mxu0 %v628
    %1502 = vmatpush1.msra.mxu0 %v627
    %1503 = vmatprep.subr.mxu0 %v630
    %1504 = vmatpush1.msra.mxu0 %v629
    %1505 = vmatprep.subr.mxu0 %v632
    %1506 = vmatpush1.msra.mxu0 %v631
    %1507 = vmatprep.subr.mxu0 %v634
    %1508 = vmatpush1.msra.mxu0 %v633
    %1509 = vmatprep.subr.mxu0 %v636
    %1510 = vmatpush1.msra.mxu0 %v635
    %1511 = vmatprep.subr.mxu0 %v638
    %1512 = vmatpush1.msra.mxu0 %v637
    %1513 = vmatprep.subr.mxu0 %v640
    %1514 = vmatpush1.msra.mxu0 %v639
    %1515 = vmatprep.subr.mxu0 %v642
    %1516 = vmatpush1.msra.mxu0 %v641
    %1517 = vmatprep.subr.mxu0 %v644
    %1518 = vmatpush1.msra.mxu0 %v643
    %1519 = vmatprep.subr.mxu0 %v646
    %1520 = vmatpush1.msra.mxu0 %v645
    %1521 = vmatprep.subr.mxu0 %v648
    %1522 = vmatpush1.msra.mxu0 %v647
    %1523 = vmatprep.subr.mxu0 %v650
    %1524 = vmatpush1.msra.mxu0 %v649
    %1525 = vmatprep.subr.mxu0 %v652
    %1526 = vmatpush1.msra.mxu0 %v651
    %1527 = vmatprep.subr.mxu0 %v654
    %1528 = vmatpush1.msra.mxu0 %v653
    %1529 = vmatprep.subr.mxu0 %v656
    %1530 = vmatpush1.msra.mxu0 %v655
    %1531 = vmatprep.subr.mxu0 %v658
    %1532 = vmatpush1.msra.mxu0 %v657
    %1533 = vmatprep.subr.mxu0 %v660
    %1534 = vmatpush1.msra.mxu0 %v659
    %1535 = vmatprep.subr.mxu0 %v662
    %1536 = vmatpush1.msra.mxu0 %v661
    %1537 = vmatprep.subr.mxu0 %v664
    %1538 = vmatpush1.msra.mxu0 %v663
    %1539 = vmatprep.subr.mxu0 %v666
    %1540 = vmatpush1.msra.mxu0 %v665
    %1541 = vmatprep.subr.mxu0 %v668
    %1542 = vmatpush1.msra.mxu0 %v667
    %1543 = vmatprep.subr.mxu0 %v670
    %1544 = vmatpush1.msra.mxu0 %v669
    %1545 = vmatprep.subr.mxu0 %v672
    %1546 = vmatpush1.msra.mxu0 %v671
    %1547 = vmatprep.mubr.f32.mxu0 %v811
    %1548 = vmatmul.mubr.f32.gmra.mrb[0].mxu0 %v809
    %v1549 = vpop.f32.mrb[0].mxu0
    %v1550 = vadd.f32 %v1479, %v1549
    %v1551 = vpop.f32.mrb[0].mxu0
    %v1552 = vadd.f32 %v1481, %v1551
    %1553 = vdwg.mxu0
    %1554 = vmatprep.subr.mxu0 %v674
    %1555 = vmatpush1.msra.mxu0 %v673
    %1556 = vmatprep.subr.mxu0 %v676
    %1557 = vmatpush1.msra.mxu0 %v675
    %1558 = vmatprep.subr.mxu0 %v678
    %1559 = vmatpush1.msra.mxu0 %v677
    %1560 = vmatprep.subr.mxu0 %v680
    %1561 = vmatpush1.msra.mxu0 %v679
    %1562 = vmatprep.subr.mxu0 %v682
    %1563 = vmatpush1.msra.mxu0 %v681
    %1564 = vmatprep.subr.mxu0 %v684
    %1565 = vmatpush1.msra.mxu0 %v683
    %1566 = vmatprep.subr.mxu0 %v686
    %1567 = vmatpush1.msra.mxu0 %v685
    %1568 = vmatprep.subr.mxu0 %v688
    %1569 = vmatpush1.msra.mxu0 %v687
    %1570 = vmatprep.subr.mxu0 %v690
    %1571 = vmatpush1.msra.mxu0 %v689
    %1572 = vmatprep.subr.mxu0 %v692
    %1573 = vmatpush1.msra.mxu0 %v691
    %1574 = vmatprep.subr.mxu0 %v694
    %1575 = vmatpush1.msra.mxu0 %v693
    %1576 = vmatprep.subr.mxu0 %v696
    %1577 = vmatpush1.msra.mxu0 %v695
    %1578 = vmatprep.subr.mxu0 %v698
    %1579 = vmatpush1.msra.mxu0 %v697
    %1580 = vmatprep.subr.mxu0 %v700
    %1581 = vmatpush1.msra.mxu0 %v699
    %1582 = vmatprep.subr.mxu0 %v702
    %1583 = vmatpush1.msra.mxu0 %v701
    %1584 = vmatprep.subr.mxu0 %v704
    %1585 = vmatpush1.msra.mxu0 %v703
    %1586 = vmatprep.subr.mxu0 %v706
    %1587 = vmatpush1.msra.mxu0 %v705
    %1588 = vmatprep.subr.mxu0 %v708
    %1589 = vmatpush1.msra.mxu0 %v707
    %1590 = vmatprep.subr.mxu0 0.0
    %1591 = vmatpush1.msra.mxu0 0.0
    %1592 = vmatprep.subr.mxu0 0.0
    %1593 = vmatpush1.msra.mxu0 0.0
    %1594 = vmatprep.subr.mxu0 0.0
    %1595 = vmatpush1.msra.mxu0 0.0
    %1596 = vmatprep.subr.mxu0 0.0
    %1597 = vmatpush1.msra.mxu0 0.0
    %1598 = vmatprep.subr.mxu0 0.0
    %1599 = vmatpush1.msra.mxu0 0.0
    %1600 = vmatprep.subr.mxu0 0.0
    %1601 = vmatpush1.msra.mxu0 0.0
    %1602 = vmatprep.subr.mxu0 0.0
    %1603 = vmatpush1.msra.mxu0 0.0
    %1604 = vmatprep.subr.mxu0 0.0
    %1605 = vmatpush1.msra.mxu0 0.0
    %1606 = vmatprep.subr.mxu0 0.0
    %1607 = vmatpush1.msra.mxu0 0.0
    %1608 = vmatprep.subr.mxu0 0.0
    %1609 = vmatpush1.msra.mxu0 0.0
    %1610 = vmatprep.subr.mxu0 0.0
    %1611 = vmatpush1.msra.mxu0 0.0
    %1612 = vmatprep.subr.mxu0 0.0
    %1613 = vmatpush1.msra.mxu0 0.0
    %1614 = vmatprep.subr.mxu0 0.0
    %1615 = vmatpush1.msra.mxu0 0.0
    %1616 = vmatprep.subr.mxu0 0.0
    %1617 = vmatpush1.msra.mxu0 0.0
    %1618 = vmatprep.mubr.f32.mxu0 %v842
    %1619 = vmatmul.mubr.f32.gmra.mrb[0].mxu0 %v818
    %v1620 = vpop.f32.mrb[0].mxu0
    %v1621 = vadd.f32 %v1550, %v1620
    %v1622 = vpop.f32.mrb[0].mxu0
    %v1623 = vadd.f32 %v1552, %v1622
    %1624 = vdwg.mxu0
    %v1625 = vld [vmem:[%s3] sm:$0xff]
    %v1626 = vld [vmem:[%s3 + $0x8] sm:$0xff]
    %v1627 = vld [vmem:[%s3 + $0x10] sm:$0xff]
    %v1628 = vld [vmem:[%s3 + $0x18] sm:$0xff]
    %v1629 = vld [vmem:[%s3 + $0x20] sm:$0xff]
    %v1630 = vld [vmem:[%s3 + $0x28] sm:$0xff]
    %v1631 = vld [vmem:[%s3 + $0x30] sm:$0xff]
    %v1632 = vld [vmem:[%s3 + $0x38] sm:$0xff]
    %v1633 = vld [vmem:[%s3 + $0x40] sm:$0xff]
    %v1634 = vld [vmem:[%s3 + $0x48] sm:$0xff]
    %v1635 = vld [vmem:[%s3 + $0x50] sm:$0xff]
    %v1636 = vld [vmem:[%s3 + $0x58] sm:$0xff]
    %v1637 = vld [vmem:[%s3 + $0x60] sm:$0xff]
    %v1638 = vld [vmem:[%s3 + $0x68] sm:$0xff]
    %v1639 = vld [vmem:[%s3 + $0x70] sm:$0xff]
    %v1640 = vld [vmem:[%s3 + $0x78] sm:$0xff]
    %v1641 = vld [vmem:[%s3 + $0x80] sm:$0xff]
    %v1642 = vld [vmem:[%s3 + $0x88] sm:$0xff]
    %v1643 = vld [vmem:[%s3 + $0x90] sm:$0xff]
    %v1644 = vld [vmem:[%s3 + $0x98] sm:$0xff]
    %v1645 = vld [vmem:[%s3 + $0xa0] sm:$0xff]
    %v1646 = vld [vmem:[%s3 + $0xa8] sm:$0xff]
    %v1647 = vld [vmem:[%s3 + $0xb0] sm:$0xff]
    %v1648 = vld [vmem:[%s3 + $0xb8] sm:$0xff]
    %v1649 = vld [vmem:[%s3 + $0xc0] sm:$0xff]
    %v1650 = vld [vmem:[%s3 + $0xc8] sm:$0xff]
    %v1651 = vld [vmem:[%s3 + $0xd0] sm:$0xff]
    %v1652 = vld [vmem:[%s3 + $0xd8] sm:$0xff]
    %v1653 = vld [vmem:[%s3 + $0xe0] sm:$0xff]
    %v1654 = vld [vmem:[%s3 + $0xe8] sm:$0xff]
    %v1655 = vld [vmem:[%s3 + $0xf0] sm:$0xff]
    %v1656 = vld [vmem:[%s3 + $0xf8] sm:$0xff]
    %v1657 = vld [vmem:[%s4] sm:$0x1]
    %v1659 = vlaneseq
    %v1660 = vshrl.u32 %v1659, 7
    %v1661 = vsub.s32 0, %v1660
    %v1662 = vrot.slane %v1657, %v1661
    %1664 = vmatprep.subr.mxu0 0.0
    %1665 = vmatpush1.msra.mxu0 %v1625
    %1666 = vmatprep.subr.mxu0 0.0
    %1667 = vmatpush1.msra.mxu0 %v1626
    %1668 = vmatprep.subr.mxu0 0.0
    %1669 = vmatpush1.msra.mxu0 %v1627
    %1670 = vmatprep.subr.mxu0 0.0
    %1671 = vmatpush1.msra.mxu0 %v1628
    %1672 = vmatprep.subr.mxu0 0.0
    %1673 = vmatpush1.msra.mxu0 %v1629
    %1674 = vmatprep.subr.mxu0 0.0
    %1675 = vmatpush1.msra.mxu0 %v1630
    %1676 = vmatprep.subr.mxu0 0.0
    %1677 = vmatpush1.msra.mxu0 %v1631
    %1678 = vmatprep.subr.mxu0 0.0
    %1679 = vmatpush1.msra.mxu0 %v1632
    %1680 = vmatprep.subr.mxu0 0.0
    %1681 = vmatpush1.msra.mxu0 %v1633
    %1682 = vmatprep.subr.mxu0 0.0
    %1683 = vmatpush1.msra.mxu0 %v1634
    %1684 = vmatprep.subr.mxu0 0.0
    %1685 = vmatpush1.msra.mxu0 %v1635
    %1686 = vmatprep.subr.mxu0 0.0
    %1687 = vmatpush1.msra.mxu0 %v1636
    %1688 = vmatprep.subr.mxu0 0.0
    %1689 = vmatpush1.msra.mxu0 %v1637
    %1690 = vmatprep.subr.mxu0 0.0
    %1691 = vmatpush1.msra.mxu0 %v1638
    %1692 = vmatprep.subr.mxu0 0.0
    %1693 = vmatpush1.msra.mxu0 %v1639
    %1694 = vmatprep.subr.mxu0 0.0
    %1695 = vmatpush1.msra.mxu0 %v1640
    %1696 = vmatprep.subr.mxu0 0.0
    %1697 = vmatpush1.msra.mxu0 %v1641
    %1698 = vmatprep.subr.mxu0 0.0
    %1699 = vmatpush1.msra.mxu0 %v1642
    %1700 = vmatprep.subr.mxu0 0.0
    %1701 = vmatpush1.msra.mxu0 %v1643
    %1702 = vmatprep.subr.mxu0 0.0
    %1703 = vmatpush1.msra.mxu0 %v1644
    %1704 = vmatprep.subr.mxu0 0.0
    %1705 = vmatpush1.msra.mxu0 %v1645
    %1706 = vmatprep.subr.mxu0 0.0
    %1707 = vmatpush1.msra.mxu0 %v1646
    %1708 = vmatprep.subr.mxu0 0.0
    %1709 = vmatpush1.msra.mxu0 %v1647
    %1710 = vmatprep.subr.mxu0 0.0
    %1711 = vmatpush1.msra.mxu0 %v1648
    %1712 = vmatprep.subr.mxu0 0.0
    %1713 = vmatpush1.msra.mxu0 %v1649
    %1714 = vmatprep.subr.mxu0 0.0
    %1715 = vmatpush1.msra.mxu0 %v1650
    %1716 = vmatprep.subr.mxu0 0.0
    %1717 = vmatpush1.msra.mxu0 %v1651
    %1718 = vmatprep.subr.mxu0 0.0
    %1719 = vmatpush1.msra.mxu0 %v1652
    %1720 = vmatprep.subr.mxu0 0.0
    %1721 = vmatpush1.msra.mxu0 %v1653
    %1722 = vmatprep.subr.mxu0 0.0
    %1723 = vmatpush1.msra.mxu0 %v1654
    %1724 = vmatprep.subr.mxu0 0.0
    %1725 = vmatpush1.msra.mxu0 %v1655
    %1726 = vmatprep.subr.mxu0 0.0
    %1727 = vmatpush1.msra.mxu0 %v1656
    %1728 = vmatprep.mubr.f32.mxu0 %v1623
    %1729 = vmatmul.mubr.f32.gmra.mrb[0].mxu0 %v1621
    %v1730 = vpop.f32.mrb[0].mxu0
    %v1731 = vadd.f32 %v1662, %v1730
    %v1732 = vpop.f32.mrb[0].mxu0
    %1733 = vdwg.mxu0
    %v1734 = vld [vmem:[%s5] sm:$0xff]
    %v1735 = vld [vmem:[%s5 + $0x8] sm:$0xff]
    %v1736 = vld [vmem:[%s5 + $0x10] sm:$0xff]
    %v1737 = vld [vmem:[%s5 + $0x18] sm:$0xff]
    %v1738 = vld [vmem:[%s5 + $0x20] sm:$0xff]
    %v1739 = vld [vmem:[%s5 + $0x28] sm:$0xff]
    %v1740 = vld [vmem:[%s5 + $0x30] sm:$0xff]
    %v1741 = vld [vmem:[%s5 + $0x38] sm:$0xff]
    %v1742 = vld [vmem:[%s6] sm:$0x1]
    %v1744 = vlaneseq
    %v1745 = vshrl.u32 %v1744, 7
    %v1746 = vsub.s32 0, %v1745
    %v1747 = vrot.slane %v1742, %v1746
    %vm1749 = vcmask 523264
    %v1751 = vsel %vm1749, %v1731, 0
    %1753 = vmatprep.subr.mxu0 0.0
    %1754 = vmatpush1.msra.mxu0 %v1734
    %1755 = vmatprep.subr.mxu0 0.0
    %1756 = vmatpush1.msra.mxu0 %v1735
    %1757 = vmatprep.subr.mxu0 0.0
    %1758 = vmatpush1.msra.mxu0 %v1736
    %1759 = vmatprep.subr.mxu0 0.0
    %1760 = vmatpush1.msra.mxu0 %v1737
    %1761 = vmatprep.subr.mxu0 0.0
    %1762 = vmatpush1.msra.mxu0 %v1738
    %1763 = vmatprep.subr.mxu0 0.0
    %1764 = vmatpush1.msra.mxu0 %v1739
    %1765 = vmatprep.subr.mxu0 0.0
    %1766 = vmatpush1.msra.mxu0 %v1740
    %1767 = vmatprep.subr.mxu0 0.0
    %1768 = vmatpush1.msra.mxu0 %v1741
    %1769 = vmatprep.subr.mxu0 0.0
    %1770 = vmatpush1.msra.mxu0 0.0
    %1771 = vmatprep.subr.mxu0 0.0
    %1772 = vmatpush1.msra.mxu0 0.0
    %1773 = vmatprep.subr.mxu0 0.0
    %1774 = vmatpush1.msra.mxu0 0.0
    %1775 = vmatprep.subr.mxu0 0.0
    %1776 = vmatpush1.msra.mxu0 0.0
    %1777 = vmatprep.subr.mxu0 0.0
    %1778 = vmatpush1.msra.mxu0 0.0
    %1779 = vmatprep.subr.mxu0 0.0
    %1780 = vmatpush1.msra.mxu0 0.0
    %1781 = vmatprep.subr.mxu0 0.0
    %1782 = vmatpush1.msra.mxu0 0.0
    %1783 = vmatprep.subr.mxu0 0.0
    %1784 = vmatpush1.msra.mxu0 0.0
    %1785 = vmatprep.subr.mxu0 0.0
    %1786 = vmatpush1.msra.mxu0 0.0
    %1787 = vmatprep.subr.mxu0 0.0
    %1788 = vmatpush1.msra.mxu0 0.0
    %1789 = vmatprep.subr.mxu0 0.0
    %1790 = vmatpush1.msra.mxu0 0.0
    %1791 = vmatprep.subr.mxu0 0.0
    %1792 = vmatpush1.msra.mxu0 0.0
    %1793 = vmatprep.subr.mxu0 0.0
    %1794 = vmatpush1.msra.mxu0 0.0
    %1795 = vmatprep.subr.mxu0 0.0
    %1796 = vmatpush1.msra.mxu0 0.0
    %1797 = vmatprep.subr.mxu0 0.0
    %1798 = vmatpush1.msra.mxu0 0.0
    %1799 = vmatprep.subr.mxu0 0.0
    %1800 = vmatpush1.msra.mxu0 0.0
    %1801 = vmatprep.subr.mxu0 0.0
    %1802 = vmatpush1.msra.mxu0 0.0
    %1803 = vmatprep.subr.mxu0 0.0
    %1804 = vmatpush1.msra.mxu0 0.0
    %1805 = vmatprep.subr.mxu0 0.0
    %1806 = vmatpush1.msra.mxu0 0.0
    %1807 = vmatprep.subr.mxu0 0.0
    %1808 = vmatpush1.msra.mxu0 0.0
    %1809 = vmatprep.subr.mxu0 0.0
    %1810 = vmatpush1.msra.mxu0 0.0
    %1811 = vmatprep.subr.mxu0 0.0
    %1812 = vmatpush1.msra.mxu0 0.0
    %1813 = vmatprep.subr.mxu0 0.0
    %1814 = vmatpush1.msra.mxu0 0.0
    %1815 = vmatprep.subr.mxu0 0.0
    %1816 = vmatpush1.msra.mxu0 0.0
    %1817 = vmatprep.mubr.f32.mxu0 0.0
    %1818 = vmatmul.mubr.f32.gmra.mrb[0].mxu0 %v1751
    %v1819 = vpop.f32.mrb[0].mxu0
    %v1820 = vadd.f32 %v1747, %v1819
    %v1821 = vpop.f32.mrb[0].mxu0
    %1822 = vdwg.mxu0
    %vm1823 = vcmask 66560
    %1824 = vst.msk [vmem:[#allocation2] sm:$0x3] %vm1823, %v1820
    // Predicated region
    $region30: #{m1_forward.5} parent=1 // pred_check
      _
    $region31: #{m1_forward.5} parent=1 // pred_check_branch
      %1826 = sbr.rel (0) target = $region33
    $region32: #{m1_forward.5} parent=1 // pred_region
      %s1828 = ssub.s32 32, 32
      %1829 = vsyncadd [#allocation3], %s1828
      %s1831 = sshll.u32 [#allocation2], 4
      %s1832 = int_to_ptr.vmem [resolvable:$true] %s1831
      %1834 = dma.vmem_to_hbm [thread:$0]  %s1832, 32, %s7, [#allocation3]
    $region33: #{m1_forward.5} parent=1 // pred_fallthru
      _
    // Predicated region
    $region34: #{m1_forward.5} parent=1 // pred_check
      _
    $region35: #{m1_forward.5} parent=1 // pred_check_branch
      %1836 = sbr.rel (0) target = $region37
    $region36: #{m1_forward.5} parent=1 // pred_region
      %1837 = dma.done [#allocation3], 32
    $region37: #{m1_forward.5} parent=1 // pred_fallthru
      _
    %1838 = vsyncpa [#allocation3], 1

</llo_original>
